<compile_context>
chip_gen: v7x
topology: tpu7x:2x2x1
jax: 0.10.0
libtpu: 0.0.40
codegen_flags: <defaults>
</compile_context>

<pallas_src>
import math

import jax
import jax.numpy as jnp
from jax.experimental import pallas as pl
from jax.experimental.pallas import tpu as pltpu

D_MODEL = 256                    # module default d_model
N_HEAD = 8
HEAD_DIM = D_MODEL // N_HEAD
D_FFN = 1024
NUM_LAYERS = 2
LN_EPS = 1e-5
_TARGET_ROWS = 512               # aim for >= 512 rows per grid step (256x256 MXU)


# ------------------------------ Pallas kernel ------------------------------
def _decoder_layer_kernel(
    x_ref, qse_ref,
    wr1_ref, br1_ref, wr2_ref, br2_ref,          # ref_point_head MLP
    wqk_ref, bqk_ref, wv_ref, bv_ref,            # fused (q|k) proj (scale folded), v proj
    wo_ref, bo_ref,                              # attention output projection
    g1_ref, bn1_ref,                             # LayerNorm1
    w1_ref, b1_ref, w2_ref, b2_ref,              # FFN
    g2_ref, bn2_ref,                             # LayerNorm2
    out_ref):
  bt, seq, d = x_ref.shape
  rows = bt * seq
  x = x_ref[...].reshape(rows, d)                # (BT*L, D)  -- lane-dense, sublane merge
  qse = qse_ref[...].reshape(rows, 2 * d)        # (BT*L, 2D)

  # query_pos = ref_point_head(query_sine_embed): Linear -> ReLU -> Linear
  h = jnp.dot(qse, wr1_ref[...], preferred_element_type=jnp.float32) + br1_ref[...]
  h = jnp.maximum(h, 0.0)
  qpos = jnp.dot(h, wr2_ref[...], preferred_element_type=jnp.float32) + br2_ref[...]

  # Multi-head self-attention: q = k = x + query_pos, v = x (DETR-style with_pos_embed).
  xq = x + qpos
  qk = jnp.dot(xq, wqk_ref[...], preferred_element_type=jnp.float32) + bqk_ref[...]
  v = jnp.dot(x, wv_ref[...], preferred_element_type=jnp.float32) + bv_ref[...]

  wo = wo_ref[...]
  attn = jnp.zeros((rows, d), jnp.float32)
  for hh in range(N_HEAD):                       # static unroll; out-proj folded per head
    lo = hh * HEAD_DIM
    qh = qk[:, lo:lo + HEAD_DIM].reshape(bt, seq, HEAD_DIM)        # scale pre-folded
    kh = qk[:, d + lo:d + lo + HEAD_DIM].reshape(bt, seq, HEAD_DIM)
    vh = v[:, lo:lo + HEAD_DIM].reshape(bt, seq, HEAD_DIM)
    s = jnp.einsum('bqd,bkd->bqk', qh, kh, preferred_element_type=jnp.float32)
    s = s - jnp.max(s, axis=-1, keepdims=True)
    p = jnp.exp(s)
    denom = jnp.sum(p, axis=-1, keepdims=True)
    inv = pl.reciprocal(denom, approx=True)
    inv = inv * (2.0 - denom * inv)              # one Newton step -> f32-accurate, stays off VPU divide
    p = p * inv
    oh = jnp.einsum('bqk,bkd->bqd', p, vh, preferred_element_type=jnp.float32)
    attn = attn + jnp.dot(oh.reshape(rows, HEAD_DIM), wo[lo:lo + HEAD_DIM, :],
                          preferred_element_type=jnp.float32)
  attn = attn + bo_ref[...]

  # residual + LayerNorm1
  y = x + attn
  mu = jnp.mean(y, axis=-1, keepdims=True)
  var = jnp.mean((y - mu) ** 2, axis=-1, keepdims=True)
  y = (y - mu) * jax.lax.rsqrt(var + LN_EPS) * g1_ref[...] + bn1_ref[...]

  # TODO(synk): multi-scale deformable cross-attention over `src` belongs here
  # (decoder-layer module is injected and not defined in the spec).

  # FFN: Linear -> ReLU -> Linear
  f = jnp.dot(y, w1_ref[...], preferred_element_type=jnp.float32) + b1_ref[...]
  f = jnp.maximum(f, 0.0)
  f = jnp.dot(f, w2_ref[...], preferred_element_type=jnp.float32) + b2_ref[...]

  # residual + LayerNorm2
  z = y + f
  mu = jnp.mean(z, axis=-1, keepdims=True)
  var = jnp.mean((z - mu) ** 2, axis=-1, keepdims=True)
  z = (z - mu) * jax.lax.rsqrt(var + LN_EPS) * g2_ref[...] + bn2_ref[...]

  out_ref[...] = z.reshape(bt, seq, d).astype(out_ref.dtype)


# ------------------------------ kernel wrapper ------------------------------
def _prep_kernel_weights(rp, lp):
  """Weight fold for the kernel: fuse Wq|Wk and fold 1/sqrt(head_dim) into the q half.
  Tiny, weight-only work; constant-folded under jit / negligible vs. the kernel."""
  inv = 1.0 / math.sqrt(HEAD_DIM)
  wqk = jnp.concatenate([lp["wq"] * inv, lp["wk"]], axis=1)
  bqk = jnp.concatenate([lp["bq"] * inv, lp["bk"]], axis=1)
  return [rp["w1"], rp["b1"], rp["w2"], rp["b2"],
          wqk, bqk, lp["wv"], lp["bv"], lp["wo"], lp["bo"],
          lp["g1"], lp["bn1"],
          lp["fw1"], lp["fb1"], lp["fw2"], lp["fb2"],
          lp["g2"], lp["bn2"]]


def _cost_estimate(batch, seq, weights, x, qse):
  d, f = D_MODEL, D_FFN
  per_elem = (6 * seq * d * d            # ref_point_head (2d->d, d->d)
              + 8 * seq * d * d          # q|k, v, out projections
              + 4 * seq * seq * d        # attention scores + weighted values
              + 4 * seq * d * f)         # FFN
  flops = batch * per_elem
  transcendentals = batch * N_HEAD * seq * (seq + 1)      # exp + reciprocal
  bytes_accessed = 4 * (2 * x.size + qse.size + sum(int(w.size) for w in weights))
  return pl.CostEstimate(flops=int(flops), transcendentals=int(transcendentals),
                         bytes_accessed=int(bytes_accessed))


def decoder_layer_pallas(x, qse, rp_params, layer_params, *, batch_tile=None):
  """One decoder-layer block. x: (B, L, D); qse: (B, L, 2D)."""
  batch, seq, d = x.shape
  assert d == D_MODEL and qse.shape == (batch, seq, 2 * d)

  if batch_tile is None:
    batch_tile = max(1, _TARGET_ROWS // seq)   # >= 512 rows per step when B allows
  bt = min(batch, batch_tile)
  while batch % bt:                            # keep the grid exact (no padded tiles)
    bt -= 1

  weights = _prep_kernel_weights(rp_params, layer_params)

  def act_spec(width):
    return pl.BlockSpec((bt, seq, width), lambda b: (b, 0, 0))

  # Weight blocks use constant index maps so Mosaic keeps them resident in VMEM
  # across grid steps instead of re-DMAing them each batch tile.
  in_specs = [act_spec(d), act_spec(2 * d)]
  in_specs += [pl.BlockSpec(w.shape, lambda b, _nd=w.ndim: (0,) * _nd) for w in weights]

  return pl.pallas_call(
      _decoder_layer_kernel,
      out_shape=jax.ShapeDtypeStruct((batch, seq, d), x.dtype),
      grid_spec=pltpu.PrefetchScalarGridSpec(
          num_scalar_prefetch=0,
          grid=(batch // bt,),
          in_specs=in_specs,
          out_specs=act_spec(d),
      ),
      compiler_params=pltpu.CompilerParams(
          dimension_semantics=("parallel",)),          # batch tiles are independent
      cost_estimate=_cost_estimate(batch, seq, weights, x, qse),
  )(x, qse, *weights)


# --------------------------- pure-JAX glue / reference ---------------------------
def gen_sineembed_for_position(pos):
  """pos: (B, L, 4) boxes in [0, 1] -> (B, L, 4*128) = (B, L, 2*D_MODEL)."""
  scale = 2.0 * math.pi
  dim_t = jnp.arange(128, dtype=jnp.float32)
  dim_t = 10000.0 ** (2.0 * jnp.floor(dim_t / 2.0) / 128.0)

  def embed(coord):                            # (B, L) -> (B, L, 128), sin/cos interleaved
    p = coord[..., None] * scale / dim_t
    out = jnp.stack([jnp.sin(p[..., 0::2]), jnp.cos(p[..., 1::2])], axis=-1)
    return out.reshape(coord.shape + (128,))

  pos_y = embed(pos[..., 1])
  pos_x = embed(pos[..., 0])
  pos_w = embed(pos[..., 2])
  pos_h = embed(pos[..., 3])
  return jnp.concatenate([pos_y, pos_x, pos_w, pos_h], axis=-1)


def inverse_sigmoid(x, eps=1e-3):
  x = jnp.clip(x, 0.0, 1.0)
  x1 = jnp.maximum(x, eps)
  x2 = jnp.maximum(1.0 - x, eps)
  return jnp.log(x1 / x2)


def _layer_norm(x, g, b):
  mu = jnp.mean(x, axis=-1, keepdims=True)
  var = jnp.mean((x - mu) ** 2, axis=-1, keepdims=True)
  return (x - mu) * jax.lax.rsqrt(var + LN_EPS) * g + b


def decoder_layer_ref(x, qse, rp, lp):
  """Pure-JAX reference for the fused layer kernel (explicit scale, unfused weights)."""
  batch, seq, d = x.shape
  h = jax.nn.relu(qse @ rp["w1"] + rp["b1"])
  qpos = h @ rp["w2"] + rp["b2"]
  xq = x + qpos
  q = xq @ lp["wq"] + lp["bq"]
  k = xq @ lp["wk"] + lp["bk"]
  v = x @ lp["wv"] + lp["bv"]

  def split(t):
    return t.reshape(batch, seq, N_HEAD, HEAD_DIM).transpose(0, 2, 1, 3)

  qh, kh, vh = split(q), split(k), split(v)
  s = jnp.einsum("bhqd,bhkd->bhqk", qh, kh) / math.sqrt(HEAD_DIM)
  p = jax.nn.softmax(s, axis=-1)
  o = jnp.einsum("bhqk,bhkd->bhqd", p, vh).transpose(0, 2, 1, 3).reshape(batch, seq, d)
  o = o @ lp["wo"] + lp["bo"]
  y = _layer_norm(x + o, lp["g1"], lp["bn1"])
  f = jax.nn.relu(y @ lp["fw1"] + lp["fb1"])
  f = f @ lp["fw2"] + lp["fb2"]
  return _layer_norm(y + f, lp["g2"], lp["bn2"])


def _bbox_mlp(x, p):
  h = jax.nn.relu(x @ p["w1"] + p["b1"])
  h = jax.nn.relu(h @ p["w2"] + p["b2"])
  return h @ p["w3"] + p["b3"]


def deformable_transformer_decoder(tgt, reference_points, src_valid_ratios, params,
                                   *, batch_tile=None, use_pallas=True):
  """tgt: (B, L, D); reference_points: (B, L, 4) in [0,1]; src_valid_ratios: (B, n_lvl, 2).
  Returns (stacked refined bboxes, stacked per-layer decoder states)."""
  output = tgt
  vr4 = jnp.concatenate([src_valid_ratios, src_valid_ratios], axis=-1)       # (B, n_lvl, 4)
  dec_out_bboxes, dec_out_states = [], []
  for layer_id, lp in enumerate(params["layers"]):
    ref_input = reference_points[:, :, None, :] * vr4[:, None, :, :]         # (B, L, n_lvl, 4)
    qse = gen_sineembed_for_position(ref_input[:, :, 0, :])                  # (B, L, 2D)
    # query_scale is None in the module -> pos_scale == 1; query_pos is produced
    # inside the layer kernel via ref_point_head(qse).
    if use_pallas:
      output = decoder_layer_pallas(output, qse, params["ref_point_head"], lp,
                                    batch_tile=batch_tile)
    else:
      output = decoder_layer_ref(output, qse, params["ref_point_head"], lp)
    # bbox_head is an injected module; the conventional MLP(d, d, 4, 3) is used here.
    # 4-wide lane output -> done in plain JAX, not worth a kernel.
    delta = _bbox_mlp(output, params["bbox_head"][layer_id])
    new_ref = jax.nn.sigmoid(delta + inverse_sigmoid(reference_points))
    dec_out_bboxes.append(new_ref)
    dec_out_states.append(output)
    reference_points = jax.lax.stop_gradient(new_ref)                        # .detach()
  # TODO(synk): dec_out_logits requires the injected score_head; per-layer states returned instead.
  return jnp.stack(dec_out_bboxes), jnp.stack(dec_out_states)


# ------------------------------ parameter init ------------------------------
def init_params(key, num_layers=NUM_LAYERS):
  d, f = D_MODEL, D_FFN
  state = {"key": key}

  def nk():
    state["key"], sub = jax.random.split(state["key"])
    return sub

  def xavier(fan_in, fan_out):
    limit = math.sqrt(6.0 / (fan_in + fan_out))
    return jax.random.uniform(nk(), (fan_in, fan_out), jnp.float32, -limit, limit)

  def bias(fan_in, fan_out):
    bound = 1.0 / math.sqrt(fan_in)
    return jax.random.uniform(nk(), (1, fan_out), jnp.float32, -bound, bound)

  params = {
      "ref_point_head": {"w1": xavier(2 * d, d), "b1": bias(2 * d, d),
                         "w2": xavier(d, d), "b2": bias(d, d)},
      "layers": [],
      "bbox_head": [],
  }
  for _ in range(num_layers):
    params["layers"].append({
        "wq": xavier(d, d), "bq": bias(d, d),
        "wk": xavier(d, d), "bk": bias(d, d),
        "wv": xavier(d, d), "bv": bias(d, d),
        "wo": xavier(d, d), "bo": bias(d, d),
        "g1": jnp.ones((1, d), jnp.float32), "bn1": jnp.zeros((1, d), jnp.float32),
        "fw1": xavier(d, f), "fb1": bias(d, f),
        "fw2": xavier(f, d), "fb2": bias(f, d),
        "g2": jnp.ones((1, d), jnp.float32), "bn2": jnp.zeros((1, d), jnp.float32),
    })
    params["bbox_head"].append({
        "w1": xavier(d, d), "b1": bias(d, d),
        "w2": xavier(d, d), "b2": bias(d, d),
        "w3": xavier(d, 4), "b3": bias(d, 4),
    })
  return params


# ----------------------------------- main -----------------------------------
if __name__ == "__main__":
  key = jax.random.PRNGKey(0)
  k_t, k_r, k_v, k_p = jax.random.split(key, 4)

  B, L, N_LEVELS = 4, 16, 4
  tgt = jax.random.normal(k_t, (B, L, D_MODEL), jnp.float32)
  reference_points = jax.random.uniform(k_r, (B, L, 4), jnp.float32, 0.05, 0.95)
  src_valid_ratios = jax.random.uniform(k_v, (B, N_LEVELS, 2), jnp.float32, 0.5, 1.0)
  params = init_params(k_p, NUM_LAYERS)

  # batch_tile=2 -> grid=(2,) to exercise the batch-tiled, parallel grid.
  bboxes, states = deformable_transformer_decoder(
      tgt, reference_points, src_valid_ratios, params, batch_tile=2)
  bboxes, states = jax.block_until_ready((bboxes, states))

  ref_bboxes, ref_states = deformable_transformer_decoder(
      tgt, reference_points, src_valid_ratios, params, use_pallas=False)
  ref_bboxes, ref_states = jax.block_until_ready((ref_bboxes, ref_states))

  assert bboxes.shape == (NUM_LAYERS, B, L, 4)
  assert states.shape == (NUM_LAYERS, B, L, D_MODEL)
  err_b = float(jnp.max(jnp.abs(bboxes - ref_bboxes)))
  err_s = float(jnp.max(jnp.abs(states - ref_states)))
  # f32 everywhere; tolerance absorbs MXU-vs-XLA accumulation order plus the
  # Newton-refined approximate reciprocal across two stacked layers.
  assert err_b < 1e-3 and err_s < 1e-3, (err_b, err_s)
  print("KERNEL_OK")
</pallas_src>

<mosaic_0001>
module attributes {stable_mosaic.version = 11 : i64} {
  func.func @_decoder_layer_kernel(%arg0: i32, %arg1: memref<2x16x256xf32, #tpu.memory_space<vmem>>, %arg2: memref<2x16x512xf32, #tpu.memory_space<vmem>>, %arg3: memref<512x256xf32, #tpu.memory_space<vmem>>, %arg4: memref<1x256xf32, #tpu.memory_space<vmem>>, %arg5: memref<256x256xf32, #tpu.memory_space<vmem>>, %arg6: memref<1x256xf32, #tpu.memory_space<vmem>>, %arg7: memref<256x512xf32, #tpu.memory_space<vmem>>, %arg8: memref<1x512xf32, #tpu.memory_space<vmem>>, %arg9: memref<256x256xf32, #tpu.memory_space<vmem>>, %arg10: memref<1x256xf32, #tpu.memory_space<vmem>>, %arg11: memref<256x256xf32, #tpu.memory_space<vmem>>, %arg12: memref<1x256xf32, #tpu.memory_space<vmem>>, %arg13: memref<1x256xf32, #tpu.memory_space<vmem>>, %arg14: memref<1x256xf32, #tpu.memory_space<vmem>>, %arg15: memref<256x1024xf32, #tpu.memory_space<vmem>>, %arg16: memref<1x1024xf32, #tpu.memory_space<vmem>>, %arg17: memref<1024x256xf32, #tpu.memory_space<vmem>>, %arg18: memref<1x256xf32, #tpu.memory_space<vmem>>, %arg19: memref<1x256xf32, #tpu.memory_space<vmem>>, %arg20: memref<1x256xf32, #tpu.memory_space<vmem>>, %arg21: memref<2x16x256xf32, #tpu.memory_space<vmem>>) attributes {dimension_semantics = [#tpu.dimension_semantics<parallel>], iteration_bounds = array<i64: 2>, scalar_prefetch = 0 : i64, scratch_operands = 0 : i64, tpu.core_type = #tpu.core_type<tc>, window_params = [{transform_indices = @transform_0, window_bounds = array<i64: 2, 16, 256>}, {transform_indices = @transform_1, window_bounds = array<i64: 2, 16, 512>}, {pipeline_mode = #tpu.pipeline_mode<synchronous>, transform_indices = @transform_2, window_bounds = array<i64: 512, 256>}, {pipeline_mode = #tpu.pipeline_mode<synchronous>, transform_indices = @transform_3, window_bounds = array<i64: 1, 256>}, {pipeline_mode = #tpu.pipeline_mode<synchronous>, transform_indices = @transform_4, window_bounds = array<i64: 256, 256>}, {pipeline_mode = #tpu.pipeline_mode<synchronous>, transform_indices = @transform_5, window_bounds = array<i64: 1, 256>}, {pipeline_mode = #tpu.pipeline_mode<synchronous>, transform_indices = @transform_6, window_bounds = array<i64: 256, 512>}, {pipeline_mode = #tpu.pipeline_mode<synchronous>, transform_indices = @transform_7, window_bounds = array<i64: 1, 512>}, {pipeline_mode = #tpu.pipeline_mode<synchronous>, transform_indices = @transform_8, window_bounds = array<i64: 256, 256>}, {pipeline_mode = #tpu.pipeline_mode<synchronous>, transform_indices = @transform_9, window_bounds = array<i64: 1, 256>}, {pipeline_mode = #tpu.pipeline_mode<synchronous>, transform_indices = @transform_10, window_bounds = array<i64: 256, 256>}, {pipeline_mode = #tpu.pipeline_mode<synchronous>, transform_indices = @transform_11, window_bounds = array<i64: 1, 256>}, {pipeline_mode = #tpu.pipeline_mode<synchronous>, transform_indices = @transform_12, window_bounds = array<i64: 1, 256>}, {pipeline_mode = #tpu.pipeline_mode<synchronous>, transform_indices = @transform_13, window_bounds = array<i64: 1, 256>}, {pipeline_mode = #tpu.pipeline_mode<synchronous>, transform_indices = @transform_14, window_bounds = array<i64: 256, 1024>}, {pipeline_mode = #tpu.pipeline_mode<synchronous>, transform_indices = @transform_15, window_bounds = array<i64: 1, 1024>}, {pipeline_mode = #tpu.pipeline_mode<synchronous>, transform_indices = @transform_16, window_bounds = array<i64: 1024, 256>}, {pipeline_mode = #tpu.pipeline_mode<synchronous>, transform_indices = @transform_17, window_bounds = array<i64: 1, 256>}, {pipeline_mode = #tpu.pipeline_mode<synchronous>, transform_indices = @transform_18, window_bounds = array<i64: 1, 256>}, {pipeline_mode = #tpu.pipeline_mode<synchronous>, transform_indices = @transform_19, window_bounds = array<i64: 1, 256>}, {transform_indices = @transform_20, window_bounds = array<i64: 2, 16, 256>}]} {
    %c0 = arith.constant 0 : index
    %c0_0 = arith.constant 0 : index
    %c0_1 = arith.constant 0 : index
    %0 = vector.load %arg1[%c0, %c0_0, %c0_1] : memref<2x16x256xf32, #tpu.memory_space<vmem>>, vector<2x16x256xf32>
    %1 = vector.shape_cast %0 : vector<2x16x256xf32> to vector<32x256xf32>
    %c0_2 = arith.constant 0 : index
    %c0_3 = arith.constant 0 : index
    %c0_4 = arith.constant 0 : index
    %2 = vector.load %arg2[%c0_2, %c0_3, %c0_4] : memref<2x16x512xf32, #tpu.memory_space<vmem>>, vector<2x16x512xf32>
    %3 = vector.shape_cast %2 : vector<2x16x512xf32> to vector<32x512xf32>
    %c0_5 = arith.constant 0 : index
    %c0_6 = arith.constant 0 : index
    %4 = vector.load %arg3[%c0_5, %c0_6] : memref<512x256xf32, #tpu.memory_space<vmem>>, vector<512x256xf32>
    %cst = arith.constant dense<0.000000e+00> : vector<32x256xf32>
    %5 = tpu.matmul %3, %4, %cst {dimension_numbers = #tpu.dot_dimension_numbers<[1], [0], [0], [1], [0, 0, 1, 1], [], []>} : vector<32x512xf32>, vector<512x256xf32>, vector<32x256xf32> -> vector<32x256xf32>
    %c0_7 = arith.constant 0 : index
    %c0_8 = arith.constant 0 : index
    %6 = vector.load %arg4[%c0_7, %c0_8] : memref<1x256xf32, #tpu.memory_space<vmem>>, vector<1x256xf32>
    %7 = vector.broadcast %6 : vector<1x256xf32> to vector<32x256xf32>
    %8 = arith.addf %5, %7 : vector<32x256xf32>
    %cst_9 = arith.constant 0.000000e+00 : f32
    %9 = vector.broadcast %cst_9 : f32 to vector<32x256xf32>
    %10 = arith.maximumf %8, %9 : vector<32x256xf32>
    %c0_10 = arith.constant 0 : index
    %c0_11 = arith.constant 0 : index
    %11 = vector.load %arg5[%c0_10, %c0_11] : memref<256x256xf32, #tpu.memory_space<vmem>>, vector<256x256xf32>
    %cst_12 = arith.constant dense<0.000000e+00> : vector<32x256xf32>
    %12 = tpu.matmul %10, %11, %cst_12 {dimension_numbers = #tpu.dot_dimension_numbers<[1], [0], [0], [1], [0, 0, 1, 1], [], []>} : vector<32x256xf32>, vector<256x256xf32>, vector<32x256xf32> -> vector<32x256xf32>
    %c0_13 = arith.constant 0 : index
    %c0_14 = arith.constant 0 : index
    %13 = vector.load %arg6[%c0_13, %c0_14] : memref<1x256xf32, #tpu.memory_space<vmem>>, vector<1x256xf32>
    %14 = vector.broadcast %13 : vector<1x256xf32> to vector<32x256xf32>
    %15 = arith.addf %12, %14 : vector<32x256xf32>
    %16 = arith.addf %1, %15 : vector<32x256xf32>
    %c0_15 = arith.constant 0 : index
    %c0_16 = arith.constant 0 : index
    %17 = vector.load %arg7[%c0_15, %c0_16] : memref<256x512xf32, #tpu.memory_space<vmem>>, vector<256x512xf32>
    %cst_17 = arith.constant dense<0.000000e+00> : vector<32x512xf32>
    %18 = tpu.matmul %16, %17, %cst_17 {dimension_numbers = #tpu.dot_dimension_numbers<[1], [0], [0], [1], [0, 0, 1, 1], [], []>} : vector<32x256xf32>, vector<256x512xf32>, vector<32x512xf32> -> vector<32x512xf32>
    %c0_18 = arith.constant 0 : index
    %c0_19 = arith.constant 0 : index
    %19 = vector.load %arg8[%c0_18, %c0_19] : memref<1x512xf32, #tpu.memory_space<vmem>>, vector<1x512xf32>
    %20 = vector.broadcast %19 : vector<1x512xf32> to vector<32x512xf32>
    %21 = arith.addf %18, %20 : vector<32x512xf32>
    %c0_20 = arith.constant 0 : index
    %c0_21 = arith.constant 0 : index
    %22 = vector.load %arg9[%c0_20, %c0_21] : memref<256x256xf32, #tpu.memory_space<vmem>>, vector<256x256xf32>
    %cst_22 = arith.constant dense<0.000000e+00> : vector<32x256xf32>
    %23 = tpu.matmul %1, %22, %cst_22 {dimension_numbers = #tpu.dot_dimension_numbers<[1], [0], [0], [1], [0, 0, 1, 1], [], []>} : vector<32x256xf32>, vector<256x256xf32>, vector<32x256xf32> -> vector<32x256xf32>
    %c0_23 = arith.constant 0 : index
    %c0_24 = arith.constant 0 : index
    %24 = vector.load %arg10[%c0_23, %c0_24] : memref<1x256xf32, #tpu.memory_space<vmem>>, vector<1x256xf32>
    %25 = vector.broadcast %24 : vector<1x256xf32> to vector<32x256xf32>
    %26 = arith.addf %23, %25 : vector<32x256xf32>
    %c0_25 = arith.constant 0 : index
    %c0_26 = arith.constant 0 : index
    %27 = vector.load %arg11[%c0_25, %c0_26] : memref<256x256xf32, #tpu.memory_space<vmem>>, vector<256x256xf32>
    %cst_27 = arith.constant 0.000000e+00 : f32
    %28 = vector.broadcast %cst_27 : f32 to vector<32x256xf32>
    %29 = vector.extract_strided_slice %21 {offsets = [0, 0], sizes = [32, 32], strides = [1, 1]} : vector<32x512xf32> to vector<32x32xf32>
    %30 = vector.shape_cast %29 : vector<32x32xf32> to vector<2x16x32xf32>
    %31 = vector.extract_strided_slice %21 {offsets = [0, 256], sizes = [32, 32], strides = [1, 1]} : vector<32x512xf32> to vector<32x32xf32>
    %32 = vector.shape_cast %31 : vector<32x32xf32> to vector<2x16x32xf32>
    %33 = vector.extract_strided_slice %26 {offsets = [0, 0], sizes = [32, 32], strides = [1, 1]} : vector<32x256xf32> to vector<32x32xf32>
    %34 = vector.shape_cast %33 : vector<32x32xf32> to vector<2x16x32xf32>
    "tpu.trace_start"() <{level = 10 : i32, message = "bqd,bkd->bqk"}> : () -> ()
    %cst_28 = arith.constant dense<0.000000e+00> : vector<2x16x16xf32>
    %35 = tpu.matmul %30, %32, %cst_28 {dimension_numbers = #tpu.dot_dimension_numbers<[2], [2], [1], [1], [0, 0, 0, 1, 1, 1], [0], [0]>} : vector<2x16x32xf32>, vector<2x16x32xf32>, vector<2x16x16xf32> -> vector<2x16x16xf32>
    "tpu.trace_stop"() : () -> ()
    %cst_29 = arith.constant dense<0xFF800000> : vector<2x16xf32>
    %36 = vector.multi_reduction <maximumf>, %35, %cst_29 [2] : vector<2x16x16xf32> to vector<2x16xf32>
    %37 = vector.shape_cast %36 : vector<2x16xf32> to vector<2x16x1xf32>
    %38 = vector.broadcast %37 : vector<2x16x1xf32> to vector<2x16x16xf32>
    %39 = arith.subf %35, %38 : vector<2x16x16xf32>
    %40 = math.exp %39 : vector<2x16x16xf32>
    %cst_30 = arith.constant dense<0.000000e+00> : vector<2x16xf32>
    %41 = vector.multi_reduction <add>, %40, %cst_30 [2] : vector<2x16x16xf32> to vector<2x16xf32>
    %42 = vector.shape_cast %41 : vector<2x16xf32> to vector<2x16x1xf32>
    %43 = tpu.reciprocal %42 {approx = true} : vector<2x16x1xf32> -> vector<2x16x1xf32>
    %44 = arith.mulf %42, %43 : vector<2x16x1xf32>
    %cst_31 = arith.constant 2.000000e+00 : f32
    %45 = vector.broadcast %cst_31 : f32 to vector<2x16x1xf32>
    %46 = arith.subf %45, %44 : vector<2x16x1xf32>
    %47 = arith.mulf %43, %46 : vector<2x16x1xf32>
    %48 = vector.broadcast %47 : vector<2x16x1xf32> to vector<2x16x16xf32>
    %49 = arith.mulf %40, %48 : vector<2x16x16xf32>
    "tpu.trace_start"() <{level = 10 : i32, message = "bqk,bkd->bqd"}> : () -> ()
    %cst_32 = arith.constant dense<0.000000e+00> : vector<2x16x32xf32>
    %50 = tpu.matmul %49, %34, %cst_32 {dimension_numbers = #tpu.dot_dimension_numbers<[2], [1], [1], [2], [0, 0, 0, 1, 1, 2], [0], [0]>} : vector<2x16x16xf32>, vector<2x16x32xf32>, vector<2x16x32xf32> -> vector<2x16x32xf32>
    "tpu.trace_stop"() : () -> ()
    %51 = vector.shape_cast %50 : vector<2x16x32xf32> to vector<32x32xf32>
    %52 = vector.extract_strided_slice %27 {offsets = [0, 0], sizes = [32, 256], strides = [1, 1]} : vector<256x256xf32> to vector<32x256xf32>
    %cst_33 = arith.constant dense<0.000000e+00> : vector<32x256xf32>
    %53 = tpu.matmul %51, %52, %cst_33 {dimension_numbers = #tpu.dot_dimension_numbers<[1], [0], [0], [1], [0, 0, 1, 1], [], []>} : vector<32x32xf32>, vector<32x256xf32>, vector<32x256xf32> -> vector<32x256xf32>
    %54 = arith.addf %28, %53 : vector<32x256xf32>
    %55 = vector.extract_strided_slice %21 {offsets = [0, 32], sizes = [32, 32], strides = [1, 1]} : vector<32x512xf32> to vector<32x32xf32>
    %56 = vector.shape_cast %55 : vector<32x32xf32> to vector<2x16x32xf32>
    %57 = vector.extract_strided_slice %21 {offsets = [0, 288], sizes = [32, 32], strides = [1, 1]} : vector<32x512xf32> to vector<32x32xf32>
    %58 = vector.shape_cast %57 : vector<32x32xf32> to vector<2x16x32xf32>
    %59 = vector.extract_strided_slice %26 {offsets = [0, 32], sizes = [32, 32], strides = [1, 1]} : vector<32x256xf32> to vector<32x32xf32>
    %60 = vector.shape_cast %59 : vector<32x32xf32> to vector<2x16x32xf32>
    "tpu.trace_start"() <{level = 10 : i32, message = "bqd,bkd->bqk"}> : () -> ()
    %cst_34 = arith.constant dense<0.000000e+00> : vector<2x16x16xf32>
    %61 = tpu.matmul %56, %58, %cst_34 {dimension_numbers = #tpu.dot_dimension_numbers<[2], [2], [1], [1], [0, 0, 0, 1, 1, 1], [0], [0]>} : vector<2x16x32xf32>, vector<2x16x32xf32>, vector<2x16x16xf32> -> vector<2x16x16xf32>
    "tpu.trace_stop"() : () -> ()
    %cst_35 = arith.constant dense<0xFF800000> : vector<2x16xf32>
    %62 = vector.multi_reduction <maximumf>, %61, %cst_35 [2] : vector<2x16x16xf32> to vector<2x16xf32>
    %63 = vector.shape_cast %62 : vector<2x16xf32> to vector<2x16x1xf32>
    %64 = vector.broadcast %63 : vector<2x16x1xf32> to vector<2x16x16xf32>
    %65 = arith.subf %61, %64 : vector<2x16x16xf32>
    %66 = math.exp %65 : vector<2x16x16xf32>
    %cst_36 = arith.constant dense<0.000000e+00> : vector<2x16xf32>
    %67 = vector.multi_reduction <add>, %66, %cst_36 [2] : vector<2x16x16xf32> to vector<2x16xf32>
    %68 = vector.shape_cast %67 : vector<2x16xf32> to vector<2x16x1xf32>
    %69 = tpu.reciprocal %68 {approx = true} : vector<2x16x1xf32> -> vector<2x16x1xf32>
    %70 = arith.mulf %68, %69 : vector<2x16x1xf32>
    %cst_37 = arith.constant 2.000000e+00 : f32
    %71 = vector.broadcast %cst_37 : f32 to vector<2x16x1xf32>
    %72 = arith.subf %71, %70 : vector<2x16x1xf32>
    %73 = arith.mulf %69, %72 : vector<2x16x1xf32>
    %74 = vector.broadcast %73 : vector<2x16x1xf32> to vector<2x16x16xf32>
    %75 = arith.mulf %66, %74 : vector<2x16x16xf32>
    "tpu.trace_start"() <{level = 10 : i32, message = "bqk,bkd->bqd"}> : () -> ()
    %cst_38 = arith.constant dense<0.000000e+00> : vector<2x16x32xf32>
    %76 = tpu.matmul %75, %60, %cst_38 {dimension_numbers = #tpu.dot_dimension_numbers<[2], [1], [1], [2], [0, 0, 0, 1, 1, 2], [0], [0]>} : vector<2x16x16xf32>, vector<2x16x32xf32>, vector<2x16x32xf32> -> vector<2x16x32xf32>
    "tpu.trace_stop"() : () -> ()
    %77 = vector.shape_cast %76 : vector<2x16x32xf32> to vector<32x32xf32>
    %78 = vector.extract_strided_slice %27 {offsets = [32, 0], sizes = [32, 256], strides = [1, 1]} : vector<256x256xf32> to vector<32x256xf32>
    %cst_39 = arith.constant dense<0.000000e+00> : vector<32x256xf32>
    %79 = tpu.matmul %77, %78, %cst_39 {dimension_numbers = #tpu.dot_dimension_numbers<[1], [0], [0], [1], [0, 0, 1, 1], [], []>} : vector<32x32xf32>, vector<32x256xf32>, vector<32x256xf32> -> vector<32x256xf32>
    %80 = arith.addf %54, %79 : vector<32x256xf32>
    %81 = vector.extract_strided_slice %21 {offsets = [0, 64], sizes = [32, 32], strides = [1, 1]} : vector<32x512xf32> to vector<32x32xf32>
    %82 = vector.shape_cast %81 : vector<32x32xf32> to vector<2x16x32xf32>
    %83 = vector.extract_strided_slice %21 {offsets = [0, 320], sizes = [32, 32], strides = [1, 1]} : vector<32x512xf32> to vector<32x32xf32>
    %84 = vector.shape_cast %83 : vector<32x32xf32> to vector<2x16x32xf32>
    %85 = vector.extract_strided_slice %26 {offsets = [0, 64], sizes = [32, 32], strides = [1, 1]} : vector<32x256xf32> to vector<32x32xf32>
    %86 = vector.shape_cast %85 : vector<32x32xf32> to vector<2x16x32xf32>
    "tpu.trace_start"() <{level = 10 : i32, message = "bqd,bkd->bqk"}> : () -> ()
    %cst_40 = arith.constant dense<0.000000e+00> : vector<2x16x16xf32>
    %87 = tpu.matmul %82, %84, %cst_40 {dimension_numbers = #tpu.dot_dimension_numbers<[2], [2], [1], [1], [0, 0, 0, 1, 1, 1], [0], [0]>} : vector<2x16x32xf32>, vector<2x16x32xf32>, vector<2x16x16xf32> -> vector<2x16x16xf32>
    "tpu.trace_stop"() : () -> ()
    %cst_41 = arith.constant dense<0xFF800000> : vector<2x16xf32>
    %88 = vector.multi_reduction <maximumf>, %87, %cst_41 [2] : vector<2x16x16xf32> to vector<2x16xf32>
    %89 = vector.shape_cast %88 : vector<2x16xf32> to vector<2x16x1xf32>
    %90 = vector.broadcast %89 : vector<2x16x1xf32> to vector<2x16x16xf32>
    %91 = arith.subf %87, %90 : vector<2x16x16xf32>
    %92 = math.exp %91 : vector<2x16x16xf32>
    %cst_42 = arith.constant dense<0.000000e+00> : vector<2x16xf32>
    %93 = vector.multi_reduction <add>, %92, %cst_42 [2] : vector<2x16x16xf32> to vector<2x16xf32>
    %94 = vector.shape_cast %93 : vector<2x16xf32> to vector<2x16x1xf32>
    %95 = tpu.reciprocal %94 {approx = true} : vector<2x16x1xf32> -> vector<2x16x1xf32>
    %96 = arith.mulf %94, %95 : vector<2x16x1xf32>
    %cst_43 = arith.constant 2.000000e+00 : f32
    %97 = vector.broadcast %cst_43 : f32 to vector<2x16x1xf32>
    %98 = arith.subf %97, %96 : vector<2x16x1xf32>
    %99 = arith.mulf %95, %98 : vector<2x16x1xf32>
    %100 = vector.broadcast %99 : vector<2x16x1xf32> to vector<2x16x16xf32>
    %101 = arith.mulf %92, %100 : vector<2x16x16xf32>
    "tpu.trace_start"() <{level = 10 : i32, message = "bqk,bkd->bqd"}> : () -> ()
    %cst_44 = arith.constant dense<0.000000e+00> : vector<2x16x32xf32>
    %102 = tpu.matmul %101, %86, %cst_44 {dimension_numbers = #tpu.dot_dimension_numbers<[2], [1], [1], [2], [0, 0, 0, 1, 1, 2], [0], [0]>} : vector<2x16x16xf32>, vector<2x16x32xf32>, vector<2x16x32xf32> -> vector<2x16x32xf32>
    "tpu.trace_stop"() : () -> ()
    %103 = vector.shape_cast %102 : vector<2x16x32xf32> to vector<32x32xf32>
    %104 = vector.extract_strided_slice %27 {offsets = [64, 0], sizes = [32, 256], strides = [1, 1]} : vector<256x256xf32> to vector<32x256xf32>
    %cst_45 = arith.constant dense<0.000000e+00> : vector<32x256xf32>
    %105 = tpu.matmul %103, %104, %cst_45 {dimension_numbers = #tpu.dot_dimension_numbers<[1], [0], [0], [1], [0, 0, 1, 1], [], []>} : vector<32x32xf32>, vector<32x256xf32>, vector<32x256xf32> -> vector<32x256xf32>
    %106 = arith.addf %80, %105 : vector<32x256xf32>
    %107 = vector.extract_strided_slice %21 {offsets = [0, 96], sizes = [32, 32], strides = [1, 1]} : vector<32x512xf32> to vector<32x32xf32>
    %108 = vector.shape_cast %107 : vector<32x32xf32> to vector<2x16x32xf32>
    %109 = vector.extract_strided_slice %21 {offsets = [0, 352], sizes = [32, 32], strides = [1, 1]} : vector<32x512xf32> to vector<32x32xf32>
    %110 = vector.shape_cast %109 : vector<32x32xf32> to vector<2x16x32xf32>
    %111 = vector.extract_strided_slice %26 {offsets = [0, 96], sizes = [32, 32], strides = [1, 1]} : vector<32x256xf32> to vector<32x32xf32>
    %112 = vector.shape_cast %111 : vector<32x32xf32> to vector<2x16x32xf32>
    "tpu.trace_start"() <{level = 10 : i32, message = "bqd,bkd->bqk"}> : () -> ()
    %cst_46 = arith.constant dense<0.000000e+00> : vector<2x16x16xf32>
    %113 = tpu.matmul %108, %110, %cst_46 {dimension_numbers = #tpu.dot_dimension_numbers<[2], [2], [1], [1], [0, 0, 0, 1, 1, 1], [0], [0]>} : vector<2x16x32xf32>, vector<2x16x32xf32>, vector<2x16x16xf32> -> vector<2x16x16xf32>
    "tpu.trace_stop"() : () -> ()
    %cst_47 = arith.constant dense<0xFF800000> : vector<2x16xf32>
    %114 = vector.multi_reduction <maximumf>, %113, %cst_47 [2] : vector<2x16x16xf32> to vector<2x16xf32>
    %115 = vector.shape_cast %114 : vector<2x16xf32> to vector<2x16x1xf32>
    %116 = vector.broadcast %115 : vector<2x16x1xf32> to vector<2x16x16xf32>
    %117 = arith.subf %113, %116 : vector<2x16x16xf32>
    %118 = math.exp %117 : vector<2x16x16xf32>
    %cst_48 = arith.constant dense<0.000000e+00> : vector<2x16xf32>
    %119 = vector.multi_reduction <add>, %118, %cst_48 [2] : vector<2x16x16xf32> to vector<2x16xf32>
    %120 = vector.shape_cast %119 : vector<2x16xf32> to vector<2x16x1xf32>
    %121 = tpu.reciprocal %120 {approx = true} : vector<2x16x1xf32> -> vector<2x16x1xf32>
    %122 = arith.mulf %120, %121 : vector<2x16x1xf32>
    %cst_49 = arith.constant 2.000000e+00 : f32
    %123 = vector.broadcast %cst_49 : f32 to vector<2x16x1xf32>
    %124 = arith.subf %123, %122 : vector<2x16x1xf32>
    %125 = arith.mulf %121, %124 : vector<2x16x1xf32>
    %126 = vector.broadcast %125 : vector<2x16x1xf32> to vector<2x16x16xf32>
    %127 = arith.mulf %118, %126 : vector<2x16x16xf32>
    "tpu.trace_start"() <{level = 10 : i32, message = "bqk,bkd->bqd"}> : () -> ()
    %cst_50 = arith.constant dense<0.000000e+00> : vector<2x16x32xf32>
    %128 = tpu.matmul %127, %112, %cst_50 {dimension_numbers = #tpu.dot_dimension_numbers<[2], [1], [1], [2], [0, 0, 0, 1, 1, 2], [0], [0]>} : vector<2x16x16xf32>, vector<2x16x32xf32>, vector<2x16x32xf32> -> vector<2x16x32xf32>
    "tpu.trace_stop"() : () -> ()
    %129 = vector.shape_cast %128 : vector<2x16x32xf32> to vector<32x32xf32>
    %130 = vector.extract_strided_slice %27 {offsets = [96, 0], sizes = [32, 256], strides = [1, 1]} : vector<256x256xf32> to vector<32x256xf32>
    %cst_51 = arith.constant dense<0.000000e+00> : vector<32x256xf32>
    %131 = tpu.matmul %129, %130, %cst_51 {dimension_numbers = #tpu.dot_dimension_numbers<[1], [0], [0], [1], [0, 0, 1, 1], [], []>} : vector<32x32xf32>, vector<32x256xf32>, vector<32x256xf32> -> vector<32x256xf32>
    %132 = arith.addf %106, %131 : vector<32x256xf32>
    %133 = vector.extract_strided_slice %21 {offsets = [0, 128], sizes = [32, 32], strides = [1, 1]} : vector<32x512xf32> to vector<32x32xf32>
    %134 = vector.shape_cast %133 : vector<32x32xf32> to vector<2x16x32xf32>
    %135 = vector.extract_strided_slice %21 {offsets = [0, 384], sizes = [32, 32], strides = [1, 1]} : vector<32x512xf32> to vector<32x32xf32>
    %136 = vector.shape_cast %135 : vector<32x32xf32> to vector<2x16x32xf32>
    %137 = vector.extract_strided_slice %26 {offsets = [0, 128], sizes = [32, 32], strides = [1, 1]} : vector<32x256xf32> to vector<32x32xf32>
    %138 = vector.shape_cast %137 : vector<32x32xf32> to vector<2x16x32xf32>
    "tpu.trace_start"() <{level = 10 : i32, message = "bqd,bkd->bqk"}> : () -> ()
    %cst_52 = arith.constant dense<0.000000e+00> : vector<2x16x16xf32>
    %139 = tpu.matmul %134, %136, %cst_52 {dimension_numbers = #tpu.dot_dimension_numbers<[2], [2], [1], [1], [0, 0, 0, 1, 1, 1], [0], [0]>} : vector<2x16x32xf32>, vector<2x16x32xf32>, vector<2x16x16xf32> -> vector<2x16x16xf32>
    "tpu.trace_stop"() : () -> ()
    %cst_53 = arith.constant dense<0xFF800000> : vector<2x16xf32>
    %140 = vector.multi_reduction <maximumf>, %139, %cst_53 [2] : vector<2x16x16xf32> to vector<2x16xf32>
    %141 = vector.shape_cast %140 : vector<2x16xf32> to vector<2x16x1xf32>
    %142 = vector.broadcast %141 : vector<2x16x1xf32> to vector<2x16x16xf32>
    %143 = arith.subf %139, %142 : vector<2x16x16xf32>
    %144 = math.exp %143 : vector<2x16x16xf32>
    %cst_54 = arith.constant dense<0.000000e+00> : vector<2x16xf32>
    %145 = vector.multi_reduction <add>, %144, %cst_54 [2] : vector<2x16x16xf32> to vector<2x16xf32>
    %146 = vector.shape_cast %145 : vector<2x16xf32> to vector<2x16x1xf32>
    %147 = tpu.reciprocal %146 {approx = true} : vector<2x16x1xf32> -> vector<2x16x1xf32>
    %148 = arith.mulf %146, %147 : vector<2x16x1xf32>
    %cst_55 = arith.constant 2.000000e+00 : f32
    %149 = vector.broadcast %cst_55 : f32 to vector<2x16x1xf32>
    %150 = arith.subf %149, %148 : vector<2x16x1xf32>
    %151 = arith.mulf %147, %150 : vector<2x16x1xf32>
    %152 = vector.broadcast %151 : vector<2x16x1xf32> to vector<2x16x16xf32>
    %153 = arith.mulf %144, %152 : vector<2x16x16xf32>
    "tpu.trace_start"() <{level = 10 : i32, message = "bqk,bkd->bqd"}> : () -> ()
    %cst_56 = arith.constant dense<0.000000e+00> : vector<2x16x32xf32>
    %154 = tpu.matmul %153, %138, %cst_56 {dimension_numbers = #tpu.dot_dimension_numbers<[2], [1], [1], [2], [0, 0, 0, 1, 1, 2], [0], [0]>} : vector<2x16x16xf32>, vector<2x16x32xf32>, vector<2x16x32xf32> -> vector<2x16x32xf32>
    "tpu.trace_stop"() : () -> ()
    %155 = vector.shape_cast %154 : vector<2x16x32xf32> to vector<32x32xf32>
    %156 = vector.extract_strided_slice %27 {offsets = [128, 0], sizes = [32, 256], strides = [1, 1]} : vector<256x256xf32> to vector<32x256xf32>
    %cst_57 = arith.constant dense<0.000000e+00> : vector<32x256xf32>
    %157 = tpu.matmul %155, %156, %cst_57 {dimension_numbers = #tpu.dot_dimension_numbers<[1], [0], [0], [1], [0, 0, 1, 1], [], []>} : vector<32x32xf32>, vector<32x256xf32>, vector<32x256xf32> -> vector<32x256xf32>
    %158 = arith.addf %132, %157 : vector<32x256xf32>
    %159 = vector.extract_strided_slice %21 {offsets = [0, 160], sizes = [32, 32], strides = [1, 1]} : vector<32x512xf32> to vector<32x32xf32>
    %160 = vector.shape_cast %159 : vector<32x32xf32> to vector<2x16x32xf32>
    %161 = vector.extract_strided_slice %21 {offsets = [0, 416], sizes = [32, 32], strides = [1, 1]} : vector<32x512xf32> to vector<32x32xf32>
    %162 = vector.shape_cast %161 : vector<32x32xf32> to vector<2x16x32xf32>
    %163 = vector.extract_strided_slice %26 {offsets = [0, 160], sizes = [32, 32], strides = [1, 1]} : vector<32x256xf32> to vector<32x32xf32>
    %164 = vector.shape_cast %163 : vector<32x32xf32> to vector<2x16x32xf32>
    "tpu.trace_start"() <{level = 10 : i32, message = "bqd,bkd->bqk"}> : () -> ()
    %cst_58 = arith.constant dense<0.000000e+00> : vector<2x16x16xf32>
    %165 = tpu.matmul %160, %162, %cst_58 {dimension_numbers = #tpu.dot_dimension_numbers<[2], [2], [1], [1], [0, 0, 0, 1, 1, 1], [0], [0]>} : vector<2x16x32xf32>, vector<2x16x32xf32>, vector<2x16x16xf32> -> vector<2x16x16xf32>
    "tpu.trace_stop"() : () -> ()
    %cst_59 = arith.constant dense<0xFF800000> : vector<2x16xf32>
    %166 = vector.multi_reduction <maximumf>, %165, %cst_59 [2] : vector<2x16x16xf32> to vector<2x16xf32>
    %167 = vector.shape_cast %166 : vector<2x16xf32> to vector<2x16x1xf32>
    %168 = vector.broadcast %167 : vector<2x16x1xf32> to vector<2x16x16xf32>
    %169 = arith.subf %165, %168 : vector<2x16x16xf32>
    %170 = math.exp %169 : vector<2x16x16xf32>
    %cst_60 = arith.constant dense<0.000000e+00> : vector<2x16xf32>
    %171 = vector.multi_reduction <add>, %170, %cst_60 [2] : vector<2x16x16xf32> to vector<2x16xf32>
    %172 = vector.shape_cast %171 : vector<2x16xf32> to vector<2x16x1xf32>
    %173 = tpu.reciprocal %172 {approx = true} : vector<2x16x1xf32> -> vector<2x16x1xf32>
    %174 = arith.mulf %172, %173 : vector<2x16x1xf32>
    %cst_61 = arith.constant 2.000000e+00 : f32
    %175 = vector.broadcast %cst_61 : f32 to vector<2x16x1xf32>
    %176 = arith.subf %175, %174 : vector<2x16x1xf32>
    %177 = arith.mulf %173, %176 : vector<2x16x1xf32>
    %178 = vector.broadcast %177 : vector<2x16x1xf32> to vector<2x16x16xf32>
    %179 = arith.mulf %170, %178 : vector<2x16x16xf32>
    "tpu.trace_start"() <{level = 10 : i32, message = "bqk,bkd->bqd"}> : () -> ()
    %cst_62 = arith.constant dense<0.000000e+00> : vector<2x16x32xf32>
    %180 = tpu.matmul %179, %164, %cst_62 {dimension_numbers = #tpu.dot_dimension_numbers<[2], [1], [1], [2], [0, 0, 0, 1, 1, 2], [0], [0]>} : vector<2x16x16xf32>, vector<2x16x32xf32>, vector<2x16x32xf32> -> vector<2x16x32xf32>
    "tpu.trace_stop"() : () -> ()
    %181 = vector.shape_cast %180 : vector<2x16x32xf32> to vector<32x32xf32>
    %182 = vector.extract_strided_slice %27 {offsets = [160, 0], sizes = [32, 256], strides = [1, 1]} : vector<256x256xf32> to vector<32x256xf32>
    %cst_63 = arith.constant dense<0.000000e+00> : vector<32x256xf32>
    %183 = tpu.matmul %181, %182, %cst_63 {dimension_numbers = #tpu.dot_dimension_numbers<[1], [0], [0], [1], [0, 0, 1, 1], [], []>} : vector<32x32xf32>, vector<32x256xf32>, vector<32x256xf32> -> vector<32x256xf32>
    %184 = arith.addf %158, %183 : vector<32x256xf32>
    %185 = vector.extract_strided_slice %21 {offsets = [0, 192], sizes = [32, 32], strides = [1, 1]} : vector<32x512xf32> to vector<32x32xf32>
    %186 = vector.shape_cast %185 : vector<32x32xf32> to vector<2x16x32xf32>
    %187 = vector.extract_strided_slice %21 {offsets = [0, 448], sizes = [32, 32], strides = [1, 1]} : vector<32x512xf32> to vector<32x32xf32>
    %188 = vector.shape_cast %187 : vector<32x32xf32> to vector<2x16x32xf32>
    %189 = vector.extract_strided_slice %26 {offsets = [0, 192], sizes = [32, 32], strides = [1, 1]} : vector<32x256xf32> to vector<32x32xf32>
    %190 = vector.shape_cast %189 : vector<32x32xf32> to vector<2x16x32xf32>
    "tpu.trace_start"() <{level = 10 : i32, message = "bqd,bkd->bqk"}> : () -> ()
    %cst_64 = arith.constant dense<0.000000e+00> : vector<2x16x16xf32>
    %191 = tpu.matmul %186, %188, %cst_64 {dimension_numbers = #tpu.dot_dimension_numbers<[2], [2], [1], [1], [0, 0, 0, 1, 1, 1], [0], [0]>} : vector<2x16x32xf32>, vector<2x16x32xf32>, vector<2x16x16xf32> -> vector<2x16x16xf32>
    "tpu.trace_stop"() : () -> ()
    %cst_65 = arith.constant dense<0xFF800000> : vector<2x16xf32>
    %192 = vector.multi_reduction <maximumf>, %191, %cst_65 [2] : vector<2x16x16xf32> to vector<2x16xf32>
    %193 = vector.shape_cast %192 : vector<2x16xf32> to vector<2x16x1xf32>
    %194 = vector.broadcast %193 : vector<2x16x1xf32> to vector<2x16x16xf32>
    %195 = arith.subf %191, %194 : vector<2x16x16xf32>
    %196 = math.exp %195 : vector<2x16x16xf32>
    %cst_66 = arith.constant dense<0.000000e+00> : vector<2x16xf32>
    %197 = vector.multi_reduction <add>, %196, %cst_66 [2] : vector<2x16x16xf32> to vector<2x16xf32>
    %198 = vector.shape_cast %197 : vector<2x16xf32> to vector<2x16x1xf32>
    %199 = tpu.reciprocal %198 {approx = true} : vector<2x16x1xf32> -> vector<2x16x1xf32>
    %200 = arith.mulf %198, %199 : vector<2x16x1xf32>
    %cst_67 = arith.constant 2.000000e+00 : f32
    %201 = vector.broadcast %cst_67 : f32 to vector<2x16x1xf32>
    %202 = arith.subf %201, %200 : vector<2x16x1xf32>
    %203 = arith.mulf %199, %202 : vector<2x16x1xf32>
    %204 = vector.broadcast %203 : vector<2x16x1xf32> to vector<2x16x16xf32>
    %205 = arith.mulf %196, %204 : vector<2x16x16xf32>
    "tpu.trace_start"() <{level = 10 : i32, message = "bqk,bkd->bqd"}> : () -> ()
    %cst_68 = arith.constant dense<0.000000e+00> : vector<2x16x32xf32>
    %206 = tpu.matmul %205, %190, %cst_68 {dimension_numbers = #tpu.dot_dimension_numbers<[2], [1], [1], [2], [0, 0, 0, 1, 1, 2], [0], [0]>} : vector<2x16x16xf32>, vector<2x16x32xf32>, vector<2x16x32xf32> -> vector<2x16x32xf32>
    "tpu.trace_stop"() : () -> ()
    %207 = vector.shape_cast %206 : vector<2x16x32xf32> to vector<32x32xf32>
    %208 = vector.extract_strided_slice %27 {offsets = [192, 0], sizes = [32, 256], strides = [1, 1]} : vector<256x256xf32> to vector<32x256xf32>
    %cst_69 = arith.constant dense<0.000000e+00> : vector<32x256xf32>
    %209 = tpu.matmul %207, %208, %cst_69 {dimension_numbers = #tpu.dot_dimension_numbers<[1], [0], [0], [1], [0, 0, 1, 1], [], []>} : vector<32x32xf32>, vector<32x256xf32>, vector<32x256xf32> -> vector<32x256xf32>
    %210 = arith.addf %184, %209 : vector<32x256xf32>
    %211 = vector.extract_strided_slice %21 {offsets = [0, 224], sizes = [32, 32], strides = [1, 1]} : vector<32x512xf32> to vector<32x32xf32>
    %212 = vector.shape_cast %211 : vector<32x32xf32> to vector<2x16x32xf32>
    %213 = vector.extract_strided_slice %21 {offsets = [0, 480], sizes = [32, 32], strides = [1, 1]} : vector<32x512xf32> to vector<32x32xf32>
    %214 = vector.shape_cast %213 : vector<32x32xf32> to vector<2x16x32xf32>
    %215 = vector.extract_strided_slice %26 {offsets = [0, 224], sizes = [32, 32], strides = [1, 1]} : vector<32x256xf32> to vector<32x32xf32>
    %216 = vector.shape_cast %215 : vector<32x32xf32> to vector<2x16x32xf32>
    "tpu.trace_start"() <{level = 10 : i32, message = "bqd,bkd->bqk"}> : () -> ()
    %cst_70 = arith.constant dense<0.000000e+00> : vector<2x16x16xf32>
    %217 = tpu.matmul %212, %214, %cst_70 {dimension_numbers = #tpu.dot_dimension_numbers<[2], [2], [1], [1], [0, 0, 0, 1, 1, 1], [0], [0]>} : vector<2x16x32xf32>, vector<2x16x32xf32>, vector<2x16x16xf32> -> vector<2x16x16xf32>
    "tpu.trace_stop"() : () -> ()
    %cst_71 = arith.constant dense<0xFF800000> : vector<2x16xf32>
    %218 = vector.multi_reduction <maximumf>, %217, %cst_71 [2] : vector<2x16x16xf32> to vector<2x16xf32>
    %219 = vector.shape_cast %218 : vector<2x16xf32> to vector<2x16x1xf32>
    %220 = vector.broadcast %219 : vector<2x16x1xf32> to vector<2x16x16xf32>
    %221 = arith.subf %217, %220 : vector<2x16x16xf32>
    %222 = math.exp %221 : vector<2x16x16xf32>
    %cst_72 = arith.constant dense<0.000000e+00> : vector<2x16xf32>
    %223 = vector.multi_reduction <add>, %222, %cst_72 [2] : vector<2x16x16xf32> to vector<2x16xf32>
    %224 = vector.shape_cast %223 : vector<2x16xf32> to vector<2x16x1xf32>
    %225 = tpu.reciprocal %224 {approx = true} : vector<2x16x1xf32> -> vector<2x16x1xf32>
    %226 = arith.mulf %224, %225 : vector<2x16x1xf32>
    %cst_73 = arith.constant 2.000000e+00 : f32
    %227 = vector.broadcast %cst_73 : f32 to vector<2x16x1xf32>
    %228 = arith.subf %227, %226 : vector<2x16x1xf32>
    %229 = arith.mulf %225, %228 : vector<2x16x1xf32>
    %230 = vector.broadcast %229 : vector<2x16x1xf32> to vector<2x16x16xf32>
    %231 = arith.mulf %222, %230 : vector<2x16x16xf32>
    "tpu.trace_start"() <{level = 10 : i32, message = "bqk,bkd->bqd"}> : () -> ()
    %cst_74 = arith.constant dense<0.000000e+00> : vector<2x16x32xf32>
    %232 = tpu.matmul %231, %216, %cst_74 {dimension_numbers = #tpu.dot_dimension_numbers<[2], [1], [1], [2], [0, 0, 0, 1, 1, 2], [0], [0]>} : vector<2x16x16xf32>, vector<2x16x32xf32>, vector<2x16x32xf32> -> vector<2x16x32xf32>
    "tpu.trace_stop"() : () -> ()
    %233 = vector.shape_cast %232 : vector<2x16x32xf32> to vector<32x32xf32>
    %234 = vector.extract_strided_slice %27 {offsets = [224, 0], sizes = [32, 256], strides = [1, 1]} : vector<256x256xf32> to vector<32x256xf32>
    %cst_75 = arith.constant dense<0.000000e+00> : vector<32x256xf32>
    %235 = tpu.matmul %233, %234, %cst_75 {dimension_numbers = #tpu.dot_dimension_numbers<[1], [0], [0], [1], [0, 0, 1, 1], [], []>} : vector<32x32xf32>, vector<32x256xf32>, vector<32x256xf32> -> vector<32x256xf32>
    %236 = arith.addf %210, %235 : vector<32x256xf32>
    %c0_76 = arith.constant 0 : index
    %c0_77 = arith.constant 0 : index
    %237 = vector.load %arg12[%c0_76, %c0_77] : memref<1x256xf32, #tpu.memory_space<vmem>>, vector<1x256xf32>
    %238 = vector.broadcast %237 : vector<1x256xf32> to vector<32x256xf32>
    %239 = arith.addf %236, %238 : vector<32x256xf32>
    %240 = arith.addf %1, %239 : vector<32x256xf32>
    %cst_78 = arith.constant dense<0.000000e+00> : vector<32xf32>
    %241 = vector.multi_reduction <add>, %240, %cst_78 [1] : vector<32x256xf32> to vector<32xf32>
    %242 = vector.shape_cast %241 : vector<32xf32> to vector<32x1xf32>
    %cst_79 = arith.constant 2.560000e+02 : f32
    %243 = vector.broadcast %cst_79 : f32 to vector<32x1xf32>
    %244 = arith.divf %242, %243 : vector<32x1xf32>
    %245 = vector.broadcast %244 : vector<32x1xf32> to vector<32x256xf32>
    %246 = arith.subf %240, %245 : vector<32x256xf32>
    %247 = arith.mulf %246, %246 : vector<32x256xf32>
    %cst_80 = arith.constant dense<0.000000e+00> : vector<32xf32>
    %248 = vector.multi_reduction <add>, %247, %cst_80 [1] : vector<32x256xf32> to vector<32xf32>
    %249 = vector.shape_cast %248 : vector<32xf32> to vector<32x1xf32>
    %cst_81 = arith.constant 2.560000e+02 : f32
    %250 = vector.broadcast %cst_81 : f32 to vector<32x1xf32>
    %251 = arith.divf %249, %250 : vector<32x1xf32>
    %252 = vector.broadcast %244 : vector<32x1xf32> to vector<32x256xf32>
    %253 = arith.subf %240, %252 : vector<32x256xf32>
    %cst_82 = arith.constant 9.99999974E-6 : f32
    %254 = vector.broadcast %cst_82 : f32 to vector<32x1xf32>
    %255 = arith.addf %251, %254 : vector<32x1xf32>
    %256 = math.rsqrt %255 : vector<32x1xf32>
    %257 = vector.broadcast %256 : vector<32x1xf32> to vector<32x256xf32>
    %258 = arith.mulf %253, %257 : vector<32x256xf32>
    %c0_83 = arith.constant 0 : index
    %c0_84 = arith.constant 0 : index
    %259 = vector.load %arg13[%c0_83, %c0_84] : memref<1x256xf32, #tpu.memory_space<vmem>>, vector<1x256xf32>
    %260 = vector.broadcast %259 : vector<1x256xf32> to vector<32x256xf32>
    %261 = arith.mulf %258, %260 : vector<32x256xf32>
    %c0_85 = arith.constant 0 : index
    %c0_86 = arith.constant 0 : index
    %262 = vector.load %arg14[%c0_85, %c0_86] : memref<1x256xf32, #tpu.memory_space<vmem>>, vector<1x256xf32>
    %263 = vector.broadcast %262 : vector<1x256xf32> to vector<32x256xf32>
    %264 = arith.addf %261, %263 : vector<32x256xf32>
    %c0_87 = arith.constant 0 : index
    %c0_88 = arith.constant 0 : index
    %265 = vector.load %arg15[%c0_87, %c0_88] : memref<256x1024xf32, #tpu.memory_space<vmem>>, vector<256x1024xf32>
    %cst_89 = arith.constant dense<0.000000e+00> : vector<32x1024xf32>
    %266 = tpu.matmul %264, %265, %cst_89 {dimension_numbers = #tpu.dot_dimension_numbers<[1], [0], [0], [1], [0, 0, 1, 1], [], []>} : vector<32x256xf32>, vector<256x1024xf32>, vector<32x1024xf32> -> vector<32x1024xf32>
    %c0_90 = arith.constant 0 : index
    %c0_91 = arith.constant 0 : index
    %267 = vector.load %arg16[%c0_90, %c0_91] : memref<1x1024xf32, #tpu.memory_space<vmem>>, vector<1x1024xf32>
    %268 = vector.broadcast %267 : vector<1x1024xf32> to vector<32x1024xf32>
    %269 = arith.addf %266, %268 : vector<32x1024xf32>
    %cst_92 = arith.constant 0.000000e+00 : f32
    %270 = vector.broadcast %cst_92 : f32 to vector<32x1024xf32>
    %271 = arith.maximumf %269, %270 : vector<32x1024xf32>
    %c0_93 = arith.constant 0 : index
    %c0_94 = arith.constant 0 : index
    %272 = vector.load %arg17[%c0_93, %c0_94] : memref<1024x256xf32, #tpu.memory_space<vmem>>, vector<1024x256xf32>
    %cst_95 = arith.constant dense<0.000000e+00> : vector<32x256xf32>
    %273 = tpu.matmul %271, %272, %cst_95 {dimension_numbers = #tpu.dot_dimension_numbers<[1], [0], [0], [1], [0, 0, 1, 1], [], []>} : vector<32x1024xf32>, vector<1024x256xf32>, vector<32x256xf32> -> vector<32x256xf32>
    %c0_96 = arith.constant 0 : index
    %c0_97 = arith.constant 0 : index
    %274 = vector.load %arg18[%c0_96, %c0_97] : memref<1x256xf32, #tpu.memory_space<vmem>>, vector<1x256xf32>
    %275 = vector.broadcast %274 : vector<1x256xf32> to vector<32x256xf32>
    %276 = arith.addf %273, %275 : vector<32x256xf32>
    %277 = arith.addf %264, %276 : vector<32x256xf32>
    %cst_98 = arith.constant dense<0.000000e+00> : vector<32xf32>
    %278 = vector.multi_reduction <add>, %277, %cst_98 [1] : vector<32x256xf32> to vector<32xf32>
    %279 = vector.shape_cast %278 : vector<32xf32> to vector<32x1xf32>
    %cst_99 = arith.constant 2.560000e+02 : f32
    %280 = vector.broadcast %cst_99 : f32 to vector<32x1xf32>
    %281 = arith.divf %279, %280 : vector<32x1xf32>
    %282 = vector.broadcast %281 : vector<32x1xf32> to vector<32x256xf32>
    %283 = arith.subf %277, %282 : vector<32x256xf32>
    %284 = arith.mulf %283, %283 : vector<32x256xf32>
    %cst_100 = arith.constant dense<0.000000e+00> : vector<32xf32>
    %285 = vector.multi_reduction <add>, %284, %cst_100 [1] : vector<32x256xf32> to vector<32xf32>
    %286 = vector.shape_cast %285 : vector<32xf32> to vector<32x1xf32>
    %cst_101 = arith.constant 2.560000e+02 : f32
    %287 = vector.broadcast %cst_101 : f32 to vector<32x1xf32>
    %288 = arith.divf %286, %287 : vector<32x1xf32>
    %289 = vector.broadcast %281 : vector<32x1xf32> to vector<32x256xf32>
    %290 = arith.subf %277, %289 : vector<32x256xf32>
    %cst_102 = arith.constant 9.99999974E-6 : f32
    %291 = vector.broadcast %cst_102 : f32 to vector<32x1xf32>
    %292 = arith.addf %288, %291 : vector<32x1xf32>
    %293 = math.rsqrt %292 : vector<32x1xf32>
    %294 = vector.broadcast %293 : vector<32x1xf32> to vector<32x256xf32>
    %295 = arith.mulf %290, %294 : vector<32x256xf32>
    %c0_103 = arith.constant 0 : index
    %c0_104 = arith.constant 0 : index
    %296 = vector.load %arg19[%c0_103, %c0_104] : memref<1x256xf32, #tpu.memory_space<vmem>>, vector<1x256xf32>
    %297 = vector.broadcast %296 : vector<1x256xf32> to vector<32x256xf32>
    %298 = arith.mulf %295, %297 : vector<32x256xf32>
    %c0_105 = arith.constant 0 : index
    %c0_106 = arith.constant 0 : index
    %299 = vector.load %arg20[%c0_105, %c0_106] : memref<1x256xf32, #tpu.memory_space<vmem>>, vector<1x256xf32>
    %300 = vector.broadcast %299 : vector<1x256xf32> to vector<32x256xf32>
    %301 = arith.addf %298, %300 : vector<32x256xf32>
    %302 = vector.shape_cast %301 : vector<32x256xf32> to vector<2x16x256xf32>
    %c0_107 = arith.constant 0 : index
    %c0_108 = arith.constant 0 : index
    %c0_109 = arith.constant 0 : index
    %303 = vector.load %arg21[%c0_107, %c0_108, %c0_109] : memref<2x16x256xf32, #tpu.memory_space<vmem>>, vector<2x16x256xf32>
    tpu.vector_store %arg21[%c0_107, %c0_108, %c0_109], %302 {strides = array<i32>} : memref<2x16x256xf32, #tpu.memory_space<vmem>>, vector<2x16x256xf32>,
    return
  }
  func.func @transform_0(%arg0: i32) -> (i32, i32, i32) {
    %c0_i32 = arith.constant 0 : i32
    %c0_i32_0 = arith.constant 0 : i32
    %c0_i32_1 = arith.constant 0 : i32
    return %arg0, %c0_i32, %c0_i32_0 : i32, i32, i32
  }
  func.func @transform_1(%arg0: i32) -> (i32, i32, i32) {
    %c0_i32 = arith.constant 0 : i32
    %c0_i32_0 = arith.constant 0 : i32
    %c0_i32_1 = arith.constant 0 : i32
    return %arg0, %c0_i32, %c0_i32_0 : i32, i32, i32
  }
  func.func @transform_2(%arg0: i32) -> (i32, i32) {
    %c0_i32 = arith.constant 0 : i32
    %c0_i32_0 = arith.constant 0 : i32
    %c0_i32_1 = arith.constant 0 : i32
    return %c0_i32, %c0_i32_0 : i32, i32
  }
  func.func @transform_3(%arg0: i32) -> (i32, i32) {
    %c0_i32 = arith.constant 0 : i32
    %c0_i32_0 = arith.constant 0 : i32
    %c0_i32_1 = arith.constant 0 : i32
    return %c0_i32, %c0_i32_0 : i32, i32
  }
  func.func @transform_4(%arg0: i32) -> (i32, i32) {
    %c0_i32 = arith.constant 0 : i32
    %c0_i32_0 = arith.constant 0 : i32
    %c0_i32_1 = arith.constant 0 : i32
    return %c0_i32, %c0_i32_0 : i32, i32
  }
  func.func @transform_5(%arg0: i32) -> (i32, i32) {
    %c0_i32 = arith.constant 0 : i32
    %c0_i32_0 = arith.constant 0 : i32
    %c0_i32_1 = arith.constant 0 : i32
    return %c0_i32, %c0_i32_0 : i32, i32
  }
  func.func @transform_6(%arg0: i32) -> (i32, i32) {
    %c0_i32 = arith.constant 0 : i32
    %c0_i32_0 = arith.constant 0 : i32
    %c0_i32_1 = arith.constant 0 : i32
    return %c0_i32, %c0_i32_0 : i32, i32
  }
  func.func @transform_7(%arg0: i32) -> (i32, i32) {
    %c0_i32 = arith.constant 0 : i32
    %c0_i32_0 = arith.constant 0 : i32
    %c0_i32_1 = arith.constant 0 : i32
    return %c0_i32, %c0_i32_0 : i32, i32
  }
  func.func @transform_8(%arg0: i32) -> (i32, i32) {
    %c0_i32 = arith.constant 0 : i32
    %c0_i32_0 = arith.constant 0 : i32
    %c0_i32_1 = arith.constant 0 : i32
    return %c0_i32, %c0_i32_0 : i32, i32
  }
  func.func @transform_9(%arg0: i32) -> (i32, i32) {
    %c0_i32 = arith.constant 0 : i32
    %c0_i32_0 = arith.constant 0 : i32
    %c0_i32_1 = arith.constant 0 : i32
    return %c0_i32, %c0_i32_0 : i32, i32
  }
  func.func @transform_10(%arg0: i32) -> (i32, i32) {
    %c0_i32 = arith.constant 0 : i32
    %c0_i32_0 = arith.constant 0 : i32
    %c0_i32_1 = arith.constant 0 : i32
    return %c0_i32, %c0_i32_0 : i32, i32
  }
  func.func @transform_11(%arg0: i32) -> (i32, i32) {
    %c0_i32 = arith.constant 0 : i32
    %c0_i32_0 = arith.constant 0 : i32
    %c0_i32_1 = arith.constant 0 : i32
    return %c0_i32, %c0_i32_0 : i32, i32
  }
  func.func @transform_12(%arg0: i32) -> (i32, i32) {
    %c0_i32 = arith.constant 0 : i32
    %c0_i32_0 = arith.constant 0 : i32
    %c0_i32_1 = arith.constant 0 : i32
    return %c0_i32, %c0_i32_0 : i32, i32
  }
  func.func @transform_13(%arg0: i32) -> (i32, i32) {
    %c0_i32 = arith.constant 0 : i32
    %c0_i32_0 = arith.constant 0 : i32
    %c0_i32_1 = arith.constant 0 : i32
    return %c0_i32, %c0_i32_0 : i32, i32
  }
  func.func @transform_14(%arg0: i32) -> (i32, i32) {
    %c0_i32 = arith.constant 0 : i32
    %c0_i32_0 = arith.constant 0 : i32
    %c0_i32_1 = arith.constant 0 : i32
    return %c0_i32, %c0_i32_0 : i32, i32
  }
  func.func @transform_15(%arg0: i32) -> (i32, i32) {
    %c0_i32 = arith.constant 0 : i32
    %c0_i32_0 = arith.constant 0 : i32
    %c0_i32_1 = arith.constant 0 : i32
    return %c0_i32, %c0_i32_0 : i32, i32
  }
  func.func @transform_16(%arg0: i32) -> (i32, i32) {
    %c0_i32 = arith.constant 0 : i32
    %c0_i32_0 = arith.constant 0 : i32
    %c0_i32_1 = arith.constant 0 : i32
    return %c0_i32, %c0_i32_0 : i32, i32
  }
  func.func @transform_17(%arg0: i32) -> (i32, i32) {
    %c0_i32 = arith.constant 0 : i32
    %c0_i32_0 = arith.constant 0 : i32
    %c0_i32_1 = arith.constant 0 : i32
    return %c0_i32, %c0_i32_0 : i32, i32
  }
  func.func @transform_18(%arg0: i32) -> (i32, i32) {
    %c0_i32 = arith.constant 0 : i32
    %c0_i32_0 = arith.constant 0 : i32
    %c0_i32_1 = arith.constant 0 : i32
    return %c0_i32, %c0_i32_0 : i32, i32
  }
  func.func @transform_19(%arg0: i32) -> (i32, i32) {
    %c0_i32 = arith.constant 0 : i32
    %c0_i32_0 = arith.constant 0 : i32
    %c0_i32_1 = arith.constant 0 : i32
    return %c0_i32, %c0_i32_0 : i32, i32
  }
  func.func @transform_20(%arg0: i32) -> (i32, i32, i32) {
    %c0_i32 = arith.constant 0 : i32
    %c0_i32_0 = arith.constant 0 : i32
    %c0_i32_1 = arith.constant 0 : i32
    return %arg0, %c0_i32, %c0_i32_0 : i32, i32, i32
  }
}

</mosaic_0001>

<llo_original>
// kernel: tpu_custom_call.1
$region0: #{tpu_custom_call.1}
  #allocation0 [shape = 'u32[]', space=smem, size = 0x4, offset = 0x4, fixed_abs, tag = 'smem constant byte address 0x4 - core index']
  #allocation1 [shape = 'u32[144,128]{1,0:T(1,128)}', space=vmem, size = 0x12000, scoped, tag = 'internal scratch']
  %s0 = inlined_call_operand.hbm [shape: f32[4,16,256], index: 0, kind: input, shape index: {}]
  %s1 = inlined_call_operand.hbm [shape: f32[4,16,512], index: 1, kind: input, shape index: {}]
  %s2 = inlined_call_operand.hbm [shape: f32[512,256], index: 2, kind: input, shape index: {}]
  %s3 = inlined_call_operand.vmem [shape: f32[1,256], index: 3, kind: input, shape index: {}]
  %s4 = inlined_call_operand.hbm [shape: f32[256,256], index: 4, kind: input, shape index: {}]
  %s5 = inlined_call_operand.vmem [shape: f32[1,256], index: 5, kind: input, shape index: {}]
  %s6 = inlined_call_operand.hbm [shape: f32[256,512], index: 6, kind: input, shape index: {}]
  %s7 = inlined_call_operand.vmem [shape: f32[1,512], index: 7, kind: input, shape index: {}]
  %s8 = inlined_call_operand.hbm [shape: f32[256,256], index: 8, kind: input, shape index: {}]
  %s9 = inlined_call_operand.vmem [shape: f32[1,256], index: 9, kind: input, shape index: {}]
  %s10 = inlined_call_operand.hbm [shape: f32[256,256], index: 10, kind: input, shape index: {}]
  %s11 = inlined_call_operand.vmem [shape: f32[1,256], index: 11, kind: input, shape index: {}]
  %s12 = inlined_call_operand.vmem [shape: f32[1,256], index: 12, kind: input, shape index: {}]
  %s13 = inlined_call_operand.vmem [shape: f32[1,256], index: 13, kind: input, shape index: {}]
  %s14 = inlined_call_operand.hbm [shape: f32[256,1024], index: 14, kind: input, shape index: {}]
  %s15 = inlined_call_operand.vmem [shape: f32[1,1024], index: 15, kind: input, shape index: {}]
  %s16 = inlined_call_operand.hbm [shape: f32[1024,256], index: 16, kind: input, shape index: {}]
  %s17 = inlined_call_operand.vmem [shape: f32[1,256], index: 17, kind: input, shape index: {}]
  %s18 = inlined_call_operand.vmem [shape: f32[1,256], index: 18, kind: input, shape index: {}]
  %s19 = inlined_call_operand.vmem [shape: f32[1,256], index: 19, kind: input, shape index: {}]
  %s20 = inlined_call_operand.hbm [shape: f32[4,16,256], index: 20, kind: output, shape index: {}]
  %s21 = sld [smem:[#allocation0]]
  $region149: #{tpu_custom_call.1} parent=0
    _
  %s23 = ssub.s32 1, %s21
  %s24 = scalar_select 0, %s23, %s21
  $region1: #{tpu_custom_call.1} parent=0
    #allocation2 [shape = 'u8[65536]{0}', space=vmem, size = 0x10000, scoped, tag = 'input window, operand 0']
    #allocation3 [shape = 's32[2]{0}', space=sflag, size = 0x8, scoped, tag = 'scoped memory for tpu_custom_call.1']
    #allocation4 [shape = 's32[2]{0}', space=sflag, size = 0x8, scoped, tag = 'scoped memory for tpu_custom_call.1']
    #allocation5 [shape = 'u8[131072]{0}', space=vmem, size = 0x20000, scoped, tag = 'input window, operand 1']
    #allocation6 [shape = 's32[2]{0}', space=sflag, size = 0x8, scoped, tag = 'scoped memory for tpu_custom_call.1']
    #allocation7 [shape = 'u8[524288]{0}', space=vmem, size = 0x80000, scoped, tag = 'input window, operand 2, single buffered']
    #allocation8 [shape = 'u8[262144]{0}', space=vmem, size = 0x40000, scoped, tag = 'input window, operand 4, single buffered']
    #allocation9 [shape = 's32[1]{0}', space=sflag, size = 0x4, scoped, tag = 'scoped memory for tpu_custom_call.1']
    #allocation10 [shape = 'u8[524288]{0}', space=vmem, size = 0x80000, scoped, tag = 'input window, operand 6, single buffered']
    #allocation11 [shape = 'u8[262144]{0}', space=vmem, size = 0x40000, scoped, tag = 'input window, operand 8, single buffered']
    #allocation12 [shape = 's32[1]{0}', space=sflag, size = 0x4, scoped, tag = 'scoped memory for tpu_custom_call.1']
    #allocation13 [shape = 'u8[262144]{0}', space=vmem, size = 0x40000, scoped, tag = 'input window, operand 10, single buffered']
    #allocation14 [shape = 'u8[1048576]{0}', space=vmem, size = 0x100000, scoped, tag = 'input window, operand 14, single buffered']
    #allocation15 [shape = 's32[1]{0}', space=sflag, size = 0x4, scoped, tag = 'scoped memory for tpu_custom_call.1']
    #allocation16 [shape = 'u8[1048576]{0}', space=vmem, size = 0x100000, scoped, tag = 'input window, operand 16, single buffered']
    #allocation17 [shape = 'u8[65536]{0}', space=vmem, size = 0x10000, scoped, tag = 'output window, operand 0']
    %25 = vsyncpa [#allocation3], 0
    %s26 = scalar_lea.sflag [#allocation3], 1
    %27 = vsyncpa %s26, 0
    %28 = vsyncpa [#allocation6], 0
    %s29 = scalar_lea.sflag [#allocation6], 1
    %30 = vsyncpa %s29, 0
    %31 = vsyncpa [#allocation9], 0
    %32 = vsyncpa [#allocation12], 0
    %33 = vsyncpa [#allocation15], 0
    %34 = vsyncpa [#allocation4], 0
    %s35 = scalar_lea.sflag [#allocation4], 1
    %36 = vsyncpa %s35, 0
    loop: start=0, step=1, limit=4
    $region2: #{tpu_custom_call.1} parent=1 // loop_pre_header
      _
    $region3: #{tpu_custom_call.1} parent=1 // loop_header
      %s38 = sphi 0, %s42
      %p39 = scmp.ge.s32.totalorder %s38, 4
      %s48 = sphi 0, %s50
      %s51 = sphi 0, %s48
      %s52 = sphi 0, %s51
      %s68 = sphi 0, %s52
      %s74 = sphi 0, %s76
      %s77 = sphi 0, %s74
      %s78 = sphi 0, %s77
      %s94 = sphi 0, %s78
      %s98 = sphi 0, %s98
      %s100 = sphi 0, %s98
      %s101 = sphi 0, %s100
      %s115 = sphi 0, %s101
      %s119 = sphi 0, %s119
      %s121 = sphi 0, %s119
      %s122 = sphi 0, %s121
      %s136 = sphi 0, %s122
      %s140 = sphi 0, %s140
      %s142 = sphi 0, %s140
      %s143 = sphi 0, %s142
      %s157 = sphi 0, %s143
      %s161 = sphi 0, %s161
      %s163 = sphi 0, %s161
      %s164 = sphi 0, %s163
      %s178 = sphi 0, %s164
      %s182 = sphi 0, %s182
      %s184 = sphi 0, %s182
      %s185 = sphi 0, %s184
      %s199 = sphi 0, %s185
      %s203 = sphi 0, %s203
      %s205 = sphi 0, %s203
      %s206 = sphi 0, %s205
      %s220 = sphi 0, %s206
      %s224 = sphi 0, %s224
      %s226 = sphi 0, %s224
      %s227 = sphi 0, %s226
      %s241 = sphi 0, %s227
      %s245 = sphi 0, %s245
      %s247 = sphi 0, %s245
      %s248 = sphi 0, %s247
      %s262 = sphi 0, %s248
      %s266 = sphi 0, %s266
      %s268 = sphi 0, %s266
      %s269 = sphi 0, %s268
      %s283 = sphi 0, %s269
      %s287 = sphi 0, %s287
      %s289 = sphi 0, %s287
      %s290 = sphi 0, %s289
      %s304 = sphi 0, %s290
      %s308 = sphi 0, %s308
      %s310 = sphi 0, %s308
      %s311 = sphi 0, %s310
      %s325 = sphi 0, %s311
      %s329 = sphi 0, %s329
      %s331 = sphi 0, %s329
      %s332 = sphi 0, %s331
      %s346 = sphi 0, %s332
      %s350 = sphi 0, %s350
      %s352 = sphi 0, %s350
      %s353 = sphi 0, %s352
      %s367 = sphi 0, %s353
      %s371 = sphi 0, %s371
      %s373 = sphi 0, %s371
      %s374 = sphi 0, %s373
      %s388 = sphi 0, %s374
      %s392 = sphi 0, %s392
      %s394 = sphi 0, %s392
      %s395 = sphi 0, %s394
      %s409 = sphi 0, %s395
      %s413 = sphi 0, %s413
      %s415 = sphi 0, %s413
      %s416 = sphi 0, %s415
      %s430 = sphi 0, %s416
      %s434 = sphi 0, %s434
      %s436 = sphi 0, %s434
      %s437 = sphi 0, %s436
      %s451 = sphi 0, %s437
      %s455 = sphi 0, %s455
      %s457 = sphi 0, %s455
      %s458 = sphi 0, %s457
      %s472 = sphi 0, %s458
      %s478 = sphi 0, %s480
      %s481 = sphi 0, %s478
      %s482 = sphi 0, %s481
      %s498 = sphi 0, %s482
    $region4: #{tpu_custom_call.1} parent=1 // loop_header_branch
      %41 = sbr.rel (%p39) target = $region8
    $region5: #{tpu_custom_call.1} parent=1 // loop_body
      %s43 = ssub.s32 %s38, 1
      %s44 = ssub.s32 %s38, 2
      %s45 = sadd.s32 %s38, 1
      %s46 = ssub.s32 %s38, %s45
      %p47 = scmp.eq.s32.totalorder %s46, 0
      %s49 = sadd.s32 %s48, 1
      %s50 = scalar_select %p47, %s48, %s49
      %p53 = pneg %p47
      %p54 = scmp.eq.s32.totalorder %s38, 1
      %p55 = por %p53, %p54
      %p56 = scmp.ne.s32.totalorder %s48, %s51
      %p57 = scmp.eq.s32.totalorder %s38, 0
      %p58 = por %p56, %p57
      %p59 = scmp.ne.s32.totalorder %s48, %s51
      %p60 = scmp.eq.s32.totalorder %s43, 1
      %p61 = por %p59, %p60
      %p62 = scmp.ne.s32.totalorder %s51, %s52
      %p63 = scmp.eq.s32.totalorder %s43, 0
      %p64 = por %p62, %p63
      %p65 = scmp.ne.s32.totalorder %s51, %s52
      %p66 = scmp.eq.s32.totalorder %s44, 1
      %p67 = por %p65, %p66
      %p69 = scmp.ne.s32.totalorder %s52, %s68
      %p70 = scmp.eq.s32.totalorder %s44, 0
      %p71 = por %p69, %p70
      %s72 = ssub.s32 %s38, %s45
      %p73 = scmp.eq.s32.totalorder %s72, 0
      %s75 = sadd.s32 %s74, 1
      %s76 = scalar_select %p73, %s74, %s75
      %p79 = pneg %p73
      %p80 = scmp.eq.s32.totalorder %s38, 1
      %p81 = por %p79, %p80
      %p82 = scmp.ne.s32.totalorder %s74, %s77
      %p83 = scmp.eq.s32.totalorder %s38, 0
      %p84 = por %p82, %p83
      %p85 = scmp.ne.s32.totalorder %s74, %s77
      %p86 = scmp.eq.s32.totalorder %s43, 1
      %p87 = por %p85, %p86
      %p88 = scmp.ne.s32.totalorder %s77, %s78
      %p89 = scmp.eq.s32.totalorder %s43, 0
      %p90 = por %p88, %p89
      %p91 = scmp.ne.s32.totalorder %s77, %s78
      %p92 = scmp.eq.s32.totalorder %s44, 1
      %p93 = por %p91, %p92
      %p95 = scmp.ne.s32.totalorder %s78, %s94
      %p96 = scmp.eq.s32.totalorder %s44, 0
      %p97 = por %p95, %p96
      %s99 = sadd.s32 %s98, 1
      %p102 = scmp.eq.s32.totalorder %s38, 1
      %p103 = scmp.ne.s32.totalorder %s98, %s100
      %p104 = scmp.eq.s32.totalorder %s38, 0
      %p105 = por %p103, %p104
      %p106 = scmp.ne.s32.totalorder %s98, %s100
      %p107 = scmp.eq.s32.totalorder %s43, 1
      %p108 = por %p106, %p107
      %p109 = scmp.ne.s32.totalorder %s100, %s101
      %p110 = scmp.eq.s32.totalorder %s43, 0
      %p111 = por %p109, %p110
      %p112 = scmp.ne.s32.totalorder %s100, %s101
      %p113 = scmp.eq.s32.totalorder %s44, 1
      %p114 = por %p112, %p113
      %p116 = scmp.ne.s32.totalorder %s101, %s115
      %p117 = scmp.eq.s32.totalorder %s44, 0
      %p118 = por %p116, %p117
      %s120 = sadd.s32 %s119, 1
      %p123 = scmp.eq.s32.totalorder %s38, 1
      %p124 = scmp.ne.s32.totalorder %s119, %s121
      %p125 = scmp.eq.s32.totalorder %s38, 0
      %p126 = por %p124, %p125
      %p127 = scmp.ne.s32.totalorder %s119, %s121
      %p128 = scmp.eq.s32.totalorder %s43, 1
      %p129 = por %p127, %p128
      %p130 = scmp.ne.s32.totalorder %s121, %s122
      %p131 = scmp.eq.s32.totalorder %s43, 0
      %p132 = por %p130, %p131
      %p133 = scmp.ne.s32.totalorder %s121, %s122
      %p134 = scmp.eq.s32.totalorder %s44, 1
      %p135 = por %p133, %p134
      %p137 = scmp.ne.s32.totalorder %s122, %s136
      %p138 = scmp.eq.s32.totalorder %s44, 0
      %p139 = por %p137, %p138
      %s141 = sadd.s32 %s140, 1
      %p144 = scmp.eq.s32.totalorder %s38, 1
      %p145 = scmp.ne.s32.totalorder %s140, %s142
      %p146 = scmp.eq.s32.totalorder %s38, 0
      %p147 = por %p145, %p146
      %p148 = scmp.ne.s32.totalorder %s140, %s142
      %p149 = scmp.eq.s32.totalorder %s43, 1
      %p150 = por %p148, %p149
      %p151 = scmp.ne.s32.totalorder %s142, %s143
      %p152 = scmp.eq.s32.totalorder %s43, 0
      %p153 = por %p151, %p152
      %p154 = scmp.ne.s32.totalorder %s142, %s143
      %p155 = scmp.eq.s32.totalorder %s44, 1
      %p156 = por %p154, %p155
      %p158 = scmp.ne.s32.totalorder %s143, %s157
      %p159 = scmp.eq.s32.totalorder %s44, 0
      %p160 = por %p158, %p159
      %s162 = sadd.s32 %s161, 1
      %p165 = scmp.eq.s32.totalorder %s38, 1
      %p166 = scmp.ne.s32.totalorder %s161, %s163
      %p167 = scmp.eq.s32.totalorder %s38, 0
      %p168 = por %p166, %p167
      %p169 = scmp.ne.s32.totalorder %s161, %s163
      %p170 = scmp.eq.s32.totalorder %s43, 1
      %p171 = por %p169, %p170
      %p172 = scmp.ne.s32.totalorder %s163, %s164
      %p173 = scmp.eq.s32.totalorder %s43, 0
      %p174 = por %p172, %p173
      %p175 = scmp.ne.s32.totalorder %s163, %s164
      %p176 = scmp.eq.s32.totalorder %s44, 1
      %p177 = por %p175, %p176
      %p179 = scmp.ne.s32.totalorder %s164, %s178
      %p180 = scmp.eq.s32.totalorder %s44, 0
      %p181 = por %p179, %p180
      %s183 = sadd.s32 %s182, 1
      %p186 = scmp.eq.s32.totalorder %s38, 1
      %p187 = scmp.ne.s32.totalorder %s182, %s184
      %p188 = scmp.eq.s32.totalorder %s38, 0
      %p189 = por %p187, %p188
      %p190 = scmp.ne.s32.totalorder %s182, %s184
      %p191 = scmp.eq.s32.totalorder %s43, 1
      %p192 = por %p190, %p191
      %p193 = scmp.ne.s32.totalorder %s184, %s185
      %p194 = scmp.eq.s32.totalorder %s43, 0
      %p195 = por %p193, %p194
      %p196 = scmp.ne.s32.totalorder %s184, %s185
      %p197 = scmp.eq.s32.totalorder %s44, 1
      %p198 = por %p196, %p197
      %p200 = scmp.ne.s32.totalorder %s185, %s199
      %p201 = scmp.eq.s32.totalorder %s44, 0
      %p202 = por %p200, %p201
      %s204 = sadd.s32 %s203, 1
      %p207 = scmp.eq.s32.totalorder %s38, 1
      %p208 = scmp.ne.s32.totalorder %s203, %s205
      %p209 = scmp.eq.s32.totalorder %s38, 0
      %p210 = por %p208, %p209
      %p211 = scmp.ne.s32.totalorder %s203, %s205
      %p212 = scmp.eq.s32.totalorder %s43, 1
      %p213 = por %p211, %p212
      %p214 = scmp.ne.s32.totalorder %s205, %s206
      %p215 = scmp.eq.s32.totalorder %s43, 0
      %p216 = por %p214, %p215
      %p217 = scmp.ne.s32.totalorder %s205, %s206
      %p218 = scmp.eq.s32.totalorder %s44, 1
      %p219 = por %p217, %p218
      %p221 = scmp.ne.s32.totalorder %s206, %s220
      %p222 = scmp.eq.s32.totalorder %s44, 0
      %p223 = por %p221, %p222
      %s225 = sadd.s32 %s224, 1
      %p228 = scmp.eq.s32.totalorder %s38, 1
      %p229 = scmp.ne.s32.totalorder %s224, %s226
      %p230 = scmp.eq.s32.totalorder %s38, 0
      %p231 = por %p229, %p230
      %p232 = scmp.ne.s32.totalorder %s224, %s226
      %p233 = scmp.eq.s32.totalorder %s43, 1
      %p234 = por %p232, %p233
      %p235 = scmp.ne.s32.totalorder %s226, %s227
      %p236 = scmp.eq.s32.totalorder %s43, 0
      %p237 = por %p235, %p236
      %p238 = scmp.ne.s32.totalorder %s226, %s227
      %p239 = scmp.eq.s32.totalorder %s44, 1
      %p240 = por %p238, %p239
      %p242 = scmp.ne.s32.totalorder %s227, %s241
      %p243 = scmp.eq.s32.totalorder %s44, 0
      %p244 = por %p242, %p243
      %s246 = sadd.s32 %s245, 1
      %p249 = scmp.eq.s32.totalorder %s38, 1
      %p250 = scmp.ne.s32.totalorder %s245, %s247
      %p251 = scmp.eq.s32.totalorder %s38, 0
      %p252 = por %p250, %p251
      %p253 = scmp.ne.s32.totalorder %s245, %s247
      %p254 = scmp.eq.s32.totalorder %s43, 1
      %p255 = por %p253, %p254
      %p256 = scmp.ne.s32.totalorder %s247, %s248
      %p257 = scmp.eq.s32.totalorder %s43, 0
      %p258 = por %p256, %p257
      %p259 = scmp.ne.s32.totalorder %s247, %s248
      %p260 = scmp.eq.s32.totalorder %s44, 1
      %p261 = por %p259, %p260
      %p263 = scmp.ne.s32.totalorder %s248, %s262
      %p264 = scmp.eq.s32.totalorder %s44, 0
      %p265 = por %p263, %p264
      %s267 = sadd.s32 %s266, 1
      %p270 = scmp.eq.s32.totalorder %s38, 1
      %p271 = scmp.ne.s32.totalorder %s266, %s268
      %p272 = scmp.eq.s32.totalorder %s38, 0
      %p273 = por %p271, %p272
      %p274 = scmp.ne.s32.totalorder %s266, %s268
      %p275 = scmp.eq.s32.totalorder %s43, 1
      %p276 = por %p274, %p275
      %p277 = scmp.ne.s32.totalorder %s268, %s269
      %p278 = scmp.eq.s32.totalorder %s43, 0
      %p279 = por %p277, %p278
      %p280 = scmp.ne.s32.totalorder %s268, %s269
      %p281 = scmp.eq.s32.totalorder %s44, 1
      %p282 = por %p280, %p281
      %p284 = scmp.ne.s32.totalorder %s269, %s283
      %p285 = scmp.eq.s32.totalorder %s44, 0
      %p286 = por %p284, %p285
      %s288 = sadd.s32 %s287, 1
      %p291 = scmp.eq.s32.totalorder %s38, 1
      %p292 = scmp.ne.s32.totalorder %s287, %s289
      %p293 = scmp.eq.s32.totalorder %s38, 0
      %p294 = por %p292, %p293
      %p295 = scmp.ne.s32.totalorder %s287, %s289
      %p296 = scmp.eq.s32.totalorder %s43, 1
      %p297 = por %p295, %p296
      %p298 = scmp.ne.s32.totalorder %s289, %s290
      %p299 = scmp.eq.s32.totalorder %s43, 0
      %p300 = por %p298, %p299
      %p301 = scmp.ne.s32.totalorder %s289, %s290
      %p302 = scmp.eq.s32.totalorder %s44, 1
      %p303 = por %p301, %p302
      %p305 = scmp.ne.s32.totalorder %s290, %s304
      %p306 = scmp.eq.s32.totalorder %s44, 0
      %p307 = por %p305, %p306
      %s309 = sadd.s32 %s308, 1
      %p312 = scmp.eq.s32.totalorder %s38, 1
      %p313 = scmp.ne.s32.totalorder %s308, %s310
      %p314 = scmp.eq.s32.totalorder %s38, 0
      %p315 = por %p313, %p314
      %p316 = scmp.ne.s32.totalorder %s308, %s310
      %p317 = scmp.eq.s32.totalorder %s43, 1
      %p318 = por %p316, %p317
      %p319 = scmp.ne.s32.totalorder %s310, %s311
      %p320 = scmp.eq.s32.totalorder %s43, 0
      %p321 = por %p319, %p320
      %p322 = scmp.ne.s32.totalorder %s310, %s311
      %p323 = scmp.eq.s32.totalorder %s44, 1
      %p324 = por %p322, %p323
      %p326 = scmp.ne.s32.totalorder %s311, %s325
      %p327 = scmp.eq.s32.totalorder %s44, 0
      %p328 = por %p326, %p327
      %s330 = sadd.s32 %s329, 1
      %p333 = scmp.eq.s32.totalorder %s38, 1
      %p334 = scmp.ne.s32.totalorder %s329, %s331
      %p335 = scmp.eq.s32.totalorder %s38, 0
      %p336 = por %p334, %p335
      %p337 = scmp.ne.s32.totalorder %s329, %s331
      %p338 = scmp.eq.s32.totalorder %s43, 1
      %p339 = por %p337, %p338
      %p340 = scmp.ne.s32.totalorder %s331, %s332
      %p341 = scmp.eq.s32.totalorder %s43, 0
      %p342 = por %p340, %p341
      %p343 = scmp.ne.s32.totalorder %s331, %s332
      %p344 = scmp.eq.s32.totalorder %s44, 1
      %p345 = por %p343, %p344
      %p347 = scmp.ne.s32.totalorder %s332, %s346
      %p348 = scmp.eq.s32.totalorder %s44, 0
      %p349 = por %p347, %p348
      %s351 = sadd.s32 %s350, 1
      %p354 = scmp.eq.s32.totalorder %s38, 1
      %p355 = scmp.ne.s32.totalorder %s350, %s352
      %p356 = scmp.eq.s32.totalorder %s38, 0
      %p357 = por %p355, %p356
      %p358 = scmp.ne.s32.totalorder %s350, %s352
      %p359 = scmp.eq.s32.totalorder %s43, 1
      %p360 = por %p358, %p359
      %p361 = scmp.ne.s32.totalorder %s352, %s353
      %p362 = scmp.eq.s32.totalorder %s43, 0
      %p363 = por %p361, %p362
      %p364 = scmp.ne.s32.totalorder %s352, %s353
      %p365 = scmp.eq.s32.totalorder %s44, 1
      %p366 = por %p364, %p365
      %p368 = scmp.ne.s32.totalorder %s353, %s367
      %p369 = scmp.eq.s32.totalorder %s44, 0
      %p370 = por %p368, %p369
      %s372 = sadd.s32 %s371, 1
      %p375 = scmp.eq.s32.totalorder %s38, 1
      %p376 = scmp.ne.s32.totalorder %s371, %s373
      %p377 = scmp.eq.s32.totalorder %s38, 0
      %p378 = por %p376, %p377
      %p379 = scmp.ne.s32.totalorder %s371, %s373
      %p380 = scmp.eq.s32.totalorder %s43, 1
      %p381 = por %p379, %p380
      %p382 = scmp.ne.s32.totalorder %s373, %s374
      %p383 = scmp.eq.s32.totalorder %s43, 0
      %p384 = por %p382, %p383
      %p385 = scmp.ne.s32.totalorder %s373, %s374
      %p386 = scmp.eq.s32.totalorder %s44, 1
      %p387 = por %p385, %p386
      %p389 = scmp.ne.s32.totalorder %s374, %s388
      %p390 = scmp.eq.s32.totalorder %s44, 0
      %p391 = por %p389, %p390
      %s393 = sadd.s32 %s392, 1
      %p396 = scmp.eq.s32.totalorder %s38, 1
      %p397 = scmp.ne.s32.totalorder %s392, %s394
      %p398 = scmp.eq.s32.totalorder %s38, 0
      %p399 = por %p397, %p398
      %p400 = scmp.ne.s32.totalorder %s392, %s394
      %p401 = scmp.eq.s32.totalorder %s43, 1
      %p402 = por %p400, %p401
      %p403 = scmp.ne.s32.totalorder %s394, %s395
      %p404 = scmp.eq.s32.totalorder %s43, 0
      %p405 = por %p403, %p404
      %p406 = scmp.ne.s32.totalorder %s394, %s395
      %p407 = scmp.eq.s32.totalorder %s44, 1
      %p408 = por %p406, %p407
      %p410 = scmp.ne.s32.totalorder %s395, %s409
      %p411 = scmp.eq.s32.totalorder %s44, 0
      %p412 = por %p410, %p411
      %s414 = sadd.s32 %s413, 1
      %p417 = scmp.eq.s32.totalorder %s38, 1
      %p418 = scmp.ne.s32.totalorder %s413, %s415
      %p419 = scmp.eq.s32.totalorder %s38, 0
      %p420 = por %p418, %p419
      %p421 = scmp.ne.s32.totalorder %s413, %s415
      %p422 = scmp.eq.s32.totalorder %s43, 1
      %p423 = por %p421, %p422
      %p424 = scmp.ne.s32.totalorder %s415, %s416
      %p425 = scmp.eq.s32.totalorder %s43, 0
      %p426 = por %p424, %p425
      %p427 = scmp.ne.s32.totalorder %s415, %s416
      %p428 = scmp.eq.s32.totalorder %s44, 1
      %p429 = por %p427, %p428
      %p431 = scmp.ne.s32.totalorder %s416, %s430
      %p432 = scmp.eq.s32.totalorder %s44, 0
      %p433 = por %p431, %p432
      %s435 = sadd.s32 %s434, 1
      %p438 = scmp.eq.s32.totalorder %s38, 1
      %p439 = scmp.ne.s32.totalorder %s434, %s436
      %p440 = scmp.eq.s32.totalorder %s38, 0
      %p441 = por %p439, %p440
      %p442 = scmp.ne.s32.totalorder %s434, %s436
      %p443 = scmp.eq.s32.totalorder %s43, 1
      %p444 = por %p442, %p443
      %p445 = scmp.ne.s32.totalorder %s436, %s437
      %p446 = scmp.eq.s32.totalorder %s43, 0
      %p447 = por %p445, %p446
      %p448 = scmp.ne.s32.totalorder %s436, %s437
      %p449 = scmp.eq.s32.totalorder %s44, 1
      %p450 = por %p448, %p449
      %p452 = scmp.ne.s32.totalorder %s437, %s451
      %p453 = scmp.eq.s32.totalorder %s44, 0
      %p454 = por %p452, %p453
      %s456 = sadd.s32 %s455, 1
      %p459 = scmp.eq.s32.totalorder %s38, 1
      %p460 = scmp.ne.s32.totalorder %s455, %s457
      %p461 = scmp.eq.s32.totalorder %s38, 0
      %p462 = por %p460, %p461
      %p463 = scmp.ne.s32.totalorder %s455, %s457
      %p464 = scmp.eq.s32.totalorder %s43, 1
      %p465 = por %p463, %p464
      %p466 = scmp.ne.s32.totalorder %s457, %s458
      %p467 = scmp.eq.s32.totalorder %s43, 0
      %p468 = por %p466, %p467
      %p469 = scmp.ne.s32.totalorder %s457, %s458
      %p470 = scmp.eq.s32.totalorder %s44, 1
      %p471 = por %p469, %p470
      %p473 = scmp.ne.s32.totalorder %s458, %s472
      %p474 = scmp.eq.s32.totalorder %s44, 0
      %p475 = por %p473, %p474
      %s476 = ssub.s32 %s38, %s45
      %p477 = scmp.eq.s32.totalorder %s476, 0
      %s479 = sadd.s32 %s478, 1
      %s480 = scalar_select %p477, %s478, %s479
      %p483 = pneg %p477
      %p484 = scmp.eq.s32.totalorder %s38, 1
      %p485 = por %p483, %p484
      %p486 = scmp.ne.s32.totalorder %s478, %s481
      %p487 = scmp.eq.s32.totalorder %s38, 0
      %p488 = por %p486, %p487
      %p489 = scmp.ne.s32.totalorder %s478, %s481
      %p490 = scmp.eq.s32.totalorder %s43, 1
      %p491 = por %p489, %p490
      %p492 = scmp.ne.s32.totalorder %s481, %s482
      %p493 = scmp.eq.s32.totalorder %s43, 0
      %p494 = por %p492, %p493
      %p495 = scmp.ne.s32.totalorder %s481, %s482
      %p496 = scmp.eq.s32.totalorder %s44, 1
      %p497 = por %p495, %p496
      %p499 = scmp.ne.s32.totalorder %s482, %s498
      %p500 = scmp.eq.s32.totalorder %s44, 0
      %p501 = por %p499, %p500
      %p502 = scmp.le.s32.totalorder 1, %s38
      %p503 = scmp.lt.s32.totalorder %s38, 3
      %p504 = pnand %p502, %p503
      %p505 = pneg %p504
      // Predicated region
      $region9: #{tpu_custom_call.1} parent=5 // pred_check
        _
      $region10: #{tpu_custom_call.1} parent=5 // pred_check_branch
        %507 = sbr.rel (%p504) target = $region12
      $region11: #{tpu_custom_call.1} parent=5 // pred_region
        %s508 = ssub.s32 %s38, 1
        // Predicated region
        $region13: #{tpu_custom_call.1} parent=11 // pred_check
          %p509 = pneg %p111
        $region14: #{tpu_custom_call.1} parent=11 // pred_check_branch
          %511 = sbr.rel (%p509) target = $region16
        $region15: #{tpu_custom_call.1} parent=11 // pred_region
          %s513 = ssub.s32 16384, 16384
          %514 = vsyncadd [#allocation6], %s513
          %s515 = sshll.u32 [#allocation7], 4
          %s516 = int_to_ptr.vmem [resolvable:$true] %s515
          %521 = dma.hbm_to_vmem [thread:$0]  %s2, 16384, %s516, [#allocation6], 256, 256, 16
        $region16: #{tpu_custom_call.1} parent=11 // pred_fallthru
          _
        // Predicated region
        $region17: #{tpu_custom_call.1} parent=11 // pred_check
          %p522 = pneg %p132
        $region18: #{tpu_custom_call.1} parent=11 // pred_check_branch
          %524 = sbr.rel (%p522) target = $region20
        $region19: #{tpu_custom_call.1} parent=11 // pred_region
          _
        $region20: #{tpu_custom_call.1} parent=11 // pred_fallthru
          _
        // Predicated region
        $region21: #{tpu_custom_call.1} parent=11 // pred_check
          %p525 = pneg %p153
        $region22: #{tpu_custom_call.1} parent=11 // pred_check_branch
          %527 = sbr.rel (%p525) target = $region24
        $region23: #{tpu_custom_call.1} parent=11 // pred_region
          %s529 = ssub.s32 8192, 8192
          %530 = vsyncadd [#allocation9], %s529
          %s531 = sshll.u32 [#allocation8], 4
          %s532 = int_to_ptr.vmem [resolvable:$true] %s531
          %537 = dma.hbm_to_vmem [thread:$0]  %s4, 8192, %s532, [#allocation9], 256, 256, 16
        $region24: #{tpu_custom_call.1} parent=11 // pred_fallthru
          _
        // Predicated region
        $region25: #{tpu_custom_call.1} parent=11 // pred_check
          %p538 = pneg %p174
        $region26: #{tpu_custom_call.1} parent=11 // pred_check_branch
          %540 = sbr.rel (%p538) target = $region28
        $region27: #{tpu_custom_call.1} parent=11 // pred_region
          _
        $region28: #{tpu_custom_call.1} parent=11 // pred_fallthru
          _
        // Predicated region
        $region29: #{tpu_custom_call.1} parent=11 // pred_check
          %p541 = pneg %p195
        $region30: #{tpu_custom_call.1} parent=11 // pred_check_branch
          %543 = sbr.rel (%p541) target = $region32
        $region31: #{tpu_custom_call.1} parent=11 // pred_region
          %s545 = ssub.s32 16384, 16384
          %546 = vsyncadd [#allocation9], %s545
          %s547 = sshll.u32 [#allocation10], 4
          %s548 = int_to_ptr.vmem [resolvable:$true] %s547
          %553 = dma.hbm_to_vmem [thread:$0]  %s6, 16384, %s548, [#allocation9], 512, 512, 32
        $region32: #{tpu_custom_call.1} parent=11 // pred_fallthru
          _
        // Predicated region
        $region33: #{tpu_custom_call.1} parent=11 // pred_check
          %p554 = pneg %p216
        $region34: #{tpu_custom_call.1} parent=11 // pred_check_branch
          %556 = sbr.rel (%p554) target = $region36
        $region35: #{tpu_custom_call.1} parent=11 // pred_region
          _
        $region36: #{tpu_custom_call.1} parent=11 // pred_fallthru
          _
        // Predicated region
        $region37: #{tpu_custom_call.1} parent=11 // pred_check
          %p557 = pneg %p237
        $region38: #{tpu_custom_call.1} parent=11 // pred_check_branch
          %559 = sbr.rel (%p557) target = $region40
        $region39: #{tpu_custom_call.1} parent=11 // pred_region
          %s561 = ssub.s32 8192, 8192
          %562 = vsyncadd [#allocation12], %s561
          %s563 = sshll.u32 [#allocation11], 4
          %s564 = int_to_ptr.vmem [resolvable:$true] %s563
          %569 = dma.hbm_to_vmem [thread:$0]  %s8, 8192, %s564, [#allocation12], 256, 256, 16
        $region40: #{tpu_custom_call.1} parent=11 // pred_fallthru
          _
        // Predicated region
        $region41: #{tpu_custom_call.1} parent=11 // pred_check
          %p570 = pneg %p258
        $region42: #{tpu_custom_call.1} parent=11 // pred_check_branch
          %572 = sbr.rel (%p570) target = $region44
        $region43: #{tpu_custom_call.1} parent=11 // pred_region
          _
        $region44: #{tpu_custom_call.1} parent=11 // pred_fallthru
          _
        // Predicated region
        $region45: #{tpu_custom_call.1} parent=11 // pred_check
          %p573 = pneg %p279
        $region46: #{tpu_custom_call.1} parent=11 // pred_check_branch
          %575 = sbr.rel (%p573) target = $region48
        $region47: #{tpu_custom_call.1} parent=11 // pred_region
          %s577 = ssub.s32 8192, 8192
          %578 = vsyncadd [#allocation12], %s577
          %s579 = sshll.u32 [#allocation13], 4
          %s580 = int_to_ptr.vmem [resolvable:$true] %s579
          %585 = dma.hbm_to_vmem [thread:$0]  %s10, 8192, %s580, [#allocation12], 256, 256, 16
        $region48: #{tpu_custom_call.1} parent=11 // pred_fallthru
          _
        // Predicated region
        $region49: #{tpu_custom_call.1} parent=11 // pred_check
          %p586 = pneg %p300
        $region50: #{tpu_custom_call.1} parent=11 // pred_check_branch
          %588 = sbr.rel (%p586) target = $region52
        $region51: #{tpu_custom_call.1} parent=11 // pred_region
          _
        $region52: #{tpu_custom_call.1} parent=11 // pred_fallthru
          _
        // Predicated region
        $region53: #{tpu_custom_call.1} parent=11 // pred_check
          %p589 = pneg %p321
        $region54: #{tpu_custom_call.1} parent=11 // pred_check_branch
          %591 = sbr.rel (%p589) target = $region56
        $region55: #{tpu_custom_call.1} parent=11 // pred_region
          _
        $region56: #{tpu_custom_call.1} parent=11 // pred_fallthru
          _
        // Predicated region
        $region57: #{tpu_custom_call.1} parent=11 // pred_check
          %p592 = pneg %p342
        $region58: #{tpu_custom_call.1} parent=11 // pred_check_branch
          %594 = sbr.rel (%p592) target = $region60
        $region59: #{tpu_custom_call.1} parent=11 // pred_region
          _
        $region60: #{tpu_custom_call.1} parent=11 // pred_fallthru
          _
        // Predicated region
        $region61: #{tpu_custom_call.1} parent=11 // pred_check
          %p595 = pneg %p363
        $region62: #{tpu_custom_call.1} parent=11 // pred_check_branch
          %597 = sbr.rel (%p595) target = $region64
        $region63: #{tpu_custom_call.1} parent=11 // pred_region
          %s599 = ssub.s32 32768, 32768
          %600 = vsyncadd [#allocation15], %s599
          %s601 = sshll.u32 [#allocation14], 4
          %s602 = int_to_ptr.vmem [resolvable:$true] %s601
          %607 = dma.hbm_to_vmem [thread:$0]  %s14, 32768, %s602, [#allocation15], 1024, 1024, 64
        $region64: #{tpu_custom_call.1} parent=11 // pred_fallthru
          _
        // Predicated region
        $region65: #{tpu_custom_call.1} parent=11 // pred_check
          %p608 = pneg %p384
        $region66: #{tpu_custom_call.1} parent=11 // pred_check_branch
          %610 = sbr.rel (%p608) target = $region68
        $region67: #{tpu_custom_call.1} parent=11 // pred_region
          _
        $region68: #{tpu_custom_call.1} parent=11 // pred_fallthru
          _
        // Predicated region
        $region69: #{tpu_custom_call.1} parent=11 // pred_check
          %p611 = pneg %p405
        $region70: #{tpu_custom_call.1} parent=11 // pred_check_branch
          %613 = sbr.rel (%p611) target = $region72
        $region71: #{tpu_custom_call.1} parent=11 // pred_region
          %s615 = ssub.s32 32768, 32768
          %616 = vsyncadd [#allocation15], %s615
          %s617 = sshll.u32 [#allocation16], 4
          %s618 = int_to_ptr.vmem [resolvable:$true] %s617
          %623 = dma.hbm_to_vmem [thread:$0]  %s16, 32768, %s618, [#allocation15], 256, 256, 16
        $region72: #{tpu_custom_call.1} parent=11 // pred_fallthru
          _
        // Predicated region
        $region73: #{tpu_custom_call.1} parent=11 // pred_check
          %p624 = pneg %p426
        $region74: #{tpu_custom_call.1} parent=11 // pred_check_branch
          %626 = sbr.rel (%p624) target = $region76
        $region75: #{tpu_custom_call.1} parent=11 // pred_region
          _
        $region76: #{tpu_custom_call.1} parent=11 // pred_fallthru
          _
        // Predicated region
        $region77: #{tpu_custom_call.1} parent=11 // pred_check
          %p627 = pneg %p447
        $region78: #{tpu_custom_call.1} parent=11 // pred_check_branch
          %629 = sbr.rel (%p627) target = $region80
        $region79: #{tpu_custom_call.1} parent=11 // pred_region
          _
        $region80: #{tpu_custom_call.1} parent=11 // pred_fallthru
          _
        // Predicated region
        $region81: #{tpu_custom_call.1} parent=11 // pred_check
          %p630 = pneg %p468
        $region82: #{tpu_custom_call.1} parent=11 // pred_check_branch
          %632 = sbr.rel (%p630) target = $region84
        $region83: #{tpu_custom_call.1} parent=11 // pred_region
          _
        $region84: #{tpu_custom_call.1} parent=11 // pred_fallthru
          _
      $region12: #{tpu_custom_call.1} parent=5 // pred_fallthru
        _
      %p633 = scmp.lt.s32.totalorder %s38, 2
      // Predicated region
      $region85: #{tpu_custom_call.1} parent=5 // pred_check
        %p634 = pneg %p633
      $region86: #{tpu_custom_call.1} parent=5 // pred_check_branch
        %636 = sbr.rel (%p634) target = $region88
      $region87: #{tpu_custom_call.1} parent=5 // pred_region
        // Predicated region
        $region89: #{tpu_custom_call.1} parent=87 // pred_check
          %p637 = pneg %p58
        $region90: #{tpu_custom_call.1} parent=87 // pred_check_branch
          %639 = sbr.rel (%p637) target = $region92
        $region91: #{tpu_custom_call.1} parent=87 // pred_region
          %s640 = sand.u32 %s48, 1
          %s641 = scalar_lea.sflag [#allocation3], %s640
          %s642 = sand.u32 %s48, 1
          %s643 = smul.addr %s642, 64
          %s644 = scalar_lea.vmem [#allocation2], %s643
          %s645 = smul.u32 2, %s38
          %s647 = ssub.s32 1024, 1024
          %648 = vsyncadd %s641, %s647
          %s649 = smul.addr %s645, 4
          %s650 = smul.addr %s649, 128
          %s651 = scalar_lea.hbm %s0, %s650
          %s652 = sshll.u32 %s644, 4
          %s653 = int_to_ptr.vmem [resolvable:$true] %s652
          %658 = dma.hbm_to_vmem [thread:$0]  %s651, 1024, %s653, %s641, 256, 256, 16
        $region92: #{tpu_custom_call.1} parent=87 // pred_fallthru
          _
        // Predicated region
        $region93: #{tpu_custom_call.1} parent=87 // pred_check
          %p659 = pneg %p84
        $region94: #{tpu_custom_call.1} parent=87 // pred_check_branch
          %661 = sbr.rel (%p659) target = $region96
        $region95: #{tpu_custom_call.1} parent=87 // pred_region
          %s662 = sand.u32 %s38, 1
          %s663 = scalar_lea.sflag [#allocation6], %s662
          %s664 = sand.u32 %s74, 1
          %s665 = smul.addr %s664, 128
          %s666 = scalar_lea.vmem [#allocation5], %s665
          %s667 = smul.u32 2, %s38
          %s669 = ssub.s32 2048, 2048
          %670 = vsyncadd %s663, %s669
          %s671 = smul.addr %s667, 8
          %s672 = smul.addr %s671, 128
          %s673 = scalar_lea.hbm %s1, %s672
          %s674 = sshll.u32 %s666, 4
          %s675 = int_to_ptr.vmem [resolvable:$true] %s674
          %680 = dma.hbm_to_vmem [thread:$0]  %s673, 2048, %s675, %s663, 512, 512, 32
        $region96: #{tpu_custom_call.1} parent=87 // pred_fallthru
          _
      $region88: #{tpu_custom_call.1} parent=5 // pred_fallthru
        _
      %p681 = scmp.le.s32.totalorder 1, %s38
      %p682 = scmp.lt.s32.totalorder %s38, 3
      %p683 = pnand %p681, %p682
      %p684 = pneg %p683
      // Predicated region
      $region97: #{tpu_custom_call.1} parent=5 // pred_check
        _
      $region98: #{tpu_custom_call.1} parent=5 // pred_check_branch
        %686 = sbr.rel (%p683) target = $region100
      $region99: #{tpu_custom_call.1} parent=5 // pred_region
        %s687 = ssub.s32 %s38, 1
        %s688 = sand.u32 %s51, 1
        %s689 = scalar_lea.sflag [#allocation3], %s688
        %s690 = sand.u32 %s51, 1
        %s691 = smul.addr %s690, 64
        %s692 = scalar_lea.vmem [#allocation2], %s691
        // Predicated region
        $region101: #{tpu_custom_call.1} parent=99 // pred_check
          %p693 = pneg %p64
        $region102: #{tpu_custom_call.1} parent=99 // pred_check_branch
          %695 = sbr.rel (%p693) target = $region104
        $region103: #{tpu_custom_call.1} parent=99 // pred_region
          %696 = dma.done %s689, 1024
        $region104: #{tpu_custom_call.1} parent=99 // pred_fallthru
          _
        %s697 = sand.u32 %s43, 1
        %s698 = scalar_lea.sflag [#allocation6], %s697
        %s699 = sand.u32 %s77, 1
        %s700 = smul.addr %s699, 128
        %s701 = scalar_lea.vmem [#allocation5], %s700
        // Predicated region
        $region105: #{tpu_custom_call.1} parent=99 // pred_check
          %p702 = pneg %p90
        $region106: #{tpu_custom_call.1} parent=99 // pred_check_branch
          %704 = sbr.rel (%p702) target = $region108
        $region107: #{tpu_custom_call.1} parent=99 // pred_region
          %705 = dma.done %s698, 2048
        $region108: #{tpu_custom_call.1} parent=99 // pred_fallthru
          _
        // Predicated region
        $region109: #{tpu_custom_call.1} parent=99 // pred_check
          %p706 = pneg %p111
        $region110: #{tpu_custom_call.1} parent=99 // pred_check_branch
          %708 = sbr.rel (%p706) target = $region112
        $region111: #{tpu_custom_call.1} parent=99 // pred_region
          %709 = dma.done [#allocation6], 16384
        $region112: #{tpu_custom_call.1} parent=99 // pred_fallthru
          _
        // Predicated region
        $region113: #{tpu_custom_call.1} parent=99 // pred_check
          %p710 = pneg %p153
        $region114: #{tpu_custom_call.1} parent=99 // pred_check_branch
          %712 = sbr.rel (%p710) target = $region116
        $region115: #{tpu_custom_call.1} parent=99 // pred_region
          %713 = dma.done [#allocation9], 8192
        $region116: #{tpu_custom_call.1} parent=99 // pred_fallthru
          _
        // Predicated region
        $region117: #{tpu_custom_call.1} parent=99 // pred_check
          %p714 = pneg %p195
        $region118: #{tpu_custom_call.1} parent=99 // pred_check_branch
          %716 = sbr.rel (%p714) target = $region120
        $region119: #{tpu_custom_call.1} parent=99 // pred_region
          %717 = dma.done [#allocation9], 16384
        $region120: #{tpu_custom_call.1} parent=99 // pred_fallthru
          _
        // Predicated region
        $region121: #{tpu_custom_call.1} parent=99 // pred_check
          %p718 = pneg %p237
        $region122: #{tpu_custom_call.1} parent=99 // pred_check_branch
          %720 = sbr.rel (%p718) target = $region124
        $region123: #{tpu_custom_call.1} parent=99 // pred_region
          %721 = dma.done [#allocation12], 8192
        $region124: #{tpu_custom_call.1} parent=99 // pred_fallthru
          _
        // Predicated region
        $region125: #{tpu_custom_call.1} parent=99 // pred_check
          %p722 = pneg %p279
        $region126: #{tpu_custom_call.1} parent=99 // pred_check_branch
          %724 = sbr.rel (%p722) target = $region128
        $region127: #{tpu_custom_call.1} parent=99 // pred_region
          %725 = dma.done [#allocation12], 8192
        $region128: #{tpu_custom_call.1} parent=99 // pred_fallthru
          _
        // Predicated region
        $region129: #{tpu_custom_call.1} parent=99 // pred_check
          %p726 = pneg %p363
        $region130: #{tpu_custom_call.1} parent=99 // pred_check_branch
          %728 = sbr.rel (%p726) target = $region132
        $region131: #{tpu_custom_call.1} parent=99 // pred_region
          %729 = dma.done [#allocation15], 32768
        $region132: #{tpu_custom_call.1} parent=99 // pred_fallthru
          _
        // Predicated region
        $region133: #{tpu_custom_call.1} parent=99 // pred_check
          %p730 = pneg %p405
        $region134: #{tpu_custom_call.1} parent=99 // pred_check_branch
          %732 = sbr.rel (%p730) target = $region136
        $region135: #{tpu_custom_call.1} parent=99 // pred_region
          %733 = dma.done [#allocation15], 32768
        $region136: #{tpu_custom_call.1} parent=99 // pred_fallthru
          _
        %s734 = sand.u32 %s51, 1
        %s735 = scalar_lea.sflag [#allocation3], %s734
        %s736 = sand.u32 %s51, 1
        %s737 = smul.addr %s736, 64
        %s738 = scalar_lea.vmem [#allocation2], %s737
        %p739 = pneg %p64
        %p740 = pneg %p61
        %s741 = sand.u32 %s43, 1
        %s742 = scalar_lea.sflag [#allocation6], %s741
        %s743 = sand.u32 %s77, 1
        %s744 = smul.addr %s743, 128
        %s745 = scalar_lea.vmem [#allocation5], %s744
        %p746 = pneg %p90
        %p747 = pneg %p87
        %p748 = pneg %p111
        %p749 = pneg %p108
        %p750 = pneg %p132
        %p751 = pneg %p129
        %p752 = pneg %p153
        %p753 = pneg %p150
        %p754 = pneg %p174
        %p755 = pneg %p171
        %p756 = pneg %p195
        %p757 = pneg %p192
        %p758 = pneg %p216
        %p759 = pneg %p213
        %p760 = pneg %p237
        %p761 = pneg %p234
        %p762 = pneg %p258
        %p763 = pneg %p255
        %p764 = pneg %p279
        %p765 = pneg %p276
        %p766 = pneg %p300
        %p767 = pneg %p297
        %p768 = pneg %p321
        %p769 = pneg %p318
        %p770 = pneg %p342
        %p771 = pneg %p339
        %p772 = pneg %p363
        %p773 = pneg %p360
        %p774 = pneg %p384
        %p775 = pneg %p381
        %p776 = pneg %p405
        %p777 = pneg %p402
        %p778 = pneg %p426
        %p779 = pneg %p423
        %p780 = pneg %p447
        %p781 = pneg %p444
        %p782 = pneg %p468
        %p783 = pneg %p465
        %p784 = pneg %p494
        %p785 = pneg %p491
        %s786 = sand.u32 %s481, 1
        %s787 = scalar_lea.sflag [#allocation4], %s786
        %s788 = sand.u32 %s481, 1
        %s789 = smul.addr %s788, 64
        %s790 = scalar_lea.vmem [#allocation17], %s789
        %s791 = smul.u32 2, %s43
        %s792 = smul.u32 2, %s43
        %s793 = smul.u32 2, %s43
        %v794 = vld [vmem:[%s692] sm:$0xff]
        %v795 = vld [vmem:[%s692 + $0x8] sm:$0xff]
        %v796 = vld [vmem:[%s692 + $0x10] sm:$0xff]
        %v797 = vld [vmem:[%s692 + $0x18] sm:$0xff]
        %v798 = vld [vmem:[%s692 + $0x20] sm:$0xff]
        %v799 = vld [vmem:[%s692 + $0x28] sm:$0xff]
        %v800 = vld [vmem:[%s692 + $0x30] sm:$0xff]
        %v801 = vld [vmem:[%s692 + $0x38] sm:$0xff]
        %v802 = vld [vmem:[%s701] sm:$0xff]
        %v803 = vld [vmem:[%s701 + $0x8] sm:$0xff]
        %v804 = vld [vmem:[%s701 + $0x10] sm:$0xff]
        %v805 = vld [vmem:[%s701 + $0x18] sm:$0xff]
        %v806 = vld [vmem:[%s701 + $0x20] sm:$0xff]
        %v807 = vld [vmem:[%s701 + $0x28] sm:$0xff]
        %v808 = vld [vmem:[%s701 + $0x30] sm:$0xff]
        %v809 = vld [vmem:[%s701 + $0x38] sm:$0xff]
        %v810 = vld [vmem:[%s701 + $0x40] sm:$0xff]
        %v811 = vld [vmem:[%s701 + $0x48] sm:$0xff]
        %v812 = vld [vmem:[%s701 + $0x50] sm:$0xff]
        %v813 = vld [vmem:[%s701 + $0x58] sm:$0xff]
        %v814 = vld [vmem:[%s701 + $0x60] sm:$0xff]
        %v815 = vld [vmem:[%s701 + $0x68] sm:$0xff]
        %v816 = vld [vmem:[%s701 + $0x70] sm:$0xff]
        %v817 = vld [vmem:[%s701 + $0x78] sm:$0xff]
        %v818 = vld [vmem:[#allocation7] sm:$0xff]
        %v819 = vld [vmem:[#allocation7 + $0x8] sm:$0xff]
        %v820 = vld [vmem:[#allocation7 + $0x10] sm:$0xff]
        %v821 = vld [vmem:[#allocation7 + $0x18] sm:$0xff]
        %v822 = vld [vmem:[#allocation7 + $0x20] sm:$0xff]
        %v823 = vld [vmem:[#allocation7 + $0x28] sm:$0xff]
        %v824 = vld [vmem:[#allocation7 + $0x30] sm:$0xff]
        %v825 = vld [vmem:[#allocation7 + $0x38] sm:$0xff]
        %v826 = vld [vmem:[#allocation7 + $0x40] sm:$0xff]
        %v827 = vld [vmem:[#allocation7 + $0x48] sm:$0xff]
        %v828 = vld [vmem:[#allocation7 + $0x50] sm:$0xff]
        %v829 = vld [vmem:[#allocation7 + $0x58] sm:$0xff]
        %v830 = vld [vmem:[#allocation7 + $0x60] sm:$0xff]
        %v831 = vld [vmem:[#allocation7 + $0x68] sm:$0xff]
        %v832 = vld [vmem:[#allocation7 + $0x70] sm:$0xff]
        %v833 = vld [vmem:[#allocation7 + $0x78] sm:$0xff]
        %v834 = vld [vmem:[#allocation7 + $0x80] sm:$0xff]
        %v835 = vld [vmem:[#allocation7 + $0x88] sm:$0xff]
        %v836 = vld [vmem:[#allocation7 + $0x90] sm:$0xff]
        %v837 = vld [vmem:[#allocation7 + $0x98] sm:$0xff]
        %v838 = vld [vmem:[#allocation7 + $0xa0] sm:$0xff]
        %v839 = vld [vmem:[#allocation7 + $0xa8] sm:$0xff]
        %v840 = vld [vmem:[#allocation7 + $0xb0] sm:$0xff]
        %v841 = vld [vmem:[#allocation7 + $0xb8] sm:$0xff]
        %v842 = vld [vmem:[#allocation7 + $0xc0] sm:$0xff]
        %v843 = vld [vmem:[#allocation7 + $0xc8] sm:$0xff]
        %v844 = vld [vmem:[#allocation7 + $0xd0] sm:$0xff]
        %v845 = vld [vmem:[#allocation7 + $0xd8] sm:$0xff]
        %v846 = vld [vmem:[#allocation7 + $0xe0] sm:$0xff]
        %v847 = vld [vmem:[#allocation7 + $0xe8] sm:$0xff]
        %v848 = vld [vmem:[#allocation7 + $0xf0] sm:$0xff]
        %v849 = vld [vmem:[#allocation7 + $0xf8] sm:$0xff]
        %v850 = vld [vmem:[#allocation7 + $0x100] sm:$0xff]
        %v851 = vld [vmem:[#allocation7 + $0x108] sm:$0xff]
        %v852 = vld [vmem:[#allocation7 + $0x110] sm:$0xff]
        %v853 = vld [vmem:[#allocation7 + $0x118] sm:$0xff]
        %v854 = vld [vmem:[#allocation7 + $0x120] sm:$0xff]
        %v855 = vld [vmem:[#allocation7 + $0x128] sm:$0xff]
        %v856 = vld [vmem:[#allocation7 + $0x130] sm:$0xff]
        %v857 = vld [vmem:[#allocation7 + $0x138] sm:$0xff]
        %v858 = vld [vmem:[#allocation7 + $0x140] sm:$0xff]
        %v859 = vld [vmem:[#allocation7 + $0x148] sm:$0xff]
        %v860 = vld [vmem:[#allocation7 + $0x150] sm:$0xff]
        %v861 = vld [vmem:[#allocation7 + $0x158] sm:$0xff]
        %v862 = vld [vmem:[#allocation7 + $0x160] sm:$0xff]
        %v863 = vld [vmem:[#allocation7 + $0x168] sm:$0xff]
        %v864 = vld [vmem:[#allocation7 + $0x170] sm:$0xff]
        %v865 = vld [vmem:[#allocation7 + $0x178] sm:$0xff]
        %v866 = vld [vmem:[#allocation7 + $0x180] sm:$0xff]
        %v867 = vld [vmem:[#allocation7 + $0x188] sm:$0xff]
        %v868 = vld [vmem:[#allocation7 + $0x190] sm:$0xff]
        %v869 = vld [vmem:[#allocation7 + $0x198] sm:$0xff]
        %v870 = vld [vmem:[#allocation7 + $0x1a0] sm:$0xff]
        %v871 = vld [vmem:[#allocation7 + $0x1a8] sm:$0xff]
        %v872 = vld [vmem:[#allocation7 + $0x1b0] sm:$0xff]
        %v873 = vld [vmem:[#allocation7 + $0x1b8] sm:$0xff]
        %v874 = vld [vmem:[#allocation7 + $0x1c0] sm:$0xff]
        %v875 = vld [vmem:[#allocation7 + $0x1c8] sm:$0xff]
        %v876 = vld [vmem:[#allocation7 + $0x1d0] sm:$0xff]
        %v877 = vld [vmem:[#allocation7 + $0x1d8] sm:$0xff]
        %v878 = vld [vmem:[#allocation7 + $0x1e0] sm:$0xff]
        %v879 = vld [vmem:[#allocation7 + $0x1e8] sm:$0xff]
        %v880 = vld [vmem:[#allocation7 + $0x1f0] sm:$0xff]
        %v881 = vld [vmem:[#allocation7 + $0x1f8] sm:$0xff]
        %v882 = vld [vmem:[#allocation7 + $0x200] sm:$0xff]
        %v883 = vld [vmem:[#allocation7 + $0x208] sm:$0xff]
        %v884 = vld [vmem:[#allocation7 + $0x210] sm:$0xff]
        %v885 = vld [vmem:[#allocation7 + $0x218] sm:$0xff]
        %v886 = vld [vmem:[#allocation7 + $0x220] sm:$0xff]
        %v887 = vld [vmem:[#allocation7 + $0x228] sm:$0xff]
        %v888 = vld [vmem:[#allocation7 + $0x230] sm:$0xff]
        %v889 = vld [vmem:[#allocation7 + $0x238] sm:$0xff]
        %v890 = vld [vmem:[#allocation7 + $0x240] sm:$0xff]
        %v891 = vld [vmem:[#allocation7 + $0x248] sm:$0xff]
        %v892 = vld [vmem:[#allocation7 + $0x250] sm:$0xff]
        %v893 = vld [vmem:[#allocation7 + $0x258] sm:$0xff]
        %v894 = vld [vmem:[#allocation7 + $0x260] sm:$0xff]
        %v895 = vld [vmem:[#allocation7 + $0x268] sm:$0xff]
        %v896 = vld [vmem:[#allocation7 + $0x270] sm:$0xff]
        %v897 = vld [vmem:[#allocation7 + $0x278] sm:$0xff]
        %v898 = vld [vmem:[#allocation7 + $0x280] sm:$0xff]
        %v899 = vld [vmem:[#allocation7 + $0x288] sm:$0xff]
        %v900 = vld [vmem:[#allocation7 + $0x290] sm:$0xff]
        %v901 = vld [vmem:[#allocation7 + $0x298] sm:$0xff]
        %v902 = vld [vmem:[#allocation7 + $0x2a0] sm:$0xff]
        %v903 = vld [vmem:[#allocation7 + $0x2a8] sm:$0xff]
        %v904 = vld [vmem:[#allocation7 + $0x2b0] sm:$0xff]
        %v905 = vld [vmem:[#allocation7 + $0x2b8] sm:$0xff]
        %v906 = vld [vmem:[#allocation7 + $0x2c0] sm:$0xff]
        %v907 = vld [vmem:[#allocation7 + $0x2c8] sm:$0xff]
        %v908 = vld [vmem:[#allocation7 + $0x2d0] sm:$0xff]
        %v909 = vld [vmem:[#allocation7 + $0x2d8] sm:$0xff]
        %v910 = vld [vmem:[#allocation7 + $0x2e0] sm:$0xff]
        %v911 = vld [vmem:[#allocation7 + $0x2e8] sm:$0xff]
        %v912 = vld [vmem:[#allocation7 + $0x2f0] sm:$0xff]
        %v913 = vld [vmem:[#allocation7 + $0x2f8] sm:$0xff]
        %v914 = vld [vmem:[#allocation7 + $0x300] sm:$0xff]
        %v915 = vld [vmem:[#allocation7 + $0x308] sm:$0xff]
        %v916 = vld [vmem:[#allocation7 + $0x310] sm:$0xff]
        %v917 = vld [vmem:[#allocation7 + $0x318] sm:$0xff]
        %v918 = vld [vmem:[#allocation7 + $0x320] sm:$0xff]
        %v919 = vld [vmem:[#allocation7 + $0x328] sm:$0xff]
        %v920 = vld [vmem:[#allocation7 + $0x330] sm:$0xff]
        %v921 = vld [vmem:[#allocation7 + $0x338] sm:$0xff]
        %v922 = vld [vmem:[#allocation7 + $0x340] sm:$0xff]
        %v923 = vld [vmem:[#allocation7 + $0x348] sm:$0xff]
        %v924 = vld [vmem:[#allocation7 + $0x350] sm:$0xff]
        %v925 = vld [vmem:[#allocation7 + $0x358] sm:$0xff]
        %v926 = vld [vmem:[#allocation7 + $0x360] sm:$0xff]
        %v927 = vld [vmem:[#allocation7 + $0x368] sm:$0xff]
        %v928 = vld [vmem:[#allocation7 + $0x370] sm:$0xff]
        %v929 = vld [vmem:[#allocation7 + $0x378] sm:$0xff]
        %v930 = vld [vmem:[#allocation7 + $0x380] sm:$0xff]
        %v931 = vld [vmem:[#allocation7 + $0x388] sm:$0xff]
        %v932 = vld [vmem:[#allocation7 + $0x390] sm:$0xff]
        %v933 = vld [vmem:[#allocation7 + $0x398] sm:$0xff]
        %v934 = vld [vmem:[#allocation7 + $0x3a0] sm:$0xff]
        %v935 = vld [vmem:[#allocation7 + $0x3a8] sm:$0xff]
        %v936 = vld [vmem:[#allocation7 + $0x3b0] sm:$0xff]
        %v937 = vld [vmem:[#allocation7 + $0x3b8] sm:$0xff]
        %v938 = vld [vmem:[#allocation7 + $0x3c0] sm:$0xff]
        %v939 = vld [vmem:[#allocation7 + $0x3c8] sm:$0xff]
        %v940 = vld [vmem:[#allocation7 + $0x3d0] sm:$0xff]
        %v941 = vld [vmem:[#allocation7 + $0x3d8] sm:$0xff]
        %v942 = vld [vmem:[#allocation7 + $0x3e0] sm:$0xff]
        %v943 = vld [vmem:[#allocation7 + $0x3e8] sm:$0xff]
        %v944 = vld [vmem:[#allocation7 + $0x3f0] sm:$0xff]
        %v945 = vld [vmem:[#allocation7 + $0x3f8] sm:$0xff]
        %v946 = vld [vmem:[%s3] sm:$0x3]
        %v948 = vlaneseq
        %v949 = vshrl.u32 %v948, 7
        %v950 = vsub.s32 0, %v949
        %v951 = vrot.slane %v946, %v950
        %v952 = vlaneseq
        %v953 = vshrl.u32 %v952, 7
        %v954 = vsub.s32 1, %v953
        %v955 = vrot.slane %v946, %v954
        %958 = vmatprep.subr.mxu0 %v819
        %959 = vmatpush1.msra.mxu0 %v818
        %960 = vmatprep.subr.mxu0 %v821
        %961 = vmatpush1.msra.mxu0 %v820
        %962 = vmatprep.subr.mxu0 %v823
        %963 = vmatpush1.msra.mxu0 %v822
        %964 = vmatprep.subr.mxu0 %v825
        %965 = vmatpush1.msra.mxu0 %v824
        %966 = vmatprep.subr.mxu0 %v827
        %967 = vmatpush1.msra.mxu0 %v826
        %968 = vmatprep.subr.mxu0 %v829
        %969 = vmatpush1.msra.mxu0 %v828
        %970 = vmatprep.subr.mxu0 %v831
        %971 = vmatpush1.msra.mxu0 %v830
        %972 = vmatprep.subr.mxu0 %v833
        %973 = vmatpush1.msra.mxu0 %v832
        %974 = vmatprep.subr.mxu0 %v835
        %975 = vmatpush1.msra.mxu0 %v834
        %976 = vmatprep.subr.mxu0 %v837
        %977 = vmatpush1.msra.mxu0 %v836
        %978 = vmatprep.subr.mxu0 %v839
        %979 = vmatpush1.msra.mxu0 %v838
        %980 = vmatprep.subr.mxu0 %v841
        %981 = vmatpush1.msra.mxu0 %v840
        %982 = vmatprep.subr.mxu0 %v843
        %983 = vmatpush1.msra.mxu0 %v842
        %984 = vmatprep.subr.mxu0 %v845
        %985 = vmatpush1.msra.mxu0 %v844
        %986 = vmatprep.subr.mxu0 %v847
        %987 = vmatpush1.msra.mxu0 %v846
        %988 = vmatprep.subr.mxu0 %v849
        %989 = vmatpush1.msra.mxu0 %v848
        %990 = vmatprep.subr.mxu0 %v851
        %991 = vmatpush1.msra.mxu0 %v850
        %992 = vmatprep.subr.mxu0 %v853
        %993 = vmatpush1.msra.mxu0 %v852
        %994 = vmatprep.subr.mxu0 %v855
        %995 = vmatpush1.msra.mxu0 %v854
        %996 = vmatprep.subr.mxu0 %v857
        %997 = vmatpush1.msra.mxu0 %v856
        %998 = vmatprep.subr.mxu0 %v859
        %999 = vmatpush1.msra.mxu0 %v858
        %1000 = vmatprep.subr.mxu0 %v861
        %1001 = vmatpush1.msra.mxu0 %v860
        %1002 = vmatprep.subr.mxu0 %v863
        %1003 = vmatpush1.msra.mxu0 %v862
        %1004 = vmatprep.subr.mxu0 %v865
        %1005 = vmatpush1.msra.mxu0 %v864
        %1006 = vmatprep.subr.mxu0 %v867
        %1007 = vmatpush1.msra.mxu0 %v866
        %1008 = vmatprep.subr.mxu0 %v869
        %1009 = vmatpush1.msra.mxu0 %v868
        %1010 = vmatprep.subr.mxu0 %v871
        %1011 = vmatpush1.msra.mxu0 %v870
        %1012 = vmatprep.subr.mxu0 %v873
        %1013 = vmatpush1.msra.mxu0 %v872
        %1014 = vmatprep.subr.mxu0 %v875
        %1015 = vmatpush1.msra.mxu0 %v874
        %1016 = vmatprep.subr.mxu0 %v877
        %1017 = vmatpush1.msra.mxu0 %v876
        %1018 = vmatprep.subr.mxu0 %v879
        %1019 = vmatpush1.msra.mxu0 %v878
        %1020 = vmatprep.subr.mxu0 %v881
        %1021 = vmatpush1.msra.mxu0 %v880
        %1022 = vmatprep.mubr.f32.mxu0 %v803
        %1023 = vmatmul.mubr.f32.gmra.mrb[0].mxu0 %v802
        %v1024 = vpop.f32.mrb[0].mxu0
        %v1025 = vadd.f32 %v951, %v1024
        %v1026 = vpop.f32.mrb[0].mxu0
        %v1027 = vadd.f32 %v955, %v1026
        %1028 = vmatprep.mubr.f32.mxu0 %v807
        %1029 = vmatmul.mubr.f32.gmra.mrb[0].mxu0 %v806
        %v1030 = vpop.f32.mrb[0].mxu0
        %v1031 = vadd.f32 %v951, %v1030
        %v1032 = vpop.f32.mrb[0].mxu0
        %v1033 = vadd.f32 %v955, %v1032
        %1034 = vmatprep.mubr.f32.mxu0 %v811
        %1035 = vmatmul.mubr.f32.gmra.mrb[0].mxu0 %v810
        %v1036 = vpop.f32.mrb[0].mxu0
        %v1037 = vadd.f32 %v951, %v1036
        %v1038 = vpop.f32.mrb[0].mxu0
        %v1039 = vadd.f32 %v955, %v1038
        %1040 = vmatprep.mubr.f32.mxu0 %v815
        %1041 = vmatmul.mubr.f32.gmra.mrb[0].mxu0 %v814
        %v1042 = vpop.f32.mrb[0].mxu0
        %v1043 = vadd.f32 %v951, %v1042
        %v1044 = vpop.f32.mrb[0].mxu0
        %v1045 = vadd.f32 %v955, %v1044
        %1046 = vdwg.mxu0
        %1047 = vmatprep.subr.mxu0 %v883
        %1048 = vmatpush1.msra.mxu0 %v882
        %1049 = vmatprep.subr.mxu0 %v885
        %1050 = vmatpush1.msra.mxu0 %v884
        %1051 = vmatprep.subr.mxu0 %v887
        %1052 = vmatpush1.msra.mxu0 %v886
        %1053 = vmatprep.subr.mxu0 %v889
        %1054 = vmatpush1.msra.mxu0 %v888
        %1055 = vmatprep.subr.mxu0 %v891
        %1056 = vmatpush1.msra.mxu0 %v890
        %1057 = vmatprep.subr.mxu0 %v893
        %1058 = vmatpush1.msra.mxu0 %v892
        %1059 = vmatprep.subr.mxu0 %v895
        %1060 = vmatpush1.msra.mxu0 %v894
        %1061 = vmatprep.subr.mxu0 %v897
        %1062 = vmatpush1.msra.mxu0 %v896
        %1063 = vmatprep.subr.mxu0 %v899
        %1064 = vmatpush1.msra.mxu0 %v898
        %1065 = vmatprep.subr.mxu0 %v901
        %1066 = vmatpush1.msra.mxu0 %v900
        %1067 = vmatprep.subr.mxu0 %v903
        %1068 = vmatpush1.msra.mxu0 %v902
        %1069 = vmatprep.subr.mxu0 %v905
        %1070 = vmatpush1.msra.mxu0 %v904
        %1071 = vmatprep.subr.mxu0 %v907
        %1072 = vmatpush1.msra.mxu0 %v906
        %1073 = vmatprep.subr.mxu0 %v909
        %1074 = vmatpush1.msra.mxu0 %v908
        %1075 = vmatprep.subr.mxu0 %v911
        %1076 = vmatpush1.msra.mxu0 %v910
        %1077 = vmatprep.subr.mxu0 %v913
        %1078 = vmatpush1.msra.mxu0 %v912
        %1079 = vmatprep.subr.mxu0 %v915
        %1080 = vmatpush1.msra.mxu0 %v914
        %1081 = vmatprep.subr.mxu0 %v917
        %1082 = vmatpush1.msra.mxu0 %v916
        %1083 = vmatprep.subr.mxu0 %v919
        %1084 = vmatpush1.msra.mxu0 %v918
        %1085 = vmatprep.subr.mxu0 %v921
        %1086 = vmatpush1.msra.mxu0 %v920
        %1087 = vmatprep.subr.mxu0 %v923
        %1088 = vmatpush1.msra.mxu0 %v922
        %1089 = vmatprep.subr.mxu0 %v925
        %1090 = vmatpush1.msra.mxu0 %v924
        %1091 = vmatprep.subr.mxu0 %v927
        %1092 = vmatpush1.msra.mxu0 %v926
        %1093 = vmatprep.subr.mxu0 %v929
        %1094 = vmatpush1.msra.mxu0 %v928
        %1095 = vmatprep.subr.mxu0 %v931
        %1096 = vmatpush1.msra.mxu0 %v930
        %1097 = vmatprep.subr.mxu0 %v933
        %1098 = vmatpush1.msra.mxu0 %v932
        %1099 = vmatprep.subr.mxu0 %v935
        %1100 = vmatpush1.msra.mxu0 %v934
        %1101 = vmatprep.subr.mxu0 %v937
        %1102 = vmatpush1.msra.mxu0 %v936
        %1103 = vmatprep.subr.mxu0 %v939
        %1104 = vmatpush1.msra.mxu0 %v938
        %1105 = vmatprep.subr.mxu0 %v941
        %1106 = vmatpush1.msra.mxu0 %v940
        %1107 = vmatprep.subr.mxu0 %v943
        %1108 = vmatpush1.msra.mxu0 %v942
        %1109 = vmatprep.subr.mxu0 %v945
        %1110 = vmatpush1.msra.mxu0 %v944
        %1111 = vmatprep.mubr.f32.mxu0 %v805
        %1112 = vmatmul.mubr.f32.gmra.mrb[0].mxu0 %v804
        %v1113 = vpop.f32.mrb[0].mxu0
        %v1114 = vadd.f32 %v1025, %v1113
        %v1115 = vpop.f32.mrb[0].mxu0
        %v1116 = vadd.f32 %v1027, %v1115
        %1117 = vmatprep.mubr.f32.mxu0 %v809
        %1118 = vmatmul.mubr.f32.gmra.mrb[0].mxu0 %v808
        %v1119 = vpop.f32.mrb[0].mxu0
        %v1120 = vadd.f32 %v1031, %v1119
        %v1121 = vpop.f32.mrb[0].mxu0
        %v1122 = vadd.f32 %v1033, %v1121
        %1123 = vmatprep.mubr.f32.mxu0 %v813
        %1124 = vmatmul.mubr.f32.gmra.mrb[0].mxu0 %v812
        %v1125 = vpop.f32.mrb[0].mxu0
        %v1126 = vadd.f32 %v1037, %v1125
        %v1127 = vpop.f32.mrb[0].mxu0
        %v1128 = vadd.f32 %v1039, %v1127
        %1129 = vmatprep.mubr.f32.mxu0 %v817
        %1130 = vmatmul.mubr.f32.gmra.mrb[0].mxu0 %v816
        %v1131 = vpop.f32.mrb[0].mxu0
        %v1132 = vadd.f32 %v1043, %v1131
        %v1133 = vpop.f32.mrb[0].mxu0
        %v1134 = vadd.f32 %v1045, %v1133
        %1135 = vdwg.mxu0
        %v1136 = vmax.f32 %v1114, 0.0
        %v1137 = vmax.f32 %v1116, 0.0
        %v1138 = vmax.f32 %v1120, 0.0
        %v1139 = vmax.f32 %v1122, 0.0
        %v1140 = vmax.f32 %v1126, 0.0
        %v1141 = vmax.f32 %v1128, 0.0
        %v1142 = vmax.f32 %v1132, 0.0
        %v1143 = vmax.f32 %v1134, 0.0
        %v1144 = vld [vmem:[#allocation8] sm:$0xff]
        %v1145 = vld [vmem:[#allocation8 + $0x8] sm:$0xff]
        %v1146 = vld [vmem:[#allocation8 + $0x10] sm:$0xff]
        %v1147 = vld [vmem:[#allocation8 + $0x18] sm:$0xff]
        %v1148 = vld [vmem:[#allocation8 + $0x20] sm:$0xff]
        %v1149 = vld [vmem:[#allocation8 + $0x28] sm:$0xff]
        %v1150 = vld [vmem:[#allocation8 + $0x30] sm:$0xff]
        %v1151 = vld [vmem:[#allocation8 + $0x38] sm:$0xff]
        %v1152 = vld [vmem:[#allocation8 + $0x40] sm:$0xff]
        %v1153 = vld [vmem:[#allocation8 + $0x48] sm:$0xff]
        %v1154 = vld [vmem:[#allocation8 + $0x50] sm:$0xff]
        %v1155 = vld [vmem:[#allocation8 + $0x58] sm:$0xff]
        %v1156 = vld [vmem:[#allocation8 + $0x60] sm:$0xff]
        %v1157 = vld [vmem:[#allocation8 + $0x68] sm:$0xff]
        %v1158 = vld [vmem:[#allocation8 + $0x70] sm:$0xff]
        %v1159 = vld [vmem:[#allocation8 + $0x78] sm:$0xff]
        %v1160 = vld [vmem:[#allocation8 + $0x80] sm:$0xff]
        %v1161 = vld [vmem:[#allocation8 + $0x88] sm:$0xff]
        %v1162 = vld [vmem:[#allocation8 + $0x90] sm:$0xff]
        %v1163 = vld [vmem:[#allocation8 + $0x98] sm:$0xff]
        %v1164 = vld [vmem:[#allocation8 + $0xa0] sm:$0xff]
        %v1165 = vld [vmem:[#allocation8 + $0xa8] sm:$0xff]
        %v1166 = vld [vmem:[#allocation8 + $0xb0] sm:$0xff]
        %v1167 = vld [vmem:[#allocation8 + $0xb8] sm:$0xff]
        %v1168 = vld [vmem:[#allocation8 + $0xc0] sm:$0xff]
        %v1169 = vld [vmem:[#allocation8 + $0xc8] sm:$0xff]
        %v1170 = vld [vmem:[#allocation8 + $0xd0] sm:$0xff]
        %v1171 = vld [vmem:[#allocation8 + $0xd8] sm:$0xff]
        %v1172 = vld [vmem:[#allocation8 + $0xe0] sm:$0xff]
        %v1173 = vld [vmem:[#allocation8 + $0xe8] sm:$0xff]
        %v1174 = vld [vmem:[#allocation8 + $0xf0] sm:$0xff]
        %v1175 = vld [vmem:[#allocation8 + $0xf8] sm:$0xff]
        %v1176 = vld [vmem:[#allocation8 + $0x100] sm:$0xff]
        %v1177 = vld [vmem:[#allocation8 + $0x108] sm:$0xff]
        %v1178 = vld [vmem:[#allocation8 + $0x110] sm:$0xff]
        %v1179 = vld [vmem:[#allocation8 + $0x118] sm:$0xff]
        %v1180 = vld [vmem:[#allocation8 + $0x120] sm:$0xff]
        %v1181 = vld [vmem:[#allocation8 + $0x128] sm:$0xff]
        %v1182 = vld [vmem:[#allocation8 + $0x130] sm:$0xff]
        %v1183 = vld [vmem:[#allocation8 + $0x138] sm:$0xff]
        %v1184 = vld [vmem:[#allocation8 + $0x140] sm:$0xff]
        %v1185 = vld [vmem:[#allocation8 + $0x148] sm:$0xff]
        %v1186 = vld [vmem:[#allocation8 + $0x150] sm:$0xff]
        %v1187 = vld [vmem:[#allocation8 + $0x158] sm:$0xff]
        %v1188 = vld [vmem:[#allocation8 + $0x160] sm:$0xff]
        %v1189 = vld [vmem:[#allocation8 + $0x168] sm:$0xff]
        %v1190 = vld [vmem:[#allocation8 + $0x170] sm:$0xff]
        %v1191 = vld [vmem:[#allocation8 + $0x178] sm:$0xff]
        %v1192 = vld [vmem:[#allocation8 + $0x180] sm:$0xff]
        %v1193 = vld [vmem:[#allocation8 + $0x188] sm:$0xff]
        %v1194 = vld [vmem:[#allocation8 + $0x190] sm:$0xff]
        %v1195 = vld [vmem:[#allocation8 + $0x198] sm:$0xff]
        %v1196 = vld [vmem:[#allocation8 + $0x1a0] sm:$0xff]
        %v1197 = vld [vmem:[#allocation8 + $0x1a8] sm:$0xff]
        %v1198 = vld [vmem:[#allocation8 + $0x1b0] sm:$0xff]
        %v1199 = vld [vmem:[#allocation8 + $0x1b8] sm:$0xff]
        %v1200 = vld [vmem:[#allocation8 + $0x1c0] sm:$0xff]
        %v1201 = vld [vmem:[#allocation8 + $0x1c8] sm:$0xff]
        %v1202 = vld [vmem:[#allocation8 + $0x1d0] sm:$0xff]
        %v1203 = vld [vmem:[#allocation8 + $0x1d8] sm:$0xff]
        %v1204 = vld [vmem:[#allocation8 + $0x1e0] sm:$0xff]
        %v1205 = vld [vmem:[#allocation8 + $0x1e8] sm:$0xff]
        %v1206 = vld [vmem:[#allocation8 + $0x1f0] sm:$0xff]
        %v1207 = vld [vmem:[#allocation8 + $0x1f8] sm:$0xff]
        %v1208 = vld [vmem:[%s5] sm:$0x3]
        %v1210 = vlaneseq
        %v1211 = vshrl.u32 %v1210, 7
        %v1212 = vsub.s32 0, %v1211
        %v1213 = vrot.slane %v1208, %v1212
        %v1214 = vlaneseq
        %v1215 = vshrl.u32 %v1214, 7
        %v1216 = vsub.s32 1, %v1215
        %v1217 = vrot.slane %v1208, %v1216
        %1220 = vmatprep.subr.mxu0 %v1145
        %1221 = vmatpush1.msra.mxu0 %v1144
        %1222 = vmatprep.subr.mxu0 %v1147
        %1223 = vmatpush1.msra.mxu0 %v1146
        %1224 = vmatprep.subr.mxu0 %v1149
        %1225 = vmatpush1.msra.mxu0 %v1148
        %1226 = vmatprep.subr.mxu0 %v1151
        %1227 = vmatpush1.msra.mxu0 %v1150
        %1228 = vmatprep.subr.mxu0 %v1153
        %1229 = vmatpush1.msra.mxu0 %v1152
        %1230 = vmatprep.subr.mxu0 %v1155
        %1231 = vmatpush1.msra.mxu0 %v1154
        %1232 = vmatprep.subr.mxu0 %v1157
        %1233 = vmatpush1.msra.mxu0 %v1156
        %1234 = vmatprep.subr.mxu0 %v1159
        %1235 = vmatpush1.msra.mxu0 %v1158
        %1236 = vmatprep.subr.mxu0 %v1161
        %1237 = vmatpush1.msra.mxu0 %v1160
        %1238 = vmatprep.subr.mxu0 %v1163
        %1239 = vmatpush1.msra.mxu0 %v1162
        %1240 = vmatprep.subr.mxu0 %v1165
        %1241 = vmatpush1.msra.mxu0 %v1164
        %1242 = vmatprep.subr.mxu0 %v1167
        %1243 = vmatpush1.msra.mxu0 %v1166
        %1244 = vmatprep.subr.mxu0 %v1169
        %1245 = vmatpush1.msra.mxu0 %v1168
        %1246 = vmatprep.subr.mxu0 %v1171
        %1247 = vmatpush1.msra.mxu0 %v1170
        %1248 = vmatprep.subr.mxu0 %v1173
        %1249 = vmatpush1.msra.mxu0 %v1172
        %1250 = vmatprep.subr.mxu0 %v1175
        %1251 = vmatpush1.msra.mxu0 %v1174
        %1252 = vmatprep.subr.mxu0 %v1177
        %1253 = vmatpush1.msra.mxu0 %v1176
        %1254 = vmatprep.subr.mxu0 %v1179
        %1255 = vmatpush1.msra.mxu0 %v1178
        %1256 = vmatprep.subr.mxu0 %v1181
        %1257 = vmatpush1.msra.mxu0 %v1180
        %1258 = vmatprep.subr.mxu0 %v1183
        %1259 = vmatpush1.msra.mxu0 %v1182
        %1260 = vmatprep.subr.mxu0 %v1185
        %1261 = vmatpush1.msra.mxu0 %v1184
        %1262 = vmatprep.subr.mxu0 %v1187
        %1263 = vmatpush1.msra.mxu0 %v1186
        %1264 = vmatprep.subr.mxu0 %v1189
        %1265 = vmatpush1.msra.mxu0 %v1188
        %1266 = vmatprep.subr.mxu0 %v1191
        %1267 = vmatpush1.msra.mxu0 %v1190
        %1268 = vmatprep.subr.mxu0 %v1193
        %1269 = vmatpush1.msra.mxu0 %v1192
        %1270 = vmatprep.subr.mxu0 %v1195
        %1271 = vmatpush1.msra.mxu0 %v1194
        %1272 = vmatprep.subr.mxu0 %v1197
        %1273 = vmatpush1.msra.mxu0 %v1196
        %1274 = vmatprep.subr.mxu0 %v1199
        %1275 = vmatpush1.msra.mxu0 %v1198
        %1276 = vmatprep.subr.mxu0 %v1201
        %1277 = vmatpush1.msra.mxu0 %v1200
        %1278 = vmatprep.subr.mxu0 %v1203
        %1279 = vmatpush1.msra.mxu0 %v1202
        %1280 = vmatprep.subr.mxu0 %v1205
        %1281 = vmatpush1.msra.mxu0 %v1204
        %1282 = vmatprep.subr.mxu0 %v1207
        %1283 = vmatpush1.msra.mxu0 %v1206
        %1284 = vmatprep.mubr.f32.mxu0 %v1137
        %1285 = vmatmul.mubr.f32.gmra.mrb[0].mxu0 %v1136
        %v1286 = vpop.f32.mrb[0].mxu0
        %v1287 = vadd.f32 %v1213, %v1286
        %v1288 = vpop.f32.mrb[0].mxu0
        %v1289 = vadd.f32 %v1217, %v1288
        %1290 = vmatprep.mubr.f32.mxu0 %v1139
        %1291 = vmatmul.mubr.f32.gmra.mrb[0].mxu0 %v1138
        %v1292 = vpop.f32.mrb[0].mxu0
        %v1293 = vadd.f32 %v1213, %v1292
        %v1294 = vpop.f32.mrb[0].mxu0
        %v1295 = vadd.f32 %v1217, %v1294
        %1296 = vmatprep.mubr.f32.mxu0 %v1141
        %1297 = vmatmul.mubr.f32.gmra.mrb[0].mxu0 %v1140
        %v1298 = vpop.f32.mrb[0].mxu0
        %v1299 = vadd.f32 %v1213, %v1298
        %v1300 = vpop.f32.mrb[0].mxu0
        %v1301 = vadd.f32 %v1217, %v1300
        %1302 = vmatprep.mubr.f32.mxu0 %v1143
        %1303 = vmatmul.mubr.f32.gmra.mrb[0].mxu0 %v1142
        %v1304 = vpop.f32.mrb[0].mxu0
        %v1305 = vadd.f32 %v1213, %v1304
        %v1306 = vpop.f32.mrb[0].mxu0
        %v1307 = vadd.f32 %v1217, %v1306
        %1308 = vdwg.mxu0
        %v1309 = vadd.f32 %v794, %v1287
        %v1310 = vadd.f32 %v795, %v1289
        %v1311 = vadd.f32 %v796, %v1293
        %v1312 = vadd.f32 %v797, %v1295
        %v1313 = vadd.f32 %v798, %v1299
        %v1314 = vadd.f32 %v799, %v1301
        %v1315 = vadd.f32 %v800, %v1305
        %v1316 = vadd.f32 %v801, %v1307
        %v1317 = vld [vmem:[#allocation10] sm:$0xff]
        %v1318 = vld [vmem:[#allocation10 + $0x8] sm:$0xff]
        %v1319 = vld [vmem:[#allocation10 + $0x10] sm:$0xff]
        %v1320 = vld [vmem:[#allocation10 + $0x18] sm:$0xff]
        %v1321 = vld [vmem:[#allocation10 + $0x20] sm:$0xff]
        %v1322 = vld [vmem:[#allocation10 + $0x28] sm:$0xff]
        %v1323 = vld [vmem:[#allocation10 + $0x30] sm:$0xff]
        %v1324 = vld [vmem:[#allocation10 + $0x38] sm:$0xff]
        %v1325 = vld [vmem:[#allocation10 + $0x40] sm:$0xff]
        %v1326 = vld [vmem:[#allocation10 + $0x48] sm:$0xff]
        %v1327 = vld [vmem:[#allocation10 + $0x50] sm:$0xff]
        %v1328 = vld [vmem:[#allocation10 + $0x58] sm:$0xff]
        %v1329 = vld [vmem:[#allocation10 + $0x60] sm:$0xff]
        %v1330 = vld [vmem:[#allocation10 + $0x68] sm:$0xff]
        %v1331 = vld [vmem:[#allocation10 + $0x70] sm:$0xff]
        %v1332 = vld [vmem:[#allocation10 + $0x78] sm:$0xff]
        %v1333 = vld [vmem:[#allocation10 + $0x80] sm:$0xff]
        %v1334 = vld [vmem:[#allocation10 + $0x88] sm:$0xff]
        %v1335 = vld [vmem:[#allocation10 + $0x90] sm:$0xff]
        %v1336 = vld [vmem:[#allocation10 + $0x98] sm:$0xff]
        %v1337 = vld [vmem:[#allocation10 + $0xa0] sm:$0xff]
        %v1338 = vld [vmem:[#allocation10 + $0xa8] sm:$0xff]
        %v1339 = vld [vmem:[#allocation10 + $0xb0] sm:$0xff]
        %v1340 = vld [vmem:[#allocation10 + $0xb8] sm:$0xff]
        %v1341 = vld [vmem:[#allocation10 + $0xc0] sm:$0xff]
        %v1342 = vld [vmem:[#allocation10 + $0xc8] sm:$0xff]
        %v1343 = vld [vmem:[#allocation10 + $0xd0] sm:$0xff]
        %v1344 = vld [vmem:[#allocation10 + $0xd8] sm:$0xff]
        %v1345 = vld [vmem:[#allocation10 + $0xe0] sm:$0xff]
        %v1346 = vld [vmem:[#allocation10 + $0xe8] sm:$0xff]
        %v1347 = vld [vmem:[#allocation10 + $0xf0] sm:$0xff]
        %v1348 = vld [vmem:[#allocation10 + $0xf8] sm:$0xff]
        %v1349 = vld [vmem:[#allocation10 + $0x100] sm:$0xff]
        %v1350 = vld [vmem:[#allocation10 + $0x108] sm:$0xff]
        %v1351 = vld [vmem:[#allocation10 + $0x110] sm:$0xff]
        %v1352 = vld [vmem:[#allocation10 + $0x118] sm:$0xff]
        %v1353 = vld [vmem:[#allocation10 + $0x120] sm:$0xff]
        %v1354 = vld [vmem:[#allocation10 + $0x128] sm:$0xff]
        %v1355 = vld [vmem:[#allocation10 + $0x130] sm:$0xff]
        %v1356 = vld [vmem:[#allocation10 + $0x138] sm:$0xff]
        %v1357 = vld [vmem:[#allocation10 + $0x140] sm:$0xff]
        %v1358 = vld [vmem:[#allocation10 + $0x148] sm:$0xff]
        %v1359 = vld [vmem:[#allocation10 + $0x150] sm:$0xff]
        %v1360 = vld [vmem:[#allocation10 + $0x158] sm:$0xff]
        %v1361 = vld [vmem:[#allocation10 + $0x160] sm:$0xff]
        %v1362 = vld [vmem:[#allocation10 + $0x168] sm:$0xff]
        %v1363 = vld [vmem:[#allocation10 + $0x170] sm:$0xff]
        %v1364 = vld [vmem:[#allocation10 + $0x178] sm:$0xff]
        %v1365 = vld [vmem:[#allocation10 + $0x180] sm:$0xff]
        %v1366 = vld [vmem:[#allocation10 + $0x188] sm:$0xff]
        %v1367 = vld [vmem:[#allocation10 + $0x190] sm:$0xff]
        %v1368 = vld [vmem:[#allocation10 + $0x198] sm:$0xff]
        %v1369 = vld [vmem:[#allocation10 + $0x1a0] sm:$0xff]
        %v1370 = vld [vmem:[#allocation10 + $0x1a8] sm:$0xff]
        %v1371 = vld [vmem:[#allocation10 + $0x1b0] sm:$0xff]
        %v1372 = vld [vmem:[#allocation10 + $0x1b8] sm:$0xff]
        %v1373 = vld [vmem:[#allocation10 + $0x1c0] sm:$0xff]
        %v1374 = vld [vmem:[#allocation10 + $0x1c8] sm:$0xff]
        %v1375 = vld [vmem:[#allocation10 + $0x1d0] sm:$0xff]
        %v1376 = vld [vmem:[#allocation10 + $0x1d8] sm:$0xff]
        %v1377 = vld [vmem:[#allocation10 + $0x1e0] sm:$0xff]
        %v1378 = vld [vmem:[#allocation10 + $0x1e8] sm:$0xff]
        %v1379 = vld [vmem:[#allocation10 + $0x1f0] sm:$0xff]
        %v1380 = vld [vmem:[#allocation10 + $0x1f8] sm:$0xff]
        %v1381 = vld [vmem:[#allocation10 + $0x200] sm:$0xff]
        %v1382 = vld [vmem:[#allocation10 + $0x208] sm:$0xff]
        %v1383 = vld [vmem:[#allocation10 + $0x210] sm:$0xff]
        %v1384 = vld [vmem:[#allocation10 + $0x218] sm:$0xff]
        %v1385 = vld [vmem:[#allocation10 + $0x220] sm:$0xff]
        %v1386 = vld [vmem:[#allocation10 + $0x228] sm:$0xff]
        %v1387 = vld [vmem:[#allocation10 + $0x230] sm:$0xff]
        %v1388 = vld [vmem:[#allocation10 + $0x238] sm:$0xff]
        %v1389 = vld [vmem:[#allocation10 + $0x240] sm:$0xff]
        %v1390 = vld [vmem:[#allocation10 + $0x248] sm:$0xff]
        %v1391 = vld [vmem:[#allocation10 + $0x250] sm:$0xff]
        %v1392 = vld [vmem:[#allocation10 + $0x258] sm:$0xff]
        %v1393 = vld [vmem:[#allocation10 + $0x260] sm:$0xff]
        %v1394 = vld [vmem:[#allocation10 + $0x268] sm:$0xff]
        %v1395 = vld [vmem:[#allocation10 + $0x270] sm:$0xff]
        %v1396 = vld [vmem:[#allocation10 + $0x278] sm:$0xff]
        %v1397 = vld [vmem:[#allocation10 + $0x280] sm:$0xff]
        %v1398 = vld [vmem:[#allocation10 + $0x288] sm:$0xff]
        %v1399 = vld [vmem:[#allocation10 + $0x290] sm:$0xff]
        %v1400 = vld [vmem:[#allocation10 + $0x298] sm:$0xff]
        %v1401 = vld [vmem:[#allocation10 + $0x2a0] sm:$0xff]
        %v1402 = vld [vmem:[#allocation10 + $0x2a8] sm:$0xff]
        %v1403 = vld [vmem:[#allocation10 + $0x2b0] sm:$0xff]
        %v1404 = vld [vmem:[#allocation10 + $0x2b8] sm:$0xff]
        %v1405 = vld [vmem:[#allocation10 + $0x2c0] sm:$0xff]
        %v1406 = vld [vmem:[#allocation10 + $0x2c8] sm:$0xff]
        %v1407 = vld [vmem:[#allocation10 + $0x2d0] sm:$0xff]
        %v1408 = vld [vmem:[#allocation10 + $0x2d8] sm:$0xff]
        %v1409 = vld [vmem:[#allocation10 + $0x2e0] sm:$0xff]
        %v1410 = vld [vmem:[#allocation10 + $0x2e8] sm:$0xff]
        %v1411 = vld [vmem:[#allocation10 + $0x2f0] sm:$0xff]
        %v1412 = vld [vmem:[#allocation10 + $0x2f8] sm:$0xff]
        %v1413 = vld [vmem:[#allocation10 + $0x300] sm:$0xff]
        %v1414 = vld [vmem:[#allocation10 + $0x308] sm:$0xff]
        %v1415 = vld [vmem:[#allocation10 + $0x310] sm:$0xff]
        %v1416 = vld [vmem:[#allocation10 + $0x318] sm:$0xff]
        %v1417 = vld [vmem:[#allocation10 + $0x320] sm:$0xff]
        %v1418 = vld [vmem:[#allocation10 + $0x328] sm:$0xff]
        %v1419 = vld [vmem:[#allocation10 + $0x330] sm:$0xff]
        %v1420 = vld [vmem:[#allocation10 + $0x338] sm:$0xff]
        %v1421 = vld [vmem:[#allocation10 + $0x340] sm:$0xff]
        %v1422 = vld [vmem:[#allocation10 + $0x348] sm:$0xff]
        %v1423 = vld [vmem:[#allocation10 + $0x350] sm:$0xff]
        %v1424 = vld [vmem:[#allocation10 + $0x358] sm:$0xff]
        %v1425 = vld [vmem:[#allocation10 + $0x360] sm:$0xff]
        %v1426 = vld [vmem:[#allocation10 + $0x368] sm:$0xff]
        %v1427 = vld [vmem:[#allocation10 + $0x370] sm:$0xff]
        %v1428 = vld [vmem:[#allocation10 + $0x378] sm:$0xff]
        %v1429 = vld [vmem:[#allocation10 + $0x380] sm:$0xff]
        %v1430 = vld [vmem:[#allocation10 + $0x388] sm:$0xff]
        %v1431 = vld [vmem:[#allocation10 + $0x390] sm:$0xff]
        %v1432 = vld [vmem:[#allocation10 + $0x398] sm:$0xff]
        %v1433 = vld [vmem:[#allocation10 + $0x3a0] sm:$0xff]
        %v1434 = vld [vmem:[#allocation10 + $0x3a8] sm:$0xff]
        %v1435 = vld [vmem:[#allocation10 + $0x3b0] sm:$0xff]
        %v1436 = vld [vmem:[#allocation10 + $0x3b8] sm:$0xff]
        %v1437 = vld [vmem:[#allocation10 + $0x3c0] sm:$0xff]
        %v1438 = vld [vmem:[#allocation10 + $0x3c8] sm:$0xff]
        %v1439 = vld [vmem:[#allocation10 + $0x3d0] sm:$0xff]
        %v1440 = vld [vmem:[#allocation10 + $0x3d8] sm:$0xff]
        %v1441 = vld [vmem:[#allocation10 + $0x3e0] sm:$0xff]
        %v1442 = vld [vmem:[#allocation10 + $0x3e8] sm:$0xff]
        %v1443 = vld [vmem:[#allocation10 + $0x3f0] sm:$0xff]
        %v1444 = vld [vmem:[#allocation10 + $0x3f8] sm:$0xff]
        %v1445 = vld [vmem:[%s7] sm:$0xf]
        %v1447 = vlaneseq
        %v1448 = vshrl.u32 %v1447, 7
        %v1449 = vsub.s32 0, %v1448
        %v1450 = vrot.slane %v1445, %v1449
        %v1451 = vlaneseq
        %v1452 = vshrl.u32 %v1451, 7
        %v1453 = vsub.s32 1, %v1452
        %v1454 = vrot.slane %v1445, %v1453
        %v1455 = vlaneseq
        %v1456 = vshrl.u32 %v1455, 7
        %v1457 = vsub.s32 2, %v1456
        %v1458 = vrot.slane %v1445, %v1457
        %v1459 = vlaneseq
        %v1460 = vshrl.u32 %v1459, 7
        %v1461 = vsub.s32 3, %v1460
        %v1462 = vrot.slane %v1445, %v1461
        %1467 = vmatprep.subr.mxu0 %v1318
        %1468 = vmatpush1.msra.mxu0 %v1317
        %1469 = vmatprep.subr.mxu0 %v1322
        %1470 = vmatpush1.msra.mxu0 %v1321
        %1471 = vmatprep.subr.mxu0 %v1326
        %1472 = vmatpush1.msra.mxu0 %v1325
        %1473 = vmatprep.subr.mxu0 %v1330
        %1474 = vmatpush1.msra.mxu0 %v1329
        %1475 = vmatprep.subr.mxu0 %v1334
        %1476 = vmatpush1.msra.mxu0 %v1333
        %1477 = vmatprep.subr.mxu0 %v1338
        %1478 = vmatpush1.msra.mxu0 %v1337
        %1479 = vmatprep.subr.mxu0 %v1342
        %1480 = vmatpush1.msra.mxu0 %v1341
        %1481 = vmatprep.subr.mxu0 %v1346
        %1482 = vmatpush1.msra.mxu0 %v1345
        %1483 = vmatprep.subr.mxu0 %v1350
        %1484 = vmatpush1.msra.mxu0 %v1349
        %1485 = vmatprep.subr.mxu0 %v1354
        %1486 = vmatpush1.msra.mxu0 %v1353
        %1487 = vmatprep.subr.mxu0 %v1358
        %1488 = vmatpush1.msra.mxu0 %v1357
        %1489 = vmatprep.subr.mxu0 %v1362
        %1490 = vmatpush1.msra.mxu0 %v1361
        %1491 = vmatprep.subr.mxu0 %v1366
        %1492 = vmatpush1.msra.mxu0 %v1365
        %1493 = vmatprep.subr.mxu0 %v1370
        %1494 = vmatpush1.msra.mxu0 %v1369
        %1495 = vmatprep.subr.mxu0 %v1374
        %1496 = vmatpush1.msra.mxu0 %v1373
        %1497 = vmatprep.subr.mxu0 %v1378
        %1498 = vmatpush1.msra.mxu0 %v1377
        %1499 = vmatprep.subr.mxu0 %v1382
        %1500 = vmatpush1.msra.mxu0 %v1381
        %1501 = vmatprep.subr.mxu0 %v1386
        %1502 = vmatpush1.msra.mxu0 %v1385
        %1503 = vmatprep.subr.mxu0 %v1390
        %1504 = vmatpush1.msra.mxu0 %v1389
        %1505 = vmatprep.subr.mxu0 %v1394
        %1506 = vmatpush1.msra.mxu0 %v1393
        %1507 = vmatprep.subr.mxu0 %v1398
        %1508 = vmatpush1.msra.mxu0 %v1397
        %1509 = vmatprep.subr.mxu0 %v1402
        %1510 = vmatpush1.msra.mxu0 %v1401
        %1511 = vmatprep.subr.mxu0 %v1406
        %1512 = vmatpush1.msra.mxu0 %v1405
        %1513 = vmatprep.subr.mxu0 %v1410
        %1514 = vmatpush1.msra.mxu0 %v1409
        %1515 = vmatprep.subr.mxu0 %v1414
        %1516 = vmatpush1.msra.mxu0 %v1413
        %1517 = vmatprep.subr.mxu0 %v1418
        %1518 = vmatpush1.msra.mxu0 %v1417
        %1519 = vmatprep.subr.mxu0 %v1422
        %1520 = vmatpush1.msra.mxu0 %v1421
        %1521 = vmatprep.subr.mxu0 %v1426
        %1522 = vmatpush1.msra.mxu0 %v1425
        %1523 = vmatprep.subr.mxu0 %v1430
        %1524 = vmatpush1.msra.mxu0 %v1429
        %1525 = vmatprep.subr.mxu0 %v1434
        %1526 = vmatpush1.msra.mxu0 %v1433
        %1527 = vmatprep.subr.mxu0 %v1438
        %1528 = vmatpush1.msra.mxu0 %v1437
        %1529 = vmatprep.subr.mxu0 %v1442
        %1530 = vmatpush1.msra.mxu0 %v1441
        %1531 = vmatprep.mubr.f32.mxu0 %v1310
        %1532 = vmatmul.mubr.f32.gmra.mrb[0].mxu0 %v1309
        %v1533 = vpop.f32.mrb[0].mxu0
        %v1534 = vadd.f32 %v1450, %v1533
        %v1535 = vpop.f32.mrb[0].mxu0
        %v1536 = vadd.f32 %v1454, %v1535
        %1537 = vmatprep.mubr.f32.mxu0 %v1312
        %1538 = vmatmul.mubr.f32.gmra.mrb[0].mxu0 %v1311
        %v1539 = vpop.f32.mrb[0].mxu0
        %v1540 = vadd.f32 %v1450, %v1539
        %v1541 = vpop.f32.mrb[0].mxu0
        %v1542 = vadd.f32 %v1454, %v1541
        %1543 = vmatprep.mubr.f32.mxu0 %v1314
        %1544 = vmatmul.mubr.f32.gmra.mrb[0].mxu0 %v1313
        %v1545 = vpop.f32.mrb[0].mxu0
        %v1546 = vadd.f32 %v1450, %v1545
        %v1547 = vpop.f32.mrb[0].mxu0
        %v1548 = vadd.f32 %v1454, %v1547
        %1549 = vmatprep.mubr.f32.mxu0 %v1316
        %1550 = vmatmul.mubr.f32.gmra.mrb[0].mxu0 %v1315
        %v1551 = vpop.f32.mrb[0].mxu0
        %v1552 = vadd.f32 %v1450, %v1551
        %v1553 = vpop.f32.mrb[0].mxu0
        %v1554 = vadd.f32 %v1454, %v1553
        %1555 = vdwg.mxu0
        %1556 = vmatprep.subr.mxu0 %v1320
        %1557 = vmatpush1.msra.mxu0 %v1319
        %1558 = vmatprep.subr.mxu0 %v1324
        %1559 = vmatpush1.msra.mxu0 %v1323
        %1560 = vmatprep.subr.mxu0 %v1328
        %1561 = vmatpush1.msra.mxu0 %v1327
        %1562 = vmatprep.subr.mxu0 %v1332
        %1563 = vmatpush1.msra.mxu0 %v1331
        %1564 = vmatprep.subr.mxu0 %v1336
        %1565 = vmatpush1.msra.mxu0 %v1335
        %1566 = vmatprep.subr.mxu0 %v1340
        %1567 = vmatpush1.msra.mxu0 %v1339
        %1568 = vmatprep.subr.mxu0 %v1344
        %1569 = vmatpush1.msra.mxu0 %v1343
        %1570 = vmatprep.subr.mxu0 %v1348
        %1571 = vmatpush1.msra.mxu0 %v1347
        %1572 = vmatprep.subr.mxu0 %v1352
        %1573 = vmatpush1.msra.mxu0 %v1351
        %1574 = vmatprep.subr.mxu0 %v1356
        %1575 = vmatpush1.msra.mxu0 %v1355
        %1576 = vmatprep.subr.mxu0 %v1360
        %1577 = vmatpush1.msra.mxu0 %v1359
        %1578 = vmatprep.subr.mxu0 %v1364
        %1579 = vmatpush1.msra.mxu0 %v1363
        %1580 = vmatprep.subr.mxu0 %v1368
        %1581 = vmatpush1.msra.mxu0 %v1367
        %1582 = vmatprep.subr.mxu0 %v1372
        %1583 = vmatpush1.msra.mxu0 %v1371
        %1584 = vmatprep.subr.mxu0 %v1376
        %1585 = vmatpush1.msra.mxu0 %v1375
        %1586 = vmatprep.subr.mxu0 %v1380
        %1587 = vmatpush1.msra.mxu0 %v1379
        %1588 = vmatprep.subr.mxu0 %v1384
        %1589 = vmatpush1.msra.mxu0 %v1383
        %1590 = vmatprep.subr.mxu0 %v1388
        %1591 = vmatpush1.msra.mxu0 %v1387
        %1592 = vmatprep.subr.mxu0 %v1392
        %1593 = vmatpush1.msra.mxu0 %v1391
        %1594 = vmatprep.subr.mxu0 %v1396
        %1595 = vmatpush1.msra.mxu0 %v1395
        %1596 = vmatprep.subr.mxu0 %v1400
        %1597 = vmatpush1.msra.mxu0 %v1399
        %1598 = vmatprep.subr.mxu0 %v1404
        %1599 = vmatpush1.msra.mxu0 %v1403
        %1600 = vmatprep.subr.mxu0 %v1408
        %1601 = vmatpush1.msra.mxu0 %v1407
        %1602 = vmatprep.subr.mxu0 %v1412
        %1603 = vmatpush1.msra.mxu0 %v1411
        %1604 = vmatprep.subr.mxu0 %v1416
        %1605 = vmatpush1.msra.mxu0 %v1415
        %1606 = vmatprep.subr.mxu0 %v1420
        %1607 = vmatpush1.msra.mxu0 %v1419
        %1608 = vmatprep.subr.mxu0 %v1424
        %1609 = vmatpush1.msra.mxu0 %v1423
        %1610 = vmatprep.subr.mxu0 %v1428
        %1611 = vmatpush1.msra.mxu0 %v1427
        %1612 = vmatprep.subr.mxu0 %v1432
        %1613 = vmatpush1.msra.mxu0 %v1431
        %1614 = vmatprep.subr.mxu0 %v1436
        %1615 = vmatpush1.msra.mxu0 %v1435
        %1616 = vmatprep.subr.mxu0 %v1440
        %1617 = vmatpush1.msra.mxu0 %v1439
        %1618 = vmatprep.subr.mxu0 %v1444
        %1619 = vmatpush1.msra.mxu0 %v1443
        %1620 = vmatprep.mubr.f32.mxu0 %v1310
        %1621 = vmatmul.mubr.f32.gmra.mrb[0].mxu0 %v1309
        %v1622 = vpop.f32.mrb[0].mxu0
        %v1623 = vadd.f32 %v1458, %v1622
        %v1624 = vpop.f32.mrb[0].mxu0
        %v1625 = vadd.f32 %v1462, %v1624
        %1626 = vmatprep.mubr.f32.mxu0 %v1312
        %1627 = vmatmul.mubr.f32.gmra.mrb[0].mxu0 %v1311
        %v1628 = vpop.f32.mrb[0].mxu0
        %v1629 = vadd.f32 %v1458, %v1628
        %v1630 = vpop.f32.mrb[0].mxu0
        %v1631 = vadd.f32 %v1462, %v1630
        %1632 = vmatprep.mubr.f32.mxu0 %v1314
        %1633 = vmatmul.mubr.f32.gmra.mrb[0].mxu0 %v1313
        %v1634 = vpop.f32.mrb[0].mxu0
        %v1635 = vadd.f32 %v1458, %v1634
        %v1636 = vpop.f32.mrb[0].mxu0
        %v1637 = vadd.f32 %v1462, %v1636
        %1638 = vmatprep.mubr.f32.mxu0 %v1316
        %1639 = vmatmul.mubr.f32.gmra.mrb[0].mxu0 %v1315
        %v1640 = vpop.f32.mrb[0].mxu0
        %v1641 = vadd.f32 %v1458, %v1640
        %v1642 = vpop.f32.mrb[0].mxu0
        %v1643 = vadd.f32 %v1462, %v1642
        %1644 = vdwg.mxu0
        %v1645 = vld [vmem:[#allocation11] sm:$0xff]
        %v1646 = vld [vmem:[#allocation11 + $0x8] sm:$0xff]
        %v1647 = vld [vmem:[#allocation11 + $0x10] sm:$0xff]
        %v1648 = vld [vmem:[#allocation11 + $0x18] sm:$0xff]
        %v1649 = vld [vmem:[#allocation11 + $0x20] sm:$0xff]
        %v1650 = vld [vmem:[#allocation11 + $0x28] sm:$0xff]
        %v1651 = vld [vmem:[#allocation11 + $0x30] sm:$0xff]
        %v1652 = vld [vmem:[#allocation11 + $0x38] sm:$0xff]
        %v1653 = vld [vmem:[#allocation11 + $0x40] sm:$0xff]
        %v1654 = vld [vmem:[#allocation11 + $0x48] sm:$0xff]
        %v1655 = vld [vmem:[#allocation11 + $0x50] sm:$0xff]
        %v1656 = vld [vmem:[#allocation11 + $0x58] sm:$0xff]
        %v1657 = vld [vmem:[#allocation11 + $0x60] sm:$0xff]
        %v1658 = vld [vmem:[#allocation11 + $0x68] sm:$0xff]
        %v1659 = vld [vmem:[#allocation11 + $0x70] sm:$0xff]
        %v1660 = vld [vmem:[#allocation11 + $0x78] sm:$0xff]
        %v1661 = vld [vmem:[#allocation11 + $0x80] sm:$0xff]
        %v1662 = vld [vmem:[#allocation11 + $0x88] sm:$0xff]
        %v1663 = vld [vmem:[#allocation11 + $0x90] sm:$0xff]
        %v1664 = vld [vmem:[#allocation11 + $0x98] sm:$0xff]
        %v1665 = vld [vmem:[#allocation11 + $0xa0] sm:$0xff]
        %v1666 = vld [vmem:[#allocation11 + $0xa8] sm:$0xff]
        %v1667 = vld [vmem:[#allocation11 + $0xb0] sm:$0xff]
        %v1668 = vld [vmem:[#allocation11 + $0xb8] sm:$0xff]
        %v1669 = vld [vmem:[#allocation11 + $0xc0] sm:$0xff]
        %v1670 = vld [vmem:[#allocation11 + $0xc8] sm:$0xff]
        %v1671 = vld [vmem:[#allocation11 + $0xd0] sm:$0xff]
        %v1672 = vld [vmem:[#allocation11 + $0xd8] sm:$0xff]
        %v1673 = vld [vmem:[#allocation11 + $0xe0] sm:$0xff]
        %v1674 = vld [vmem:[#allocation11 + $0xe8] sm:$0xff]
        %v1675 = vld [vmem:[#allocation11 + $0xf0] sm:$0xff]
        %v1676 = vld [vmem:[#allocation11 + $0xf8] sm:$0xff]
        %v1677 = vld [vmem:[#allocation11 + $0x100] sm:$0xff]
        %v1678 = vld [vmem:[#allocation11 + $0x108] sm:$0xff]
        %v1679 = vld [vmem:[#allocation11 + $0x110] sm:$0xff]
        %v1680 = vld [vmem:[#allocation11 + $0x118] sm:$0xff]
        %v1681 = vld [vmem:[#allocation11 + $0x120] sm:$0xff]
        %v1682 = vld [vmem:[#allocation11 + $0x128] sm:$0xff]
        %v1683 = vld [vmem:[#allocation11 + $0x130] sm:$0xff]
        %v1684 = vld [vmem:[#allocation11 + $0x138] sm:$0xff]
        %v1685 = vld [vmem:[#allocation11 + $0x140] sm:$0xff]
        %v1686 = vld [vmem:[#allocation11 + $0x148] sm:$0xff]
        %v1687 = vld [vmem:[#allocation11 + $0x150] sm:$0xff]
        %v1688 = vld [vmem:[#allocation11 + $0x158] sm:$0xff]
        %v1689 = vld [vmem:[#allocation11 + $0x160] sm:$0xff]
        %v1690 = vld [vmem:[#allocation11 + $0x168] sm:$0xff]
        %v1691 = vld [vmem:[#allocation11 + $0x170] sm:$0xff]
        %v1692 = vld [vmem:[#allocation11 + $0x178] sm:$0xff]
        %v1693 = vld [vmem:[#allocation11 + $0x180] sm:$0xff]
        %v1694 = vld [vmem:[#allocation11 + $0x188] sm:$0xff]
        %v1695 = vld [vmem:[#allocation11 + $0x190] sm:$0xff]
        %v1696 = vld [vmem:[#allocation11 + $0x198] sm:$0xff]
        %v1697 = vld [vmem:[#allocation11 + $0x1a0] sm:$0xff]
        %v1698 = vld [vmem:[#allocation11 + $0x1a8] sm:$0xff]
        %v1699 = vld [vmem:[#allocation11 + $0x1b0] sm:$0xff]
        %v1700 = vld [vmem:[#allocation11 + $0x1b8] sm:$0xff]
        %v1701 = vld [vmem:[#allocation11 + $0x1c0] sm:$0xff]
        %v1702 = vld [vmem:[#allocation11 + $0x1c8] sm:$0xff]
        %v1703 = vld [vmem:[#allocation11 + $0x1d0] sm:$0xff]
        %v1704 = vld [vmem:[#allocation11 + $0x1d8] sm:$0xff]
        %v1705 = vld [vmem:[#allocation11 + $0x1e0] sm:$0xff]
        %v1706 = vld [vmem:[#allocation11 + $0x1e8] sm:$0xff]
        %v1707 = vld [vmem:[#allocation11 + $0x1f0] sm:$0xff]
        %v1708 = vld [vmem:[#allocation11 + $0x1f8] sm:$0xff]
        %v1709 = vld [vmem:[%s9] sm:$0x3]
        %v1711 = vlaneseq
        %v1712 = vshrl.u32 %v1711, 7
        %v1713 = vsub.s32 0, %v1712
        %v1714 = vrot.slane %v1709, %v1713
        %v1715 = vlaneseq
        %v1716 = vshrl.u32 %v1715, 7
        %v1717 = vsub.s32 1, %v1716
        %v1718 = vrot.slane %v1709, %v1717
        %1721 = vmatprep.subr.mxu0 %v1646
        %1722 = vmatpush1.msra.mxu0 %v1645
        %1723 = vmatprep.subr.mxu0 %v1648
        %1724 = vmatpush1.msra.mxu0 %v1647
        %1725 = vmatprep.subr.mxu0 %v1650
        %1726 = vmatpush1.msra.mxu0 %v1649
        %1727 = vmatprep.subr.mxu0 %v1652
        %1728 = vmatpush1.msra.mxu0 %v1651
        %1729 = vmatprep.subr.mxu0 %v1654
        %1730 = vmatpush1.msra.mxu0 %v1653
        %1731 = vmatprep.subr.mxu0 %v1656
        %1732 = vmatpush1.msra.mxu0 %v1655
        %1733 = vmatprep.subr.mxu0 %v1658
        %1734 = vmatpush1.msra.mxu0 %v1657
        %1735 = vmatprep.subr.mxu0 %v1660
        %1736 = vmatpush1.msra.mxu0 %v1659
        %1737 = vmatprep.subr.mxu0 %v1662
        %1738 = vmatpush1.msra.mxu0 %v1661
        %1739 = vmatprep.subr.mxu0 %v1664
        %1740 = vmatpush1.msra.mxu0 %v1663
        %1741 = vmatprep.subr.mxu0 %v1666
        %1742 = vmatpush1.msra.mxu0 %v1665
        %1743 = vmatprep.subr.mxu0 %v1668
        %1744 = vmatpush1.msra.mxu0 %v1667
        %1745 = vmatprep.subr.mxu0 %v1670
        %1746 = vmatpush1.msra.mxu0 %v1669
        %1747 = vmatprep.subr.mxu0 %v1672
        %1748 = vmatpush1.msra.mxu0 %v1671
        %1749 = vmatprep.subr.mxu0 %v1674
        %1750 = vmatpush1.msra.mxu0 %v1673
        %1751 = vmatprep.subr.mxu0 %v1676
        %1752 = vmatpush1.msra.mxu0 %v1675
        %1753 = vmatprep.subr.mxu0 %v1678
        %1754 = vmatpush1.msra.mxu0 %v1677
        %1755 = vmatprep.subr.mxu0 %v1680
        %1756 = vmatpush1.msra.mxu0 %v1679
        %1757 = vmatprep.subr.mxu0 %v1682
        %1758 = vmatpush1.msra.mxu0 %v1681
        %1759 = vmatprep.subr.mxu0 %v1684
        %1760 = vmatpush1.msra.mxu0 %v1683
        %1761 = vmatprep.subr.mxu0 %v1686
        %1762 = vmatpush1.msra.mxu0 %v1685
        %1763 = vmatprep.subr.mxu0 %v1688
        %1764 = vmatpush1.msra.mxu0 %v1687
        %1765 = vmatprep.subr.mxu0 %v1690
        %1766 = vmatpush1.msra.mxu0 %v1689
        %1767 = vmatprep.subr.mxu0 %v1692
        %1768 = vmatpush1.msra.mxu0 %v1691
        %1769 = vmatprep.subr.mxu0 %v1694
        %1770 = vmatpush1.msra.mxu0 %v1693
        %1771 = vmatprep.subr.mxu0 %v1696
        %1772 = vmatpush1.msra.mxu0 %v1695
        %1773 = vmatprep.subr.mxu0 %v1698
        %1774 = vmatpush1.msra.mxu0 %v1697
        %1775 = vmatprep.subr.mxu0 %v1700
        %1776 = vmatpush1.msra.mxu0 %v1699
        %1777 = vmatprep.subr.mxu0 %v1702
        %1778 = vmatpush1.msra.mxu0 %v1701
        %1779 = vmatprep.subr.mxu0 %v1704
        %1780 = vmatpush1.msra.mxu0 %v1703
        %1781 = vmatprep.subr.mxu0 %v1706
        %1782 = vmatpush1.msra.mxu0 %v1705
        %1783 = vmatprep.subr.mxu0 %v1708
        %1784 = vmatpush1.msra.mxu0 %v1707
        %1785 = vmatprep.mubr.f32.mxu0 %v795
        %1786 = vmatmul.mubr.f32.gmra.mrb[0].mxu0 %v794
        %v1787 = vpop.f32.mrb[0].mxu0
        %v1788 = vadd.f32 %v1714, %v1787
        %v1789 = vpop.f32.mrb[0].mxu0
        %v1790 = vadd.f32 %v1718, %v1789
        %1791 = vmatprep.mubr.f32.mxu0 %v797
        %1792 = vmatmul.mubr.f32.gmra.mrb[0].mxu0 %v796
        %v1793 = vpop.f32.mrb[0].mxu0
        %v1794 = vadd.f32 %v1714, %v1793
        %v1795 = vpop.f32.mrb[0].mxu0
        %v1796 = vadd.f32 %v1718, %v1795
        %1797 = vmatprep.mubr.f32.mxu0 %v799
        %1798 = vmatmul.mubr.f32.gmra.mrb[0].mxu0 %v798
        %v1799 = vpop.f32.mrb[0].mxu0
        %v1800 = vadd.f32 %v1714, %v1799
        %v1801 = vpop.f32.mrb[0].mxu0
        %v1802 = vadd.f32 %v1718, %v1801
        %1803 = vmatprep.mubr.f32.mxu0 %v801
        %1804 = vmatmul.mubr.f32.gmra.mrb[0].mxu0 %v800
        %v1805 = vpop.f32.mrb[0].mxu0
        %v1806 = vadd.f32 %v1714, %v1805
        %v1807 = vpop.f32.mrb[0].mxu0
        %v1808 = vadd.f32 %v1718, %v1807
        %1809 = vdwg.mxu0
        %v1810 = vld [vmem:[#allocation13] sm:$0xff]
        %v1811 = vld [vmem:[#allocation13 + $0x8] sm:$0xff]
        %v1812 = vld [vmem:[#allocation13 + $0x10] sm:$0xff]
        %v1813 = vld [vmem:[#allocation13 + $0x18] sm:$0xff]
        %v1814 = vld [vmem:[#allocation13 + $0x20] sm:$0xff]
        %v1815 = vld [vmem:[#allocation13 + $0x28] sm:$0xff]
        %v1816 = vld [vmem:[#allocation13 + $0x30] sm:$0xff]
        %v1817 = vld [vmem:[#allocation13 + $0x38] sm:$0xff]
        %v1818 = vld [vmem:[#allocation13 + $0x40] sm:$0xff]
        %v1819 = vld [vmem:[#allocation13 + $0x48] sm:$0xff]
        %v1820 = vld [vmem:[#allocation13 + $0x50] sm:$0xff]
        %v1821 = vld [vmem:[#allocation13 + $0x58] sm:$0xff]
        %v1822 = vld [vmem:[#allocation13 + $0x60] sm:$0xff]
        %v1823 = vld [vmem:[#allocation13 + $0x68] sm:$0xff]
        %v1824 = vld [vmem:[#allocation13 + $0x70] sm:$0xff]
        %v1825 = vld [vmem:[#allocation13 + $0x78] sm:$0xff]
        %v1826 = vld [vmem:[#allocation13 + $0x80] sm:$0xff]
        %v1827 = vld [vmem:[#allocation13 + $0x88] sm:$0xff]
        %v1828 = vld [vmem:[#allocation13 + $0x90] sm:$0xff]
        %v1829 = vld [vmem:[#allocation13 + $0x98] sm:$0xff]
        %v1830 = vld [vmem:[#allocation13 + $0xa0] sm:$0xff]
        %v1831 = vld [vmem:[#allocation13 + $0xa8] sm:$0xff]
        %v1832 = vld [vmem:[#allocation13 + $0xb0] sm:$0xff]
        %v1833 = vld [vmem:[#allocation13 + $0xb8] sm:$0xff]
        %v1834 = vld [vmem:[#allocation13 + $0xc0] sm:$0xff]
        %v1835 = vld [vmem:[#allocation13 + $0xc8] sm:$0xff]
        %v1836 = vld [vmem:[#allocation13 + $0xd0] sm:$0xff]
        %v1837 = vld [vmem:[#allocation13 + $0xd8] sm:$0xff]
        %v1838 = vld [vmem:[#allocation13 + $0xe0] sm:$0xff]
        %v1839 = vld [vmem:[#allocation13 + $0xe8] sm:$0xff]
        %v1840 = vld [vmem:[#allocation13 + $0xf0] sm:$0xff]
        %v1841 = vld [vmem:[#allocation13 + $0xf8] sm:$0xff]
        %v1842 = vld [vmem:[#allocation13 + $0x100] sm:$0xff]
        %v1843 = vld [vmem:[#allocation13 + $0x108] sm:$0xff]
        %v1844 = vld [vmem:[#allocation13 + $0x110] sm:$0xff]
        %v1845 = vld [vmem:[#allocation13 + $0x118] sm:$0xff]
        %v1846 = vld [vmem:[#allocation13 + $0x120] sm:$0xff]
        %v1847 = vld [vmem:[#allocation13 + $0x128] sm:$0xff]
        %v1848 = vld [vmem:[#allocation13 + $0x130] sm:$0xff]
        %v1849 = vld [vmem:[#allocation13 + $0x138] sm:$0xff]
        %v1850 = vld [vmem:[#allocation13 + $0x140] sm:$0xff]
        %v1851 = vld [vmem:[#allocation13 + $0x148] sm:$0xff]
        %v1852 = vld [vmem:[#allocation13 + $0x150] sm:$0xff]
        %v1853 = vld [vmem:[#allocation13 + $0x158] sm:$0xff]
        %v1854 = vld [vmem:[#allocation13 + $0x160] sm:$0xff]
        %v1855 = vld [vmem:[#allocation13 + $0x168] sm:$0xff]
        %v1856 = vld [vmem:[#allocation13 + $0x170] sm:$0xff]
        %v1857 = vld [vmem:[#allocation13 + $0x178] sm:$0xff]
        %v1858 = vld [vmem:[#allocation13 + $0x180] sm:$0xff]
        %v1859 = vld [vmem:[#allocation13 + $0x188] sm:$0xff]
        %v1860 = vld [vmem:[#allocation13 + $0x190] sm:$0xff]
        %v1861 = vld [vmem:[#allocation13 + $0x198] sm:$0xff]
        %v1862 = vld [vmem:[#allocation13 + $0x1a0] sm:$0xff]
        %v1863 = vld [vmem:[#allocation13 + $0x1a8] sm:$0xff]
        %v1864 = vld [vmem:[#allocation13 + $0x1b0] sm:$0xff]
        %v1865 = vld [vmem:[#allocation13 + $0x1b8] sm:$0xff]
        %v1866 = vld [vmem:[#allocation13 + $0x1c0] sm:$0xff]
        %v1867 = vld [vmem:[#allocation13 + $0x1c8] sm:$0xff]
        %v1868 = vld [vmem:[#allocation13 + $0x1d0] sm:$0xff]
        %v1869 = vld [vmem:[#allocation13 + $0x1d8] sm:$0xff]
        %v1870 = vld [vmem:[#allocation13 + $0x1e0] sm:$0xff]
        %v1871 = vld [vmem:[#allocation13 + $0x1e8] sm:$0xff]
        %v1872 = vld [vmem:[#allocation13 + $0x1f0] sm:$0xff]
        %v1873 = vld [vmem:[#allocation13 + $0x1f8] sm:$0xff]
        %vm1874 = vcmask 261120
        %v1876 = vsel %vm1874, %v1534, 0
        %v1879 = vsel %vm1874, %v1540, 0
        %v1882 = vsel %vm1874, %v1623, 0
        %v1885 = vsel %vm1874, %v1629, 0
        %1887 = vmatprep.subr.mxu0 0.0
        %1888 = vmatpush1.xpose.msra.mxu0 %v1882
        %1889 = vmatprep.subr.mxu0 0.0
        %1890 = vmatpush1.xpose.msra.mxu0 %v1885
        %1891 = vmatprep.subr.mxu0 0.0
        %1892 = vmatpush1.xpose.msra.mxu0 0.0
        %1893 = vmatprep.subr.mxu0 0.0
        %1894 = vmatpush1.xpose.msra.mxu0 0.0
        %1895 = vmatprep.subr.mxu0 0.0
        %1896 = vmatpush1.xpose.msra.mxu0 0.0
        %1897 = vmatprep.subr.mxu0 0.0
        %1898 = vmatpush1.xpose.msra.mxu0 0.0
        %1899 = vmatprep.subr.mxu0 0.0
        %1900 = vmatpush1.xpose.msra.mxu0 0.0
        %1901 = vmatprep.subr.mxu0 0.0
        %1902 = vmatpush1.xpose.msra.mxu0 0.0
        %1903 = vmatprep.subr.mxu0 0.0
        %1904 = vmatpush1.xpose.msra.mxu0 0.0
        %1905 = vmatprep.subr.mxu0 0.0
        %1906 = vmatpush1.xpose.msra.mxu0 0.0
        %1907 = vmatprep.subr.mxu0 0.0
        %1908 = vmatpush1.xpose.msra.mxu0 0.0
        %1909 = vmatprep.subr.mxu0 0.0
        %1910 = vmatpush1.xpose.msra.mxu0 0.0
        %1911 = vmatprep.subr.mxu0 0.0
        %1912 = vmatpush1.xpose.msra.mxu0 0.0
        %1913 = vmatprep.subr.mxu0 0.0
        %1914 = vmatpush1.xpose.msra.mxu0 0.0
        %1915 = vmatprep.subr.mxu0 0.0
        %1916 = vmatpush1.xpose.msra.mxu0 0.0
        %1917 = vmatprep.subr.mxu0 0.0
        %1918 = vmatpush1.xpose.msra.mxu0 0.0
        %1919 = vmatprep.subr.mxu0 0.0
        %1920 = vmatpush1.xpose.msra.mxu0 0.0
        %1921 = vmatprep.subr.mxu0 0.0
        %1922 = vmatpush1.xpose.msra.mxu0 0.0
        %1923 = vmatprep.subr.mxu0 0.0
        %1924 = vmatpush1.xpose.msra.mxu0 0.0
        %1925 = vmatprep.subr.mxu0 0.0
        %1926 = vmatpush1.xpose.msra.mxu0 0.0
        %1927 = vmatprep.subr.mxu0 0.0
        %1928 = vmatpush1.xpose.msra.mxu0 0.0
        %1929 = vmatprep.subr.mxu0 0.0
        %1930 = vmatpush1.xpose.msra.mxu0 0.0
        %1931 = vmatprep.subr.mxu0 0.0
        %1932 = vmatpush1.xpose.msra.mxu0 0.0
        %1933 = vmatprep.subr.mxu0 0.0
        %1934 = vmatpush1.xpose.msra.mxu0 0.0
        %1935 = vmatprep.subr.mxu0 0.0
        %1936 = vmatpush1.xpose.msra.mxu0 0.0
        %1937 = vmatprep.subr.mxu0 0.0
        %1938 = vmatpush1.xpose.msra.mxu0 0.0
        %1939 = vmatprep.subr.mxu0 0.0
        %1940 = vmatpush1.xpose.msra.mxu0 0.0
        %1941 = vmatprep.subr.mxu0 0.0
        %1942 = vmatpush1.xpose.msra.mxu0 0.0
        %1943 = vmatprep.subr.mxu0 0.0
        %1944 = vmatpush1.xpose.msra.mxu0 0.0
        %1945 = vmatprep.subr.mxu0 0.0
        %1946 = vmatpush1.xpose.msra.mxu0 0.0
        %1947 = vmatprep.subr.mxu0 0.0
        %1948 = vmatpush1.xpose.msra.mxu0 0.0
        %1949 = vmatprep.subr.mxu0 0.0
        %1950 = vmatpush1.xpose.msra.mxu0 0.0
        %1951 = vmatprep.mubr.f32.mxu0 0.0
        %1952 = vmatmul.mubr.f32.gmra.mrb[0].mxu0 %v1876
        %v1953 = vpop.f32.mrb[0].mxu0
        %v1954 = vadd.f32 0.0, %v1953
        %v1955 = vpop.f32.mrb[0].mxu0
        %1956 = vmatprep.mubr.f32.mxu0 0.0
        %1957 = vmatmul.mubr.f32.gmra.mrb[0].mxu0 %v1879
        %v1958 = vpop.f32.mrb[0].mxu0
        %v1959 = vadd.f32 0.0, %v1958
        %v1960 = vpop.f32.mrb[0].mxu0
        %1961 = vdwg.mxu0
        %v1963 = vsel %vm1874, %v1546, 0
        %v1966 = vsel %vm1874, %v1552, 0
        %v1969 = vsel %vm1874, %v1635, 0
        %v1972 = vsel %vm1874, %v1641, 0
        %1974 = vmatprep.subr.mxu0 0.0
        %1975 = vmatpush1.xpose.msra.mxu0 %v1969
        %1976 = vmatprep.subr.mxu0 0.0
        %1977 = vmatpush1.xpose.msra.mxu0 %v1972
        %1978 = vmatprep.subr.mxu0 0.0
        %1979 = vmatpush1.xpose.msra.mxu0 0.0
        %1980 = vmatprep.subr.mxu0 0.0
        %1981 = vmatpush1.xpose.msra.mxu0 0.0
        %1982 = vmatprep.subr.mxu0 0.0
        %1983 = vmatpush1.xpose.msra.mxu0 0.0
        %1984 = vmatprep.subr.mxu0 0.0
        %1985 = vmatpush1.xpose.msra.mxu0 0.0
        %1986 = vmatprep.subr.mxu0 0.0
        %1987 = vmatpush1.xpose.msra.mxu0 0.0
        %1988 = vmatprep.subr.mxu0 0.0
        %1989 = vmatpush1.xpose.msra.mxu0 0.0
        %1990 = vmatprep.subr.mxu0 0.0
        %1991 = vmatpush1.xpose.msra.mxu0 0.0
        %1992 = vmatprep.subr.mxu0 0.0
        %1993 = vmatpush1.xpose.msra.mxu0 0.0
        %1994 = vmatprep.subr.mxu0 0.0
        %1995 = vmatpush1.xpose.msra.mxu0 0.0
        %1996 = vmatprep.subr.mxu0 0.0
        %1997 = vmatpush1.xpose.msra.mxu0 0.0
        %1998 = vmatprep.subr.mxu0 0.0
        %1999 = vmatpush1.xpose.msra.mxu0 0.0
        %2000 = vmatprep.subr.mxu0 0.0
        %2001 = vmatpush1.xpose.msra.mxu0 0.0
        %2002 = vmatprep.subr.mxu0 0.0
        %2003 = vmatpush1.xpose.msra.mxu0 0.0
        %2004 = vmatprep.subr.mxu0 0.0
        %2005 = vmatpush1.xpose.msra.mxu0 0.0
        %2006 = vmatprep.subr.mxu0 0.0
        %2007 = vmatpush1.xpose.msra.mxu0 0.0
        %2008 = vmatprep.subr.mxu0 0.0
        %2009 = vmatpush1.xpose.msra.mxu0 0.0
        %2010 = vmatprep.subr.mxu0 0.0
        %2011 = vmatpush1.xpose.msra.mxu0 0.0
        %2012 = vmatprep.subr.mxu0 0.0
        %2013 = vmatpush1.xpose.msra.mxu0 0.0
        %2014 = vmatprep.subr.mxu0 0.0
        %2015 = vmatpush1.xpose.msra.mxu0 0.0
        %2016 = vmatprep.subr.mxu0 0.0
        %2017 = vmatpush1.xpose.msra.mxu0 0.0
        %2018 = vmatprep.subr.mxu0 0.0
        %2019 = vmatpush1.xpose.msra.mxu0 0.0
        %2020 = vmatprep.subr.mxu0 0.0
        %2021 = vmatpush1.xpose.msra.mxu0 0.0
        %2022 = vmatprep.subr.mxu0 0.0
        %2023 = vmatpush1.xpose.msra.mxu0 0.0
        %2024 = vmatprep.subr.mxu0 0.0
        %2025 = vmatpush1.xpose.msra.mxu0 0.0
        %2026 = vmatprep.subr.mxu0 0.0
        %2027 = vmatpush1.xpose.msra.mxu0 0.0
        %2028 = vmatprep.subr.mxu0 0.0
        %2029 = vmatpush1.xpose.msra.mxu0 0.0
        %2030 = vmatprep.subr.mxu0 0.0
        %2031 = vmatpush1.xpose.msra.mxu0 0.0
        %2032 = vmatprep.subr.mxu0 0.0
        %2033 = vmatpush1.xpose.msra.mxu0 0.0
        %2034 = vmatprep.subr.mxu0 0.0
        %2035 = vmatpush1.xpose.msra.mxu0 0.0
        %2036 = vmatprep.subr.mxu0 0.0
        %2037 = vmatpush1.xpose.msra.mxu0 0.0
        %2038 = vmatprep.mubr.f32.mxu0 0.0
        %2039 = vmatmul.mubr.f32.gmra.mrb[0].mxu0 %v1963
        %v2040 = vpop.f32.mrb[0].mxu0
        %v2041 = vadd.f32 0.0, %v2040
        %v2042 = vpop.f32.mrb[0].mxu0
        %2043 = vmatprep.mubr.f32.mxu0 0.0
        %2044 = vmatmul.mubr.f32.gmra.mrb[0].mxu0 %v1966
        %v2045 = vpop.f32.mrb[0].mxu0
        %v2046 = vadd.f32 0.0, %v2045
        %v2047 = vpop.f32.mrb[0].mxu0
        %2048 = vdwg.mxu0
        %vm2049 = vcmask 130048
        %v2050 = vsel %vm2049, %v1954, -inf
        %2051 = vmax.xlane.f32.xlu0 %v2050
        %v2052 = vpop.xlane.xlu0 %2051
        %v2053 = vsel %vm2049, %v1959, -inf
        %2054 = vmax.xlane.f32.xlu0 %v2053
        %v2055 = vpop.xlane.xlu0 %2054
        %v2056 = vsel %vm2049, %v2041, -inf
        %2057 = vmax.xlane.f32.xlu0 %v2056
        %v2058 = vpop.xlane.xlu0 %2057
        %v2059 = vsel %vm2049, %v2046, -inf
        %2060 = vmax.xlane.f32.xlu0 %v2059
        %v2061 = vpop.xlane.xlu0 %2060
        %v2062 = vsub.f32 %v1954, %v2052
        %v2063 = vsub.f32 %v1959, %v2055
        %v2064 = vsub.f32 %v2041, %v2058
        %v2065 = vsub.f32 %v2046, %v2061
        %v2066 = vmul.f32 %v2062, 1.442695
        %v2067 = vpow.pop %v2066
        %v2068 = vmul.f32 %v2063, 1.442695
        %v2069 = vpow.pop %v2068
        %v2070 = vmul.f32 %v2064, 1.442695
        %v2071 = vpow.pop %v2070
        %v2072 = vmul.f32 %v2065, 1.442695
        %v2073 = vpow.pop %v2072
        %v2074 = vsel %vm2049, %v2067, 0.0
        %2075 = vadd.xlane.f32.xlu0 %v2074
        %v2076 = vpop.xlane.xlu0 %2075
        %v2077 = vsel %vm2049, %v2069, 0.0
        %2078 = vadd.xlane.f32.xlu0 %v2077
        %v2079 = vpop.xlane.xlu0 %2078
        %v2080 = vsel %vm2049, %v2071, 0.0
        %2081 = vadd.xlane.f32.xlu0 %v2080
        %v2082 = vpop.xlane.xlu0 %2081
        %v2083 = vsel %vm2049, %v2073, 0.0
        %2084 = vadd.xlane.f32.xlu0 %v2083
        %v2085 = vpop.xlane.xlu0 %2084
        %v2086 = vrcp.pop %v2076
        %v2087 = vrcp.pop %v2079
        %v2088 = vrcp.pop %v2082
        %v2089 = vrcp.pop %v2085
        %v2090 = vmul.f32 %v2076, %v2086
        %v2091 = vmul.f32 %v2079, %v2087
        %v2092 = vmul.f32 %v2082, %v2088
        %v2093 = vmul.f32 %v2085, %v2089
        %v2094 = vsub.f32 2.0, %v2090
        %v2095 = vsub.f32 2.0, %v2091
        %v2096 = vsub.f32 2.0, %v2092
        %v2097 = vsub.f32 2.0, %v2093
        %v2098 = vmul.f32 %v2086, %v2094
        %v2099 = vmul.f32 %v2087, %v2095
        %v2100 = vmul.f32 %v2088, %v2096
        %v2101 = vmul.f32 %v2089, %v2097
        %v2102 = vmul.f32 %v2067, %v2098
        %v2103 = vmul.f32 %v2069, %v2099
        %v2104 = vmul.f32 %v2071, %v2100
        %v2105 = vmul.f32 %v2073, %v2101
        %v2107 = vsel %vm2049, %v2102, 0
        %v2110 = vsel %vm2049, %v2103, 0
        %2112 = vmatprep.subr.mxu0 0.0
        %2113 = vmatpush1.msra.mxu0 %v1788
        %2114 = vmatprep.subr.mxu0 0.0
        %2115 = vmatpush1.msra.mxu0 %v1794
        %2116 = vmatprep.subr.mxu0 0.0
        %2117 = vmatpush1.msra.mxu0 0.0
        %2118 = vmatprep.subr.mxu0 0.0
        %2119 = vmatpush1.msra.mxu0 0.0
        %2120 = vmatprep.subr.mxu0 0.0
        %2121 = vmatpush1.msra.mxu0 0.0
        %2122 = vmatprep.subr.mxu0 0.0
        %2123 = vmatpush1.msra.mxu0 0.0
        %2124 = vmatprep.subr.mxu0 0.0
        %2125 = vmatpush1.msra.mxu0 0.0
        %2126 = vmatprep.subr.mxu0 0.0
        %2127 = vmatpush1.msra.mxu0 0.0
        %2128 = vmatprep.subr.mxu0 0.0
        %2129 = vmatpush1.msra.mxu0 0.0
        %2130 = vmatprep.subr.mxu0 0.0
        %2131 = vmatpush1.msra.mxu0 0.0
        %2132 = vmatprep.subr.mxu0 0.0
        %2133 = vmatpush1.msra.mxu0 0.0
        %2134 = vmatprep.subr.mxu0 0.0
        %2135 = vmatpush1.msra.mxu0 0.0
        %2136 = vmatprep.subr.mxu0 0.0
        %2137 = vmatpush1.msra.mxu0 0.0
        %2138 = vmatprep.subr.mxu0 0.0
        %2139 = vmatpush1.msra.mxu0 0.0
        %2140 = vmatprep.subr.mxu0 0.0
        %2141 = vmatpush1.msra.mxu0 0.0
        %2142 = vmatprep.subr.mxu0 0.0
        %2143 = vmatpush1.msra.mxu0 0.0
        %2144 = vmatprep.subr.mxu0 0.0
        %2145 = vmatpush1.msra.mxu0 0.0
        %2146 = vmatprep.subr.mxu0 0.0
        %2147 = vmatpush1.msra.mxu0 0.0
        %2148 = vmatprep.subr.mxu0 0.0
        %2149 = vmatpush1.msra.mxu0 0.0
        %2150 = vmatprep.subr.mxu0 0.0
        %2151 = vmatpush1.msra.mxu0 0.0
        %2152 = vmatprep.subr.mxu0 0.0
        %2153 = vmatpush1.msra.mxu0 0.0
        %2154 = vmatprep.subr.mxu0 0.0
        %2155 = vmatpush1.msra.mxu0 0.0
        %2156 = vmatprep.subr.mxu0 0.0
        %2157 = vmatpush1.msra.mxu0 0.0
        %2158 = vmatprep.subr.mxu0 0.0
        %2159 = vmatpush1.msra.mxu0 0.0
        %2160 = vmatprep.subr.mxu0 0.0
        %2161 = vmatpush1.msra.mxu0 0.0
        %2162 = vmatprep.subr.mxu0 0.0
        %2163 = vmatpush1.msra.mxu0 0.0
        %2164 = vmatprep.subr.mxu0 0.0
        %2165 = vmatpush1.msra.mxu0 0.0
        %2166 = vmatprep.subr.mxu0 0.0
        %2167 = vmatpush1.msra.mxu0 0.0
        %2168 = vmatprep.subr.mxu0 0.0
        %2169 = vmatpush1.msra.mxu0 0.0
        %2170 = vmatprep.subr.mxu0 0.0
        %2171 = vmatpush1.msra.mxu0 0.0
        %2172 = vmatprep.subr.mxu0 0.0
        %2173 = vmatpush1.msra.mxu0 0.0
        %2174 = vmatprep.subr.mxu0 0.0
        %2175 = vmatpush1.msra.mxu0 0.0
        %2176 = vmatprep.mubr.f32.mxu0 0.0
        %2177 = vmatmul.mubr.f32.gmra.mrb[0].mxu0 %v2107
        %v2178 = vpop.f32.mrb[0].mxu0
        %v2179 = vadd.f32 0.0, %v2178
        %v2180 = vpop.f32.mrb[0].mxu0
        %2181 = vmatprep.mubr.f32.mxu0 0.0
        %2182 = vmatmul.mubr.f32.gmra.mrb[0].mxu0 %v2110
        %v2183 = vpop.f32.mrb[0].mxu0
        %v2184 = vadd.f32 0.0, %v2183
        %v2185 = vpop.f32.mrb[0].mxu0
        %2186 = vdwg.mxu0
        %v2188 = vsel %vm2049, %v2104, 0
        %v2191 = vsel %vm2049, %v2105, 0
        %2193 = vmatprep.subr.mxu0 0.0
        %2194 = vmatpush1.msra.mxu0 %v1800
        %2195 = vmatprep.subr.mxu0 0.0
        %2196 = vmatpush1.msra.mxu0 %v1806
        %2197 = vmatprep.subr.mxu0 0.0
        %2198 = vmatpush1.msra.mxu0 0.0
        %2199 = vmatprep.subr.mxu0 0.0
        %2200 = vmatpush1.msra.mxu0 0.0
        %2201 = vmatprep.subr.mxu0 0.0
        %2202 = vmatpush1.msra.mxu0 0.0
        %2203 = vmatprep.subr.mxu0 0.0
        %2204 = vmatpush1.msra.mxu0 0.0
        %2205 = vmatprep.subr.mxu0 0.0
        %2206 = vmatpush1.msra.mxu0 0.0
        %2207 = vmatprep.subr.mxu0 0.0
        %2208 = vmatpush1.msra.mxu0 0.0
        %2209 = vmatprep.subr.mxu0 0.0
        %2210 = vmatpush1.msra.mxu0 0.0
        %2211 = vmatprep.subr.mxu0 0.0
        %2212 = vmatpush1.msra.mxu0 0.0
        %2213 = vmatprep.subr.mxu0 0.0
        %2214 = vmatpush1.msra.mxu0 0.0
        %2215 = vmatprep.subr.mxu0 0.0
        %2216 = vmatpush1.msra.mxu0 0.0
        %2217 = vmatprep.subr.mxu0 0.0
        %2218 = vmatpush1.msra.mxu0 0.0
        %2219 = vmatprep.subr.mxu0 0.0
        %2220 = vmatpush1.msra.mxu0 0.0
        %2221 = vmatprep.subr.mxu0 0.0
        %2222 = vmatpush1.msra.mxu0 0.0
        %2223 = vmatprep.subr.mxu0 0.0
        %2224 = vmatpush1.msra.mxu0 0.0
        %2225 = vmatprep.subr.mxu0 0.0
        %2226 = vmatpush1.msra.mxu0 0.0
        %2227 = vmatprep.subr.mxu0 0.0
        %2228 = vmatpush1.msra.mxu0 0.0
        %2229 = vmatprep.subr.mxu0 0.0
        %2230 = vmatpush1.msra.mxu0 0.0
        %2231 = vmatprep.subr.mxu0 0.0
        %2232 = vmatpush1.msra.mxu0 0.0
        %2233 = vmatprep.subr.mxu0 0.0
        %2234 = vmatpush1.msra.mxu0 0.0
        %2235 = vmatprep.subr.mxu0 0.0
        %2236 = vmatpush1.msra.mxu0 0.0
        %2237 = vmatprep.subr.mxu0 0.0
        %2238 = vmatpush1.msra.mxu0 0.0
        %2239 = vmatprep.subr.mxu0 0.0
        %2240 = vmatpush1.msra.mxu0 0.0
        %2241 = vmatprep.subr.mxu0 0.0
        %2242 = vmatpush1.msra.mxu0 0.0
        %2243 = vmatprep.subr.mxu0 0.0
        %2244 = vmatpush1.msra.mxu0 0.0
        %2245 = vmatprep.subr.mxu0 0.0
        %2246 = vmatpush1.msra.mxu0 0.0
        %2247 = vmatprep.subr.mxu0 0.0
        %2248 = vmatpush1.msra.mxu0 0.0
        %2249 = vmatprep.subr.mxu0 0.0
        %2250 = vmatpush1.msra.mxu0 0.0
        %2251 = vmatprep.subr.mxu0 0.0
        %2252 = vmatpush1.msra.mxu0 0.0
        %2253 = vmatprep.subr.mxu0 0.0
        %2254 = vmatpush1.msra.mxu0 0.0
        %2255 = vmatprep.subr.mxu0 0.0
        %2256 = vmatpush1.msra.mxu0 0.0
        %2257 = vmatprep.mubr.f32.mxu0 0.0
        %2258 = vmatmul.mubr.f32.gmra.mrb[0].mxu0 %v2188
        %v2259 = vpop.f32.mrb[0].mxu0
        %v2260 = vadd.f32 0.0, %v2259
        %v2261 = vpop.f32.mrb[0].mxu0
        %2262 = vmatprep.mubr.f32.mxu0 0.0
        %2263 = vmatmul.mubr.f32.gmra.mrb[0].mxu0 %v2191
        %v2264 = vpop.f32.mrb[0].mxu0
        %v2265 = vadd.f32 0.0, %v2264
        %v2266 = vpop.f32.mrb[0].mxu0
        %2267 = vdwg.mxu0
        %2268 = vrot.lane.b32.xlu0 %v1534, 96
        %v2269 = vpop.permute.xlu0 %2268
        %2270 = vrot.lane.b32.xlu0 %v1540, 96
        %v2271 = vpop.permute.xlu0 %2270
        %2272 = vrot.lane.b32.xlu0 %v1623, 96
        %v2273 = vpop.permute.xlu0 %2272
        %2274 = vrot.lane.b32.xlu0 %v1629, 96
        %v2275 = vpop.permute.xlu0 %2274
        %v2276 = vsel %vm1874, %v2269, 0
        %v2278 = vsel %vm1874, %v2271, 0
        %v2280 = vsel %vm1874, %v2273, 0
        %v2282 = vsel %vm1874, %v2275, 0
        %2284 = vmatprep.subr.mxu0 0.0
        %2285 = vmatpush1.xpose.msra.mxu0 %v2280
        %2286 = vmatprep.subr.mxu0 0.0
        %2287 = vmatpush1.xpose.msra.mxu0 %v2282
        %2288 = vmatprep.subr.mxu0 0.0
        %2289 = vmatpush1.xpose.msra.mxu0 0.0
        %2290 = vmatprep.subr.mxu0 0.0
        %2291 = vmatpush1.xpose.msra.mxu0 0.0
        %2292 = vmatprep.subr.mxu0 0.0
        %2293 = vmatpush1.xpose.msra.mxu0 0.0
        %2294 = vmatprep.subr.mxu0 0.0
        %2295 = vmatpush1.xpose.msra.mxu0 0.0
        %2296 = vmatprep.subr.mxu0 0.0
        %2297 = vmatpush1.xpose.msra.mxu0 0.0
        %2298 = vmatprep.subr.mxu0 0.0
        %2299 = vmatpush1.xpose.msra.mxu0 0.0
        %2300 = vmatprep.subr.mxu0 0.0
        %2301 = vmatpush1.xpose.msra.mxu0 0.0
        %2302 = vmatprep.subr.mxu0 0.0
        %2303 = vmatpush1.xpose.msra.mxu0 0.0
        %2304 = vmatprep.subr.mxu0 0.0
        %2305 = vmatpush1.xpose.msra.mxu0 0.0
        %2306 = vmatprep.subr.mxu0 0.0
        %2307 = vmatpush1.xpose.msra.mxu0 0.0
        %2308 = vmatprep.subr.mxu0 0.0
        %2309 = vmatpush1.xpose.msra.mxu0 0.0
        %2310 = vmatprep.subr.mxu0 0.0
        %2311 = vmatpush1.xpose.msra.mxu0 0.0
        %2312 = vmatprep.subr.mxu0 0.0
        %2313 = vmatpush1.xpose.msra.mxu0 0.0
        %2314 = vmatprep.subr.mxu0 0.0
        %2315 = vmatpush1.xpose.msra.mxu0 0.0
        %2316 = vmatprep.subr.mxu0 0.0
        %2317 = vmatpush1.xpose.msra.mxu0 0.0
        %2318 = vmatprep.subr.mxu0 0.0
        %2319 = vmatpush1.xpose.msra.mxu0 0.0
        %2320 = vmatprep.subr.mxu0 0.0
        %2321 = vmatpush1.xpose.msra.mxu0 0.0
        %2322 = vmatprep.subr.mxu0 0.0
        %2323 = vmatpush1.xpose.msra.mxu0 0.0
        %2324 = vmatprep.subr.mxu0 0.0
        %2325 = vmatpush1.xpose.msra.mxu0 0.0
        %2326 = vmatprep.subr.mxu0 0.0
        %2327 = vmatpush1.xpose.msra.mxu0 0.0
        %2328 = vmatprep.subr.mxu0 0.0
        %2329 = vmatpush1.xpose.msra.mxu0 0.0
        %2330 = vmatprep.subr.mxu0 0.0
        %2331 = vmatpush1.xpose.msra.mxu0 0.0
        %2332 = vmatprep.subr.mxu0 0.0
        %2333 = vmatpush1.xpose.msra.mxu0 0.0
        %2334 = vmatprep.subr.mxu0 0.0
        %2335 = vmatpush1.xpose.msra.mxu0 0.0
        %2336 = vmatprep.subr.mxu0 0.0
        %2337 = vmatpush1.xpose.msra.mxu0 0.0
        %2338 = vmatprep.subr.mxu0 0.0
        %2339 = vmatpush1.xpose.msra.mxu0 0.0
        %2340 = vmatprep.subr.mxu0 0.0
        %2341 = vmatpush1.xpose.msra.mxu0 0.0
        %2342 = vmatprep.subr.mxu0 0.0
        %2343 = vmatpush1.xpose.msra.mxu0 0.0
        %2344 = vmatprep.subr.mxu0 0.0
        %2345 = vmatpush1.xpose.msra.mxu0 0.0
        %2346 = vmatprep.subr.mxu0 0.0
        %2347 = vmatpush1.xpose.msra.mxu0 0.0
        %2348 = vmatprep.mubr.f32.mxu0 0.0
        %2349 = vmatmul.mubr.f32.gmra.mrb[0].mxu0 %v2276
        %v2350 = vpop.f32.mrb[0].mxu0
        %v2351 = vadd.f32 0.0, %v2350
        %v2352 = vpop.f32.mrb[0].mxu0
        %2353 = vmatprep.mubr.f32.mxu0 0.0
        %2354 = vmatmul.mubr.f32.gmra.mrb[0].mxu0 %v2278
        %v2355 = vpop.f32.mrb[0].mxu0
        %v2356 = vadd.f32 0.0, %v2355
        %v2357 = vpop.f32.mrb[0].mxu0
        %2358 = vdwg.mxu0
        %2359 = vrot.lane.b32.xlu0 %v1546, 96
        %v2360 = vpop.permute.xlu0 %2359
        %2361 = vrot.lane.b32.xlu0 %v1552, 96
        %v2362 = vpop.permute.xlu0 %2361
        %2363 = vrot.lane.b32.xlu0 %v1635, 96
        %v2364 = vpop.permute.xlu0 %2363
        %2365 = vrot.lane.b32.xlu0 %v1641, 96
        %v2366 = vpop.permute.xlu0 %2365
        %v2367 = vsel %vm1874, %v2360, 0
        %v2369 = vsel %vm1874, %v2362, 0
        %v2371 = vsel %vm1874, %v2364, 0
        %v2373 = vsel %vm1874, %v2366, 0
        %2375 = vmatprep.subr.mxu0 0.0
        %2376 = vmatpush1.xpose.msra.mxu0 %v2371
        %2377 = vmatprep.subr.mxu0 0.0
        %2378 = vmatpush1.xpose.msra.mxu0 %v2373
        %2379 = vmatprep.subr.mxu0 0.0
        %2380 = vmatpush1.xpose.msra.mxu0 0.0
        %2381 = vmatprep.subr.mxu0 0.0
        %2382 = vmatpush1.xpose.msra.mxu0 0.0
        %2383 = vmatprep.subr.mxu0 0.0
        %2384 = vmatpush1.xpose.msra.mxu0 0.0
        %2385 = vmatprep.subr.mxu0 0.0
        %2386 = vmatpush1.xpose.msra.mxu0 0.0
        %2387 = vmatprep.subr.mxu0 0.0
        %2388 = vmatpush1.xpose.msra.mxu0 0.0
        %2389 = vmatprep.subr.mxu0 0.0
        %2390 = vmatpush1.xpose.msra.mxu0 0.0
        %2391 = vmatprep.subr.mxu0 0.0
        %2392 = vmatpush1.xpose.msra.mxu0 0.0
        %2393 = vmatprep.subr.mxu0 0.0
        %2394 = vmatpush1.xpose.msra.mxu0 0.0
        %2395 = vmatprep.subr.mxu0 0.0
        %2396 = vmatpush1.xpose.msra.mxu0 0.0
        %2397 = vmatprep.subr.mxu0 0.0
        %2398 = vmatpush1.xpose.msra.mxu0 0.0
        %2399 = vmatprep.subr.mxu0 0.0
        %2400 = vmatpush1.xpose.msra.mxu0 0.0
        %2401 = vmatprep.subr.mxu0 0.0
        %2402 = vmatpush1.xpose.msra.mxu0 0.0
        %2403 = vmatprep.subr.mxu0 0.0
        %2404 = vmatpush1.xpose.msra.mxu0 0.0
        %2405 = vmatprep.subr.mxu0 0.0
        %2406 = vmatpush1.xpose.msra.mxu0 0.0
        %2407 = vmatprep.subr.mxu0 0.0
        %2408 = vmatpush1.xpose.msra.mxu0 0.0
        %2409 = vmatprep.subr.mxu0 0.0
        %2410 = vmatpush1.xpose.msra.mxu0 0.0
        %2411 = vmatprep.subr.mxu0 0.0
        %2412 = vmatpush1.xpose.msra.mxu0 0.0
        %2413 = vmatprep.subr.mxu0 0.0
        %2414 = vmatpush1.xpose.msra.mxu0 0.0
        %2415 = vmatprep.subr.mxu0 0.0
        %2416 = vmatpush1.xpose.msra.mxu0 0.0
        %2417 = vmatprep.subr.mxu0 0.0
        %2418 = vmatpush1.xpose.msra.mxu0 0.0
        %2419 = vmatprep.subr.mxu0 0.0
        %2420 = vmatpush1.xpose.msra.mxu0 0.0
        %2421 = vmatprep.subr.mxu0 0.0
        %2422 = vmatpush1.xpose.msra.mxu0 0.0
        %2423 = vmatprep.subr.mxu0 0.0
        %2424 = vmatpush1.xpose.msra.mxu0 0.0
        %2425 = vmatprep.subr.mxu0 0.0
        %2426 = vmatpush1.xpose.msra.mxu0 0.0
        %2427 = vmatprep.subr.mxu0 0.0
        %2428 = vmatpush1.xpose.msra.mxu0 0.0
        %2429 = vmatprep.subr.mxu0 0.0
        %2430 = vmatpush1.xpose.msra.mxu0 0.0
        %2431 = vmatprep.subr.mxu0 0.0
        %2432 = vmatpush1.xpose.msra.mxu0 0.0
        %2433 = vmatprep.subr.mxu0 0.0
        %2434 = vmatpush1.xpose.msra.mxu0 0.0
        %2435 = vmatprep.subr.mxu0 0.0
        %2436 = vmatpush1.xpose.msra.mxu0 0.0
        %2437 = vmatprep.subr.mxu0 0.0
        %2438 = vmatpush1.xpose.msra.mxu0 0.0
        %2439 = vmatprep.mubr.f32.mxu0 0.0
        %2440 = vmatmul.mubr.f32.gmra.mrb[0].mxu0 %v2367
        %v2441 = vpop.f32.mrb[0].mxu0
        %v2442 = vadd.f32 0.0, %v2441
        %v2443 = vpop.f32.mrb[0].mxu0
        %2444 = vmatprep.mubr.f32.mxu0 0.0
        %2445 = vmatmul.mubr.f32.gmra.mrb[0].mxu0 %v2369
        %v2446 = vpop.f32.mrb[0].mxu0
        %v2447 = vadd.f32 0.0, %v2446
        %v2448 = vpop.f32.mrb[0].mxu0
        %2449 = vdwg.mxu0
        %v2450 = vsel %vm2049, %v2351, -inf
        %2451 = vmax.xlane.f32.xlu0 %v2450
        %v2452 = vpop.xlane.xlu0 %2451
        %v2453 = vsel %vm2049, %v2356, -inf
        %2454 = vmax.xlane.f32.xlu0 %v2453
        %v2455 = vpop.xlane.xlu0 %2454
        %v2456 = vsel %vm2049, %v2442, -inf
        %2457 = vmax.xlane.f32.xlu0 %v2456
        %v2458 = vpop.xlane.xlu0 %2457
        %v2459 = vsel %vm2049, %v2447, -inf
        %2460 = vmax.xlane.f32.xlu0 %v2459
        %v2461 = vpop.xlane.xlu0 %2460
        %v2462 = vsub.f32 %v2351, %v2452
        %v2463 = vsub.f32 %v2356, %v2455
        %v2464 = vsub.f32 %v2442, %v2458
        %v2465 = vsub.f32 %v2447, %v2461
        %v2466 = vmul.f32 %v2462, 1.442695
        %v2467 = vpow.pop %v2466
        %v2468 = vmul.f32 %v2463, 1.442695
        %v2469 = vpow.pop %v2468
        %v2470 = vmul.f32 %v2464, 1.442695
        %v2471 = vpow.pop %v2470
        %v2472 = vmul.f32 %v2465, 1.442695
        %v2473 = vpow.pop %v2472
        %v2474 = vsel %vm2049, %v2467, 0.0
        %2475 = vadd.xlane.f32.xlu0 %v2474
        %v2476 = vpop.xlane.xlu0 %2475
        %v2477 = vsel %vm2049, %v2469, 0.0
        %2478 = vadd.xlane.f32.xlu0 %v2477
        %v2479 = vpop.xlane.xlu0 %2478
        %v2480 = vsel %vm2049, %v2471, 0.0
        %2481 = vadd.xlane.f32.xlu0 %v2480
        %v2482 = vpop.xlane.xlu0 %2481
        %v2483 = vsel %vm2049, %v2473, 0.0
        %2484 = vadd.xlane.f32.xlu0 %v2483
        %v2485 = vpop.xlane.xlu0 %2484
        %v2486 = vrcp.pop %v2476
        %v2487 = vrcp.pop %v2479
        %v2488 = vrcp.pop %v2482
        %v2489 = vrcp.pop %v2485
        %v2490 = vmul.f32 %v2476, %v2486
        %v2491 = vmul.f32 %v2479, %v2487
        %v2492 = vmul.f32 %v2482, %v2488
        %v2493 = vmul.f32 %v2485, %v2489
        %v2494 = vsub.f32 2.0, %v2490
        %v2495 = vsub.f32 2.0, %v2491
        %v2496 = vsub.f32 2.0, %v2492
        %v2497 = vsub.f32 2.0, %v2493
        %v2498 = vmul.f32 %v2486, %v2494
        %v2499 = vmul.f32 %v2487, %v2495
        %v2500 = vmul.f32 %v2488, %v2496
        %v2501 = vmul.f32 %v2489, %v2497
        %v2502 = vmul.f32 %v2467, %v2498
        %v2503 = vmul.f32 %v2469, %v2499
        %v2504 = vmul.f32 %v2471, %v2500
        %v2505 = vmul.f32 %v2473, %v2501
        %2508 = vrot.lane.b32.xlu0 %v1788, 96
        %v2509 = vpop.permute.xlu0 %2508
        %2510 = vrot.lane.b32.xlu0 %v1794, 96
        %v2511 = vpop.permute.xlu0 %2510
        %v2515 = vsel %vm2049, %v2502, 0
        %v2518 = vsel %vm2049, %v2503, 0
        %2520 = vmatprep.subr.mxu0 0.0
        %2521 = vmatpush1.msra.mxu0 %v2509
        %2522 = vmatprep.subr.mxu0 0.0
        %2523 = vmatpush1.msra.mxu0 %v2511
        %2524 = vmatprep.subr.mxu0 0.0
        %2525 = vmatpush1.msra.mxu0 0.0
        %2526 = vmatprep.subr.mxu0 0.0
        %2527 = vmatpush1.msra.mxu0 0.0
        %2528 = vmatprep.subr.mxu0 0.0
        %2529 = vmatpush1.msra.mxu0 0.0
        %2530 = vmatprep.subr.mxu0 0.0
        %2531 = vmatpush1.msra.mxu0 0.0
        %2532 = vmatprep.subr.mxu0 0.0
        %2533 = vmatpush1.msra.mxu0 0.0
        %2534 = vmatprep.subr.mxu0 0.0
        %2535 = vmatpush1.msra.mxu0 0.0
        %2536 = vmatprep.subr.mxu0 0.0
        %2537 = vmatpush1.msra.mxu0 0.0
        %2538 = vmatprep.subr.mxu0 0.0
        %2539 = vmatpush1.msra.mxu0 0.0
        %2540 = vmatprep.subr.mxu0 0.0
        %2541 = vmatpush1.msra.mxu0 0.0
        %2542 = vmatprep.subr.mxu0 0.0
        %2543 = vmatpush1.msra.mxu0 0.0
        %2544 = vmatprep.subr.mxu0 0.0
        %2545 = vmatpush1.msra.mxu0 0.0
        %2546 = vmatprep.subr.mxu0 0.0
        %2547 = vmatpush1.msra.mxu0 0.0
        %2548 = vmatprep.subr.mxu0 0.0
        %2549 = vmatpush1.msra.mxu0 0.0
        %2550 = vmatprep.subr.mxu0 0.0
        %2551 = vmatpush1.msra.mxu0 0.0
        %2552 = vmatprep.subr.mxu0 0.0
        %2553 = vmatpush1.msra.mxu0 0.0
        %2554 = vmatprep.subr.mxu0 0.0
        %2555 = vmatpush1.msra.mxu0 0.0
        %2556 = vmatprep.subr.mxu0 0.0
        %2557 = vmatpush1.msra.mxu0 0.0
        %2558 = vmatprep.subr.mxu0 0.0
        %2559 = vmatpush1.msra.mxu0 0.0
        %2560 = vmatprep.subr.mxu0 0.0
        %2561 = vmatpush1.msra.mxu0 0.0
        %2562 = vmatprep.subr.mxu0 0.0
        %2563 = vmatpush1.msra.mxu0 0.0
        %2564 = vmatprep.subr.mxu0 0.0
        %2565 = vmatpush1.msra.mxu0 0.0
        %2566 = vmatprep.subr.mxu0 0.0
        %2567 = vmatpush1.msra.mxu0 0.0
        %2568 = vmatprep.subr.mxu0 0.0
        %2569 = vmatpush1.msra.mxu0 0.0
        %2570 = vmatprep.subr.mxu0 0.0
        %2571 = vmatpush1.msra.mxu0 0.0
        %2572 = vmatprep.subr.mxu0 0.0
        %2573 = vmatpush1.msra.mxu0 0.0
        %2574 = vmatprep.subr.mxu0 0.0
        %2575 = vmatpush1.msra.mxu0 0.0
        %2576 = vmatprep.subr.mxu0 0.0
        %2577 = vmatpush1.msra.mxu0 0.0
        %2578 = vmatprep.subr.mxu0 0.0
        %2579 = vmatpush1.msra.mxu0 0.0
        %2580 = vmatprep.subr.mxu0 0.0
        %2581 = vmatpush1.msra.mxu0 0.0
        %2582 = vmatprep.subr.mxu0 0.0
        %2583 = vmatpush1.msra.mxu0 0.0
        %2584 = vmatprep.mubr.f32.mxu0 0.0
        %2585 = vmatmul.mubr.f32.gmra.mrb[0].mxu0 %v2515
        %v2586 = vpop.f32.mrb[0].mxu0
        %v2587 = vadd.f32 0.0, %v2586
        %v2588 = vpop.f32.mrb[0].mxu0
        %2589 = vmatprep.mubr.f32.mxu0 0.0
        %2590 = vmatmul.mubr.f32.gmra.mrb[0].mxu0 %v2518
        %v2591 = vpop.f32.mrb[0].mxu0
        %v2592 = vadd.f32 0.0, %v2591
        %v2593 = vpop.f32.mrb[0].mxu0
        %2594 = vdwg.mxu0
        %2597 = vrot.lane.b32.xlu0 %v1800, 96
        %v2598 = vpop.permute.xlu0 %2597
        %2599 = vrot.lane.b32.xlu0 %v1806, 96
        %v2600 = vpop.permute.xlu0 %2599
        %v2604 = vsel %vm2049, %v2504, 0
        %v2607 = vsel %vm2049, %v2505, 0
        %2609 = vmatprep.subr.mxu0 0.0
        %2610 = vmatpush1.msra.mxu0 %v2598
        %2611 = vmatprep.subr.mxu0 0.0
        %2612 = vmatpush1.msra.mxu0 %v2600
        %2613 = vmatprep.subr.mxu0 0.0
        %2614 = vmatpush1.msra.mxu0 0.0
        %2615 = vmatprep.subr.mxu0 0.0
        %2616 = vmatpush1.msra.mxu0 0.0
        %2617 = vmatprep.subr.mxu0 0.0
        %2618 = vmatpush1.msra.mxu0 0.0
        %2619 = vmatprep.subr.mxu0 0.0
        %2620 = vmatpush1.msra.mxu0 0.0
        %2621 = vmatprep.subr.mxu0 0.0
        %2622 = vmatpush1.msra.mxu0 0.0
        %2623 = vmatprep.subr.mxu0 0.0
        %2624 = vmatpush1.msra.mxu0 0.0
        %2625 = vmatprep.subr.mxu0 0.0
        %2626 = vmatpush1.msra.mxu0 0.0
        %2627 = vmatprep.subr.mxu0 0.0
        %2628 = vmatpush1.msra.mxu0 0.0
        %2629 = vmatprep.subr.mxu0 0.0
        %2630 = vmatpush1.msra.mxu0 0.0
        %2631 = vmatprep.subr.mxu0 0.0
        %2632 = vmatpush1.msra.mxu0 0.0
        %2633 = vmatprep.subr.mxu0 0.0
        %2634 = vmatpush1.msra.mxu0 0.0
        %2635 = vmatprep.subr.mxu0 0.0
        %2636 = vmatpush1.msra.mxu0 0.0
        %2637 = vmatprep.subr.mxu0 0.0
        %2638 = vmatpush1.msra.mxu0 0.0
        %2639 = vmatprep.subr.mxu0 0.0
        %2640 = vmatpush1.msra.mxu0 0.0
        %2641 = vmatprep.subr.mxu0 0.0
        %2642 = vmatpush1.msra.mxu0 0.0
        %2643 = vmatprep.subr.mxu0 0.0
        %2644 = vmatpush1.msra.mxu0 0.0
        %2645 = vmatprep.subr.mxu0 0.0
        %2646 = vmatpush1.msra.mxu0 0.0
        %2647 = vmatprep.subr.mxu0 0.0
        %2648 = vmatpush1.msra.mxu0 0.0
        %2649 = vmatprep.subr.mxu0 0.0
        %2650 = vmatpush1.msra.mxu0 0.0
        %2651 = vmatprep.subr.mxu0 0.0
        %2652 = vmatpush1.msra.mxu0 0.0
        %2653 = vmatprep.subr.mxu0 0.0
        %2654 = vmatpush1.msra.mxu0 0.0
        %2655 = vmatprep.subr.mxu0 0.0
        %2656 = vmatpush1.msra.mxu0 0.0
        %2657 = vmatprep.subr.mxu0 0.0
        %2658 = vmatpush1.msra.mxu0 0.0
        %2659 = vmatprep.subr.mxu0 0.0
        %2660 = vmatpush1.msra.mxu0 0.0
        %2661 = vmatprep.subr.mxu0 0.0
        %2662 = vmatpush1.msra.mxu0 0.0
        %2663 = vmatprep.subr.mxu0 0.0
        %2664 = vmatpush1.msra.mxu0 0.0
        %2665 = vmatprep.subr.mxu0 0.0
        %2666 = vmatpush1.msra.mxu0 0.0
        %2667 = vmatprep.subr.mxu0 0.0
        %2668 = vmatpush1.msra.mxu0 0.0
        %2669 = vmatprep.subr.mxu0 0.0
        %2670 = vmatpush1.msra.mxu0 0.0
        %2671 = vmatprep.subr.mxu0 0.0
        %2672 = vmatpush1.msra.mxu0 0.0
        %2673 = vmatprep.mubr.f32.mxu0 0.0
        %2674 = vmatmul.mubr.f32.gmra.mrb[0].mxu0 %v2604
        %v2675 = vpop.f32.mrb[0].mxu0
        %v2676 = vadd.f32 0.0, %v2675
        %v2677 = vpop.f32.mrb[0].mxu0
        %2678 = vmatprep.mubr.f32.mxu0 0.0
        %2679 = vmatmul.mubr.f32.gmra.mrb[0].mxu0 %v2607
        %v2680 = vpop.f32.mrb[0].mxu0
        %v2681 = vadd.f32 0.0, %v2680
        %v2682 = vpop.f32.mrb[0].mxu0
        %2683 = vdwg.mxu0
        %v2685 = vsel %vm1874, %v2587, 0
        %v2688 = vsel %vm1874, %v2592, 0
        %v2691 = vsel %vm1874, %v2676, 0
        %v2694 = vsel %vm1874, %v2681, 0
        %2696 = vmatprep.subr.mxu0 %v1819
        %2697 = vmatpush1.msra.mxu0 %v1818
        %2698 = vmatprep.subr.mxu0 %v1821
        %2699 = vmatpush1.msra.mxu0 %v1820
        %2700 = vmatprep.subr.mxu0 %v1823
        %2701 = vmatpush1.msra.mxu0 %v1822
        %2702 = vmatprep.subr.mxu0 %v1825
        %2703 = vmatpush1.msra.mxu0 %v1824
        %2704 = vmatprep.subr.mxu0 0.0
        %2705 = vmatpush1.msra.mxu0 0.0
        %2706 = vmatprep.subr.mxu0 0.0
        %2707 = vmatpush1.msra.mxu0 0.0
        %2708 = vmatprep.subr.mxu0 0.0
        %2709 = vmatpush1.msra.mxu0 0.0
        %2710 = vmatprep.subr.mxu0 0.0
        %2711 = vmatpush1.msra.mxu0 0.0
        %2712 = vmatprep.subr.mxu0 0.0
        %2713 = vmatpush1.msra.mxu0 0.0
        %2714 = vmatprep.subr.mxu0 0.0
        %2715 = vmatpush1.msra.mxu0 0.0
        %2716 = vmatprep.subr.mxu0 0.0
        %2717 = vmatpush1.msra.mxu0 0.0
        %2718 = vmatprep.subr.mxu0 0.0
        %2719 = vmatpush1.msra.mxu0 0.0
        %2720 = vmatprep.subr.mxu0 0.0
        %2721 = vmatpush1.msra.mxu0 0.0
        %2722 = vmatprep.subr.mxu0 0.0
        %2723 = vmatpush1.msra.mxu0 0.0
        %2724 = vmatprep.subr.mxu0 0.0
        %2725 = vmatpush1.msra.mxu0 0.0
        %2726 = vmatprep.subr.mxu0 0.0
        %2727 = vmatpush1.msra.mxu0 0.0
        %2728 = vmatprep.subr.mxu0 0.0
        %2729 = vmatpush1.msra.mxu0 0.0
        %2730 = vmatprep.subr.mxu0 0.0
        %2731 = vmatpush1.msra.mxu0 0.0
        %2732 = vmatprep.subr.mxu0 0.0
        %2733 = vmatpush1.msra.mxu0 0.0
        %2734 = vmatprep.subr.mxu0 0.0
        %2735 = vmatpush1.msra.mxu0 0.0
        %2736 = vmatprep.subr.mxu0 0.0
        %2737 = vmatpush1.msra.mxu0 0.0
        %2738 = vmatprep.subr.mxu0 0.0
        %2739 = vmatpush1.msra.mxu0 0.0
        %2740 = vmatprep.subr.mxu0 0.0
        %2741 = vmatpush1.msra.mxu0 0.0
        %2742 = vmatprep.subr.mxu0 0.0
        %2743 = vmatpush1.msra.mxu0 0.0
        %2744 = vmatprep.subr.mxu0 0.0
        %2745 = vmatpush1.msra.mxu0 0.0
        %2746 = vmatprep.subr.mxu0 0.0
        %2747 = vmatpush1.msra.mxu0 0.0
        %2748 = vmatprep.subr.mxu0 0.0
        %2749 = vmatpush1.msra.mxu0 0.0
        %2750 = vmatprep.subr.mxu0 0.0
        %2751 = vmatpush1.msra.mxu0 0.0
        %2752 = vmatprep.subr.mxu0 0.0
        %2753 = vmatpush1.msra.mxu0 0.0
        %2754 = vmatprep.subr.mxu0 0.0
        %2755 = vmatpush1.msra.mxu0 0.0
        %2756 = vmatprep.subr.mxu0 0.0
        %2757 = vmatpush1.msra.mxu0 0.0
        %2758 = vmatprep.subr.mxu0 0.0
        %2759 = vmatpush1.msra.mxu0 0.0
        %2760 = vmatprep.mubr.f32.mxu0 0.0
        %2761 = vmatmul.mubr.f32.gmra.mrb[0].mxu0 %v2685
        %v2762 = vpop.f32.mrb[0].mxu0
        %v2763 = vadd.f32 0.0, %v2762
        %v2764 = vpop.f32.mrb[0].mxu0
        %v2765 = vadd.f32 0.0, %v2764
        %2766 = vmatprep.mubr.f32.mxu0 0.0
        %2767 = vmatmul.mubr.f32.gmra.mrb[0].mxu0 %v2688
        %v2768 = vpop.f32.mrb[0].mxu0
        %v2769 = vadd.f32 0.0, %v2768
        %v2770 = vpop.f32.mrb[0].mxu0
        %v2771 = vadd.f32 0.0, %v2770
        %2772 = vmatprep.mubr.f32.mxu0 0.0
        %2773 = vmatmul.mubr.f32.gmra.mrb[0].mxu0 %v2691
        %v2774 = vpop.f32.mrb[0].mxu0
        %v2775 = vadd.f32 0.0, %v2774
        %v2776 = vpop.f32.mrb[0].mxu0
        %v2777 = vadd.f32 0.0, %v2776
        %2778 = vmatprep.mubr.f32.mxu0 0.0
        %2779 = vmatmul.mubr.f32.gmra.mrb[0].mxu0 %v2694
        %v2780 = vpop.f32.mrb[0].mxu0
        %v2781 = vadd.f32 0.0, %v2780
        %v2782 = vpop.f32.mrb[0].mxu0
        %v2783 = vadd.f32 0.0, %v2782
        %2784 = vdwg.mxu0
        %v2786 = vsel %vm1874, %v2179, 0
        %v2789 = vsel %vm1874, %v2184, 0
        %v2792 = vsel %vm1874, %v2260, 0
        %v2795 = vsel %vm1874, %v2265, 0
        %2797 = vmatprep.subr.mxu0 %v1811
        %2798 = vmatpush1.msra.mxu0 %v1810
        %2799 = vmatprep.subr.mxu0 %v1813
        %2800 = vmatpush1.msra.mxu0 %v1812
        %2801 = vmatprep.subr.mxu0 %v1815
        %2802 = vmatpush1.msra.mxu0 %v1814
        %2803 = vmatprep.subr.mxu0 %v1817
        %2804 = vmatpush1.msra.mxu0 %v1816
        %2805 = vmatprep.subr.mxu0 0.0
        %2806 = vmatpush1.msra.mxu0 0.0
        %2807 = vmatprep.subr.mxu0 0.0
        %2808 = vmatpush1.msra.mxu0 0.0
        %2809 = vmatprep.subr.mxu0 0.0
        %2810 = vmatpush1.msra.mxu0 0.0
        %2811 = vmatprep.subr.mxu0 0.0
        %2812 = vmatpush1.msra.mxu0 0.0
        %2813 = vmatprep.subr.mxu0 0.0
        %2814 = vmatpush1.msra.mxu0 0.0
        %2815 = vmatprep.subr.mxu0 0.0
        %2816 = vmatpush1.msra.mxu0 0.0
        %2817 = vmatprep.subr.mxu0 0.0
        %2818 = vmatpush1.msra.mxu0 0.0
        %2819 = vmatprep.subr.mxu0 0.0
        %2820 = vmatpush1.msra.mxu0 0.0
        %2821 = vmatprep.subr.mxu0 0.0
        %2822 = vmatpush1.msra.mxu0 0.0
        %2823 = vmatprep.subr.mxu0 0.0
        %2824 = vmatpush1.msra.mxu0 0.0
        %2825 = vmatprep.subr.mxu0 0.0
        %2826 = vmatpush1.msra.mxu0 0.0
        %2827 = vmatprep.subr.mxu0 0.0
        %2828 = vmatpush1.msra.mxu0 0.0
        %2829 = vmatprep.subr.mxu0 0.0
        %2830 = vmatpush1.msra.mxu0 0.0
        %2831 = vmatprep.subr.mxu0 0.0
        %2832 = vmatpush1.msra.mxu0 0.0
        %2833 = vmatprep.subr.mxu0 0.0
        %2834 = vmatpush1.msra.mxu0 0.0
        %2835 = vmatprep.subr.mxu0 0.0
        %2836 = vmatpush1.msra.mxu0 0.0
        %2837 = vmatprep.subr.mxu0 0.0
        %2838 = vmatpush1.msra.mxu0 0.0
        %2839 = vmatprep.subr.mxu0 0.0
        %2840 = vmatpush1.msra.mxu0 0.0
        %2841 = vmatprep.subr.mxu0 0.0
        %2842 = vmatpush1.msra.mxu0 0.0
        %2843 = vmatprep.subr.mxu0 0.0
        %2844 = vmatpush1.msra.mxu0 0.0
        %2845 = vmatprep.subr.mxu0 0.0
        %2846 = vmatpush1.msra.mxu0 0.0
        %2847 = vmatprep.subr.mxu0 0.0
        %2848 = vmatpush1.msra.mxu0 0.0
        %2849 = vmatprep.subr.mxu0 0.0
        %2850 = vmatpush1.msra.mxu0 0.0
        %2851 = vmatprep.subr.mxu0 0.0
        %2852 = vmatpush1.msra.mxu0 0.0
        %2853 = vmatprep.subr.mxu0 0.0
        %2854 = vmatpush1.msra.mxu0 0.0
        %2855 = vmatprep.subr.mxu0 0.0
        %2856 = vmatpush1.msra.mxu0 0.0
        %2857 = vmatprep.subr.mxu0 0.0
        %2858 = vmatpush1.msra.mxu0 0.0
        %2859 = vmatprep.subr.mxu0 0.0
        %2860 = vmatpush1.msra.mxu0 0.0
        %2861 = vmatprep.mubr.f32.mxu0 0.0
        %2862 = vmatmul.mubr.f32.gmra.mrb[0].mxu0 %v2786
        %v2863 = vpop.f32.mrb[0].mxu0
        %v2864 = vadd.f32 %v2763, %v2863
        %v2865 = vpop.f32.mrb[0].mxu0
        %v2866 = vadd.f32 %v2765, %v2865
        %2867 = vmatprep.mubr.f32.mxu0 0.0
        %2868 = vmatmul.mubr.f32.gmra.mrb[0].mxu0 %v2789
        %v2869 = vpop.f32.mrb[0].mxu0
        %v2870 = vadd.f32 %v2769, %v2869
        %v2871 = vpop.f32.mrb[0].mxu0
        %v2872 = vadd.f32 %v2771, %v2871
        %2873 = vmatprep.mubr.f32.mxu0 0.0
        %2874 = vmatmul.mubr.f32.gmra.mrb[0].mxu0 %v2792
        %v2875 = vpop.f32.mrb[0].mxu0
        %v2876 = vadd.f32 %v2775, %v2875
        %v2877 = vpop.f32.mrb[0].mxu0
        %v2878 = vadd.f32 %v2777, %v2877
        %2879 = vmatprep.mubr.f32.mxu0 0.0
        %2880 = vmatmul.mubr.f32.gmra.mrb[0].mxu0 %v2795
        %v2881 = vpop.f32.mrb[0].mxu0
        %v2882 = vadd.f32 %v2781, %v2881
        %v2883 = vpop.f32.mrb[0].mxu0
        %v2884 = vadd.f32 %v2783, %v2883
        %2885 = vdwg.mxu0
        %2886 = vrot.lane.b32.xlu0 %v1534, 64
        %v2887 = vpop.permute.xlu0 %2886
        %2888 = vrot.lane.b32.xlu0 %v1540, 64
        %v2889 = vpop.permute.xlu0 %2888
        %2890 = vrot.lane.b32.xlu0 %v1623, 64
        %v2891 = vpop.permute.xlu0 %2890
        %2892 = vrot.lane.b32.xlu0 %v1629, 64
        %v2893 = vpop.permute.xlu0 %2892
        %v2894 = vsel %vm1874, %v2887, 0
        %v2896 = vsel %vm1874, %v2889, 0
        %v2898 = vsel %vm1874, %v2891, 0
        %v2900 = vsel %vm1874, %v2893, 0
        %2902 = vmatprep.subr.mxu0 0.0
        %2903 = vmatpush1.xpose.msra.mxu0 %v2898
        %2904 = vmatprep.subr.mxu0 0.0
        %2905 = vmatpush1.xpose.msra.mxu0 %v2900
        %2906 = vmatprep.subr.mxu0 0.0
        %2907 = vmatpush1.xpose.msra.mxu0 0.0
        %2908 = vmatprep.subr.mxu0 0.0
        %2909 = vmatpush1.xpose.msra.mxu0 0.0
        %2910 = vmatprep.subr.mxu0 0.0
        %2911 = vmatpush1.xpose.msra.mxu0 0.0
        %2912 = vmatprep.subr.mxu0 0.0
        %2913 = vmatpush1.xpose.msra.mxu0 0.0
        %2914 = vmatprep.subr.mxu0 0.0
        %2915 = vmatpush1.xpose.msra.mxu0 0.0
        %2916 = vmatprep.subr.mxu0 0.0
        %2917 = vmatpush1.xpose.msra.mxu0 0.0
        %2918 = vmatprep.subr.mxu0 0.0
        %2919 = vmatpush1.xpose.msra.mxu0 0.0
        %2920 = vmatprep.subr.mxu0 0.0
        %2921 = vmatpush1.xpose.msra.mxu0 0.0
        %2922 = vmatprep.subr.mxu0 0.0
        %2923 = vmatpush1.xpose.msra.mxu0 0.0
        %2924 = vmatprep.subr.mxu0 0.0
        %2925 = vmatpush1.xpose.msra.mxu0 0.0
        %2926 = vmatprep.subr.mxu0 0.0
        %2927 = vmatpush1.xpose.msra.mxu0 0.0
        %2928 = vmatprep.subr.mxu0 0.0
        %2929 = vmatpush1.xpose.msra.mxu0 0.0
        %2930 = vmatprep.subr.mxu0 0.0
        %2931 = vmatpush1.xpose.msra.mxu0 0.0
        %2932 = vmatprep.subr.mxu0 0.0
        %2933 = vmatpush1.xpose.msra.mxu0 0.0
        %2934 = vmatprep.subr.mxu0 0.0
        %2935 = vmatpush1.xpose.msra.mxu0 0.0
        %2936 = vmatprep.subr.mxu0 0.0
        %2937 = vmatpush1.xpose.msra.mxu0 0.0
        %2938 = vmatprep.subr.mxu0 0.0
        %2939 = vmatpush1.xpose.msra.mxu0 0.0
        %2940 = vmatprep.subr.mxu0 0.0
        %2941 = vmatpush1.xpose.msra.mxu0 0.0
        %2942 = vmatprep.subr.mxu0 0.0
        %2943 = vmatpush1.xpose.msra.mxu0 0.0
        %2944 = vmatprep.subr.mxu0 0.0
        %2945 = vmatpush1.xpose.msra.mxu0 0.0
        %2946 = vmatprep.subr.mxu0 0.0
        %2947 = vmatpush1.xpose.msra.mxu0 0.0
        %2948 = vmatprep.subr.mxu0 0.0
        %2949 = vmatpush1.xpose.msra.mxu0 0.0
        %2950 = vmatprep.subr.mxu0 0.0
        %2951 = vmatpush1.xpose.msra.mxu0 0.0
        %2952 = vmatprep.subr.mxu0 0.0
        %2953 = vmatpush1.xpose.msra.mxu0 0.0
        %2954 = vmatprep.subr.mxu0 0.0
        %2955 = vmatpush1.xpose.msra.mxu0 0.0
        %2956 = vmatprep.subr.mxu0 0.0
        %2957 = vmatpush1.xpose.msra.mxu0 0.0
        %2958 = vmatprep.subr.mxu0 0.0
        %2959 = vmatpush1.xpose.msra.mxu0 0.0
        %2960 = vmatprep.subr.mxu0 0.0
        %2961 = vmatpush1.xpose.msra.mxu0 0.0
        %2962 = vmatprep.subr.mxu0 0.0
        %2963 = vmatpush1.xpose.msra.mxu0 0.0
        %2964 = vmatprep.subr.mxu0 0.0
        %2965 = vmatpush1.xpose.msra.mxu0 0.0
        %2966 = vmatprep.mubr.f32.mxu0 0.0
        %2967 = vmatmul.mubr.f32.gmra.mrb[0].mxu0 %v2894
        %v2968 = vpop.f32.mrb[0].mxu0
        %v2969 = vadd.f32 0.0, %v2968
        %v2970 = vpop.f32.mrb[0].mxu0
        %2971 = vmatprep.mubr.f32.mxu0 0.0
        %2972 = vmatmul.mubr.f32.gmra.mrb[0].mxu0 %v2896
        %v2973 = vpop.f32.mrb[0].mxu0
        %v2974 = vadd.f32 0.0, %v2973
        %v2975 = vpop.f32.mrb[0].mxu0
        %2976 = vdwg.mxu0
        %2977 = vrot.lane.b32.xlu0 %v1546, 64
        %v2978 = vpop.permute.xlu0 %2977
        %2979 = vrot.lane.b32.xlu0 %v1552, 64
        %v2980 = vpop.permute.xlu0 %2979
        %2981 = vrot.lane.b32.xlu0 %v1635, 64
        %v2982 = vpop.permute.xlu0 %2981
        %2983 = vrot.lane.b32.xlu0 %v1641, 64
        %v2984 = vpop.permute.xlu0 %2983
        %v2985 = vsel %vm1874, %v2978, 0
        %v2987 = vsel %vm1874, %v2980, 0
        %v2989 = vsel %vm1874, %v2982, 0
        %v2991 = vsel %vm1874, %v2984, 0
        %2993 = vmatprep.subr.mxu0 0.0
        %2994 = vmatpush1.xpose.msra.mxu0 %v2989
        %2995 = vmatprep.subr.mxu0 0.0
        %2996 = vmatpush1.xpose.msra.mxu0 %v2991
        %2997 = vmatprep.subr.mxu0 0.0
        %2998 = vmatpush1.xpose.msra.mxu0 0.0
        %2999 = vmatprep.subr.mxu0 0.0
        %3000 = vmatpush1.xpose.msra.mxu0 0.0
        %3001 = vmatprep.subr.mxu0 0.0
        %3002 = vmatpush1.xpose.msra.mxu0 0.0
        %3003 = vmatprep.subr.mxu0 0.0
        %3004 = vmatpush1.xpose.msra.mxu0 0.0
        %3005 = vmatprep.subr.mxu0 0.0
        %3006 = vmatpush1.xpose.msra.mxu0 0.0
        %3007 = vmatprep.subr.mxu0 0.0
        %3008 = vmatpush1.xpose.msra.mxu0 0.0
        %3009 = vmatprep.subr.mxu0 0.0
        %3010 = vmatpush1.xpose.msra.mxu0 0.0
        %3011 = vmatprep.subr.mxu0 0.0
        %3012 = vmatpush1.xpose.msra.mxu0 0.0
        %3013 = vmatprep.subr.mxu0 0.0
        %3014 = vmatpush1.xpose.msra.mxu0 0.0
        %3015 = vmatprep.subr.mxu0 0.0
        %3016 = vmatpush1.xpose.msra.mxu0 0.0
        %3017 = vmatprep.subr.mxu0 0.0
        %3018 = vmatpush1.xpose.msra.mxu0 0.0
        %3019 = vmatprep.subr.mxu0 0.0
        %3020 = vmatpush1.xpose.msra.mxu0 0.0
        %3021 = vmatprep.subr.mxu0 0.0
        %3022 = vmatpush1.xpose.msra.mxu0 0.0
        %3023 = vmatprep.subr.mxu0 0.0
        %3024 = vmatpush1.xpose.msra.mxu0 0.0
        %3025 = vmatprep.subr.mxu0 0.0
        %3026 = vmatpush1.xpose.msra.mxu0 0.0
        %3027 = vmatprep.subr.mxu0 0.0
        %3028 = vmatpush1.xpose.msra.mxu0 0.0
        %3029 = vmatprep.subr.mxu0 0.0
        %3030 = vmatpush1.xpose.msra.mxu0 0.0
        %3031 = vmatprep.subr.mxu0 0.0
        %3032 = vmatpush1.xpose.msra.mxu0 0.0
        %3033 = vmatprep.subr.mxu0 0.0
        %3034 = vmatpush1.xpose.msra.mxu0 0.0
        %3035 = vmatprep.subr.mxu0 0.0
        %3036 = vmatpush1.xpose.msra.mxu0 0.0
        %3037 = vmatprep.subr.mxu0 0.0
        %3038 = vmatpush1.xpose.msra.mxu0 0.0
        %3039 = vmatprep.subr.mxu0 0.0
        %3040 = vmatpush1.xpose.msra.mxu0 0.0
        %3041 = vmatprep.subr.mxu0 0.0
        %3042 = vmatpush1.xpose.msra.mxu0 0.0
        %3043 = vmatprep.subr.mxu0 0.0
        %3044 = vmatpush1.xpose.msra.mxu0 0.0
        %3045 = vmatprep.subr.mxu0 0.0
        %3046 = vmatpush1.xpose.msra.mxu0 0.0
        %3047 = vmatprep.subr.mxu0 0.0
        %3048 = vmatpush1.xpose.msra.mxu0 0.0
        %3049 = vmatprep.subr.mxu0 0.0
        %3050 = vmatpush1.xpose.msra.mxu0 0.0
        %3051 = vmatprep.subr.mxu0 0.0
        %3052 = vmatpush1.xpose.msra.mxu0 0.0
        %3053 = vmatprep.subr.mxu0 0.0
        %3054 = vmatpush1.xpose.msra.mxu0 0.0
        %3055 = vmatprep.subr.mxu0 0.0
        %3056 = vmatpush1.xpose.msra.mxu0 0.0
        %3057 = vmatprep.mubr.f32.mxu0 0.0
        %3058 = vmatmul.mubr.f32.gmra.mrb[0].mxu0 %v2985
        %v3059 = vpop.f32.mrb[0].mxu0
        %v3060 = vadd.f32 0.0, %v3059
        %v3061 = vpop.f32.mrb[0].mxu0
        %3062 = vmatprep.mubr.f32.mxu0 0.0
        %3063 = vmatmul.mubr.f32.gmra.mrb[0].mxu0 %v2987
        %v3064 = vpop.f32.mrb[0].mxu0
        %v3065 = vadd.f32 0.0, %v3064
        %v3066 = vpop.f32.mrb[0].mxu0
        %3067 = vdwg.mxu0
        %v3068 = vsel %vm2049, %v2969, -inf
        %3069 = vmax.xlane.f32.xlu0 %v3068
        %v3070 = vpop.xlane.xlu0 %3069
        %v3071 = vsel %vm2049, %v2974, -inf
        %3072 = vmax.xlane.f32.xlu0 %v3071
        %v3073 = vpop.xlane.xlu0 %3072
        %v3074 = vsel %vm2049, %v3060, -inf
        %3075 = vmax.xlane.f32.xlu0 %v3074
        %v3076 = vpop.xlane.xlu0 %3075
        %v3077 = vsel %vm2049, %v3065, -inf
        %3078 = vmax.xlane.f32.xlu0 %v3077
        %v3079 = vpop.xlane.xlu0 %3078
        %v3080 = vsub.f32 %v2969, %v3070
        %v3081 = vsub.f32 %v2974, %v3073
        %v3082 = vsub.f32 %v3060, %v3076
        %v3083 = vsub.f32 %v3065, %v3079
        %v3084 = vmul.f32 %v3080, 1.442695
        %v3085 = vpow.pop %v3084
        %v3086 = vmul.f32 %v3081, 1.442695
        %v3087 = vpow.pop %v3086
        %v3088 = vmul.f32 %v3082, 1.442695
        %v3089 = vpow.pop %v3088
        %v3090 = vmul.f32 %v3083, 1.442695
        %v3091 = vpow.pop %v3090
        %v3092 = vsel %vm2049, %v3085, 0.0
        %3093 = vadd.xlane.f32.xlu0 %v3092
        %v3094 = vpop.xlane.xlu0 %3093
        %v3095 = vsel %vm2049, %v3087, 0.0
        %3096 = vadd.xlane.f32.xlu0 %v3095
        %v3097 = vpop.xlane.xlu0 %3096
        %v3098 = vsel %vm2049, %v3089, 0.0
        %3099 = vadd.xlane.f32.xlu0 %v3098
        %v3100 = vpop.xlane.xlu0 %3099
        %v3101 = vsel %vm2049, %v3091, 0.0
        %3102 = vadd.xlane.f32.xlu0 %v3101
        %v3103 = vpop.xlane.xlu0 %3102
        %v3104 = vrcp.pop %v3094
        %v3105 = vrcp.pop %v3097
        %v3106 = vrcp.pop %v3100
        %v3107 = vrcp.pop %v3103
        %v3108 = vmul.f32 %v3094, %v3104
        %v3109 = vmul.f32 %v3097, %v3105
        %v3110 = vmul.f32 %v3100, %v3106
        %v3111 = vmul.f32 %v3103, %v3107
        %v3112 = vsub.f32 2.0, %v3108
        %v3113 = vsub.f32 2.0, %v3109
        %v3114 = vsub.f32 2.0, %v3110
        %v3115 = vsub.f32 2.0, %v3111
        %v3116 = vmul.f32 %v3104, %v3112
        %v3117 = vmul.f32 %v3105, %v3113
        %v3118 = vmul.f32 %v3106, %v3114
        %v3119 = vmul.f32 %v3107, %v3115
        %v3120 = vmul.f32 %v3085, %v3116
        %v3121 = vmul.f32 %v3087, %v3117
        %v3122 = vmul.f32 %v3089, %v3118
        %v3123 = vmul.f32 %v3091, %v3119
        %3124 = vrot.lane.b32.xlu0 %v1788, 64
        %v3125 = vpop.permute.xlu0 %3124
        %3126 = vrot.lane.b32.xlu0 %v1794, 64
        %v3127 = vpop.permute.xlu0 %3126
        %v3131 = vsel %vm2049, %v3120, 0
        %v3134 = vsel %vm2049, %v3121, 0
        %3136 = vmatprep.subr.mxu0 0.0
        %3137 = vmatpush1.msra.mxu0 %v3125
        %3138 = vmatprep.subr.mxu0 0.0
        %3139 = vmatpush1.msra.mxu0 %v3127
        %3140 = vmatprep.subr.mxu0 0.0
        %3141 = vmatpush1.msra.mxu0 0.0
        %3142 = vmatprep.subr.mxu0 0.0
        %3143 = vmatpush1.msra.mxu0 0.0
        %3144 = vmatprep.subr.mxu0 0.0
        %3145 = vmatpush1.msra.mxu0 0.0
        %3146 = vmatprep.subr.mxu0 0.0
        %3147 = vmatpush1.msra.mxu0 0.0
        %3148 = vmatprep.subr.mxu0 0.0
        %3149 = vmatpush1.msra.mxu0 0.0
        %3150 = vmatprep.subr.mxu0 0.0
        %3151 = vmatpush1.msra.mxu0 0.0
        %3152 = vmatprep.subr.mxu0 0.0
        %3153 = vmatpush1.msra.mxu0 0.0
        %3154 = vmatprep.subr.mxu0 0.0
        %3155 = vmatpush1.msra.mxu0 0.0
        %3156 = vmatprep.subr.mxu0 0.0
        %3157 = vmatpush1.msra.mxu0 0.0
        %3158 = vmatprep.subr.mxu0 0.0
        %3159 = vmatpush1.msra.mxu0 0.0
        %3160 = vmatprep.subr.mxu0 0.0
        %3161 = vmatpush1.msra.mxu0 0.0
        %3162 = vmatprep.subr.mxu0 0.0
        %3163 = vmatpush1.msra.mxu0 0.0
        %3164 = vmatprep.subr.mxu0 0.0
        %3165 = vmatpush1.msra.mxu0 0.0
        %3166 = vmatprep.subr.mxu0 0.0
        %3167 = vmatpush1.msra.mxu0 0.0
        %3168 = vmatprep.subr.mxu0 0.0
        %3169 = vmatpush1.msra.mxu0 0.0
        %3170 = vmatprep.subr.mxu0 0.0
        %3171 = vmatpush1.msra.mxu0 0.0
        %3172 = vmatprep.subr.mxu0 0.0
        %3173 = vmatpush1.msra.mxu0 0.0
        %3174 = vmatprep.subr.mxu0 0.0
        %3175 = vmatpush1.msra.mxu0 0.0
        %3176 = vmatprep.subr.mxu0 0.0
        %3177 = vmatpush1.msra.mxu0 0.0
        %3178 = vmatprep.subr.mxu0 0.0
        %3179 = vmatpush1.msra.mxu0 0.0
        %3180 = vmatprep.subr.mxu0 0.0
        %3181 = vmatpush1.msra.mxu0 0.0
        %3182 = vmatprep.subr.mxu0 0.0
        %3183 = vmatpush1.msra.mxu0 0.0
        %3184 = vmatprep.subr.mxu0 0.0
        %3185 = vmatpush1.msra.mxu0 0.0
        %3186 = vmatprep.subr.mxu0 0.0
        %3187 = vmatpush1.msra.mxu0 0.0
        %3188 = vmatprep.subr.mxu0 0.0
        %3189 = vmatpush1.msra.mxu0 0.0
        %3190 = vmatprep.subr.mxu0 0.0
        %3191 = vmatpush1.msra.mxu0 0.0
        %3192 = vmatprep.subr.mxu0 0.0
        %3193 = vmatpush1.msra.mxu0 0.0
        %3194 = vmatprep.subr.mxu0 0.0
        %3195 = vmatpush1.msra.mxu0 0.0
        %3196 = vmatprep.subr.mxu0 0.0
        %3197 = vmatpush1.msra.mxu0 0.0
        %3198 = vmatprep.subr.mxu0 0.0
        %3199 = vmatpush1.msra.mxu0 0.0
        %3200 = vmatprep.mubr.f32.mxu0 0.0
        %3201 = vmatmul.mubr.f32.gmra.mrb[0].mxu0 %v3131
        %v3202 = vpop.f32.mrb[0].mxu0
        %v3203 = vadd.f32 0.0, %v3202
        %v3204 = vpop.f32.mrb[0].mxu0
        %3205 = vmatprep.mubr.f32.mxu0 0.0
        %3206 = vmatmul.mubr.f32.gmra.mrb[0].mxu0 %v3134
        %v3207 = vpop.f32.mrb[0].mxu0
        %v3208 = vadd.f32 0.0, %v3207
        %v3209 = vpop.f32.mrb[0].mxu0
        %3210 = vdwg.mxu0
        %3211 = vrot.lane.b32.xlu0 %v1800, 64
        %v3212 = vpop.permute.xlu0 %3211
        %3213 = vrot.lane.b32.xlu0 %v1806, 64
        %v3214 = vpop.permute.xlu0 %3213
        %v3218 = vsel %vm2049, %v3122, 0
        %v3221 = vsel %vm2049, %v3123, 0
        %3223 = vmatprep.subr.mxu0 0.0
        %3224 = vmatpush1.msra.mxu0 %v3212
        %3225 = vmatprep.subr.mxu0 0.0
        %3226 = vmatpush1.msra.mxu0 %v3214
        %3227 = vmatprep.subr.mxu0 0.0
        %3228 = vmatpush1.msra.mxu0 0.0
        %3229 = vmatprep.subr.mxu0 0.0
        %3230 = vmatpush1.msra.mxu0 0.0
        %3231 = vmatprep.subr.mxu0 0.0
        %3232 = vmatpush1.msra.mxu0 0.0
        %3233 = vmatprep.subr.mxu0 0.0
        %3234 = vmatpush1.msra.mxu0 0.0
        %3235 = vmatprep.subr.mxu0 0.0
        %3236 = vmatpush1.msra.mxu0 0.0
        %3237 = vmatprep.subr.mxu0 0.0
        %3238 = vmatpush1.msra.mxu0 0.0
        %3239 = vmatprep.subr.mxu0 0.0
        %3240 = vmatpush1.msra.mxu0 0.0
        %3241 = vmatprep.subr.mxu0 0.0
        %3242 = vmatpush1.msra.mxu0 0.0
        %3243 = vmatprep.subr.mxu0 0.0
        %3244 = vmatpush1.msra.mxu0 0.0
        %3245 = vmatprep.subr.mxu0 0.0
        %3246 = vmatpush1.msra.mxu0 0.0
        %3247 = vmatprep.subr.mxu0 0.0
        %3248 = vmatpush1.msra.mxu0 0.0
        %3249 = vmatprep.subr.mxu0 0.0
        %3250 = vmatpush1.msra.mxu0 0.0
        %3251 = vmatprep.subr.mxu0 0.0
        %3252 = vmatpush1.msra.mxu0 0.0
        %3253 = vmatprep.subr.mxu0 0.0
        %3254 = vmatpush1.msra.mxu0 0.0
        %3255 = vmatprep.subr.mxu0 0.0
        %3256 = vmatpush1.msra.mxu0 0.0
        %3257 = vmatprep.subr.mxu0 0.0
        %3258 = vmatpush1.msra.mxu0 0.0
        %3259 = vmatprep.subr.mxu0 0.0
        %3260 = vmatpush1.msra.mxu0 0.0
        %3261 = vmatprep.subr.mxu0 0.0
        %3262 = vmatpush1.msra.mxu0 0.0
        %3263 = vmatprep.subr.mxu0 0.0
        %3264 = vmatpush1.msra.mxu0 0.0
        %3265 = vmatprep.subr.mxu0 0.0
        %3266 = vmatpush1.msra.mxu0 0.0
        %3267 = vmatprep.subr.mxu0 0.0
        %3268 = vmatpush1.msra.mxu0 0.0
        %3269 = vmatprep.subr.mxu0 0.0
        %3270 = vmatpush1.msra.mxu0 0.0
        %3271 = vmatprep.subr.mxu0 0.0
        %3272 = vmatpush1.msra.mxu0 0.0
        %3273 = vmatprep.subr.mxu0 0.0
        %3274 = vmatpush1.msra.mxu0 0.0
        %3275 = vmatprep.subr.mxu0 0.0
        %3276 = vmatpush1.msra.mxu0 0.0
        %3277 = vmatprep.subr.mxu0 0.0
        %3278 = vmatpush1.msra.mxu0 0.0
        %3279 = vmatprep.subr.mxu0 0.0
        %3280 = vmatpush1.msra.mxu0 0.0
        %3281 = vmatprep.subr.mxu0 0.0
        %3282 = vmatpush1.msra.mxu0 0.0
        %3283 = vmatprep.subr.mxu0 0.0
        %3284 = vmatpush1.msra.mxu0 0.0
        %3285 = vmatprep.subr.mxu0 0.0
        %3286 = vmatpush1.msra.mxu0 0.0
        %3287 = vmatprep.mubr.f32.mxu0 0.0
        %3288 = vmatmul.mubr.f32.gmra.mrb[0].mxu0 %v3218
        %v3289 = vpop.f32.mrb[0].mxu0
        %v3290 = vadd.f32 0.0, %v3289
        %v3291 = vpop.f32.mrb[0].mxu0
        %3292 = vmatprep.mubr.f32.mxu0 0.0
        %3293 = vmatmul.mubr.f32.gmra.mrb[0].mxu0 %v3221
        %v3294 = vpop.f32.mrb[0].mxu0
        %v3295 = vadd.f32 0.0, %v3294
        %v3296 = vpop.f32.mrb[0].mxu0
        %3297 = vdwg.mxu0
        %v3299 = vsel %vm1874, %v3203, 0
        %v3302 = vsel %vm1874, %v3208, 0
        %v3305 = vsel %vm1874, %v3290, 0
        %v3308 = vsel %vm1874, %v3295, 0
        %3310 = vmatprep.subr.mxu0 %v1827
        %3311 = vmatpush1.msra.mxu0 %v1826
        %3312 = vmatprep.subr.mxu0 %v1829
        %3313 = vmatpush1.msra.mxu0 %v1828
        %3314 = vmatprep.subr.mxu0 %v1831
        %3315 = vmatpush1.msra.mxu0 %v1830
        %3316 = vmatprep.subr.mxu0 %v1833
        %3317 = vmatpush1.msra.mxu0 %v1832
        %3318 = vmatprep.subr.mxu0 0.0
        %3319 = vmatpush1.msra.mxu0 0.0
        %3320 = vmatprep.subr.mxu0 0.0
        %3321 = vmatpush1.msra.mxu0 0.0
        %3322 = vmatprep.subr.mxu0 0.0
        %3323 = vmatpush1.msra.mxu0 0.0
        %3324 = vmatprep.subr.mxu0 0.0
        %3325 = vmatpush1.msra.mxu0 0.0
        %3326 = vmatprep.subr.mxu0 0.0
        %3327 = vmatpush1.msra.mxu0 0.0
        %3328 = vmatprep.subr.mxu0 0.0
        %3329 = vmatpush1.msra.mxu0 0.0
        %3330 = vmatprep.subr.mxu0 0.0
        %3331 = vmatpush1.msra.mxu0 0.0
        %3332 = vmatprep.subr.mxu0 0.0
        %3333 = vmatpush1.msra.mxu0 0.0
        %3334 = vmatprep.subr.mxu0 0.0
        %3335 = vmatpush1.msra.mxu0 0.0
        %3336 = vmatprep.subr.mxu0 0.0
        %3337 = vmatpush1.msra.mxu0 0.0
        %3338 = vmatprep.subr.mxu0 0.0
        %3339 = vmatpush1.msra.mxu0 0.0
        %3340 = vmatprep.subr.mxu0 0.0
        %3341 = vmatpush1.msra.mxu0 0.0
        %3342 = vmatprep.subr.mxu0 0.0
        %3343 = vmatpush1.msra.mxu0 0.0
        %3344 = vmatprep.subr.mxu0 0.0
        %3345 = vmatpush1.msra.mxu0 0.0
        %3346 = vmatprep.subr.mxu0 0.0
        %3347 = vmatpush1.msra.mxu0 0.0
        %3348 = vmatprep.subr.mxu0 0.0
        %3349 = vmatpush1.msra.mxu0 0.0
        %3350 = vmatprep.subr.mxu0 0.0
        %3351 = vmatpush1.msra.mxu0 0.0
        %3352 = vmatprep.subr.mxu0 0.0
        %3353 = vmatpush1.msra.mxu0 0.0
        %3354 = vmatprep.subr.mxu0 0.0
        %3355 = vmatpush1.msra.mxu0 0.0
        %3356 = vmatprep.subr.mxu0 0.0
        %3357 = vmatpush1.msra.mxu0 0.0
        %3358 = vmatprep.subr.mxu0 0.0
        %3359 = vmatpush1.msra.mxu0 0.0
        %3360 = vmatprep.subr.mxu0 0.0
        %3361 = vmatpush1.msra.mxu0 0.0
        %3362 = vmatprep.subr.mxu0 0.0
        %3363 = vmatpush1.msra.mxu0 0.0
        %3364 = vmatprep.subr.mxu0 0.0
        %3365 = vmatpush1.msra.mxu0 0.0
        %3366 = vmatprep.subr.mxu0 0.0
        %3367 = vmatpush1.msra.mxu0 0.0
        %3368 = vmatprep.subr.mxu0 0.0
        %3369 = vmatpush1.msra.mxu0 0.0
        %3370 = vmatprep.subr.mxu0 0.0
        %3371 = vmatpush1.msra.mxu0 0.0
        %3372 = vmatprep.subr.mxu0 0.0
        %3373 = vmatpush1.msra.mxu0 0.0
        %3374 = vmatprep.mubr.f32.mxu0 0.0
        %3375 = vmatmul.mubr.f32.gmra.mrb[0].mxu0 %v3299
        %v3376 = vpop.f32.mrb[0].mxu0
        %v3377 = vadd.f32 0.0, %v3376
        %v3378 = vpop.f32.mrb[0].mxu0
        %v3379 = vadd.f32 0.0, %v3378
        %3380 = vmatprep.mubr.f32.mxu0 0.0
        %3381 = vmatmul.mubr.f32.gmra.mrb[0].mxu0 %v3302
        %v3382 = vpop.f32.mrb[0].mxu0
        %v3383 = vadd.f32 0.0, %v3382
        %v3384 = vpop.f32.mrb[0].mxu0
        %v3385 = vadd.f32 0.0, %v3384
        %3386 = vmatprep.mubr.f32.mxu0 0.0
        %3387 = vmatmul.mubr.f32.gmra.mrb[0].mxu0 %v3305
        %v3388 = vpop.f32.mrb[0].mxu0
        %v3389 = vadd.f32 0.0, %v3388
        %v3390 = vpop.f32.mrb[0].mxu0
        %v3391 = vadd.f32 0.0, %v3390
        %3392 = vmatprep.mubr.f32.mxu0 0.0
        %3393 = vmatmul.mubr.f32.gmra.mrb[0].mxu0 %v3308
        %v3394 = vpop.f32.mrb[0].mxu0
        %v3395 = vadd.f32 0.0, %v3394
        %v3396 = vpop.f32.mrb[0].mxu0
        %v3397 = vadd.f32 0.0, %v3396
        %3398 = vdwg.mxu0
        %v3399 = vadd.f32 %v2864, %v3377
        %v3400 = vadd.f32 %v2866, %v3379
        %v3401 = vadd.f32 %v2870, %v3383
        %v3402 = vadd.f32 %v2872, %v3385
        %v3403 = vadd.f32 %v2876, %v3389
        %v3404 = vadd.f32 %v2878, %v3391
        %v3405 = vadd.f32 %v2882, %v3395
        %v3406 = vadd.f32 %v2884, %v3397
        %3407 = vrot.lane.b32.xlu0 %v1534, 32
        %v3408 = vpop.permute.xlu0 %3407
        %3409 = vrot.lane.b32.xlu0 %v1540, 32
        %v3410 = vpop.permute.xlu0 %3409
        %3411 = vrot.lane.b32.xlu0 %v1623, 32
        %v3412 = vpop.permute.xlu0 %3411
        %3413 = vrot.lane.b32.xlu0 %v1629, 32
        %v3414 = vpop.permute.xlu0 %3413
        %v3415 = vsel %vm1874, %v3408, 0
        %v3417 = vsel %vm1874, %v3410, 0
        %v3419 = vsel %vm1874, %v3412, 0
        %v3421 = vsel %vm1874, %v3414, 0
        %3423 = vmatprep.subr.mxu0 0.0
        %3424 = vmatpush1.xpose.msra.mxu0 %v3419
        %3425 = vmatprep.subr.mxu0 0.0
        %3426 = vmatpush1.xpose.msra.mxu0 %v3421
        %3427 = vmatprep.subr.mxu0 0.0
        %3428 = vmatpush1.xpose.msra.mxu0 0.0
        %3429 = vmatprep.subr.mxu0 0.0
        %3430 = vmatpush1.xpose.msra.mxu0 0.0
        %3431 = vmatprep.subr.mxu0 0.0
        %3432 = vmatpush1.xpose.msra.mxu0 0.0
        %3433 = vmatprep.subr.mxu0 0.0
        %3434 = vmatpush1.xpose.msra.mxu0 0.0
        %3435 = vmatprep.subr.mxu0 0.0
        %3436 = vmatpush1.xpose.msra.mxu0 0.0
        %3437 = vmatprep.subr.mxu0 0.0
        %3438 = vmatpush1.xpose.msra.mxu0 0.0
        %3439 = vmatprep.subr.mxu0 0.0
        %3440 = vmatpush1.xpose.msra.mxu0 0.0
        %3441 = vmatprep.subr.mxu0 0.0
        %3442 = vmatpush1.xpose.msra.mxu0 0.0
        %3443 = vmatprep.subr.mxu0 0.0
        %3444 = vmatpush1.xpose.msra.mxu0 0.0
        %3445 = vmatprep.subr.mxu0 0.0
        %3446 = vmatpush1.xpose.msra.mxu0 0.0
        %3447 = vmatprep.subr.mxu0 0.0
        %3448 = vmatpush1.xpose.msra.mxu0 0.0
        %3449 = vmatprep.subr.mxu0 0.0
        %3450 = vmatpush1.xpose.msra.mxu0 0.0
        %3451 = vmatprep.subr.mxu0 0.0
        %3452 = vmatpush1.xpose.msra.mxu0 0.0
        %3453 = vmatprep.subr.mxu0 0.0
        %3454 = vmatpush1.xpose.msra.mxu0 0.0
        %3455 = vmatprep.subr.mxu0 0.0
        %3456 = vmatpush1.xpose.msra.mxu0 0.0
        %3457 = vmatprep.subr.mxu0 0.0
        %3458 = vmatpush1.xpose.msra.mxu0 0.0
        %3459 = vmatprep.subr.mxu0 0.0
        %3460 = vmatpush1.xpose.msra.mxu0 0.0
        %3461 = vmatprep.subr.mxu0 0.0
        %3462 = vmatpush1.xpose.msra.mxu0 0.0
        %3463 = vmatprep.subr.mxu0 0.0
        %3464 = vmatpush1.xpose.msra.mxu0 0.0
        %3465 = vmatprep.subr.mxu0 0.0
        %3466 = vmatpush1.xpose.msra.mxu0 0.0
        %3467 = vmatprep.subr.mxu0 0.0
        %3468 = vmatpush1.xpose.msra.mxu0 0.0
        %3469 = vmatprep.subr.mxu0 0.0
        %3470 = vmatpush1.xpose.msra.mxu0 0.0
        %3471 = vmatprep.subr.mxu0 0.0
        %3472 = vmatpush1.xpose.msra.mxu0 0.0
        %3473 = vmatprep.subr.mxu0 0.0
        %3474 = vmatpush1.xpose.msra.mxu0 0.0
        %3475 = vmatprep.subr.mxu0 0.0
        %3476 = vmatpush1.xpose.msra.mxu0 0.0
        %3477 = vmatprep.subr.mxu0 0.0
        %3478 = vmatpush1.xpose.msra.mxu0 0.0
        %3479 = vmatprep.subr.mxu0 0.0
        %3480 = vmatpush1.xpose.msra.mxu0 0.0
        %3481 = vmatprep.subr.mxu0 0.0
        %3482 = vmatpush1.xpose.msra.mxu0 0.0
        %3483 = vmatprep.subr.mxu0 0.0
        %3484 = vmatpush1.xpose.msra.mxu0 0.0
        %3485 = vmatprep.subr.mxu0 0.0
        %3486 = vmatpush1.xpose.msra.mxu0 0.0
        %3487 = vmatprep.mubr.f32.mxu0 0.0
        %3488 = vmatmul.mubr.f32.gmra.mrb[0].mxu0 %v3415
        %v3489 = vpop.f32.mrb[0].mxu0
        %v3490 = vadd.f32 0.0, %v3489
        %v3491 = vpop.f32.mrb[0].mxu0
        %3492 = vmatprep.mubr.f32.mxu0 0.0
        %3493 = vmatmul.mubr.f32.gmra.mrb[0].mxu0 %v3417
        %v3494 = vpop.f32.mrb[0].mxu0
        %v3495 = vadd.f32 0.0, %v3494
        %v3496 = vpop.f32.mrb[0].mxu0
        %3497 = vdwg.mxu0
        %3498 = vrot.lane.b32.xlu0 %v1546, 32
        %v3499 = vpop.permute.xlu0 %3498
        %3500 = vrot.lane.b32.xlu0 %v1552, 32
        %v3501 = vpop.permute.xlu0 %3500
        %3502 = vrot.lane.b32.xlu0 %v1635, 32
        %v3503 = vpop.permute.xlu0 %3502
        %3504 = vrot.lane.b32.xlu0 %v1641, 32
        %v3505 = vpop.permute.xlu0 %3504
        %v3506 = vsel %vm1874, %v3499, 0
        %v3508 = vsel %vm1874, %v3501, 0
        %v3510 = vsel %vm1874, %v3503, 0
        %v3512 = vsel %vm1874, %v3505, 0
        %3514 = vmatprep.subr.mxu0 0.0
        %3515 = vmatpush1.xpose.msra.mxu0 %v3510
        %3516 = vmatprep.subr.mxu0 0.0
        %3517 = vmatpush1.xpose.msra.mxu0 %v3512
        %3518 = vmatprep.subr.mxu0 0.0
        %3519 = vmatpush1.xpose.msra.mxu0 0.0
        %3520 = vmatprep.subr.mxu0 0.0
        %3521 = vmatpush1.xpose.msra.mxu0 0.0
        %3522 = vmatprep.subr.mxu0 0.0
        %3523 = vmatpush1.xpose.msra.mxu0 0.0
        %3524 = vmatprep.subr.mxu0 0.0
        %3525 = vmatpush1.xpose.msra.mxu0 0.0
        %3526 = vmatprep.subr.mxu0 0.0
        %3527 = vmatpush1.xpose.msra.mxu0 0.0
        %3528 = vmatprep.subr.mxu0 0.0
        %3529 = vmatpush1.xpose.msra.mxu0 0.0
        %3530 = vmatprep.subr.mxu0 0.0
        %3531 = vmatpush1.xpose.msra.mxu0 0.0
        %3532 = vmatprep.subr.mxu0 0.0
        %3533 = vmatpush1.xpose.msra.mxu0 0.0
        %3534 = vmatprep.subr.mxu0 0.0
        %3535 = vmatpush1.xpose.msra.mxu0 0.0
        %3536 = vmatprep.subr.mxu0 0.0
        %3537 = vmatpush1.xpose.msra.mxu0 0.0
        %3538 = vmatprep.subr.mxu0 0.0
        %3539 = vmatpush1.xpose.msra.mxu0 0.0
        %3540 = vmatprep.subr.mxu0 0.0
        %3541 = vmatpush1.xpose.msra.mxu0 0.0
        %3542 = vmatprep.subr.mxu0 0.0
        %3543 = vmatpush1.xpose.msra.mxu0 0.0
        %3544 = vmatprep.subr.mxu0 0.0
        %3545 = vmatpush1.xpose.msra.mxu0 0.0
        %3546 = vmatprep.subr.mxu0 0.0
        %3547 = vmatpush1.xpose.msra.mxu0 0.0
        %3548 = vmatprep.subr.mxu0 0.0
        %3549 = vmatpush1.xpose.msra.mxu0 0.0
        %3550 = vmatprep.subr.mxu0 0.0
        %3551 = vmatpush1.xpose.msra.mxu0 0.0
        %3552 = vmatprep.subr.mxu0 0.0
        %3553 = vmatpush1.xpose.msra.mxu0 0.0
        %3554 = vmatprep.subr.mxu0 0.0
        %3555 = vmatpush1.xpose.msra.mxu0 0.0
        %3556 = vmatprep.subr.mxu0 0.0
        %3557 = vmatpush1.xpose.msra.mxu0 0.0
        %3558 = vmatprep.subr.mxu0 0.0
        %3559 = vmatpush1.xpose.msra.mxu0 0.0
        %3560 = vmatprep.subr.mxu0 0.0
        %3561 = vmatpush1.xpose.msra.mxu0 0.0
        %3562 = vmatprep.subr.mxu0 0.0
        %3563 = vmatpush1.xpose.msra.mxu0 0.0
        %3564 = vmatprep.subr.mxu0 0.0
        %3565 = vmatpush1.xpose.msra.mxu0 0.0
        %3566 = vmatprep.subr.mxu0 0.0
        %3567 = vmatpush1.xpose.msra.mxu0 0.0
        %3568 = vmatprep.subr.mxu0 0.0
        %3569 = vmatpush1.xpose.msra.mxu0 0.0
        %3570 = vmatprep.subr.mxu0 0.0
        %3571 = vmatpush1.xpose.msra.mxu0 0.0
        %3572 = vmatprep.subr.mxu0 0.0
        %3573 = vmatpush1.xpose.msra.mxu0 0.0
        %3574 = vmatprep.subr.mxu0 0.0
        %3575 = vmatpush1.xpose.msra.mxu0 0.0
        %3576 = vmatprep.subr.mxu0 0.0
        %3577 = vmatpush1.xpose.msra.mxu0 0.0
        %3578 = vmatprep.mubr.f32.mxu0 0.0
        %3579 = vmatmul.mubr.f32.gmra.mrb[0].mxu0 %v3506
        %v3580 = vpop.f32.mrb[0].mxu0
        %v3581 = vadd.f32 0.0, %v3580
        %v3582 = vpop.f32.mrb[0].mxu0
        %3583 = vmatprep.mubr.f32.mxu0 0.0
        %3584 = vmatmul.mubr.f32.gmra.mrb[0].mxu0 %v3508
        %v3585 = vpop.f32.mrb[0].mxu0
        %v3586 = vadd.f32 0.0, %v3585
        %v3587 = vpop.f32.mrb[0].mxu0
        %3588 = vdwg.mxu0
        %v3589 = vsel %vm2049, %v3490, -inf
        %3590 = vmax.xlane.f32.xlu0 %v3589
        %v3591 = vpop.xlane.xlu0 %3590
        %v3592 = vsel %vm2049, %v3495, -inf
        %3593 = vmax.xlane.f32.xlu0 %v3592
        %v3594 = vpop.xlane.xlu0 %3593
        %v3595 = vsel %vm2049, %v3581, -inf
        %3596 = vmax.xlane.f32.xlu0 %v3595
        %v3597 = vpop.xlane.xlu0 %3596
        %v3598 = vsel %vm2049, %v3586, -inf
        %3599 = vmax.xlane.f32.xlu0 %v3598
        %v3600 = vpop.xlane.xlu0 %3599
        %v3601 = vsub.f32 %v3490, %v3591
        %v3602 = vsub.f32 %v3495, %v3594
        %v3603 = vsub.f32 %v3581, %v3597
        %v3604 = vsub.f32 %v3586, %v3600
        %v3605 = vmul.f32 %v3601, 1.442695
        %v3606 = vpow.pop %v3605
        %v3607 = vmul.f32 %v3602, 1.442695
        %v3608 = vpow.pop %v3607
        %v3609 = vmul.f32 %v3603, 1.442695
        %v3610 = vpow.pop %v3609
        %v3611 = vmul.f32 %v3604, 1.442695
        %v3612 = vpow.pop %v3611
        %v3613 = vsel %vm2049, %v3606, 0.0
        %3614 = vadd.xlane.f32.xlu0 %v3613
        %v3615 = vpop.xlane.xlu0 %3614
        %v3616 = vsel %vm2049, %v3608, 0.0
        %3617 = vadd.xlane.f32.xlu0 %v3616
        %v3618 = vpop.xlane.xlu0 %3617
        %v3619 = vsel %vm2049, %v3610, 0.0
        %3620 = vadd.xlane.f32.xlu0 %v3619
        %v3621 = vpop.xlane.xlu0 %3620
        %v3622 = vsel %vm2049, %v3612, 0.0
        %3623 = vadd.xlane.f32.xlu0 %v3622
        %v3624 = vpop.xlane.xlu0 %3623
        %v3625 = vrcp.pop %v3615
        %v3626 = vrcp.pop %v3618
        %v3627 = vrcp.pop %v3621
        %v3628 = vrcp.pop %v3624
        %v3629 = vmul.f32 %v3615, %v3625
        %v3630 = vmul.f32 %v3618, %v3626
        %v3631 = vmul.f32 %v3621, %v3627
        %v3632 = vmul.f32 %v3624, %v3628
        %v3633 = vsub.f32 2.0, %v3629
        %v3634 = vsub.f32 2.0, %v3630
        %v3635 = vsub.f32 2.0, %v3631
        %v3636 = vsub.f32 2.0, %v3632
        %v3637 = vmul.f32 %v3625, %v3633
        %v3638 = vmul.f32 %v3626, %v3634
        %v3639 = vmul.f32 %v3627, %v3635
        %v3640 = vmul.f32 %v3628, %v3636
        %v3641 = vmul.f32 %v3606, %v3637
        %v3642 = vmul.f32 %v3608, %v3638
        %v3643 = vmul.f32 %v3610, %v3639
        %v3644 = vmul.f32 %v3612, %v3640
        %3645 = vrot.lane.b32.xlu0 %v1788, 32
        %v3646 = vpop.permute.xlu0 %3645
        %3647 = vrot.lane.b32.xlu0 %v1794, 32
        %v3648 = vpop.permute.xlu0 %3647
        %v3652 = vsel %vm2049, %v3641, 0
        %v3655 = vsel %vm2049, %v3642, 0
        %3657 = vmatprep.subr.mxu0 0.0
        %3658 = vmatpush1.msra.mxu0 %v3646
        %3659 = vmatprep.subr.mxu0 0.0
        %3660 = vmatpush1.msra.mxu0 %v3648
        %3661 = vmatprep.subr.mxu0 0.0
        %3662 = vmatpush1.msra.mxu0 0.0
        %3663 = vmatprep.subr.mxu0 0.0
        %3664 = vmatpush1.msra.mxu0 0.0
        %3665 = vmatprep.subr.mxu0 0.0
        %3666 = vmatpush1.msra.mxu0 0.0
        %3667 = vmatprep.subr.mxu0 0.0
        %3668 = vmatpush1.msra.mxu0 0.0
        %3669 = vmatprep.subr.mxu0 0.0
        %3670 = vmatpush1.msra.mxu0 0.0
        %3671 = vmatprep.subr.mxu0 0.0
        %3672 = vmatpush1.msra.mxu0 0.0
        %3673 = vmatprep.subr.mxu0 0.0
        %3674 = vmatpush1.msra.mxu0 0.0
        %3675 = vmatprep.subr.mxu0 0.0
        %3676 = vmatpush1.msra.mxu0 0.0
        %3677 = vmatprep.subr.mxu0 0.0
        %3678 = vmatpush1.msra.mxu0 0.0
        %3679 = vmatprep.subr.mxu0 0.0
        %3680 = vmatpush1.msra.mxu0 0.0
        %3681 = vmatprep.subr.mxu0 0.0
        %3682 = vmatpush1.msra.mxu0 0.0
        %3683 = vmatprep.subr.mxu0 0.0
        %3684 = vmatpush1.msra.mxu0 0.0
        %3685 = vmatprep.subr.mxu0 0.0
        %3686 = vmatpush1.msra.mxu0 0.0
        %3687 = vmatprep.subr.mxu0 0.0
        %3688 = vmatpush1.msra.mxu0 0.0
        %3689 = vmatprep.subr.mxu0 0.0
        %3690 = vmatpush1.msra.mxu0 0.0
        %3691 = vmatprep.subr.mxu0 0.0
        %3692 = vmatpush1.msra.mxu0 0.0
        %3693 = vmatprep.subr.mxu0 0.0
        %3694 = vmatpush1.msra.mxu0 0.0
        %3695 = vmatprep.subr.mxu0 0.0
        %3696 = vmatpush1.msra.mxu0 0.0
        %3697 = vmatprep.subr.mxu0 0.0
        %3698 = vmatpush1.msra.mxu0 0.0
        %3699 = vmatprep.subr.mxu0 0.0
        %3700 = vmatpush1.msra.mxu0 0.0
        %3701 = vmatprep.subr.mxu0 0.0
        %3702 = vmatpush1.msra.mxu0 0.0
        %3703 = vmatprep.subr.mxu0 0.0
        %3704 = vmatpush1.msra.mxu0 0.0
        %3705 = vmatprep.subr.mxu0 0.0
        %3706 = vmatpush1.msra.mxu0 0.0
        %3707 = vmatprep.subr.mxu0 0.0
        %3708 = vmatpush1.msra.mxu0 0.0
        %3709 = vmatprep.subr.mxu0 0.0
        %3710 = vmatpush1.msra.mxu0 0.0
        %3711 = vmatprep.subr.mxu0 0.0
        %3712 = vmatpush1.msra.mxu0 0.0
        %3713 = vmatprep.subr.mxu0 0.0
        %3714 = vmatpush1.msra.mxu0 0.0
        %3715 = vmatprep.subr.mxu0 0.0
        %3716 = vmatpush1.msra.mxu0 0.0
        %3717 = vmatprep.subr.mxu0 0.0
        %3718 = vmatpush1.msra.mxu0 0.0
        %3719 = vmatprep.subr.mxu0 0.0
        %3720 = vmatpush1.msra.mxu0 0.0
        %3721 = vmatprep.mubr.f32.mxu0 0.0
        %3722 = vmatmul.mubr.f32.gmra.mrb[0].mxu0 %v3652
        %v3723 = vpop.f32.mrb[0].mxu0
        %v3724 = vadd.f32 0.0, %v3723
        %v3725 = vpop.f32.mrb[0].mxu0
        %3726 = vmatprep.mubr.f32.mxu0 0.0
        %3727 = vmatmul.mubr.f32.gmra.mrb[0].mxu0 %v3655
        %v3728 = vpop.f32.mrb[0].mxu0
        %v3729 = vadd.f32 0.0, %v3728
        %v3730 = vpop.f32.mrb[0].mxu0
        %3731 = vdwg.mxu0
        %3732 = vrot.lane.b32.xlu0 %v1800, 32
        %v3733 = vpop.permute.xlu0 %3732
        %3734 = vrot.lane.b32.xlu0 %v1806, 32
        %v3735 = vpop.permute.xlu0 %3734
        %v3739 = vsel %vm2049, %v3643, 0
        %v3742 = vsel %vm2049, %v3644, 0
        %3744 = vmatprep.subr.mxu0 0.0
        %3745 = vmatpush1.msra.mxu0 %v3733
        %3746 = vmatprep.subr.mxu0 0.0
        %3747 = vmatpush1.msra.mxu0 %v3735
        %3748 = vmatprep.subr.mxu0 0.0
        %3749 = vmatpush1.msra.mxu0 0.0
        %3750 = vmatprep.subr.mxu0 0.0
        %3751 = vmatpush1.msra.mxu0 0.0
        %3752 = vmatprep.subr.mxu0 0.0
        %3753 = vmatpush1.msra.mxu0 0.0
        %3754 = vmatprep.subr.mxu0 0.0
        %3755 = vmatpush1.msra.mxu0 0.0
        %3756 = vmatprep.subr.mxu0 0.0
        %3757 = vmatpush1.msra.mxu0 0.0
        %3758 = vmatprep.subr.mxu0 0.0
        %3759 = vmatpush1.msra.mxu0 0.0
        %3760 = vmatprep.subr.mxu0 0.0
        %3761 = vmatpush1.msra.mxu0 0.0
        %3762 = vmatprep.subr.mxu0 0.0
        %3763 = vmatpush1.msra.mxu0 0.0
        %3764 = vmatprep.subr.mxu0 0.0
        %3765 = vmatpush1.msra.mxu0 0.0
        %3766 = vmatprep.subr.mxu0 0.0
        %3767 = vmatpush1.msra.mxu0 0.0
        %3768 = vmatprep.subr.mxu0 0.0
        %3769 = vmatpush1.msra.mxu0 0.0
        %3770 = vmatprep.subr.mxu0 0.0
        %3771 = vmatpush1.msra.mxu0 0.0
        %3772 = vmatprep.subr.mxu0 0.0
        %3773 = vmatpush1.msra.mxu0 0.0
        %3774 = vmatprep.subr.mxu0 0.0
        %3775 = vmatpush1.msra.mxu0 0.0
        %3776 = vmatprep.subr.mxu0 0.0
        %3777 = vmatpush1.msra.mxu0 0.0
        %3778 = vmatprep.subr.mxu0 0.0
        %3779 = vmatpush1.msra.mxu0 0.0
        %3780 = vmatprep.subr.mxu0 0.0
        %3781 = vmatpush1.msra.mxu0 0.0
        %3782 = vmatprep.subr.mxu0 0.0
        %3783 = vmatpush1.msra.mxu0 0.0
        %3784 = vmatprep.subr.mxu0 0.0
        %3785 = vmatpush1.msra.mxu0 0.0
        %3786 = vmatprep.subr.mxu0 0.0
        %3787 = vmatpush1.msra.mxu0 0.0
        %3788 = vmatprep.subr.mxu0 0.0
        %3789 = vmatpush1.msra.mxu0 0.0
        %3790 = vmatprep.subr.mxu0 0.0
        %3791 = vmatpush1.msra.mxu0 0.0
        %3792 = vmatprep.subr.mxu0 0.0
        %3793 = vmatpush1.msra.mxu0 0.0
        %3794 = vmatprep.subr.mxu0 0.0
        %3795 = vmatpush1.msra.mxu0 0.0
        %3796 = vmatprep.subr.mxu0 0.0
        %3797 = vmatpush1.msra.mxu0 0.0
        %3798 = vmatprep.subr.mxu0 0.0
        %3799 = vmatpush1.msra.mxu0 0.0
        %3800 = vmatprep.subr.mxu0 0.0
        %3801 = vmatpush1.msra.mxu0 0.0
        %3802 = vmatprep.subr.mxu0 0.0
        %3803 = vmatpush1.msra.mxu0 0.0
        %3804 = vmatprep.subr.mxu0 0.0
        %3805 = vmatpush1.msra.mxu0 0.0
        %3806 = vmatprep.subr.mxu0 0.0
        %3807 = vmatpush1.msra.mxu0 0.0
        %3808 = vmatprep.mubr.f32.mxu0 0.0
        %3809 = vmatmul.mubr.f32.gmra.mrb[0].mxu0 %v3739
        %v3810 = vpop.f32.mrb[0].mxu0
        %v3811 = vadd.f32 0.0, %v3810
        %v3812 = vpop.f32.mrb[0].mxu0
        %3813 = vmatprep.mubr.f32.mxu0 0.0
        %3814 = vmatmul.mubr.f32.gmra.mrb[0].mxu0 %v3742
        %v3815 = vpop.f32.mrb[0].mxu0
        %v3816 = vadd.f32 0.0, %v3815
        %v3817 = vpop.f32.mrb[0].mxu0
        %3818 = vdwg.mxu0
        %v3820 = vsel %vm1874, %v3724, 0
        %v3823 = vsel %vm1874, %v3729, 0
        %v3826 = vsel %vm1874, %v3811, 0
        %v3829 = vsel %vm1874, %v3816, 0
        %3831 = vmatprep.subr.mxu0 %v1835
        %3832 = vmatpush1.msra.mxu0 %v1834
        %3833 = vmatprep.subr.mxu0 %v1837
        %3834 = vmatpush1.msra.mxu0 %v1836
        %3835 = vmatprep.subr.mxu0 %v1839
        %3836 = vmatpush1.msra.mxu0 %v1838
        %3837 = vmatprep.subr.mxu0 %v1841
        %3838 = vmatpush1.msra.mxu0 %v1840
        %3839 = vmatprep.subr.mxu0 0.0
        %3840 = vmatpush1.msra.mxu0 0.0
        %3841 = vmatprep.subr.mxu0 0.0
        %3842 = vmatpush1.msra.mxu0 0.0
        %3843 = vmatprep.subr.mxu0 0.0
        %3844 = vmatpush1.msra.mxu0 0.0
        %3845 = vmatprep.subr.mxu0 0.0
        %3846 = vmatpush1.msra.mxu0 0.0
        %3847 = vmatprep.subr.mxu0 0.0
        %3848 = vmatpush1.msra.mxu0 0.0
        %3849 = vmatprep.subr.mxu0 0.0
        %3850 = vmatpush1.msra.mxu0 0.0
        %3851 = vmatprep.subr.mxu0 0.0
        %3852 = vmatpush1.msra.mxu0 0.0
        %3853 = vmatprep.subr.mxu0 0.0
        %3854 = vmatpush1.msra.mxu0 0.0
        %3855 = vmatprep.subr.mxu0 0.0
        %3856 = vmatpush1.msra.mxu0 0.0
        %3857 = vmatprep.subr.mxu0 0.0
        %3858 = vmatpush1.msra.mxu0 0.0
        %3859 = vmatprep.subr.mxu0 0.0
        %3860 = vmatpush1.msra.mxu0 0.0
        %3861 = vmatprep.subr.mxu0 0.0
        %3862 = vmatpush1.msra.mxu0 0.0
        %3863 = vmatprep.subr.mxu0 0.0
        %3864 = vmatpush1.msra.mxu0 0.0
        %3865 = vmatprep.subr.mxu0 0.0
        %3866 = vmatpush1.msra.mxu0 0.0
        %3867 = vmatprep.subr.mxu0 0.0
        %3868 = vmatpush1.msra.mxu0 0.0
        %3869 = vmatprep.subr.mxu0 0.0
        %3870 = vmatpush1.msra.mxu0 0.0
        %3871 = vmatprep.subr.mxu0 0.0
        %3872 = vmatpush1.msra.mxu0 0.0
        %3873 = vmatprep.subr.mxu0 0.0
        %3874 = vmatpush1.msra.mxu0 0.0
        %3875 = vmatprep.subr.mxu0 0.0
        %3876 = vmatpush1.msra.mxu0 0.0
        %3877 = vmatprep.subr.mxu0 0.0
        %3878 = vmatpush1.msra.mxu0 0.0
        %3879 = vmatprep.subr.mxu0 0.0
        %3880 = vmatpush1.msra.mxu0 0.0
        %3881 = vmatprep.subr.mxu0 0.0
        %3882 = vmatpush1.msra.mxu0 0.0
        %3883 = vmatprep.subr.mxu0 0.0
        %3884 = vmatpush1.msra.mxu0 0.0
        %3885 = vmatprep.subr.mxu0 0.0
        %3886 = vmatpush1.msra.mxu0 0.0
        %3887 = vmatprep.subr.mxu0 0.0
        %3888 = vmatpush1.msra.mxu0 0.0
        %3889 = vmatprep.subr.mxu0 0.0
        %3890 = vmatpush1.msra.mxu0 0.0
        %3891 = vmatprep.subr.mxu0 0.0
        %3892 = vmatpush1.msra.mxu0 0.0
        %3893 = vmatprep.subr.mxu0 0.0
        %3894 = vmatpush1.msra.mxu0 0.0
        %3895 = vmatprep.mubr.f32.mxu0 0.0
        %3896 = vmatmul.mubr.f32.gmra.mrb[0].mxu0 %v3820
        %v3897 = vpop.f32.mrb[0].mxu0
        %v3898 = vadd.f32 0.0, %v3897
        %v3899 = vpop.f32.mrb[0].mxu0
        %v3900 = vadd.f32 0.0, %v3899
        %3901 = vmatprep.mubr.f32.mxu0 0.0
        %3902 = vmatmul.mubr.f32.gmra.mrb[0].mxu0 %v3823
        %v3903 = vpop.f32.mrb[0].mxu0
        %v3904 = vadd.f32 0.0, %v3903
        %v3905 = vpop.f32.mrb[0].mxu0
        %v3906 = vadd.f32 0.0, %v3905
        %3907 = vmatprep.mubr.f32.mxu0 0.0
        %3908 = vmatmul.mubr.f32.gmra.mrb[0].mxu0 %v3826
        %v3909 = vpop.f32.mrb[0].mxu0
        %v3910 = vadd.f32 0.0, %v3909
        %v3911 = vpop.f32.mrb[0].mxu0
        %v3912 = vadd.f32 0.0, %v3911
        %3913 = vmatprep.mubr.f32.mxu0 0.0
        %3914 = vmatmul.mubr.f32.gmra.mrb[0].mxu0 %v3829
        %v3915 = vpop.f32.mrb[0].mxu0
        %v3916 = vadd.f32 0.0, %v3915
        %v3917 = vpop.f32.mrb[0].mxu0
        %v3918 = vadd.f32 0.0, %v3917
        %3919 = vdwg.mxu0
        %v3920 = vadd.f32 %v3399, %v3898
        %v3921 = vadd.f32 %v3400, %v3900
        %v3922 = vadd.f32 %v3401, %v3904
        %v3923 = vadd.f32 %v3402, %v3906
        %v3924 = vadd.f32 %v3403, %v3910
        %v3925 = vadd.f32 %v3404, %v3912
        %v3926 = vadd.f32 %v3405, %v3916
        %v3927 = vadd.f32 %v3406, %v3918
        %v3929 = vsel %vm1874, %v1536, 0
        %v3932 = vsel %vm1874, %v1542, 0
        %v3935 = vsel %vm1874, %v1625, 0
        %v3938 = vsel %vm1874, %v1631, 0
        %3940 = vmatprep.subr.mxu0 0.0
        %3941 = vmatpush1.xpose.msra.mxu0 %v3935
        %3942 = vmatprep.subr.mxu0 0.0
        %3943 = vmatpush1.xpose.msra.mxu0 %v3938
        %3944 = vmatprep.subr.mxu0 0.0
        %3945 = vmatpush1.xpose.msra.mxu0 0.0
        %3946 = vmatprep.subr.mxu0 0.0
        %3947 = vmatpush1.xpose.msra.mxu0 0.0
        %3948 = vmatprep.subr.mxu0 0.0
        %3949 = vmatpush1.xpose.msra.mxu0 0.0
        %3950 = vmatprep.subr.mxu0 0.0
        %3951 = vmatpush1.xpose.msra.mxu0 0.0
        %3952 = vmatprep.subr.mxu0 0.0
        %3953 = vmatpush1.xpose.msra.mxu0 0.0
        %3954 = vmatprep.subr.mxu0 0.0
        %3955 = vmatpush1.xpose.msra.mxu0 0.0
        %3956 = vmatprep.subr.mxu0 0.0
        %3957 = vmatpush1.xpose.msra.mxu0 0.0
        %3958 = vmatprep.subr.mxu0 0.0
        %3959 = vmatpush1.xpose.msra.mxu0 0.0
        %3960 = vmatprep.subr.mxu0 0.0
        %3961 = vmatpush1.xpose.msra.mxu0 0.0
        %3962 = vmatprep.subr.mxu0 0.0
        %3963 = vmatpush1.xpose.msra.mxu0 0.0
        %3964 = vmatprep.subr.mxu0 0.0
        %3965 = vmatpush1.xpose.msra.mxu0 0.0
        %3966 = vmatprep.subr.mxu0 0.0
        %3967 = vmatpush1.xpose.msra.mxu0 0.0
        %3968 = vmatprep.subr.mxu0 0.0
        %3969 = vmatpush1.xpose.msra.mxu0 0.0
        %3970 = vmatprep.subr.mxu0 0.0
        %3971 = vmatpush1.xpose.msra.mxu0 0.0
        %3972 = vmatprep.subr.mxu0 0.0
        %3973 = vmatpush1.xpose.msra.mxu0 0.0
        %3974 = vmatprep.subr.mxu0 0.0
        %3975 = vmatpush1.xpose.msra.mxu0 0.0
        %3976 = vmatprep.subr.mxu0 0.0
        %3977 = vmatpush1.xpose.msra.mxu0 0.0
        %3978 = vmatprep.subr.mxu0 0.0
        %3979 = vmatpush1.xpose.msra.mxu0 0.0
        %3980 = vmatprep.subr.mxu0 0.0
        %3981 = vmatpush1.xpose.msra.mxu0 0.0
        %3982 = vmatprep.subr.mxu0 0.0
        %3983 = vmatpush1.xpose.msra.mxu0 0.0
        %3984 = vmatprep.subr.mxu0 0.0
        %3985 = vmatpush1.xpose.msra.mxu0 0.0
        %3986 = vmatprep.subr.mxu0 0.0
        %3987 = vmatpush1.xpose.msra.mxu0 0.0
        %3988 = vmatprep.subr.mxu0 0.0
        %3989 = vmatpush1.xpose.msra.mxu0 0.0
        %3990 = vmatprep.subr.mxu0 0.0
        %3991 = vmatpush1.xpose.msra.mxu0 0.0
        %3992 = vmatprep.subr.mxu0 0.0
        %3993 = vmatpush1.xpose.msra.mxu0 0.0
        %3994 = vmatprep.subr.mxu0 0.0
        %3995 = vmatpush1.xpose.msra.mxu0 0.0
        %3996 = vmatprep.subr.mxu0 0.0
        %3997 = vmatpush1.xpose.msra.mxu0 0.0
        %3998 = vmatprep.subr.mxu0 0.0
        %3999 = vmatpush1.xpose.msra.mxu0 0.0
        %4000 = vmatprep.subr.mxu0 0.0
        %4001 = vmatpush1.xpose.msra.mxu0 0.0
        %4002 = vmatprep.subr.mxu0 0.0
        %4003 = vmatpush1.xpose.msra.mxu0 0.0
        %4004 = vmatprep.mubr.f32.mxu0 0.0
        %4005 = vmatmul.mubr.f32.gmra.mrb[0].mxu0 %v3929
        %v4006 = vpop.f32.mrb[0].mxu0
        %v4007 = vadd.f32 0.0, %v4006
        %v4008 = vpop.f32.mrb[0].mxu0
        %4009 = vmatprep.mubr.f32.mxu0 0.0
        %4010 = vmatmul.mubr.f32.gmra.mrb[0].mxu0 %v3932
        %v4011 = vpop.f32.mrb[0].mxu0
        %v4012 = vadd.f32 0.0, %v4011
        %v4013 = vpop.f32.mrb[0].mxu0
        %4014 = vdwg.mxu0
        %v4016 = vsel %vm1874, %v1548, 0
        %v4019 = vsel %vm1874, %v1554, 0
        %v4022 = vsel %vm1874, %v1637, 0
        %v4025 = vsel %vm1874, %v1643, 0
        %4027 = vmatprep.subr.mxu0 0.0
        %4028 = vmatpush1.xpose.msra.mxu0 %v4022
        %4029 = vmatprep.subr.mxu0 0.0
        %4030 = vmatpush1.xpose.msra.mxu0 %v4025
        %4031 = vmatprep.subr.mxu0 0.0
        %4032 = vmatpush1.xpose.msra.mxu0 0.0
        %4033 = vmatprep.subr.mxu0 0.0
        %4034 = vmatpush1.xpose.msra.mxu0 0.0
        %4035 = vmatprep.subr.mxu0 0.0
        %4036 = vmatpush1.xpose.msra.mxu0 0.0
        %4037 = vmatprep.subr.mxu0 0.0
        %4038 = vmatpush1.xpose.msra.mxu0 0.0
        %4039 = vmatprep.subr.mxu0 0.0
        %4040 = vmatpush1.xpose.msra.mxu0 0.0
        %4041 = vmatprep.subr.mxu0 0.0
        %4042 = vmatpush1.xpose.msra.mxu0 0.0
        %4043 = vmatprep.subr.mxu0 0.0
        %4044 = vmatpush1.xpose.msra.mxu0 0.0
        %4045 = vmatprep.subr.mxu0 0.0
        %4046 = vmatpush1.xpose.msra.mxu0 0.0
        %4047 = vmatprep.subr.mxu0 0.0
        %4048 = vmatpush1.xpose.msra.mxu0 0.0
        %4049 = vmatprep.subr.mxu0 0.0
        %4050 = vmatpush1.xpose.msra.mxu0 0.0
        %4051 = vmatprep.subr.mxu0 0.0
        %4052 = vmatpush1.xpose.msra.mxu0 0.0
        %4053 = vmatprep.subr.mxu0 0.0
        %4054 = vmatpush1.xpose.msra.mxu0 0.0
        %4055 = vmatprep.subr.mxu0 0.0
        %4056 = vmatpush1.xpose.msra.mxu0 0.0
        %4057 = vmatprep.subr.mxu0 0.0
        %4058 = vmatpush1.xpose.msra.mxu0 0.0
        %4059 = vmatprep.subr.mxu0 0.0
        %4060 = vmatpush1.xpose.msra.mxu0 0.0
        %4061 = vmatprep.subr.mxu0 0.0
        %4062 = vmatpush1.xpose.msra.mxu0 0.0
        %4063 = vmatprep.subr.mxu0 0.0
        %4064 = vmatpush1.xpose.msra.mxu0 0.0
        %4065 = vmatprep.subr.mxu0 0.0
        %4066 = vmatpush1.xpose.msra.mxu0 0.0
        %4067 = vmatprep.subr.mxu0 0.0
        %4068 = vmatpush1.xpose.msra.mxu0 0.0
        %4069 = vmatprep.subr.mxu0 0.0
        %4070 = vmatpush1.xpose.msra.mxu0 0.0
        %4071 = vmatprep.subr.mxu0 0.0
        %4072 = vmatpush1.xpose.msra.mxu0 0.0
        %4073 = vmatprep.subr.mxu0 0.0
        %4074 = vmatpush1.xpose.msra.mxu0 0.0
        %4075 = vmatprep.subr.mxu0 0.0
        %4076 = vmatpush1.xpose.msra.mxu0 0.0
        %4077 = vmatprep.subr.mxu0 0.0
        %4078 = vmatpush1.xpose.msra.mxu0 0.0
        %4079 = vmatprep.subr.mxu0 0.0
        %4080 = vmatpush1.xpose.msra.mxu0 0.0
        %4081 = vmatprep.subr.mxu0 0.0
        %4082 = vmatpush1.xpose.msra.mxu0 0.0
        %4083 = vmatprep.subr.mxu0 0.0
        %4084 = vmatpush1.xpose.msra.mxu0 0.0
        %4085 = vmatprep.subr.mxu0 0.0
        %4086 = vmatpush1.xpose.msra.mxu0 0.0
        %4087 = vmatprep.subr.mxu0 0.0
        %4088 = vmatpush1.xpose.msra.mxu0 0.0
        %4089 = vmatprep.subr.mxu0 0.0
        %4090 = vmatpush1.xpose.msra.mxu0 0.0
        %4091 = vmatprep.mubr.f32.mxu0 0.0
        %4092 = vmatmul.mubr.f32.gmra.mrb[0].mxu0 %v4016
        %v4093 = vpop.f32.mrb[0].mxu0
        %v4094 = vadd.f32 0.0, %v4093
        %v4095 = vpop.f32.mrb[0].mxu0
        %4096 = vmatprep.mubr.f32.mxu0 0.0
        %4097 = vmatmul.mubr.f32.gmra.mrb[0].mxu0 %v4019
        %v4098 = vpop.f32.mrb[0].mxu0
        %v4099 = vadd.f32 0.0, %v4098
        %v4100 = vpop.f32.mrb[0].mxu0
        %4101 = vdwg.mxu0
        %v4102 = vsel %vm2049, %v4007, -inf
        %4103 = vmax.xlane.f32.xlu0 %v4102
        %v4104 = vpop.xlane.xlu0 %4103
        %v4105 = vsel %vm2049, %v4012, -inf
        %4106 = vmax.xlane.f32.xlu0 %v4105
        %v4107 = vpop.xlane.xlu0 %4106
        %v4108 = vsel %vm2049, %v4094, -inf
        %4109 = vmax.xlane.f32.xlu0 %v4108
        %v4110 = vpop.xlane.xlu0 %4109
        %v4111 = vsel %vm2049, %v4099, -inf
        %4112 = vmax.xlane.f32.xlu0 %v4111
        %v4113 = vpop.xlane.xlu0 %4112
        %v4114 = vsub.f32 %v4007, %v4104
        %v4115 = vsub.f32 %v4012, %v4107
        %v4116 = vsub.f32 %v4094, %v4110
        %v4117 = vsub.f32 %v4099, %v4113
        %v4118 = vmul.f32 %v4114, 1.442695
        %v4119 = vpow.pop %v4118
        %v4120 = vmul.f32 %v4115, 1.442695
        %v4121 = vpow.pop %v4120
        %v4122 = vmul.f32 %v4116, 1.442695
        %v4123 = vpow.pop %v4122
        %v4124 = vmul.f32 %v4117, 1.442695
        %v4125 = vpow.pop %v4124
        %v4126 = vsel %vm2049, %v4119, 0.0
        %4127 = vadd.xlane.f32.xlu0 %v4126
        %v4128 = vpop.xlane.xlu0 %4127
        %v4129 = vsel %vm2049, %v4121, 0.0
        %4130 = vadd.xlane.f32.xlu0 %v4129
        %v4131 = vpop.xlane.xlu0 %4130
        %v4132 = vsel %vm2049, %v4123, 0.0
        %4133 = vadd.xlane.f32.xlu0 %v4132
        %v4134 = vpop.xlane.xlu0 %4133
        %v4135 = vsel %vm2049, %v4125, 0.0
        %4136 = vadd.xlane.f32.xlu0 %v4135
        %v4137 = vpop.xlane.xlu0 %4136
        %v4138 = vrcp.pop %v4128
        %v4139 = vrcp.pop %v4131
        %v4140 = vrcp.pop %v4134
        %v4141 = vrcp.pop %v4137
        %v4142 = vmul.f32 %v4128, %v4138
        %v4143 = vmul.f32 %v4131, %v4139
        %v4144 = vmul.f32 %v4134, %v4140
        %v4145 = vmul.f32 %v4137, %v4141
        %v4146 = vsub.f32 2.0, %v4142
        %v4147 = vsub.f32 2.0, %v4143
        %v4148 = vsub.f32 2.0, %v4144
        %v4149 = vsub.f32 2.0, %v4145
        %v4150 = vmul.f32 %v4138, %v4146
        %v4151 = vmul.f32 %v4139, %v4147
        %v4152 = vmul.f32 %v4140, %v4148
        %v4153 = vmul.f32 %v4141, %v4149
        %v4154 = vmul.f32 %v4119, %v4150
        %v4155 = vmul.f32 %v4121, %v4151
        %v4156 = vmul.f32 %v4123, %v4152
        %v4157 = vmul.f32 %v4125, %v4153
        %v4159 = vsel %vm2049, %v4154, 0
        %v4162 = vsel %vm2049, %v4155, 0
        %4164 = vmatprep.subr.mxu0 0.0
        %4165 = vmatpush1.msra.mxu0 %v1790
        %4166 = vmatprep.subr.mxu0 0.0
        %4167 = vmatpush1.msra.mxu0 %v1796
        %4168 = vmatprep.subr.mxu0 0.0
        %4169 = vmatpush1.msra.mxu0 0.0
        %4170 = vmatprep.subr.mxu0 0.0
        %4171 = vmatpush1.msra.mxu0 0.0
        %4172 = vmatprep.subr.mxu0 0.0
        %4173 = vmatpush1.msra.mxu0 0.0
        %4174 = vmatprep.subr.mxu0 0.0
        %4175 = vmatpush1.msra.mxu0 0.0
        %4176 = vmatprep.subr.mxu0 0.0
        %4177 = vmatpush1.msra.mxu0 0.0
        %4178 = vmatprep.subr.mxu0 0.0
        %4179 = vmatpush1.msra.mxu0 0.0
        %4180 = vmatprep.subr.mxu0 0.0
        %4181 = vmatpush1.msra.mxu0 0.0
        %4182 = vmatprep.subr.mxu0 0.0
        %4183 = vmatpush1.msra.mxu0 0.0
        %4184 = vmatprep.subr.mxu0 0.0
        %4185 = vmatpush1.msra.mxu0 0.0
        %4186 = vmatprep.subr.mxu0 0.0
        %4187 = vmatpush1.msra.mxu0 0.0
        %4188 = vmatprep.subr.mxu0 0.0
        %4189 = vmatpush1.msra.mxu0 0.0
        %4190 = vmatprep.subr.mxu0 0.0
        %4191 = vmatpush1.msra.mxu0 0.0
        %4192 = vmatprep.subr.mxu0 0.0
        %4193 = vmatpush1.msra.mxu0 0.0
        %4194 = vmatprep.subr.mxu0 0.0
        %4195 = vmatpush1.msra.mxu0 0.0
        %4196 = vmatprep.subr.mxu0 0.0
        %4197 = vmatpush1.msra.mxu0 0.0
        %4198 = vmatprep.subr.mxu0 0.0
        %4199 = vmatpush1.msra.mxu0 0.0
        %4200 = vmatprep.subr.mxu0 0.0
        %4201 = vmatpush1.msra.mxu0 0.0
        %4202 = vmatprep.subr.mxu0 0.0
        %4203 = vmatpush1.msra.mxu0 0.0
        %4204 = vmatprep.subr.mxu0 0.0
        %4205 = vmatpush1.msra.mxu0 0.0
        %4206 = vmatprep.subr.mxu0 0.0
        %4207 = vmatpush1.msra.mxu0 0.0
        %4208 = vmatprep.subr.mxu0 0.0
        %4209 = vmatpush1.msra.mxu0 0.0
        %4210 = vmatprep.subr.mxu0 0.0
        %4211 = vmatpush1.msra.mxu0 0.0
        %4212 = vmatprep.subr.mxu0 0.0
        %4213 = vmatpush1.msra.mxu0 0.0
        %4214 = vmatprep.subr.mxu0 0.0
        %4215 = vmatpush1.msra.mxu0 0.0
        %4216 = vmatprep.subr.mxu0 0.0
        %4217 = vmatpush1.msra.mxu0 0.0
        %4218 = vmatprep.subr.mxu0 0.0
        %4219 = vmatpush1.msra.mxu0 0.0
        %4220 = vmatprep.subr.mxu0 0.0
        %4221 = vmatpush1.msra.mxu0 0.0
        %4222 = vmatprep.subr.mxu0 0.0
        %4223 = vmatpush1.msra.mxu0 0.0
        %4224 = vmatprep.subr.mxu0 0.0
        %4225 = vmatpush1.msra.mxu0 0.0
        %4226 = vmatprep.subr.mxu0 0.0
        %4227 = vmatpush1.msra.mxu0 0.0
        %4228 = vmatprep.mubr.f32.mxu0 0.0
        %4229 = vmatmul.mubr.f32.gmra.mrb[0].mxu0 %v4159
        %v4230 = vpop.f32.mrb[0].mxu0
        %v4231 = vadd.f32 0.0, %v4230
        %v4232 = vpop.f32.mrb[0].mxu0
        %4233 = vmatprep.mubr.f32.mxu0 0.0
        %4234 = vmatmul.mubr.f32.gmra.mrb[0].mxu0 %v4162
        %v4235 = vpop.f32.mrb[0].mxu0
        %v4236 = vadd.f32 0.0, %v4235
        %v4237 = vpop.f32.mrb[0].mxu0
        %4238 = vdwg.mxu0
        %v4240 = vsel %vm2049, %v4156, 0
        %v4243 = vsel %vm2049, %v4157, 0
        %4245 = vmatprep.subr.mxu0 0.0
        %4246 = vmatpush1.msra.mxu0 %v1802
        %4247 = vmatprep.subr.mxu0 0.0
        %4248 = vmatpush1.msra.mxu0 %v1808
        %4249 = vmatprep.subr.mxu0 0.0
        %4250 = vmatpush1.msra.mxu0 0.0
        %4251 = vmatprep.subr.mxu0 0.0
        %4252 = vmatpush1.msra.mxu0 0.0
        %4253 = vmatprep.subr.mxu0 0.0
        %4254 = vmatpush1.msra.mxu0 0.0
        %4255 = vmatprep.subr.mxu0 0.0
        %4256 = vmatpush1.msra.mxu0 0.0
        %4257 = vmatprep.subr.mxu0 0.0
        %4258 = vmatpush1.msra.mxu0 0.0
        %4259 = vmatprep.subr.mxu0 0.0
        %4260 = vmatpush1.msra.mxu0 0.0
        %4261 = vmatprep.subr.mxu0 0.0
        %4262 = vmatpush1.msra.mxu0 0.0
        %4263 = vmatprep.subr.mxu0 0.0
        %4264 = vmatpush1.msra.mxu0 0.0
        %4265 = vmatprep.subr.mxu0 0.0
        %4266 = vmatpush1.msra.mxu0 0.0
        %4267 = vmatprep.subr.mxu0 0.0
        %4268 = vmatpush1.msra.mxu0 0.0
        %4269 = vmatprep.subr.mxu0 0.0
        %4270 = vmatpush1.msra.mxu0 0.0
        %4271 = vmatprep.subr.mxu0 0.0
        %4272 = vmatpush1.msra.mxu0 0.0
        %4273 = vmatprep.subr.mxu0 0.0
        %4274 = vmatpush1.msra.mxu0 0.0
        %4275 = vmatprep.subr.mxu0 0.0
        %4276 = vmatpush1.msra.mxu0 0.0
        %4277 = vmatprep.subr.mxu0 0.0
        %4278 = vmatpush1.msra.mxu0 0.0
        %4279 = vmatprep.subr.mxu0 0.0
        %4280 = vmatpush1.msra.mxu0 0.0
        %4281 = vmatprep.subr.mxu0 0.0
        %4282 = vmatpush1.msra.mxu0 0.0
        %4283 = vmatprep.subr.mxu0 0.0
        %4284 = vmatpush1.msra.mxu0 0.0
        %4285 = vmatprep.subr.mxu0 0.0
        %4286 = vmatpush1.msra.mxu0 0.0
        %4287 = vmatprep.subr.mxu0 0.0
        %4288 = vmatpush1.msra.mxu0 0.0
        %4289 = vmatprep.subr.mxu0 0.0
        %4290 = vmatpush1.msra.mxu0 0.0
        %4291 = vmatprep.subr.mxu0 0.0
        %4292 = vmatpush1.msra.mxu0 0.0
        %4293 = vmatprep.subr.mxu0 0.0
        %4294 = vmatpush1.msra.mxu0 0.0
        %4295 = vmatprep.subr.mxu0 0.0
        %4296 = vmatpush1.msra.mxu0 0.0
        %4297 = vmatprep.subr.mxu0 0.0
        %4298 = vmatpush1.msra.mxu0 0.0
        %4299 = vmatprep.subr.mxu0 0.0
        %4300 = vmatpush1.msra.mxu0 0.0
        %4301 = vmatprep.subr.mxu0 0.0
        %4302 = vmatpush1.msra.mxu0 0.0
        %4303 = vmatprep.subr.mxu0 0.0
        %4304 = vmatpush1.msra.mxu0 0.0
        %4305 = vmatprep.subr.mxu0 0.0
        %4306 = vmatpush1.msra.mxu0 0.0
        %4307 = vmatprep.subr.mxu0 0.0
        %4308 = vmatpush1.msra.mxu0 0.0
        %4309 = vmatprep.mubr.f32.mxu0 0.0
        %4310 = vmatmul.mubr.f32.gmra.mrb[0].mxu0 %v4240
        %v4311 = vpop.f32.mrb[0].mxu0
        %v4312 = vadd.f32 0.0, %v4311
        %v4313 = vpop.f32.mrb[0].mxu0
        %4314 = vmatprep.mubr.f32.mxu0 0.0
        %4315 = vmatmul.mubr.f32.gmra.mrb[0].mxu0 %v4243
        %v4316 = vpop.f32.mrb[0].mxu0
        %v4317 = vadd.f32 0.0, %v4316
        %v4318 = vpop.f32.mrb[0].mxu0
        %4319 = vdwg.mxu0
        %v4321 = vsel %vm1874, %v4231, 0
        %v4324 = vsel %vm1874, %v4236, 0
        %v4327 = vsel %vm1874, %v4312, 0
        %v4330 = vsel %vm1874, %v4317, 0
        %4332 = vmatprep.subr.mxu0 %v1843
        %4333 = vmatpush1.msra.mxu0 %v1842
        %4334 = vmatprep.subr.mxu0 %v1845
        %4335 = vmatpush1.msra.mxu0 %v1844
        %4336 = vmatprep.subr.mxu0 %v1847
        %4337 = vmatpush1.msra.mxu0 %v1846
        %4338 = vmatprep.subr.mxu0 %v1849
        %4339 = vmatpush1.msra.mxu0 %v1848
        %4340 = vmatprep.subr.mxu0 0.0
        %4341 = vmatpush1.msra.mxu0 0.0
        %4342 = vmatprep.subr.mxu0 0.0
        %4343 = vmatpush1.msra.mxu0 0.0
        %4344 = vmatprep.subr.mxu0 0.0
        %4345 = vmatpush1.msra.mxu0 0.0
        %4346 = vmatprep.subr.mxu0 0.0
        %4347 = vmatpush1.msra.mxu0 0.0
        %4348 = vmatprep.subr.mxu0 0.0
        %4349 = vmatpush1.msra.mxu0 0.0
        %4350 = vmatprep.subr.mxu0 0.0
        %4351 = vmatpush1.msra.mxu0 0.0
        %4352 = vmatprep.subr.mxu0 0.0
        %4353 = vmatpush1.msra.mxu0 0.0
        %4354 = vmatprep.subr.mxu0 0.0
        %4355 = vmatpush1.msra.mxu0 0.0
        %4356 = vmatprep.subr.mxu0 0.0
        %4357 = vmatpush1.msra.mxu0 0.0
        %4358 = vmatprep.subr.mxu0 0.0
        %4359 = vmatpush1.msra.mxu0 0.0
        %4360 = vmatprep.subr.mxu0 0.0
        %4361 = vmatpush1.msra.mxu0 0.0
        %4362 = vmatprep.subr.mxu0 0.0
        %4363 = vmatpush1.msra.mxu0 0.0
        %4364 = vmatprep.subr.mxu0 0.0
        %4365 = vmatpush1.msra.mxu0 0.0
        %4366 = vmatprep.subr.mxu0 0.0
        %4367 = vmatpush1.msra.mxu0 0.0
        %4368 = vmatprep.subr.mxu0 0.0
        %4369 = vmatpush1.msra.mxu0 0.0
        %4370 = vmatprep.subr.mxu0 0.0
        %4371 = vmatpush1.msra.mxu0 0.0
        %4372 = vmatprep.subr.mxu0 0.0
        %4373 = vmatpush1.msra.mxu0 0.0
        %4374 = vmatprep.subr.mxu0 0.0
        %4375 = vmatpush1.msra.mxu0 0.0
        %4376 = vmatprep.subr.mxu0 0.0
        %4377 = vmatpush1.msra.mxu0 0.0
        %4378 = vmatprep.subr.mxu0 0.0
        %4379 = vmatpush1.msra.mxu0 0.0
        %4380 = vmatprep.subr.mxu0 0.0
        %4381 = vmatpush1.msra.mxu0 0.0
        %4382 = vmatprep.subr.mxu0 0.0
        %4383 = vmatpush1.msra.mxu0 0.0
        %4384 = vmatprep.subr.mxu0 0.0
        %4385 = vmatpush1.msra.mxu0 0.0
        %4386 = vmatprep.subr.mxu0 0.0
        %4387 = vmatpush1.msra.mxu0 0.0
        %4388 = vmatprep.subr.mxu0 0.0
        %4389 = vmatpush1.msra.mxu0 0.0
        %4390 = vmatprep.subr.mxu0 0.0
        %4391 = vmatpush1.msra.mxu0 0.0
        %4392 = vmatprep.subr.mxu0 0.0
        %4393 = vmatpush1.msra.mxu0 0.0
        %4394 = vmatprep.subr.mxu0 0.0
        %4395 = vmatpush1.msra.mxu0 0.0
        %4396 = vmatprep.mubr.f32.mxu0 0.0
        %4397 = vmatmul.mubr.f32.gmra.mrb[0].mxu0 %v4321
        %v4398 = vpop.f32.mrb[0].mxu0
        %v4399 = vadd.f32 0.0, %v4398
        %v4400 = vpop.f32.mrb[0].mxu0
        %v4401 = vadd.f32 0.0, %v4400
        %4402 = vmatprep.mubr.f32.mxu0 0.0
        %4403 = vmatmul.mubr.f32.gmra.mrb[0].mxu0 %v4324
        %v4404 = vpop.f32.mrb[0].mxu0
        %v4405 = vadd.f32 0.0, %v4404
        %v4406 = vpop.f32.mrb[0].mxu0
        %v4407 = vadd.f32 0.0, %v4406
        %4408 = vmatprep.mubr.f32.mxu0 0.0
        %4409 = vmatmul.mubr.f32.gmra.mrb[0].mxu0 %v4327
        %v4410 = vpop.f32.mrb[0].mxu0
        %v4411 = vadd.f32 0.0, %v4410
        %v4412 = vpop.f32.mrb[0].mxu0
        %v4413 = vadd.f32 0.0, %v4412
        %4414 = vmatprep.mubr.f32.mxu0 0.0
        %4415 = vmatmul.mubr.f32.gmra.mrb[0].mxu0 %v4330
        %v4416 = vpop.f32.mrb[0].mxu0
        %v4417 = vadd.f32 0.0, %v4416
        %v4418 = vpop.f32.mrb[0].mxu0
        %v4419 = vadd.f32 0.0, %v4418
        %4420 = vdwg.mxu0
        %v4421 = vadd.f32 %v3920, %v4399
        %v4422 = vadd.f32 %v3921, %v4401
        %v4423 = vadd.f32 %v3922, %v4405
        %v4424 = vadd.f32 %v3923, %v4407
        %v4425 = vadd.f32 %v3924, %v4411
        %v4426 = vadd.f32 %v3925, %v4413
        %v4427 = vadd.f32 %v3926, %v4417
        %v4428 = vadd.f32 %v3927, %v4419
        %4429 = vrot.lane.b32.xlu0 %v1536, 96
        %v4430 = vpop.permute.xlu0 %4429
        %4431 = vrot.lane.b32.xlu0 %v1542, 96
        %v4432 = vpop.permute.xlu0 %4431
        %4433 = vrot.lane.b32.xlu0 %v1625, 96
        %v4434 = vpop.permute.xlu0 %4433
        %4435 = vrot.lane.b32.xlu0 %v1631, 96
        %v4436 = vpop.permute.xlu0 %4435
        %v4437 = vsel %vm1874, %v4430, 0
        %v4439 = vsel %vm1874, %v4432, 0
        %v4441 = vsel %vm1874, %v4434, 0
        %v4443 = vsel %vm1874, %v4436, 0
        %4445 = vmatprep.subr.mxu0 0.0
        %4446 = vmatpush1.xpose.msra.mxu0 %v4441
        %4447 = vmatprep.subr.mxu0 0.0
        %4448 = vmatpush1.xpose.msra.mxu0 %v4443
        %4449 = vmatprep.subr.mxu0 0.0
        %4450 = vmatpush1.xpose.msra.mxu0 0.0
        %4451 = vmatprep.subr.mxu0 0.0
        %4452 = vmatpush1.xpose.msra.mxu0 0.0
        %4453 = vmatprep.subr.mxu0 0.0
        %4454 = vmatpush1.xpose.msra.mxu0 0.0
        %4455 = vmatprep.subr.mxu0 0.0
        %4456 = vmatpush1.xpose.msra.mxu0 0.0
        %4457 = vmatprep.subr.mxu0 0.0
        %4458 = vmatpush1.xpose.msra.mxu0 0.0
        %4459 = vmatprep.subr.mxu0 0.0
        %4460 = vmatpush1.xpose.msra.mxu0 0.0
        %4461 = vmatprep.subr.mxu0 0.0
        %4462 = vmatpush1.xpose.msra.mxu0 0.0
        %4463 = vmatprep.subr.mxu0 0.0
        %4464 = vmatpush1.xpose.msra.mxu0 0.0
        %4465 = vmatprep.subr.mxu0 0.0
        %4466 = vmatpush1.xpose.msra.mxu0 0.0
        %4467 = vmatprep.subr.mxu0 0.0
        %4468 = vmatpush1.xpose.msra.mxu0 0.0
        %4469 = vmatprep.subr.mxu0 0.0
        %4470 = vmatpush1.xpose.msra.mxu0 0.0
        %4471 = vmatprep.subr.mxu0 0.0
        %4472 = vmatpush1.xpose.msra.mxu0 0.0
        %4473 = vmatprep.subr.mxu0 0.0
        %4474 = vmatpush1.xpose.msra.mxu0 0.0
        %4475 = vmatprep.subr.mxu0 0.0
        %4476 = vmatpush1.xpose.msra.mxu0 0.0
        %4477 = vmatprep.subr.mxu0 0.0
        %4478 = vmatpush1.xpose.msra.mxu0 0.0
        %4479 = vmatprep.subr.mxu0 0.0
        %4480 = vmatpush1.xpose.msra.mxu0 0.0
        %4481 = vmatprep.subr.mxu0 0.0
        %4482 = vmatpush1.xpose.msra.mxu0 0.0
        %4483 = vmatprep.subr.mxu0 0.0
        %4484 = vmatpush1.xpose.msra.mxu0 0.0
        %4485 = vmatprep.subr.mxu0 0.0
        %4486 = vmatpush1.xpose.msra.mxu0 0.0
        %4487 = vmatprep.subr.mxu0 0.0
        %4488 = vmatpush1.xpose.msra.mxu0 0.0
        %4489 = vmatprep.subr.mxu0 0.0
        %4490 = vmatpush1.xpose.msra.mxu0 0.0
        %4491 = vmatprep.subr.mxu0 0.0
        %4492 = vmatpush1.xpose.msra.mxu0 0.0
        %4493 = vmatprep.subr.mxu0 0.0
        %4494 = vmatpush1.xpose.msra.mxu0 0.0
        %4495 = vmatprep.subr.mxu0 0.0
        %4496 = vmatpush1.xpose.msra.mxu0 0.0
        %4497 = vmatprep.subr.mxu0 0.0
        %4498 = vmatpush1.xpose.msra.mxu0 0.0
        %4499 = vmatprep.subr.mxu0 0.0
        %4500 = vmatpush1.xpose.msra.mxu0 0.0
        %4501 = vmatprep.subr.mxu0 0.0
        %4502 = vmatpush1.xpose.msra.mxu0 0.0
        %4503 = vmatprep.subr.mxu0 0.0
        %4504 = vmatpush1.xpose.msra.mxu0 0.0
        %4505 = vmatprep.subr.mxu0 0.0
        %4506 = vmatpush1.xpose.msra.mxu0 0.0
        %4507 = vmatprep.subr.mxu0 0.0
        %4508 = vmatpush1.xpose.msra.mxu0 0.0
        %4509 = vmatprep.mubr.f32.mxu0 0.0
        %4510 = vmatmul.mubr.f32.gmra.mrb[0].mxu0 %v4437
        %v4511 = vpop.f32.mrb[0].mxu0
        %v4512 = vadd.f32 0.0, %v4511
        %v4513 = vpop.f32.mrb[0].mxu0
        %4514 = vmatprep.mubr.f32.mxu0 0.0
        %4515 = vmatmul.mubr.f32.gmra.mrb[0].mxu0 %v4439
        %v4516 = vpop.f32.mrb[0].mxu0
        %v4517 = vadd.f32 0.0, %v4516
        %v4518 = vpop.f32.mrb[0].mxu0
        %4519 = vdwg.mxu0
        %4520 = vrot.lane.b32.xlu0 %v1548, 96
        %v4521 = vpop.permute.xlu0 %4520
        %4522 = vrot.lane.b32.xlu0 %v1554, 96
        %v4523 = vpop.permute.xlu0 %4522
        %4524 = vrot.lane.b32.xlu0 %v1637, 96
        %v4525 = vpop.permute.xlu0 %4524
        %4526 = vrot.lane.b32.xlu0 %v1643, 96
        %v4527 = vpop.permute.xlu0 %4526
        %v4528 = vsel %vm1874, %v4521, 0
        %v4530 = vsel %vm1874, %v4523, 0
        %v4532 = vsel %vm1874, %v4525, 0
        %v4534 = vsel %vm1874, %v4527, 0
        %4536 = vmatprep.subr.mxu0 0.0
        %4537 = vmatpush1.xpose.msra.mxu0 %v4532
        %4538 = vmatprep.subr.mxu0 0.0
        %4539 = vmatpush1.xpose.msra.mxu0 %v4534
        %4540 = vmatprep.subr.mxu0 0.0
        %4541 = vmatpush1.xpose.msra.mxu0 0.0
        %4542 = vmatprep.subr.mxu0 0.0
        %4543 = vmatpush1.xpose.msra.mxu0 0.0
        %4544 = vmatprep.subr.mxu0 0.0
        %4545 = vmatpush1.xpose.msra.mxu0 0.0
        %4546 = vmatprep.subr.mxu0 0.0
        %4547 = vmatpush1.xpose.msra.mxu0 0.0
        %4548 = vmatprep.subr.mxu0 0.0
        %4549 = vmatpush1.xpose.msra.mxu0 0.0
        %4550 = vmatprep.subr.mxu0 0.0
        %4551 = vmatpush1.xpose.msra.mxu0 0.0
        %4552 = vmatprep.subr.mxu0 0.0
        %4553 = vmatpush1.xpose.msra.mxu0 0.0
        %4554 = vmatprep.subr.mxu0 0.0
        %4555 = vmatpush1.xpose.msra.mxu0 0.0
        %4556 = vmatprep.subr.mxu0 0.0
        %4557 = vmatpush1.xpose.msra.mxu0 0.0
        %4558 = vmatprep.subr.mxu0 0.0
        %4559 = vmatpush1.xpose.msra.mxu0 0.0
        %4560 = vmatprep.subr.mxu0 0.0
        %4561 = vmatpush1.xpose.msra.mxu0 0.0
        %4562 = vmatprep.subr.mxu0 0.0
        %4563 = vmatpush1.xpose.msra.mxu0 0.0
        %4564 = vmatprep.subr.mxu0 0.0
        %4565 = vmatpush1.xpose.msra.mxu0 0.0
        %4566 = vmatprep.subr.mxu0 0.0
        %4567 = vmatpush1.xpose.msra.mxu0 0.0
        %4568 = vmatprep.subr.mxu0 0.0
        %4569 = vmatpush1.xpose.msra.mxu0 0.0
        %4570 = vmatprep.subr.mxu0 0.0
        %4571 = vmatpush1.xpose.msra.mxu0 0.0
        %4572 = vmatprep.subr.mxu0 0.0
        %4573 = vmatpush1.xpose.msra.mxu0 0.0
        %4574 = vmatprep.subr.mxu0 0.0
        %4575 = vmatpush1.xpose.msra.mxu0 0.0
        %4576 = vmatprep.subr.mxu0 0.0
        %4577 = vmatpush1.xpose.msra.mxu0 0.0
        %4578 = vmatprep.subr.mxu0 0.0
        %4579 = vmatpush1.xpose.msra.mxu0 0.0
        %4580 = vmatprep.subr.mxu0 0.0
        %4581 = vmatpush1.xpose.msra.mxu0 0.0
        %4582 = vmatprep.subr.mxu0 0.0
        %4583 = vmatpush1.xpose.msra.mxu0 0.0
        %4584 = vmatprep.subr.mxu0 0.0
        %4585 = vmatpush1.xpose.msra.mxu0 0.0
        %4586 = vmatprep.subr.mxu0 0.0
        %4587 = vmatpush1.xpose.msra.mxu0 0.0
        %4588 = vmatprep.subr.mxu0 0.0
        %4589 = vmatpush1.xpose.msra.mxu0 0.0
        %4590 = vmatprep.subr.mxu0 0.0
        %4591 = vmatpush1.xpose.msra.mxu0 0.0
        %4592 = vmatprep.subr.mxu0 0.0
        %4593 = vmatpush1.xpose.msra.mxu0 0.0
        %4594 = vmatprep.subr.mxu0 0.0
        %4595 = vmatpush1.xpose.msra.mxu0 0.0
        %4596 = vmatprep.subr.mxu0 0.0
        %4597 = vmatpush1.xpose.msra.mxu0 0.0
        %4598 = vmatprep.subr.mxu0 0.0
        %4599 = vmatpush1.xpose.msra.mxu0 0.0
        %4600 = vmatprep.mubr.f32.mxu0 0.0
        %4601 = vmatmul.mubr.f32.gmra.mrb[0].mxu0 %v4528
        %v4602 = vpop.f32.mrb[0].mxu0
        %v4603 = vadd.f32 0.0, %v4602
        %v4604 = vpop.f32.mrb[0].mxu0
        %4605 = vmatprep.mubr.f32.mxu0 0.0
        %4606 = vmatmul.mubr.f32.gmra.mrb[0].mxu0 %v4530
        %v4607 = vpop.f32.mrb[0].mxu0
        %v4608 = vadd.f32 0.0, %v4607
        %v4609 = vpop.f32.mrb[0].mxu0
        %4610 = vdwg.mxu0
        %v4611 = vsel %vm2049, %v4512, -inf
        %4612 = vmax.xlane.f32.xlu0 %v4611
        %v4613 = vpop.xlane.xlu0 %4612
        %v4614 = vsel %vm2049, %v4517, -inf
        %4615 = vmax.xlane.f32.xlu0 %v4614
        %v4616 = vpop.xlane.xlu0 %4615
        %v4617 = vsel %vm2049, %v4603, -inf
        %4618 = vmax.xlane.f32.xlu0 %v4617
        %v4619 = vpop.xlane.xlu0 %4618
        %v4620 = vsel %vm2049, %v4608, -inf
        %4621 = vmax.xlane.f32.xlu0 %v4620
        %v4622 = vpop.xlane.xlu0 %4621
        %v4623 = vsub.f32 %v4512, %v4613
        %v4624 = vsub.f32 %v4517, %v4616
        %v4625 = vsub.f32 %v4603, %v4619
        %v4626 = vsub.f32 %v4608, %v4622
        %v4627 = vmul.f32 %v4623, 1.442695
        %v4628 = vpow.pop %v4627
        %v4629 = vmul.f32 %v4624, 1.442695
        %v4630 = vpow.pop %v4629
        %v4631 = vmul.f32 %v4625, 1.442695
        %v4632 = vpow.pop %v4631
        %v4633 = vmul.f32 %v4626, 1.442695
        %v4634 = vpow.pop %v4633
        %v4635 = vsel %vm2049, %v4628, 0.0
        %4636 = vadd.xlane.f32.xlu0 %v4635
        %v4637 = vpop.xlane.xlu0 %4636
        %v4638 = vsel %vm2049, %v4630, 0.0
        %4639 = vadd.xlane.f32.xlu0 %v4638
        %v4640 = vpop.xlane.xlu0 %4639
        %v4641 = vsel %vm2049, %v4632, 0.0
        %4642 = vadd.xlane.f32.xlu0 %v4641
        %v4643 = vpop.xlane.xlu0 %4642
        %v4644 = vsel %vm2049, %v4634, 0.0
        %4645 = vadd.xlane.f32.xlu0 %v4644
        %v4646 = vpop.xlane.xlu0 %4645
        %v4647 = vrcp.pop %v4637
        %v4648 = vrcp.pop %v4640
        %v4649 = vrcp.pop %v4643
        %v4650 = vrcp.pop %v4646
        %v4651 = vmul.f32 %v4637, %v4647
        %v4652 = vmul.f32 %v4640, %v4648
        %v4653 = vmul.f32 %v4643, %v4649
        %v4654 = vmul.f32 %v4646, %v4650
        %v4655 = vsub.f32 2.0, %v4651
        %v4656 = vsub.f32 2.0, %v4652
        %v4657 = vsub.f32 2.0, %v4653
        %v4658 = vsub.f32 2.0, %v4654
        %v4659 = vmul.f32 %v4647, %v4655
        %v4660 = vmul.f32 %v4648, %v4656
        %v4661 = vmul.f32 %v4649, %v4657
        %v4662 = vmul.f32 %v4650, %v4658
        %v4663 = vmul.f32 %v4628, %v4659
        %v4664 = vmul.f32 %v4630, %v4660
        %v4665 = vmul.f32 %v4632, %v4661
        %v4666 = vmul.f32 %v4634, %v4662
        %4669 = vrot.lane.b32.xlu0 %v1790, 96
        %v4670 = vpop.permute.xlu0 %4669
        %4671 = vrot.lane.b32.xlu0 %v1796, 96
        %v4672 = vpop.permute.xlu0 %4671
        %v4676 = vsel %vm2049, %v4663, 0
        %v4679 = vsel %vm2049, %v4664, 0
        %4681 = vmatprep.subr.mxu0 0.0
        %4682 = vmatpush1.msra.mxu0 %v4670
        %4683 = vmatprep.subr.mxu0 0.0
        %4684 = vmatpush1.msra.mxu0 %v4672
        %4685 = vmatprep.subr.mxu0 0.0
        %4686 = vmatpush1.msra.mxu0 0.0
        %4687 = vmatprep.subr.mxu0 0.0
        %4688 = vmatpush1.msra.mxu0 0.0
        %4689 = vmatprep.subr.mxu0 0.0
        %4690 = vmatpush1.msra.mxu0 0.0
        %4691 = vmatprep.subr.mxu0 0.0
        %4692 = vmatpush1.msra.mxu0 0.0
        %4693 = vmatprep.subr.mxu0 0.0
        %4694 = vmatpush1.msra.mxu0 0.0
        %4695 = vmatprep.subr.mxu0 0.0
        %4696 = vmatpush1.msra.mxu0 0.0
        %4697 = vmatprep.subr.mxu0 0.0
        %4698 = vmatpush1.msra.mxu0 0.0
        %4699 = vmatprep.subr.mxu0 0.0
        %4700 = vmatpush1.msra.mxu0 0.0
        %4701 = vmatprep.subr.mxu0 0.0
        %4702 = vmatpush1.msra.mxu0 0.0
        %4703 = vmatprep.subr.mxu0 0.0
        %4704 = vmatpush1.msra.mxu0 0.0
        %4705 = vmatprep.subr.mxu0 0.0
        %4706 = vmatpush1.msra.mxu0 0.0
        %4707 = vmatprep.subr.mxu0 0.0
        %4708 = vmatpush1.msra.mxu0 0.0
        %4709 = vmatprep.subr.mxu0 0.0
        %4710 = vmatpush1.msra.mxu0 0.0
        %4711 = vmatprep.subr.mxu0 0.0
        %4712 = vmatpush1.msra.mxu0 0.0
        %4713 = vmatprep.subr.mxu0 0.0
        %4714 = vmatpush1.msra.mxu0 0.0
        %4715 = vmatprep.subr.mxu0 0.0
        %4716 = vmatpush1.msra.mxu0 0.0
        %4717 = vmatprep.subr.mxu0 0.0
        %4718 = vmatpush1.msra.mxu0 0.0
        %4719 = vmatprep.subr.mxu0 0.0
        %4720 = vmatpush1.msra.mxu0 0.0
        %4721 = vmatprep.subr.mxu0 0.0
        %4722 = vmatpush1.msra.mxu0 0.0
        %4723 = vmatprep.subr.mxu0 0.0
        %4724 = vmatpush1.msra.mxu0 0.0
        %4725 = vmatprep.subr.mxu0 0.0
        %4726 = vmatpush1.msra.mxu0 0.0
        %4727 = vmatprep.subr.mxu0 0.0
        %4728 = vmatpush1.msra.mxu0 0.0
        %4729 = vmatprep.subr.mxu0 0.0
        %4730 = vmatpush1.msra.mxu0 0.0
        %4731 = vmatprep.subr.mxu0 0.0
        %4732 = vmatpush1.msra.mxu0 0.0
        %4733 = vmatprep.subr.mxu0 0.0
        %4734 = vmatpush1.msra.mxu0 0.0
        %4735 = vmatprep.subr.mxu0 0.0
        %4736 = vmatpush1.msra.mxu0 0.0
        %4737 = vmatprep.subr.mxu0 0.0
        %4738 = vmatpush1.msra.mxu0 0.0
        %4739 = vmatprep.subr.mxu0 0.0
        %4740 = vmatpush1.msra.mxu0 0.0
        %4741 = vmatprep.subr.mxu0 0.0
        %4742 = vmatpush1.msra.mxu0 0.0
        %4743 = vmatprep.subr.mxu0 0.0
        %4744 = vmatpush1.msra.mxu0 0.0
        %4745 = vmatprep.mubr.f32.mxu0 0.0
        %4746 = vmatmul.mubr.f32.gmra.mrb[0].mxu0 %v4676
        %v4747 = vpop.f32.mrb[0].mxu0
        %v4748 = vadd.f32 0.0, %v4747
        %v4749 = vpop.f32.mrb[0].mxu0
        %4750 = vmatprep.mubr.f32.mxu0 0.0
        %4751 = vmatmul.mubr.f32.gmra.mrb[0].mxu0 %v4679
        %v4752 = vpop.f32.mrb[0].mxu0
        %v4753 = vadd.f32 0.0, %v4752
        %v4754 = vpop.f32.mrb[0].mxu0
        %4755 = vdwg.mxu0
        %4758 = vrot.lane.b32.xlu0 %v1802, 96
        %v4759 = vpop.permute.xlu0 %4758
        %4760 = vrot.lane.b32.xlu0 %v1808, 96
        %v4761 = vpop.permute.xlu0 %4760
        %v4765 = vsel %vm2049, %v4665, 0
        %v4768 = vsel %vm2049, %v4666, 0
        %4770 = vmatprep.subr.mxu0 0.0
        %4771 = vmatpush1.msra.mxu0 %v4759
        %4772 = vmatprep.subr.mxu0 0.0
        %4773 = vmatpush1.msra.mxu0 %v4761
        %4774 = vmatprep.subr.mxu0 0.0
        %4775 = vmatpush1.msra.mxu0 0.0
        %4776 = vmatprep.subr.mxu0 0.0
        %4777 = vmatpush1.msra.mxu0 0.0
        %4778 = vmatprep.subr.mxu0 0.0
        %4779 = vmatpush1.msra.mxu0 0.0
        %4780 = vmatprep.subr.mxu0 0.0
        %4781 = vmatpush1.msra.mxu0 0.0
        %4782 = vmatprep.subr.mxu0 0.0
        %4783 = vmatpush1.msra.mxu0 0.0
        %4784 = vmatprep.subr.mxu0 0.0
        %4785 = vmatpush1.msra.mxu0 0.0
        %4786 = vmatprep.subr.mxu0 0.0
        %4787 = vmatpush1.msra.mxu0 0.0
        %4788 = vmatprep.subr.mxu0 0.0
        %4789 = vmatpush1.msra.mxu0 0.0
        %4790 = vmatprep.subr.mxu0 0.0
        %4791 = vmatpush1.msra.mxu0 0.0
        %4792 = vmatprep.subr.mxu0 0.0
        %4793 = vmatpush1.msra.mxu0 0.0
        %4794 = vmatprep.subr.mxu0 0.0
        %4795 = vmatpush1.msra.mxu0 0.0
        %4796 = vmatprep.subr.mxu0 0.0
        %4797 = vmatpush1.msra.mxu0 0.0
        %4798 = vmatprep.subr.mxu0 0.0
        %4799 = vmatpush1.msra.mxu0 0.0
        %4800 = vmatprep.subr.mxu0 0.0
        %4801 = vmatpush1.msra.mxu0 0.0
        %4802 = vmatprep.subr.mxu0 0.0
        %4803 = vmatpush1.msra.mxu0 0.0
        %4804 = vmatprep.subr.mxu0 0.0
        %4805 = vmatpush1.msra.mxu0 0.0
        %4806 = vmatprep.subr.mxu0 0.0
        %4807 = vmatpush1.msra.mxu0 0.0
        %4808 = vmatprep.subr.mxu0 0.0
        %4809 = vmatpush1.msra.mxu0 0.0
        %4810 = vmatprep.subr.mxu0 0.0
        %4811 = vmatpush1.msra.mxu0 0.0
        %4812 = vmatprep.subr.mxu0 0.0
        %4813 = vmatpush1.msra.mxu0 0.0
        %4814 = vmatprep.subr.mxu0 0.0
        %4815 = vmatpush1.msra.mxu0 0.0
        %4816 = vmatprep.subr.mxu0 0.0
        %4817 = vmatpush1.msra.mxu0 0.0
        %4818 = vmatprep.subr.mxu0 0.0
        %4819 = vmatpush1.msra.mxu0 0.0
        %4820 = vmatprep.subr.mxu0 0.0
        %4821 = vmatpush1.msra.mxu0 0.0
        %4822 = vmatprep.subr.mxu0 0.0
        %4823 = vmatpush1.msra.mxu0 0.0
        %4824 = vmatprep.subr.mxu0 0.0
        %4825 = vmatpush1.msra.mxu0 0.0
        %4826 = vmatprep.subr.mxu0 0.0
        %4827 = vmatpush1.msra.mxu0 0.0
        %4828 = vmatprep.subr.mxu0 0.0
        %4829 = vmatpush1.msra.mxu0 0.0
        %4830 = vmatprep.subr.mxu0 0.0
        %4831 = vmatpush1.msra.mxu0 0.0
        %4832 = vmatprep.subr.mxu0 0.0
        %4833 = vmatpush1.msra.mxu0 0.0
        %4834 = vmatprep.mubr.f32.mxu0 0.0
        %4835 = vmatmul.mubr.f32.gmra.mrb[0].mxu0 %v4765
        %v4836 = vpop.f32.mrb[0].mxu0
        %v4837 = vadd.f32 0.0, %v4836
        %v4838 = vpop.f32.mrb[0].mxu0
        %4839 = vmatprep.mubr.f32.mxu0 0.0
        %4840 = vmatmul.mubr.f32.gmra.mrb[0].mxu0 %v4768
        %v4841 = vpop.f32.mrb[0].mxu0
        %v4842 = vadd.f32 0.0, %v4841
        %v4843 = vpop.f32.mrb[0].mxu0
        %4844 = vdwg.mxu0
        %v4846 = vsel %vm1874, %v4748, 0
        %v4849 = vsel %vm1874, %v4753, 0
        %v4852 = vsel %vm1874, %v4837, 0
        %v4855 = vsel %vm1874, %v4842, 0
        %4857 = vmatprep.subr.mxu0 %v1851
        %4858 = vmatpush1.msra.mxu0 %v1850
        %4859 = vmatprep.subr.mxu0 %v1853
        %4860 = vmatpush1.msra.mxu0 %v1852
        %4861 = vmatprep.subr.mxu0 %v1855
        %4862 = vmatpush1.msra.mxu0 %v1854
        %4863 = vmatprep.subr.mxu0 %v1857
        %4864 = vmatpush1.msra.mxu0 %v1856
        %4865 = vmatprep.subr.mxu0 0.0
        %4866 = vmatpush1.msra.mxu0 0.0
        %4867 = vmatprep.subr.mxu0 0.0
        %4868 = vmatpush1.msra.mxu0 0.0
        %4869 = vmatprep.subr.mxu0 0.0
        %4870 = vmatpush1.msra.mxu0 0.0
        %4871 = vmatprep.subr.mxu0 0.0
        %4872 = vmatpush1.msra.mxu0 0.0
        %4873 = vmatprep.subr.mxu0 0.0
        %4874 = vmatpush1.msra.mxu0 0.0
        %4875 = vmatprep.subr.mxu0 0.0
        %4876 = vmatpush1.msra.mxu0 0.0
        %4877 = vmatprep.subr.mxu0 0.0
        %4878 = vmatpush1.msra.mxu0 0.0
        %4879 = vmatprep.subr.mxu0 0.0
        %4880 = vmatpush1.msra.mxu0 0.0
        %4881 = vmatprep.subr.mxu0 0.0
        %4882 = vmatpush1.msra.mxu0 0.0
        %4883 = vmatprep.subr.mxu0 0.0
        %4884 = vmatpush1.msra.mxu0 0.0
        %4885 = vmatprep.subr.mxu0 0.0
        %4886 = vmatpush1.msra.mxu0 0.0
        %4887 = vmatprep.subr.mxu0 0.0
        %4888 = vmatpush1.msra.mxu0 0.0
        %4889 = vmatprep.subr.mxu0 0.0
        %4890 = vmatpush1.msra.mxu0 0.0
        %4891 = vmatprep.subr.mxu0 0.0
        %4892 = vmatpush1.msra.mxu0 0.0
        %4893 = vmatprep.subr.mxu0 0.0
        %4894 = vmatpush1.msra.mxu0 0.0
        %4895 = vmatprep.subr.mxu0 0.0
        %4896 = vmatpush1.msra.mxu0 0.0
        %4897 = vmatprep.subr.mxu0 0.0
        %4898 = vmatpush1.msra.mxu0 0.0
        %4899 = vmatprep.subr.mxu0 0.0
        %4900 = vmatpush1.msra.mxu0 0.0
        %4901 = vmatprep.subr.mxu0 0.0
        %4902 = vmatpush1.msra.mxu0 0.0
        %4903 = vmatprep.subr.mxu0 0.0
        %4904 = vmatpush1.msra.mxu0 0.0
        %4905 = vmatprep.subr.mxu0 0.0
        %4906 = vmatpush1.msra.mxu0 0.0
        %4907 = vmatprep.subr.mxu0 0.0
        %4908 = vmatpush1.msra.mxu0 0.0
        %4909 = vmatprep.subr.mxu0 0.0
        %4910 = vmatpush1.msra.mxu0 0.0
        %4911 = vmatprep.subr.mxu0 0.0
        %4912 = vmatpush1.msra.mxu0 0.0
        %4913 = vmatprep.subr.mxu0 0.0
        %4914 = vmatpush1.msra.mxu0 0.0
        %4915 = vmatprep.subr.mxu0 0.0
        %4916 = vmatpush1.msra.mxu0 0.0
        %4917 = vmatprep.subr.mxu0 0.0
        %4918 = vmatpush1.msra.mxu0 0.0
        %4919 = vmatprep.subr.mxu0 0.0
        %4920 = vmatpush1.msra.mxu0 0.0
        %4921 = vmatprep.mubr.f32.mxu0 0.0
        %4922 = vmatmul.mubr.f32.gmra.mrb[0].mxu0 %v4846
        %v4923 = vpop.f32.mrb[0].mxu0
        %v4924 = vadd.f32 0.0, %v4923
        %v4925 = vpop.f32.mrb[0].mxu0
        %v4926 = vadd.f32 0.0, %v4925
        %4927 = vmatprep.mubr.f32.mxu0 0.0
        %4928 = vmatmul.mubr.f32.gmra.mrb[0].mxu0 %v4849
        %v4929 = vpop.f32.mrb[0].mxu0
        %v4930 = vadd.f32 0.0, %v4929
        %v4931 = vpop.f32.mrb[0].mxu0
        %v4932 = vadd.f32 0.0, %v4931
        %4933 = vmatprep.mubr.f32.mxu0 0.0
        %4934 = vmatmul.mubr.f32.gmra.mrb[0].mxu0 %v4852
        %v4935 = vpop.f32.mrb[0].mxu0
        %v4936 = vadd.f32 0.0, %v4935
        %v4937 = vpop.f32.mrb[0].mxu0
        %v4938 = vadd.f32 0.0, %v4937
        %4939 = vmatprep.mubr.f32.mxu0 0.0
        %4940 = vmatmul.mubr.f32.gmra.mrb[0].mxu0 %v4855
        %v4941 = vpop.f32.mrb[0].mxu0
        %v4942 = vadd.f32 0.0, %v4941
        %v4943 = vpop.f32.mrb[0].mxu0
        %v4944 = vadd.f32 0.0, %v4943
        %4945 = vdwg.mxu0
        %v4946 = vadd.f32 %v4421, %v4924
        %v4947 = vadd.f32 %v4422, %v4926
        %v4948 = vadd.f32 %v4423, %v4930
        %v4949 = vadd.f32 %v4424, %v4932
        %v4950 = vadd.f32 %v4425, %v4936
        %v4951 = vadd.f32 %v4426, %v4938
        %v4952 = vadd.f32 %v4427, %v4942
        %v4953 = vadd.f32 %v4428, %v4944
        %4954 = vrot.lane.b32.xlu0 %v1536, 64
        %v4955 = vpop.permute.xlu0 %4954
        %4956 = vrot.lane.b32.xlu0 %v1542, 64
        %v4957 = vpop.permute.xlu0 %4956
        %4958 = vrot.lane.b32.xlu0 %v1625, 64
        %v4959 = vpop.permute.xlu0 %4958
        %4960 = vrot.lane.b32.xlu0 %v1631, 64
        %v4961 = vpop.permute.xlu0 %4960
        %v4962 = vsel %vm1874, %v4955, 0
        %v4964 = vsel %vm1874, %v4957, 0
        %v4966 = vsel %vm1874, %v4959, 0
        %v4968 = vsel %vm1874, %v4961, 0
        %4970 = vmatprep.subr.mxu0 0.0
        %4971 = vmatpush1.xpose.msra.mxu0 %v4966
        %4972 = vmatprep.subr.mxu0 0.0
        %4973 = vmatpush1.xpose.msra.mxu0 %v4968
        %4974 = vmatprep.subr.mxu0 0.0
        %4975 = vmatpush1.xpose.msra.mxu0 0.0
        %4976 = vmatprep.subr.mxu0 0.0
        %4977 = vmatpush1.xpose.msra.mxu0 0.0
        %4978 = vmatprep.subr.mxu0 0.0
        %4979 = vmatpush1.xpose.msra.mxu0 0.0
        %4980 = vmatprep.subr.mxu0 0.0
        %4981 = vmatpush1.xpose.msra.mxu0 0.0
        %4982 = vmatprep.subr.mxu0 0.0
        %4983 = vmatpush1.xpose.msra.mxu0 0.0
        %4984 = vmatprep.subr.mxu0 0.0
        %4985 = vmatpush1.xpose.msra.mxu0 0.0
        %4986 = vmatprep.subr.mxu0 0.0
        %4987 = vmatpush1.xpose.msra.mxu0 0.0
        %4988 = vmatprep.subr.mxu0 0.0
        %4989 = vmatpush1.xpose.msra.mxu0 0.0
        %4990 = vmatprep.subr.mxu0 0.0
        %4991 = vmatpush1.xpose.msra.mxu0 0.0
        %4992 = vmatprep.subr.mxu0 0.0
        %4993 = vmatpush1.xpose.msra.mxu0 0.0
        %4994 = vmatprep.subr.mxu0 0.0
        %4995 = vmatpush1.xpose.msra.mxu0 0.0
        %4996 = vmatprep.subr.mxu0 0.0
        %4997 = vmatpush1.xpose.msra.mxu0 0.0
        %4998 = vmatprep.subr.mxu0 0.0
        %4999 = vmatpush1.xpose.msra.mxu0 0.0
        %5000 = vmatprep.subr.mxu0 0.0
        %5001 = vmatpush1.xpose.msra.mxu0 0.0
        %5002 = vmatprep.subr.mxu0 0.0
        %5003 = vmatpush1.xpose.msra.mxu0 0.0
        %5004 = vmatprep.subr.mxu0 0.0
        %5005 = vmatpush1.xpose.msra.mxu0 0.0
        %5006 = vmatprep.subr.mxu0 0.0
        %5007 = vmatpush1.xpose.msra.mxu0 0.0
        %5008 = vmatprep.subr.mxu0 0.0
        %5009 = vmatpush1.xpose.msra.mxu0 0.0
        %5010 = vmatprep.subr.mxu0 0.0
        %5011 = vmatpush1.xpose.msra.mxu0 0.0
        %5012 = vmatprep.subr.mxu0 0.0
        %5013 = vmatpush1.xpose.msra.mxu0 0.0
        %5014 = vmatprep.subr.mxu0 0.0
        %5015 = vmatpush1.xpose.msra.mxu0 0.0
        %5016 = vmatprep.subr.mxu0 0.0
        %5017 = vmatpush1.xpose.msra.mxu0 0.0
        %5018 = vmatprep.subr.mxu0 0.0
        %5019 = vmatpush1.xpose.msra.mxu0 0.0
        %5020 = vmatprep.subr.mxu0 0.0
        %5021 = vmatpush1.xpose.msra.mxu0 0.0
        %5022 = vmatprep.subr.mxu0 0.0
        %5023 = vmatpush1.xpose.msra.mxu0 0.0
        %5024 = vmatprep.subr.mxu0 0.0
        %5025 = vmatpush1.xpose.msra.mxu0 0.0
        %5026 = vmatprep.subr.mxu0 0.0
        %5027 = vmatpush1.xpose.msra.mxu0 0.0
        %5028 = vmatprep.subr.mxu0 0.0
        %5029 = vmatpush1.xpose.msra.mxu0 0.0
        %5030 = vmatprep.subr.mxu0 0.0
        %5031 = vmatpush1.xpose.msra.mxu0 0.0
        %5032 = vmatprep.subr.mxu0 0.0
        %5033 = vmatpush1.xpose.msra.mxu0 0.0
        %5034 = vmatprep.mubr.f32.mxu0 0.0
        %5035 = vmatmul.mubr.f32.gmra.mrb[0].mxu0 %v4962
        %v5036 = vpop.f32.mrb[0].mxu0
        %v5037 = vadd.f32 0.0, %v5036
        %v5038 = vpop.f32.mrb[0].mxu0
        %5039 = vmatprep.mubr.f32.mxu0 0.0
        %5040 = vmatmul.mubr.f32.gmra.mrb[0].mxu0 %v4964
        %v5041 = vpop.f32.mrb[0].mxu0
        %v5042 = vadd.f32 0.0, %v5041
        %v5043 = vpop.f32.mrb[0].mxu0
        %5044 = vdwg.mxu0
        %5045 = vrot.lane.b32.xlu0 %v1548, 64
        %v5046 = vpop.permute.xlu0 %5045
        %5047 = vrot.lane.b32.xlu0 %v1554, 64
        %v5048 = vpop.permute.xlu0 %5047
        %5049 = vrot.lane.b32.xlu0 %v1637, 64
        %v5050 = vpop.permute.xlu0 %5049
        %5051 = vrot.lane.b32.xlu0 %v1643, 64
        %v5052 = vpop.permute.xlu0 %5051
        %v5053 = vsel %vm1874, %v5046, 0
        %v5055 = vsel %vm1874, %v5048, 0
        %v5057 = vsel %vm1874, %v5050, 0
        %v5059 = vsel %vm1874, %v5052, 0
        %5061 = vmatprep.subr.mxu0 0.0
        %5062 = vmatpush1.xpose.msra.mxu0 %v5057
        %5063 = vmatprep.subr.mxu0 0.0
        %5064 = vmatpush1.xpose.msra.mxu0 %v5059
        %5065 = vmatprep.subr.mxu0 0.0
        %5066 = vmatpush1.xpose.msra.mxu0 0.0
        %5067 = vmatprep.subr.mxu0 0.0
        %5068 = vmatpush1.xpose.msra.mxu0 0.0
        %5069 = vmatprep.subr.mxu0 0.0
        %5070 = vmatpush1.xpose.msra.mxu0 0.0
        %5071 = vmatprep.subr.mxu0 0.0
        %5072 = vmatpush1.xpose.msra.mxu0 0.0
        %5073 = vmatprep.subr.mxu0 0.0
        %5074 = vmatpush1.xpose.msra.mxu0 0.0
        %5075 = vmatprep.subr.mxu0 0.0
        %5076 = vmatpush1.xpose.msra.mxu0 0.0
        %5077 = vmatprep.subr.mxu0 0.0
        %5078 = vmatpush1.xpose.msra.mxu0 0.0
        %5079 = vmatprep.subr.mxu0 0.0
        %5080 = vmatpush1.xpose.msra.mxu0 0.0
        %5081 = vmatprep.subr.mxu0 0.0
        %5082 = vmatpush1.xpose.msra.mxu0 0.0
        %5083 = vmatprep.subr.mxu0 0.0
        %5084 = vmatpush1.xpose.msra.mxu0 0.0
        %5085 = vmatprep.subr.mxu0 0.0
        %5086 = vmatpush1.xpose.msra.mxu0 0.0
        %5087 = vmatprep.subr.mxu0 0.0
        %5088 = vmatpush1.xpose.msra.mxu0 0.0
        %5089 = vmatprep.subr.mxu0 0.0
        %5090 = vmatpush1.xpose.msra.mxu0 0.0
        %5091 = vmatprep.subr.mxu0 0.0
        %5092 = vmatpush1.xpose.msra.mxu0 0.0
        %5093 = vmatprep.subr.mxu0 0.0
        %5094 = vmatpush1.xpose.msra.mxu0 0.0
        %5095 = vmatprep.subr.mxu0 0.0
        %5096 = vmatpush1.xpose.msra.mxu0 0.0
        %5097 = vmatprep.subr.mxu0 0.0
        %5098 = vmatpush1.xpose.msra.mxu0 0.0
        %5099 = vmatprep.subr.mxu0 0.0
        %5100 = vmatpush1.xpose.msra.mxu0 0.0
        %5101 = vmatprep.subr.mxu0 0.0
        %5102 = vmatpush1.xpose.msra.mxu0 0.0
        %5103 = vmatprep.subr.mxu0 0.0
        %5104 = vmatpush1.xpose.msra.mxu0 0.0
        %5105 = vmatprep.subr.mxu0 0.0
        %5106 = vmatpush1.xpose.msra.mxu0 0.0
        %5107 = vmatprep.subr.mxu0 0.0
        %5108 = vmatpush1.xpose.msra.mxu0 0.0
        %5109 = vmatprep.subr.mxu0 0.0
        %5110 = vmatpush1.xpose.msra.mxu0 0.0
        %5111 = vmatprep.subr.mxu0 0.0
        %5112 = vmatpush1.xpose.msra.mxu0 0.0
        %5113 = vmatprep.subr.mxu0 0.0
        %5114 = vmatpush1.xpose.msra.mxu0 0.0
        %5115 = vmatprep.subr.mxu0 0.0
        %5116 = vmatpush1.xpose.msra.mxu0 0.0
        %5117 = vmatprep.subr.mxu0 0.0
        %5118 = vmatpush1.xpose.msra.mxu0 0.0
        %5119 = vmatprep.subr.mxu0 0.0
        %5120 = vmatpush1.xpose.msra.mxu0 0.0
        %5121 = vmatprep.subr.mxu0 0.0
        %5122 = vmatpush1.xpose.msra.mxu0 0.0
        %5123 = vmatprep.subr.mxu0 0.0
        %5124 = vmatpush1.xpose.msra.mxu0 0.0
        %5125 = vmatprep.mubr.f32.mxu0 0.0
        %5126 = vmatmul.mubr.f32.gmra.mrb[0].mxu0 %v5053
        %v5127 = vpop.f32.mrb[0].mxu0
        %v5128 = vadd.f32 0.0, %v5127
        %v5129 = vpop.f32.mrb[0].mxu0
        %5130 = vmatprep.mubr.f32.mxu0 0.0
        %5131 = vmatmul.mubr.f32.gmra.mrb[0].mxu0 %v5055
        %v5132 = vpop.f32.mrb[0].mxu0
        %v5133 = vadd.f32 0.0, %v5132
        %v5134 = vpop.f32.mrb[0].mxu0
        %5135 = vdwg.mxu0
        %v5136 = vsel %vm2049, %v5037, -inf
        %5137 = vmax.xlane.f32.xlu0 %v5136
        %v5138 = vpop.xlane.xlu0 %5137
        %v5139 = vsel %vm2049, %v5042, -inf
        %5140 = vmax.xlane.f32.xlu0 %v5139
        %v5141 = vpop.xlane.xlu0 %5140
        %v5142 = vsel %vm2049, %v5128, -inf
        %5143 = vmax.xlane.f32.xlu0 %v5142
        %v5144 = vpop.xlane.xlu0 %5143
        %v5145 = vsel %vm2049, %v5133, -inf
        %5146 = vmax.xlane.f32.xlu0 %v5145
        %v5147 = vpop.xlane.xlu0 %5146
        %v5148 = vsub.f32 %v5037, %v5138
        %v5149 = vsub.f32 %v5042, %v5141
        %v5150 = vsub.f32 %v5128, %v5144
        %v5151 = vsub.f32 %v5133, %v5147
        %v5152 = vmul.f32 %v5148, 1.442695
        %v5153 = vpow.pop %v5152
        %v5154 = vmul.f32 %v5149, 1.442695
        %v5155 = vpow.pop %v5154
        %v5156 = vmul.f32 %v5150, 1.442695
        %v5157 = vpow.pop %v5156
        %v5158 = vmul.f32 %v5151, 1.442695
        %v5159 = vpow.pop %v5158
        %v5160 = vsel %vm2049, %v5153, 0.0
        %5161 = vadd.xlane.f32.xlu0 %v5160
        %v5162 = vpop.xlane.xlu0 %5161
        %v5163 = vsel %vm2049, %v5155, 0.0
        %5164 = vadd.xlane.f32.xlu0 %v5163
        %v5165 = vpop.xlane.xlu0 %5164
        %v5166 = vsel %vm2049, %v5157, 0.0
        %5167 = vadd.xlane.f32.xlu0 %v5166
        %v5168 = vpop.xlane.xlu0 %5167
        %v5169 = vsel %vm2049, %v5159, 0.0
        %5170 = vadd.xlane.f32.xlu0 %v5169
        %v5171 = vpop.xlane.xlu0 %5170
        %v5172 = vrcp.pop %v5162
        %v5173 = vrcp.pop %v5165
        %v5174 = vrcp.pop %v5168
        %v5175 = vrcp.pop %v5171
        %v5176 = vmul.f32 %v5162, %v5172
        %v5177 = vmul.f32 %v5165, %v5173
        %v5178 = vmul.f32 %v5168, %v5174
        %v5179 = vmul.f32 %v5171, %v5175
        %v5180 = vsub.f32 2.0, %v5176
        %v5181 = vsub.f32 2.0, %v5177
        %v5182 = vsub.f32 2.0, %v5178
        %v5183 = vsub.f32 2.0, %v5179
        %v5184 = vmul.f32 %v5172, %v5180
        %v5185 = vmul.f32 %v5173, %v5181
        %v5186 = vmul.f32 %v5174, %v5182
        %v5187 = vmul.f32 %v5175, %v5183
        %v5188 = vmul.f32 %v5153, %v5184
        %v5189 = vmul.f32 %v5155, %v5185
        %v5190 = vmul.f32 %v5157, %v5186
        %v5191 = vmul.f32 %v5159, %v5187
        %5192 = vrot.lane.b32.xlu0 %v1790, 64
        %v5193 = vpop.permute.xlu0 %5192
        %5194 = vrot.lane.b32.xlu0 %v1796, 64
        %v5195 = vpop.permute.xlu0 %5194
        %v5199 = vsel %vm2049, %v5188, 0
        %v5202 = vsel %vm2049, %v5189, 0
        %5204 = vmatprep.subr.mxu0 0.0
        %5205 = vmatpush1.msra.mxu0 %v5193
        %5206 = vmatprep.subr.mxu0 0.0
        %5207 = vmatpush1.msra.mxu0 %v5195
        %5208 = vmatprep.subr.mxu0 0.0
        %5209 = vmatpush1.msra.mxu0 0.0
        %5210 = vmatprep.subr.mxu0 0.0
        %5211 = vmatpush1.msra.mxu0 0.0
        %5212 = vmatprep.subr.mxu0 0.0
        %5213 = vmatpush1.msra.mxu0 0.0
        %5214 = vmatprep.subr.mxu0 0.0
        %5215 = vmatpush1.msra.mxu0 0.0
        %5216 = vmatprep.subr.mxu0 0.0
        %5217 = vmatpush1.msra.mxu0 0.0
        %5218 = vmatprep.subr.mxu0 0.0
        %5219 = vmatpush1.msra.mxu0 0.0
        %5220 = vmatprep.subr.mxu0 0.0
        %5221 = vmatpush1.msra.mxu0 0.0
        %5222 = vmatprep.subr.mxu0 0.0
        %5223 = vmatpush1.msra.mxu0 0.0
        %5224 = vmatprep.subr.mxu0 0.0
        %5225 = vmatpush1.msra.mxu0 0.0
        %5226 = vmatprep.subr.mxu0 0.0
        %5227 = vmatpush1.msra.mxu0 0.0
        %5228 = vmatprep.subr.mxu0 0.0
        %5229 = vmatpush1.msra.mxu0 0.0
        %5230 = vmatprep.subr.mxu0 0.0
        %5231 = vmatpush1.msra.mxu0 0.0
        %5232 = vmatprep.subr.mxu0 0.0
        %5233 = vmatpush1.msra.mxu0 0.0
        %5234 = vmatprep.subr.mxu0 0.0
        %5235 = vmatpush1.msra.mxu0 0.0
        %5236 = vmatprep.subr.mxu0 0.0
        %5237 = vmatpush1.msra.mxu0 0.0
        %5238 = vmatprep.subr.mxu0 0.0
        %5239 = vmatpush1.msra.mxu0 0.0
        %5240 = vmatprep.subr.mxu0 0.0
        %5241 = vmatpush1.msra.mxu0 0.0
        %5242 = vmatprep.subr.mxu0 0.0
        %5243 = vmatpush1.msra.mxu0 0.0
        %5244 = vmatprep.subr.mxu0 0.0
        %5245 = vmatpush1.msra.mxu0 0.0
        %5246 = vmatprep.subr.mxu0 0.0
        %5247 = vmatpush1.msra.mxu0 0.0
        %5248 = vmatprep.subr.mxu0 0.0
        %5249 = vmatpush1.msra.mxu0 0.0
        %5250 = vmatprep.subr.mxu0 0.0
        %5251 = vmatpush1.msra.mxu0 0.0
        %5252 = vmatprep.subr.mxu0 0.0
        %5253 = vmatpush1.msra.mxu0 0.0
        %5254 = vmatprep.subr.mxu0 0.0
        %5255 = vmatpush1.msra.mxu0 0.0
        %5256 = vmatprep.subr.mxu0 0.0
        %5257 = vmatpush1.msra.mxu0 0.0
        %5258 = vmatprep.subr.mxu0 0.0
        %5259 = vmatpush1.msra.mxu0 0.0
        %5260 = vmatprep.subr.mxu0 0.0
        %5261 = vmatpush1.msra.mxu0 0.0
        %5262 = vmatprep.subr.mxu0 0.0
        %5263 = vmatpush1.msra.mxu0 0.0
        %5264 = vmatprep.subr.mxu0 0.0
        %5265 = vmatpush1.msra.mxu0 0.0
        %5266 = vmatprep.subr.mxu0 0.0
        %5267 = vmatpush1.msra.mxu0 0.0
        %5268 = vmatprep.mubr.f32.mxu0 0.0
        %5269 = vmatmul.mubr.f32.gmra.mrb[0].mxu0 %v5199
        %v5270 = vpop.f32.mrb[0].mxu0
        %v5271 = vadd.f32 0.0, %v5270
        %v5272 = vpop.f32.mrb[0].mxu0
        %5273 = vmatprep.mubr.f32.mxu0 0.0
        %5274 = vmatmul.mubr.f32.gmra.mrb[0].mxu0 %v5202
        %v5275 = vpop.f32.mrb[0].mxu0
        %v5276 = vadd.f32 0.0, %v5275
        %v5277 = vpop.f32.mrb[0].mxu0
        %5278 = vdwg.mxu0
        %5279 = vrot.lane.b32.xlu0 %v1802, 64
        %v5280 = vpop.permute.xlu0 %5279
        %5281 = vrot.lane.b32.xlu0 %v1808, 64
        %v5282 = vpop.permute.xlu0 %5281
        %v5286 = vsel %vm2049, %v5190, 0
        %v5289 = vsel %vm2049, %v5191, 0
        %5291 = vmatprep.subr.mxu0 0.0
        %5292 = vmatpush1.msra.mxu0 %v5280
        %5293 = vmatprep.subr.mxu0 0.0
        %5294 = vmatpush1.msra.mxu0 %v5282
        %5295 = vmatprep.subr.mxu0 0.0
        %5296 = vmatpush1.msra.mxu0 0.0
        %5297 = vmatprep.subr.mxu0 0.0
        %5298 = vmatpush1.msra.mxu0 0.0
        %5299 = vmatprep.subr.mxu0 0.0
        %5300 = vmatpush1.msra.mxu0 0.0
        %5301 = vmatprep.subr.mxu0 0.0
        %5302 = vmatpush1.msra.mxu0 0.0
        %5303 = vmatprep.subr.mxu0 0.0
        %5304 = vmatpush1.msra.mxu0 0.0
        %5305 = vmatprep.subr.mxu0 0.0
        %5306 = vmatpush1.msra.mxu0 0.0
        %5307 = vmatprep.subr.mxu0 0.0
        %5308 = vmatpush1.msra.mxu0 0.0
        %5309 = vmatprep.subr.mxu0 0.0
        %5310 = vmatpush1.msra.mxu0 0.0
        %5311 = vmatprep.subr.mxu0 0.0
        %5312 = vmatpush1.msra.mxu0 0.0
        %5313 = vmatprep.subr.mxu0 0.0
        %5314 = vmatpush1.msra.mxu0 0.0
        %5315 = vmatprep.subr.mxu0 0.0
        %5316 = vmatpush1.msra.mxu0 0.0
        %5317 = vmatprep.subr.mxu0 0.0
        %5318 = vmatpush1.msra.mxu0 0.0
        %5319 = vmatprep.subr.mxu0 0.0
        %5320 = vmatpush1.msra.mxu0 0.0
        %5321 = vmatprep.subr.mxu0 0.0
        %5322 = vmatpush1.msra.mxu0 0.0
        %5323 = vmatprep.subr.mxu0 0.0
        %5324 = vmatpush1.msra.mxu0 0.0
        %5325 = vmatprep.subr.mxu0 0.0
        %5326 = vmatpush1.msra.mxu0 0.0
        %5327 = vmatprep.subr.mxu0 0.0
        %5328 = vmatpush1.msra.mxu0 0.0
        %5329 = vmatprep.subr.mxu0 0.0
        %5330 = vmatpush1.msra.mxu0 0.0
        %5331 = vmatprep.subr.mxu0 0.0
        %5332 = vmatpush1.msra.mxu0 0.0
        %5333 = vmatprep.subr.mxu0 0.0
        %5334 = vmatpush1.msra.mxu0 0.0
        %5335 = vmatprep.subr.mxu0 0.0
        %5336 = vmatpush1.msra.mxu0 0.0
        %5337 = vmatprep.subr.mxu0 0.0
        %5338 = vmatpush1.msra.mxu0 0.0
        %5339 = vmatprep.subr.mxu0 0.0
        %5340 = vmatpush1.msra.mxu0 0.0
        %5341 = vmatprep.subr.mxu0 0.0
        %5342 = vmatpush1.msra.mxu0 0.0
        %5343 = vmatprep.subr.mxu0 0.0
        %5344 = vmatpush1.msra.mxu0 0.0
        %5345 = vmatprep.subr.mxu0 0.0
        %5346 = vmatpush1.msra.mxu0 0.0
        %5347 = vmatprep.subr.mxu0 0.0
        %5348 = vmatpush1.msra.mxu0 0.0
        %5349 = vmatprep.subr.mxu0 0.0
        %5350 = vmatpush1.msra.mxu0 0.0
        %5351 = vmatprep.subr.mxu0 0.0
        %5352 = vmatpush1.msra.mxu0 0.0
        %5353 = vmatprep.subr.mxu0 0.0
        %5354 = vmatpush1.msra.mxu0 0.0
        %5355 = vmatprep.mubr.f32.mxu0 0.0
        %5356 = vmatmul.mubr.f32.gmra.mrb[0].mxu0 %v5286
        %v5357 = vpop.f32.mrb[0].mxu0
        %v5358 = vadd.f32 0.0, %v5357
        %v5359 = vpop.f32.mrb[0].mxu0
        %5360 = vmatprep.mubr.f32.mxu0 0.0
        %5361 = vmatmul.mubr.f32.gmra.mrb[0].mxu0 %v5289
        %v5362 = vpop.f32.mrb[0].mxu0
        %v5363 = vadd.f32 0.0, %v5362
        %v5364 = vpop.f32.mrb[0].mxu0
        %5365 = vdwg.mxu0
        %v5367 = vsel %vm1874, %v5271, 0
        %v5370 = vsel %vm1874, %v5276, 0
        %v5373 = vsel %vm1874, %v5358, 0
        %v5376 = vsel %vm1874, %v5363, 0
        %5378 = vmatprep.subr.mxu0 %v1859
        %5379 = vmatpush1.msra.mxu0 %v1858
        %5380 = vmatprep.subr.mxu0 %v1861
        %5381 = vmatpush1.msra.mxu0 %v1860
        %5382 = vmatprep.subr.mxu0 %v1863
        %5383 = vmatpush1.msra.mxu0 %v1862
        %5384 = vmatprep.subr.mxu0 %v1865
        %5385 = vmatpush1.msra.mxu0 %v1864
        %5386 = vmatprep.subr.mxu0 0.0
        %5387 = vmatpush1.msra.mxu0 0.0
        %5388 = vmatprep.subr.mxu0 0.0
        %5389 = vmatpush1.msra.mxu0 0.0
        %5390 = vmatprep.subr.mxu0 0.0
        %5391 = vmatpush1.msra.mxu0 0.0
        %5392 = vmatprep.subr.mxu0 0.0
        %5393 = vmatpush1.msra.mxu0 0.0
        %5394 = vmatprep.subr.mxu0 0.0
        %5395 = vmatpush1.msra.mxu0 0.0
        %5396 = vmatprep.subr.mxu0 0.0
        %5397 = vmatpush1.msra.mxu0 0.0
        %5398 = vmatprep.subr.mxu0 0.0
        %5399 = vmatpush1.msra.mxu0 0.0
        %5400 = vmatprep.subr.mxu0 0.0
        %5401 = vmatpush1.msra.mxu0 0.0
        %5402 = vmatprep.subr.mxu0 0.0
        %5403 = vmatpush1.msra.mxu0 0.0
        %5404 = vmatprep.subr.mxu0 0.0
        %5405 = vmatpush1.msra.mxu0 0.0
        %5406 = vmatprep.subr.mxu0 0.0
        %5407 = vmatpush1.msra.mxu0 0.0
        %5408 = vmatprep.subr.mxu0 0.0
        %5409 = vmatpush1.msra.mxu0 0.0
        %5410 = vmatprep.subr.mxu0 0.0
        %5411 = vmatpush1.msra.mxu0 0.0
        %5412 = vmatprep.subr.mxu0 0.0
        %5413 = vmatpush1.msra.mxu0 0.0
        %5414 = vmatprep.subr.mxu0 0.0
        %5415 = vmatpush1.msra.mxu0 0.0
        %5416 = vmatprep.subr.mxu0 0.0
        %5417 = vmatpush1.msra.mxu0 0.0
        %5418 = vmatprep.subr.mxu0 0.0
        %5419 = vmatpush1.msra.mxu0 0.0
        %5420 = vmatprep.subr.mxu0 0.0
        %5421 = vmatpush1.msra.mxu0 0.0
        %5422 = vmatprep.subr.mxu0 0.0
        %5423 = vmatpush1.msra.mxu0 0.0
        %5424 = vmatprep.subr.mxu0 0.0
        %5425 = vmatpush1.msra.mxu0 0.0
        %5426 = vmatprep.subr.mxu0 0.0
        %5427 = vmatpush1.msra.mxu0 0.0
        %5428 = vmatprep.subr.mxu0 0.0
        %5429 = vmatpush1.msra.mxu0 0.0
        %5430 = vmatprep.subr.mxu0 0.0
        %5431 = vmatpush1.msra.mxu0 0.0
        %5432 = vmatprep.subr.mxu0 0.0
        %5433 = vmatpush1.msra.mxu0 0.0
        %5434 = vmatprep.subr.mxu0 0.0
        %5435 = vmatpush1.msra.mxu0 0.0
        %5436 = vmatprep.subr.mxu0 0.0
        %5437 = vmatpush1.msra.mxu0 0.0
        %5438 = vmatprep.subr.mxu0 0.0
        %5439 = vmatpush1.msra.mxu0 0.0
        %5440 = vmatprep.subr.mxu0 0.0
        %5441 = vmatpush1.msra.mxu0 0.0
        %5442 = vmatprep.mubr.f32.mxu0 0.0
        %5443 = vmatmul.mubr.f32.gmra.mrb[0].mxu0 %v5367
        %v5444 = vpop.f32.mrb[0].mxu0
        %v5445 = vadd.f32 0.0, %v5444
        %v5446 = vpop.f32.mrb[0].mxu0
        %v5447 = vadd.f32 0.0, %v5446
        %5448 = vmatprep.mubr.f32.mxu0 0.0
        %5449 = vmatmul.mubr.f32.gmra.mrb[0].mxu0 %v5370
        %v5450 = vpop.f32.mrb[0].mxu0
        %v5451 = vadd.f32 0.0, %v5450
        %v5452 = vpop.f32.mrb[0].mxu0
        %v5453 = vadd.f32 0.0, %v5452
        %5454 = vmatprep.mubr.f32.mxu0 0.0
        %5455 = vmatmul.mubr.f32.gmra.mrb[0].mxu0 %v5373
        %v5456 = vpop.f32.mrb[0].mxu0
        %v5457 = vadd.f32 0.0, %v5456
        %v5458 = vpop.f32.mrb[0].mxu0
        %v5459 = vadd.f32 0.0, %v5458
        %5460 = vmatprep.mubr.f32.mxu0 0.0
        %5461 = vmatmul.mubr.f32.gmra.mrb[0].mxu0 %v5376
        %v5462 = vpop.f32.mrb[0].mxu0
        %v5463 = vadd.f32 0.0, %v5462
        %v5464 = vpop.f32.mrb[0].mxu0
        %v5465 = vadd.f32 0.0, %v5464
        %5466 = vdwg.mxu0
        %v5467 = vadd.f32 %v4946, %v5445
        %v5468 = vadd.f32 %v4947, %v5447
        %v5469 = vadd.f32 %v4948, %v5451
        %v5470 = vadd.f32 %v4949, %v5453
        %v5471 = vadd.f32 %v4950, %v5457
        %v5472 = vadd.f32 %v4951, %v5459
        %v5473 = vadd.f32 %v4952, %v5463
        %v5474 = vadd.f32 %v4953, %v5465
        %5475 = vrot.lane.b32.xlu0 %v1536, 32
        %v5476 = vpop.permute.xlu0 %5475
        %5477 = vrot.lane.b32.xlu0 %v1542, 32
        %v5478 = vpop.permute.xlu0 %5477
        %5479 = vrot.lane.b32.xlu0 %v1625, 32
        %v5480 = vpop.permute.xlu0 %5479
        %5481 = vrot.lane.b32.xlu0 %v1631, 32
        %v5482 = vpop.permute.xlu0 %5481
        %v5483 = vsel %vm1874, %v5476, 0
        %v5485 = vsel %vm1874, %v5478, 0
        %v5487 = vsel %vm1874, %v5480, 0
        %v5489 = vsel %vm1874, %v5482, 0
        %5491 = vmatprep.subr.mxu0 0.0
        %5492 = vmatpush1.xpose.msra.mxu0 %v5487
        %5493 = vmatprep.subr.mxu0 0.0
        %5494 = vmatpush1.xpose.msra.mxu0 %v5489
        %5495 = vmatprep.subr.mxu0 0.0
        %5496 = vmatpush1.xpose.msra.mxu0 0.0
        %5497 = vmatprep.subr.mxu0 0.0
        %5498 = vmatpush1.xpose.msra.mxu0 0.0
        %5499 = vmatprep.subr.mxu0 0.0
        %5500 = vmatpush1.xpose.msra.mxu0 0.0
        %5501 = vmatprep.subr.mxu0 0.0
        %5502 = vmatpush1.xpose.msra.mxu0 0.0
        %5503 = vmatprep.subr.mxu0 0.0
        %5504 = vmatpush1.xpose.msra.mxu0 0.0
        %5505 = vmatprep.subr.mxu0 0.0
        %5506 = vmatpush1.xpose.msra.mxu0 0.0
        %5507 = vmatprep.subr.mxu0 0.0
        %5508 = vmatpush1.xpose.msra.mxu0 0.0
        %5509 = vmatprep.subr.mxu0 0.0
        %5510 = vmatpush1.xpose.msra.mxu0 0.0
        %5511 = vmatprep.subr.mxu0 0.0
        %5512 = vmatpush1.xpose.msra.mxu0 0.0
        %5513 = vmatprep.subr.mxu0 0.0
        %5514 = vmatpush1.xpose.msra.mxu0 0.0
        %5515 = vmatprep.subr.mxu0 0.0
        %5516 = vmatpush1.xpose.msra.mxu0 0.0
        %5517 = vmatprep.subr.mxu0 0.0
        %5518 = vmatpush1.xpose.msra.mxu0 0.0
        %5519 = vmatprep.subr.mxu0 0.0
        %5520 = vmatpush1.xpose.msra.mxu0 0.0
        %5521 = vmatprep.subr.mxu0 0.0
        %5522 = vmatpush1.xpose.msra.mxu0 0.0
        %5523 = vmatprep.subr.mxu0 0.0
        %5524 = vmatpush1.xpose.msra.mxu0 0.0
        %5525 = vmatprep.subr.mxu0 0.0
        %5526 = vmatpush1.xpose.msra.mxu0 0.0
        %5527 = vmatprep.subr.mxu0 0.0
        %5528 = vmatpush1.xpose.msra.mxu0 0.0
        %5529 = vmatprep.subr.mxu0 0.0
        %5530 = vmatpush1.xpose.msra.mxu0 0.0
        %5531 = vmatprep.subr.mxu0 0.0
        %5532 = vmatpush1.xpose.msra.mxu0 0.0
        %5533 = vmatprep.subr.mxu0 0.0
        %5534 = vmatpush1.xpose.msra.mxu0 0.0
        %5535 = vmatprep.subr.mxu0 0.0
        %5536 = vmatpush1.xpose.msra.mxu0 0.0
        %5537 = vmatprep.subr.mxu0 0.0
        %5538 = vmatpush1.xpose.msra.mxu0 0.0
        %5539 = vmatprep.subr.mxu0 0.0
        %5540 = vmatpush1.xpose.msra.mxu0 0.0
        %5541 = vmatprep.subr.mxu0 0.0
        %5542 = vmatpush1.xpose.msra.mxu0 0.0
        %5543 = vmatprep.subr.mxu0 0.0
        %5544 = vmatpush1.xpose.msra.mxu0 0.0
        %5545 = vmatprep.subr.mxu0 0.0
        %5546 = vmatpush1.xpose.msra.mxu0 0.0
        %5547 = vmatprep.subr.mxu0 0.0
        %5548 = vmatpush1.xpose.msra.mxu0 0.0
        %5549 = vmatprep.subr.mxu0 0.0
        %5550 = vmatpush1.xpose.msra.mxu0 0.0
        %5551 = vmatprep.subr.mxu0 0.0
        %5552 = vmatpush1.xpose.msra.mxu0 0.0
        %5553 = vmatprep.subr.mxu0 0.0
        %5554 = vmatpush1.xpose.msra.mxu0 0.0
        %5555 = vmatprep.mubr.f32.mxu0 0.0
        %5556 = vmatmul.mubr.f32.gmra.mrb[0].mxu0 %v5483
        %v5557 = vpop.f32.mrb[0].mxu0
        %v5558 = vadd.f32 0.0, %v5557
        %v5559 = vpop.f32.mrb[0].mxu0
        %5560 = vmatprep.mubr.f32.mxu0 0.0
        %5561 = vmatmul.mubr.f32.gmra.mrb[0].mxu0 %v5485
        %v5562 = vpop.f32.mrb[0].mxu0
        %v5563 = vadd.f32 0.0, %v5562
        %v5564 = vpop.f32.mrb[0].mxu0
        %5565 = vdwg.mxu0
        %5566 = vrot.lane.b32.xlu0 %v1548, 32
        %v5567 = vpop.permute.xlu0 %5566
        %5568 = vrot.lane.b32.xlu0 %v1554, 32
        %v5569 = vpop.permute.xlu0 %5568
        %5570 = vrot.lane.b32.xlu0 %v1637, 32
        %v5571 = vpop.permute.xlu0 %5570
        %5572 = vrot.lane.b32.xlu0 %v1643, 32
        %v5573 = vpop.permute.xlu0 %5572
        %v5574 = vsel %vm1874, %v5567, 0
        %v5576 = vsel %vm1874, %v5569, 0
        %v5578 = vsel %vm1874, %v5571, 0
        %v5580 = vsel %vm1874, %v5573, 0
        %5582 = vmatprep.subr.mxu0 0.0
        %5583 = vmatpush1.xpose.msra.mxu0 %v5578
        %5584 = vmatprep.subr.mxu0 0.0
        %5585 = vmatpush1.xpose.msra.mxu0 %v5580
        %5586 = vmatprep.subr.mxu0 0.0
        %5587 = vmatpush1.xpose.msra.mxu0 0.0
        %5588 = vmatprep.subr.mxu0 0.0
        %5589 = vmatpush1.xpose.msra.mxu0 0.0
        %5590 = vmatprep.subr.mxu0 0.0
        %5591 = vmatpush1.xpose.msra.mxu0 0.0
        %5592 = vmatprep.subr.mxu0 0.0
        %5593 = vmatpush1.xpose.msra.mxu0 0.0
        %5594 = vmatprep.subr.mxu0 0.0
        %5595 = vmatpush1.xpose.msra.mxu0 0.0
        %5596 = vmatprep.subr.mxu0 0.0
        %5597 = vmatpush1.xpose.msra.mxu0 0.0
        %5598 = vmatprep.subr.mxu0 0.0
        %5599 = vmatpush1.xpose.msra.mxu0 0.0
        %5600 = vmatprep.subr.mxu0 0.0
        %5601 = vmatpush1.xpose.msra.mxu0 0.0
        %5602 = vmatprep.subr.mxu0 0.0
        %5603 = vmatpush1.xpose.msra.mxu0 0.0
        %5604 = vmatprep.subr.mxu0 0.0
        %5605 = vmatpush1.xpose.msra.mxu0 0.0
        %5606 = vmatprep.subr.mxu0 0.0
        %5607 = vmatpush1.xpose.msra.mxu0 0.0
        %5608 = vmatprep.subr.mxu0 0.0
        %5609 = vmatpush1.xpose.msra.mxu0 0.0
        %5610 = vmatprep.subr.mxu0 0.0
        %5611 = vmatpush1.xpose.msra.mxu0 0.0
        %5612 = vmatprep.subr.mxu0 0.0
        %5613 = vmatpush1.xpose.msra.mxu0 0.0
        %5614 = vmatprep.subr.mxu0 0.0
        %5615 = vmatpush1.xpose.msra.mxu0 0.0
        %5616 = vmatprep.subr.mxu0 0.0
        %5617 = vmatpush1.xpose.msra.mxu0 0.0
        %5618 = vmatprep.subr.mxu0 0.0
        %5619 = vmatpush1.xpose.msra.mxu0 0.0
        %5620 = vmatprep.subr.mxu0 0.0
        %5621 = vmatpush1.xpose.msra.mxu0 0.0
        %5622 = vmatprep.subr.mxu0 0.0
        %5623 = vmatpush1.xpose.msra.mxu0 0.0
        %5624 = vmatprep.subr.mxu0 0.0
        %5625 = vmatpush1.xpose.msra.mxu0 0.0
        %5626 = vmatprep.subr.mxu0 0.0
        %5627 = vmatpush1.xpose.msra.mxu0 0.0
        %5628 = vmatprep.subr.mxu0 0.0
        %5629 = vmatpush1.xpose.msra.mxu0 0.0
        %5630 = vmatprep.subr.mxu0 0.0
        %5631 = vmatpush1.xpose.msra.mxu0 0.0
        %5632 = vmatprep.subr.mxu0 0.0
        %5633 = vmatpush1.xpose.msra.mxu0 0.0
        %5634 = vmatprep.subr.mxu0 0.0
        %5635 = vmatpush1.xpose.msra.mxu0 0.0
        %5636 = vmatprep.subr.mxu0 0.0
        %5637 = vmatpush1.xpose.msra.mxu0 0.0
        %5638 = vmatprep.subr.mxu0 0.0
        %5639 = vmatpush1.xpose.msra.mxu0 0.0
        %5640 = vmatprep.subr.mxu0 0.0
        %5641 = vmatpush1.xpose.msra.mxu0 0.0
        %5642 = vmatprep.subr.mxu0 0.0
        %5643 = vmatpush1.xpose.msra.mxu0 0.0
        %5644 = vmatprep.subr.mxu0 0.0
        %5645 = vmatpush1.xpose.msra.mxu0 0.0
        %5646 = vmatprep.mubr.f32.mxu0 0.0
        %5647 = vmatmul.mubr.f32.gmra.mrb[0].mxu0 %v5574
        %v5648 = vpop.f32.mrb[0].mxu0
        %v5649 = vadd.f32 0.0, %v5648
        %v5650 = vpop.f32.mrb[0].mxu0
        %5651 = vmatprep.mubr.f32.mxu0 0.0
        %5652 = vmatmul.mubr.f32.gmra.mrb[0].mxu0 %v5576
        %v5653 = vpop.f32.mrb[0].mxu0
        %v5654 = vadd.f32 0.0, %v5653
        %v5655 = vpop.f32.mrb[0].mxu0
        %5656 = vdwg.mxu0
        %v5657 = vsel %vm2049, %v5558, -inf
        %5658 = vmax.xlane.f32.xlu0 %v5657
        %v5659 = vpop.xlane.xlu0 %5658
        %v5660 = vsel %vm2049, %v5563, -inf
        %5661 = vmax.xlane.f32.xlu0 %v5660
        %v5662 = vpop.xlane.xlu0 %5661
        %v5663 = vsel %vm2049, %v5649, -inf
        %5664 = vmax.xlane.f32.xlu0 %v5663
        %v5665 = vpop.xlane.xlu0 %5664
        %v5666 = vsel %vm2049, %v5654, -inf
        %5667 = vmax.xlane.f32.xlu0 %v5666
        %v5668 = vpop.xlane.xlu0 %5667
        %v5669 = vsub.f32 %v5558, %v5659
        %v5670 = vsub.f32 %v5563, %v5662
        %v5671 = vsub.f32 %v5649, %v5665
        %v5672 = vsub.f32 %v5654, %v5668
        %v5673 = vmul.f32 %v5669, 1.442695
        %v5674 = vpow.pop %v5673
        %v5675 = vmul.f32 %v5670, 1.442695
        %v5676 = vpow.pop %v5675
        %v5677 = vmul.f32 %v5671, 1.442695
        %v5678 = vpow.pop %v5677
        %v5679 = vmul.f32 %v5672, 1.442695
        %v5680 = vpow.pop %v5679
        %v5681 = vsel %vm2049, %v5674, 0.0
        %5682 = vadd.xlane.f32.xlu0 %v5681
        %v5683 = vpop.xlane.xlu0 %5682
        %v5684 = vsel %vm2049, %v5676, 0.0
        %5685 = vadd.xlane.f32.xlu0 %v5684
        %v5686 = vpop.xlane.xlu0 %5685
        %v5687 = vsel %vm2049, %v5678, 0.0
        %5688 = vadd.xlane.f32.xlu0 %v5687
        %v5689 = vpop.xlane.xlu0 %5688
        %v5690 = vsel %vm2049, %v5680, 0.0
        %5691 = vadd.xlane.f32.xlu0 %v5690
        %v5692 = vpop.xlane.xlu0 %5691
        %v5693 = vrcp.pop %v5683
        %v5694 = vrcp.pop %v5686
        %v5695 = vrcp.pop %v5689
        %v5696 = vrcp.pop %v5692
        %v5697 = vmul.f32 %v5683, %v5693
        %v5698 = vmul.f32 %v5686, %v5694
        %v5699 = vmul.f32 %v5689, %v5695
        %v5700 = vmul.f32 %v5692, %v5696
        %v5701 = vsub.f32 2.0, %v5697
        %v5702 = vsub.f32 2.0, %v5698
        %v5703 = vsub.f32 2.0, %v5699
        %v5704 = vsub.f32 2.0, %v5700
        %v5705 = vmul.f32 %v5693, %v5701
        %v5706 = vmul.f32 %v5694, %v5702
        %v5707 = vmul.f32 %v5695, %v5703
        %v5708 = vmul.f32 %v5696, %v5704
        %v5709 = vmul.f32 %v5674, %v5705
        %v5710 = vmul.f32 %v5676, %v5706
        %v5711 = vmul.f32 %v5678, %v5707
        %v5712 = vmul.f32 %v5680, %v5708
        %5713 = vrot.lane.b32.xlu0 %v1790, 32
        %v5714 = vpop.permute.xlu0 %5713
        %5715 = vrot.lane.b32.xlu0 %v1796, 32
        %v5716 = vpop.permute.xlu0 %5715
        %v5720 = vsel %vm2049, %v5709, 0
        %v5723 = vsel %vm2049, %v5710, 0
        %5725 = vmatprep.subr.mxu0 0.0
        %5726 = vmatpush1.msra.mxu0 %v5714
        %5727 = vmatprep.subr.mxu0 0.0
        %5728 = vmatpush1.msra.mxu0 %v5716
        %5729 = vmatprep.subr.mxu0 0.0
        %5730 = vmatpush1.msra.mxu0 0.0
        %5731 = vmatprep.subr.mxu0 0.0
        %5732 = vmatpush1.msra.mxu0 0.0
        %5733 = vmatprep.subr.mxu0 0.0
        %5734 = vmatpush1.msra.mxu0 0.0
        %5735 = vmatprep.subr.mxu0 0.0
        %5736 = vmatpush1.msra.mxu0 0.0
        %5737 = vmatprep.subr.mxu0 0.0
        %5738 = vmatpush1.msra.mxu0 0.0
        %5739 = vmatprep.subr.mxu0 0.0
        %5740 = vmatpush1.msra.mxu0 0.0
        %5741 = vmatprep.subr.mxu0 0.0
        %5742 = vmatpush1.msra.mxu0 0.0
        %5743 = vmatprep.subr.mxu0 0.0
        %5744 = vmatpush1.msra.mxu0 0.0
        %5745 = vmatprep.subr.mxu0 0.0
        %5746 = vmatpush1.msra.mxu0 0.0
        %5747 = vmatprep.subr.mxu0 0.0
        %5748 = vmatpush1.msra.mxu0 0.0
        %5749 = vmatprep.subr.mxu0 0.0
        %5750 = vmatpush1.msra.mxu0 0.0
        %5751 = vmatprep.subr.mxu0 0.0
        %5752 = vmatpush1.msra.mxu0 0.0
        %5753 = vmatprep.subr.mxu0 0.0
        %5754 = vmatpush1.msra.mxu0 0.0
        %5755 = vmatprep.subr.mxu0 0.0
        %5756 = vmatpush1.msra.mxu0 0.0
        %5757 = vmatprep.subr.mxu0 0.0
        %5758 = vmatpush1.msra.mxu0 0.0
        %5759 = vmatprep.subr.mxu0 0.0
        %5760 = vmatpush1.msra.mxu0 0.0
        %5761 = vmatprep.subr.mxu0 0.0
        %5762 = vmatpush1.msra.mxu0 0.0
        %5763 = vmatprep.subr.mxu0 0.0
        %5764 = vmatpush1.msra.mxu0 0.0
        %5765 = vmatprep.subr.mxu0 0.0
        %5766 = vmatpush1.msra.mxu0 0.0
        %5767 = vmatprep.subr.mxu0 0.0
        %5768 = vmatpush1.msra.mxu0 0.0
        %5769 = vmatprep.subr.mxu0 0.0
        %5770 = vmatpush1.msra.mxu0 0.0
        %5771 = vmatprep.subr.mxu0 0.0
        %5772 = vmatpush1.msra.mxu0 0.0
        %5773 = vmatprep.subr.mxu0 0.0
        %5774 = vmatpush1.msra.mxu0 0.0
        %5775 = vmatprep.subr.mxu0 0.0
        %5776 = vmatpush1.msra.mxu0 0.0
        %5777 = vmatprep.subr.mxu0 0.0
        %5778 = vmatpush1.msra.mxu0 0.0
        %5779 = vmatprep.subr.mxu0 0.0
        %5780 = vmatpush1.msra.mxu0 0.0
        %5781 = vmatprep.subr.mxu0 0.0
        %5782 = vmatpush1.msra.mxu0 0.0
        %5783 = vmatprep.subr.mxu0 0.0
        %5784 = vmatpush1.msra.mxu0 0.0
        %5785 = vmatprep.subr.mxu0 0.0
        %5786 = vmatpush1.msra.mxu0 0.0
        %5787 = vmatprep.subr.mxu0 0.0
        %5788 = vmatpush1.msra.mxu0 0.0
        %5789 = vmatprep.mubr.f32.mxu0 0.0
        %5790 = vmatmul.mubr.f32.gmra.mrb[0].mxu0 %v5720
        %v5791 = vpop.f32.mrb[0].mxu0
        %v5792 = vadd.f32 0.0, %v5791
        %v5793 = vpop.f32.mrb[0].mxu0
        %5794 = vmatprep.mubr.f32.mxu0 0.0
        %5795 = vmatmul.mubr.f32.gmra.mrb[0].mxu0 %v5723
        %v5796 = vpop.f32.mrb[0].mxu0
        %v5797 = vadd.f32 0.0, %v5796
        %v5798 = vpop.f32.mrb[0].mxu0
        %5799 = vdwg.mxu0
        %5800 = vrot.lane.b32.xlu0 %v1802, 32
        %v5801 = vpop.permute.xlu0 %5800
        %5802 = vrot.lane.b32.xlu0 %v1808, 32
        %v5803 = vpop.permute.xlu0 %5802
        %v5807 = vsel %vm2049, %v5711, 0
        %v5810 = vsel %vm2049, %v5712, 0
        %5812 = vmatprep.subr.mxu0 0.0
        %5813 = vmatpush1.msra.mxu0 %v5801
        %5814 = vmatprep.subr.mxu0 0.0
        %5815 = vmatpush1.msra.mxu0 %v5803
        %5816 = vmatprep.subr.mxu0 0.0
        %5817 = vmatpush1.msra.mxu0 0.0
        %5818 = vmatprep.subr.mxu0 0.0
        %5819 = vmatpush1.msra.mxu0 0.0
        %5820 = vmatprep.subr.mxu0 0.0
        %5821 = vmatpush1.msra.mxu0 0.0
        %5822 = vmatprep.subr.mxu0 0.0
        %5823 = vmatpush1.msra.mxu0 0.0
        %5824 = vmatprep.subr.mxu0 0.0
        %5825 = vmatpush1.msra.mxu0 0.0
        %5826 = vmatprep.subr.mxu0 0.0
        %5827 = vmatpush1.msra.mxu0 0.0
        %5828 = vmatprep.subr.mxu0 0.0
        %5829 = vmatpush1.msra.mxu0 0.0
        %5830 = vmatprep.subr.mxu0 0.0
        %5831 = vmatpush1.msra.mxu0 0.0
        %5832 = vmatprep.subr.mxu0 0.0
        %5833 = vmatpush1.msra.mxu0 0.0
        %5834 = vmatprep.subr.mxu0 0.0
        %5835 = vmatpush1.msra.mxu0 0.0
        %5836 = vmatprep.subr.mxu0 0.0
        %5837 = vmatpush1.msra.mxu0 0.0
        %5838 = vmatprep.subr.mxu0 0.0
        %5839 = vmatpush1.msra.mxu0 0.0
        %5840 = vmatprep.subr.mxu0 0.0
        %5841 = vmatpush1.msra.mxu0 0.0
        %5842 = vmatprep.subr.mxu0 0.0
        %5843 = vmatpush1.msra.mxu0 0.0
        %5844 = vmatprep.subr.mxu0 0.0
        %5845 = vmatpush1.msra.mxu0 0.0
        %5846 = vmatprep.subr.mxu0 0.0
        %5847 = vmatpush1.msra.mxu0 0.0
        %5848 = vmatprep.subr.mxu0 0.0
        %5849 = vmatpush1.msra.mxu0 0.0
        %5850 = vmatprep.subr.mxu0 0.0
        %5851 = vmatpush1.msra.mxu0 0.0
        %5852 = vmatprep.subr.mxu0 0.0
        %5853 = vmatpush1.msra.mxu0 0.0
        %5854 = vmatprep.subr.mxu0 0.0
        %5855 = vmatpush1.msra.mxu0 0.0
        %5856 = vmatprep.subr.mxu0 0.0
        %5857 = vmatpush1.msra.mxu0 0.0
        %5858 = vmatprep.subr.mxu0 0.0
        %5859 = vmatpush1.msra.mxu0 0.0
        %5860 = vmatprep.subr.mxu0 0.0
        %5861 = vmatpush1.msra.mxu0 0.0
        %5862 = vmatprep.subr.mxu0 0.0
        %5863 = vmatpush1.msra.mxu0 0.0
        %5864 = vmatprep.subr.mxu0 0.0
        %5865 = vmatpush1.msra.mxu0 0.0
        %5866 = vmatprep.subr.mxu0 0.0
        %5867 = vmatpush1.msra.mxu0 0.0
        %5868 = vmatprep.subr.mxu0 0.0
        %5869 = vmatpush1.msra.mxu0 0.0
        %5870 = vmatprep.subr.mxu0 0.0
        %5871 = vmatpush1.msra.mxu0 0.0
        %5872 = vmatprep.subr.mxu0 0.0
        %5873 = vmatpush1.msra.mxu0 0.0
        %5874 = vmatprep.subr.mxu0 0.0
        %5875 = vmatpush1.msra.mxu0 0.0
        %5876 = vmatprep.mubr.f32.mxu0 0.0
        %5877 = vmatmul.mubr.f32.gmra.mrb[0].mxu0 %v5807
        %v5878 = vpop.f32.mrb[0].mxu0
        %v5879 = vadd.f32 0.0, %v5878
        %v5880 = vpop.f32.mrb[0].mxu0
        %5881 = vmatprep.mubr.f32.mxu0 0.0
        %5882 = vmatmul.mubr.f32.gmra.mrb[0].mxu0 %v5810
        %v5883 = vpop.f32.mrb[0].mxu0
        %v5884 = vadd.f32 0.0, %v5883
        %v5885 = vpop.f32.mrb[0].mxu0
        %5886 = vdwg.mxu0
        %v5888 = vsel %vm1874, %v5792, 0
        %v5891 = vsel %vm1874, %v5797, 0
        %v5894 = vsel %vm1874, %v5879, 0
        %v5897 = vsel %vm1874, %v5884, 0
        %5899 = vmatprep.subr.mxu0 %v1867
        %5900 = vmatpush1.msra.mxu0 %v1866
        %5901 = vmatprep.subr.mxu0 %v1869
        %5902 = vmatpush1.msra.mxu0 %v1868
        %5903 = vmatprep.subr.mxu0 %v1871
        %5904 = vmatpush1.msra.mxu0 %v1870
        %5905 = vmatprep.subr.mxu0 %v1873
        %5906 = vmatpush1.msra.mxu0 %v1872
        %5907 = vmatprep.subr.mxu0 0.0
        %5908 = vmatpush1.msra.mxu0 0.0
        %5909 = vmatprep.subr.mxu0 0.0
        %5910 = vmatpush1.msra.mxu0 0.0
        %5911 = vmatprep.subr.mxu0 0.0
        %5912 = vmatpush1.msra.mxu0 0.0
        %5913 = vmatprep.subr.mxu0 0.0
        %5914 = vmatpush1.msra.mxu0 0.0
        %5915 = vmatprep.subr.mxu0 0.0
        %5916 = vmatpush1.msra.mxu0 0.0
        %5917 = vmatprep.subr.mxu0 0.0
        %5918 = vmatpush1.msra.mxu0 0.0
        %5919 = vmatprep.subr.mxu0 0.0
        %5920 = vmatpush1.msra.mxu0 0.0
        %5921 = vmatprep.subr.mxu0 0.0
        %5922 = vmatpush1.msra.mxu0 0.0
        %5923 = vmatprep.subr.mxu0 0.0
        %5924 = vmatpush1.msra.mxu0 0.0
        %5925 = vmatprep.subr.mxu0 0.0
        %5926 = vmatpush1.msra.mxu0 0.0
        %5927 = vmatprep.subr.mxu0 0.0
        %5928 = vmatpush1.msra.mxu0 0.0
        %5929 = vmatprep.subr.mxu0 0.0
        %5930 = vmatpush1.msra.mxu0 0.0
        %5931 = vmatprep.subr.mxu0 0.0
        %5932 = vmatpush1.msra.mxu0 0.0
        %5933 = vmatprep.subr.mxu0 0.0
        %5934 = vmatpush1.msra.mxu0 0.0
        %5935 = vmatprep.subr.mxu0 0.0
        %5936 = vmatpush1.msra.mxu0 0.0
        %5937 = vmatprep.subr.mxu0 0.0
        %5938 = vmatpush1.msra.mxu0 0.0
        %5939 = vmatprep.subr.mxu0 0.0
        %5940 = vmatpush1.msra.mxu0 0.0
        %5941 = vmatprep.subr.mxu0 0.0
        %5942 = vmatpush1.msra.mxu0 0.0
        %5943 = vmatprep.subr.mxu0 0.0
        %5944 = vmatpush1.msra.mxu0 0.0
        %5945 = vmatprep.subr.mxu0 0.0
        %5946 = vmatpush1.msra.mxu0 0.0
        %5947 = vmatprep.subr.mxu0 0.0
        %5948 = vmatpush1.msra.mxu0 0.0
        %5949 = vmatprep.subr.mxu0 0.0
        %5950 = vmatpush1.msra.mxu0 0.0
        %5951 = vmatprep.subr.mxu0 0.0
        %5952 = vmatpush1.msra.mxu0 0.0
        %5953 = vmatprep.subr.mxu0 0.0
        %5954 = vmatpush1.msra.mxu0 0.0
        %5955 = vmatprep.subr.mxu0 0.0
        %5956 = vmatpush1.msra.mxu0 0.0
        %5957 = vmatprep.subr.mxu0 0.0
        %5958 = vmatpush1.msra.mxu0 0.0
        %5959 = vmatprep.subr.mxu0 0.0
        %5960 = vmatpush1.msra.mxu0 0.0
        %5961 = vmatprep.subr.mxu0 0.0
        %5962 = vmatpush1.msra.mxu0 0.0
        %5963 = vmatprep.mubr.f32.mxu0 0.0
        %5964 = vmatmul.mubr.f32.gmra.mrb[0].mxu0 %v5888
        %v5965 = vpop.f32.mrb[0].mxu0
        %v5966 = vadd.f32 0.0, %v5965
        %v5967 = vpop.f32.mrb[0].mxu0
        %v5968 = vadd.f32 0.0, %v5967
        %5969 = vmatprep.mubr.f32.mxu0 0.0
        %5970 = vmatmul.mubr.f32.gmra.mrb[0].mxu0 %v5891
        %v5971 = vpop.f32.mrb[0].mxu0
        %v5972 = vadd.f32 0.0, %v5971
        %v5973 = vpop.f32.mrb[0].mxu0
        %v5974 = vadd.f32 0.0, %v5973
        %5975 = vmatprep.mubr.f32.mxu0 0.0
        %5976 = vmatmul.mubr.f32.gmra.mrb[0].mxu0 %v5894
        %v5977 = vpop.f32.mrb[0].mxu0
        %v5978 = vadd.f32 0.0, %v5977
        %v5979 = vpop.f32.mrb[0].mxu0
        %v5980 = vadd.f32 0.0, %v5979
        %5981 = vmatprep.mubr.f32.mxu0 0.0
        %5982 = vmatmul.mubr.f32.gmra.mrb[0].mxu0 %v5897
        %v5983 = vpop.f32.mrb[0].mxu0
        %v5984 = vadd.f32 0.0, %v5983
        %v5985 = vpop.f32.mrb[0].mxu0
        %v5986 = vadd.f32 0.0, %v5985
        %5987 = vdwg.mxu0
        %v5988 = vadd.f32 %v5467, %v5966
        %v5989 = vadd.f32 %v5468, %v5968
        %v5990 = vadd.f32 %v5469, %v5972
        %v5991 = vadd.f32 %v5470, %v5974
        %v5992 = vadd.f32 %v5471, %v5978
        %v5993 = vadd.f32 %v5472, %v5980
        %v5994 = vadd.f32 %v5473, %v5984
        %v5995 = vadd.f32 %v5474, %v5986
        %v5996 = vld [vmem:[%s11] sm:$0x3]
        %v5998 = vlaneseq
        %v5999 = vshrl.u32 %v5998, 7
        %v6000 = vsub.s32 0, %v5999
        %v6001 = vrot.slane %v5996, %v6000
        %v6002 = vlaneseq
        %v6003 = vshrl.u32 %v6002, 7
        %v6004 = vsub.s32 1, %v6003
        %v6005 = vrot.slane %v5996, %v6004
        %v6008 = vadd.f32 %v5988, %v6001
        %v6009 = vadd.f32 %v5989, %v6005
        %v6010 = vadd.f32 %v5990, %v6001
        %v6011 = vadd.f32 %v5991, %v6005
        %v6012 = vadd.f32 %v5992, %v6001
        %v6013 = vadd.f32 %v5993, %v6005
        %v6014 = vadd.f32 %v5994, %v6001
        %v6015 = vadd.f32 %v5995, %v6005
        %v6016 = vadd.f32 %v794, %v6008
        %v6017 = vadd.f32 %v795, %v6009
        %v6018 = vadd.f32 %v796, %v6010
        %v6019 = vadd.f32 %v797, %v6011
        %v6020 = vadd.f32 %v798, %v6012
        %v6021 = vadd.f32 %v799, %v6013
        %v6022 = vadd.f32 %v800, %v6014
        %v6023 = vadd.f32 %v801, %v6015
        %v6024 = vadd.f32 %v6016, %v6017
        %6025 = vadd.xlane.f32.xlu0 %v6024
        %v6026 = vpop.xlane.xlu0 %6025
        %v6027 = vadd.f32 %v6018, %v6019
        %6028 = vadd.xlane.f32.xlu0 %v6027
        %v6029 = vpop.xlane.xlu0 %6028
        %v6030 = vadd.f32 %v6020, %v6021
        %6031 = vadd.xlane.f32.xlu0 %v6030
        %v6032 = vpop.xlane.xlu0 %6031
        %v6033 = vadd.f32 %v6022, %v6023
        %6034 = vadd.xlane.f32.xlu0 %v6033
        %v6035 = vpop.xlane.xlu0 %6034
        %v6036 = vrcp.pop 256.0
        %v6037 = vmul.f32 %v6026, %v6036
        %v6038 = vmul.f32 %v6029, %v6036
        %v6039 = vmul.f32 %v6032, %v6036
        %v6040 = vmul.f32 %v6035, %v6036
        %v6041 = vsub.f32 %v6016, %v6037
        %v6042 = vsub.f32 %v6017, %v6037
        %v6043 = vsub.f32 %v6018, %v6038
        %v6044 = vsub.f32 %v6019, %v6038
        %v6045 = vsub.f32 %v6020, %v6039
        %v6046 = vsub.f32 %v6021, %v6039
        %v6047 = vsub.f32 %v6022, %v6040
        %v6048 = vsub.f32 %v6023, %v6040
        %v6049 = vmul.f32 %v6041, %v6041
        %v6050 = vmul.f32 %v6042, %v6042
        %v6051 = vmul.f32 %v6043, %v6043
        %v6052 = vmul.f32 %v6044, %v6044
        %v6053 = vmul.f32 %v6045, %v6045
        %v6054 = vmul.f32 %v6046, %v6046
        %v6055 = vmul.f32 %v6047, %v6047
        %v6056 = vmul.f32 %v6048, %v6048
        %v6057 = vadd.f32 %v6049, %v6050
        %6058 = vadd.xlane.f32.xlu0 %v6057
        %v6059 = vpop.xlane.xlu0 %6058
        %v6060 = vadd.f32 %v6051, %v6052
        %6061 = vadd.xlane.f32.xlu0 %v6060
        %v6062 = vpop.xlane.xlu0 %6061
        %v6063 = vadd.f32 %v6053, %v6054
        %6064 = vadd.xlane.f32.xlu0 %v6063
        %v6065 = vpop.xlane.xlu0 %6064
        %v6066 = vadd.f32 %v6055, %v6056
        %6067 = vadd.xlane.f32.xlu0 %v6066
        %v6068 = vpop.xlane.xlu0 %6067
        %v6069 = vmul.f32 %v6059, %v6036
        %v6070 = vmul.f32 %v6062, %v6036
        %v6071 = vmul.f32 %v6065, %v6036
        %v6072 = vmul.f32 %v6068, %v6036
        %v6073 = vadd.f32 %v6069, 1e-05
        %v6074 = vadd.f32 %v6070, 1e-05
        %v6075 = vadd.f32 %v6071, 1e-05
        %v6076 = vadd.f32 %v6072, 1e-05
        %v6077 = vrsqrt.pop %v6073
        %v6078 = vrsqrt.pop %v6074
        %v6079 = vrsqrt.pop %v6075
        %v6080 = vrsqrt.pop %v6076
        %v6081 = vmul.f32 %v6041, %v6077
        %v6082 = vmul.f32 %v6042, %v6077
        %v6083 = vmul.f32 %v6043, %v6078
        %v6084 = vmul.f32 %v6044, %v6078
        %v6085 = vmul.f32 %v6045, %v6079
        %v6086 = vmul.f32 %v6046, %v6079
        %v6087 = vmul.f32 %v6047, %v6080
        %v6088 = vmul.f32 %v6048, %v6080
        %v6089 = vld [vmem:[%s12] sm:$0x3]
        %v6091 = vlaneseq
        %v6092 = vshrl.u32 %v6091, 7
        %v6093 = vsub.s32 0, %v6092
        %v6094 = vrot.slane %v6089, %v6093
        %v6095 = vlaneseq
        %v6096 = vshrl.u32 %v6095, 7
        %v6097 = vsub.s32 1, %v6096
        %v6098 = vrot.slane %v6089, %v6097
        %v6101 = vmul.f32 %v6081, %v6094
        %v6102 = vmul.f32 %v6082, %v6098
        %v6103 = vmul.f32 %v6083, %v6094
        %v6104 = vmul.f32 %v6084, %v6098
        %v6105 = vmul.f32 %v6085, %v6094
        %v6106 = vmul.f32 %v6086, %v6098
        %v6107 = vmul.f32 %v6087, %v6094
        %v6108 = vmul.f32 %v6088, %v6098
        %v6109 = vld [vmem:[%s13] sm:$0x3]
        %v6111 = vlaneseq
        %v6112 = vshrl.u32 %v6111, 7
        %v6113 = vsub.s32 0, %v6112
        %v6114 = vrot.slane %v6109, %v6113
        %v6115 = vlaneseq
        %v6116 = vshrl.u32 %v6115, 7
        %v6117 = vsub.s32 1, %v6116
        %v6118 = vrot.slane %v6109, %v6117
        %v6121 = vadd.f32 %v6101, %v6114
        %v6122 = vadd.f32 %v6102, %v6118
        %v6123 = vadd.f32 %v6103, %v6114
        %v6124 = vadd.f32 %v6104, %v6118
        %v6125 = vadd.f32 %v6105, %v6114
        %v6126 = vadd.f32 %v6106, %v6118
        %v6127 = vadd.f32 %v6107, %v6114
        %v6128 = vadd.f32 %v6108, %v6118
        %v6129 = vld [vmem:[#allocation14] sm:$0xff]
        %v6130 = vld [vmem:[#allocation14 + $0x8] sm:$0xff]
        %v6131 = vld [vmem:[#allocation14 + $0x10] sm:$0xff]
        %v6132 = vld [vmem:[#allocation14 + $0x18] sm:$0xff]
        %v6133 = vld [vmem:[#allocation14 + $0x20] sm:$0xff]
        %v6134 = vld [vmem:[#allocation14 + $0x28] sm:$0xff]
        %v6135 = vld [vmem:[#allocation14 + $0x30] sm:$0xff]
        %v6136 = vld [vmem:[#allocation14 + $0x38] sm:$0xff]
        %v6137 = vld [vmem:[#allocation14 + $0x40] sm:$0xff]
        %v6138 = vld [vmem:[#allocation14 + $0x48] sm:$0xff]
        %v6139 = vld [vmem:[#allocation14 + $0x50] sm:$0xff]
        %v6140 = vld [vmem:[#allocation14 + $0x58] sm:$0xff]
        %v6141 = vld [vmem:[#allocation14 + $0x60] sm:$0xff]
        %v6142 = vld [vmem:[#allocation14 + $0x68] sm:$0xff]
        %v6143 = vld [vmem:[#allocation14 + $0x70] sm:$0xff]
        %v6144 = vld [vmem:[#allocation14 + $0x78] sm:$0xff]
        %v6145 = vld [vmem:[#allocation14 + $0x80] sm:$0xff]
        %v6146 = vld [vmem:[#allocation14 + $0x88] sm:$0xff]
        %v6147 = vld [vmem:[#allocation14 + $0x90] sm:$0xff]
        %v6148 = vld [vmem:[#allocation14 + $0x98] sm:$0xff]
        %v6149 = vld [vmem:[#allocation14 + $0xa0] sm:$0xff]
        %v6150 = vld [vmem:[#allocation14 + $0xa8] sm:$0xff]
        %v6151 = vld [vmem:[#allocation14 + $0xb0] sm:$0xff]
        %v6152 = vld [vmem:[#allocation14 + $0xb8] sm:$0xff]
        %v6153 = vld [vmem:[#allocation14 + $0xc0] sm:$0xff]
        %v6154 = vld [vmem:[#allocation14 + $0xc8] sm:$0xff]
        %v6155 = vld [vmem:[#allocation14 + $0xd0] sm:$0xff]
        %v6156 = vld [vmem:[#allocation14 + $0xd8] sm:$0xff]
        %v6157 = vld [vmem:[#allocation14 + $0xe0] sm:$0xff]
        %v6158 = vld [vmem:[#allocation14 + $0xe8] sm:$0xff]
        %v6159 = vld [vmem:[#allocation14 + $0xf0] sm:$0xff]
        %v6160 = vld [vmem:[#allocation14 + $0xf8] sm:$0xff]
        %v6161 = vld [vmem:[#allocation14 + $0x100] sm:$0xff]
        %v6162 = vld [vmem:[#allocation14 + $0x108] sm:$0xff]
        %v6163 = vld [vmem:[#allocation14 + $0x110] sm:$0xff]
        %v6164 = vld [vmem:[#allocation14 + $0x118] sm:$0xff]
        %v6165 = vld [vmem:[#allocation14 + $0x120] sm:$0xff]
        %v6166 = vld [vmem:[#allocation14 + $0x128] sm:$0xff]
        %v6167 = vld [vmem:[#allocation14 + $0x130] sm:$0xff]
        %v6168 = vld [vmem:[#allocation14 + $0x138] sm:$0xff]
        %v6169 = vld [vmem:[#allocation14 + $0x140] sm:$0xff]
        %v6170 = vld [vmem:[#allocation14 + $0x148] sm:$0xff]
        %v6171 = vld [vmem:[#allocation14 + $0x150] sm:$0xff]
        %v6172 = vld [vmem:[#allocation14 + $0x158] sm:$0xff]
        %v6173 = vld [vmem:[#allocation14 + $0x160] sm:$0xff]
        %v6174 = vld [vmem:[#allocation14 + $0x168] sm:$0xff]
        %v6175 = vld [vmem:[#allocation14 + $0x170] sm:$0xff]
        %v6176 = vld [vmem:[#allocation14 + $0x178] sm:$0xff]
        %v6177 = vld [vmem:[#allocation14 + $0x180] sm:$0xff]
        %v6178 = vld [vmem:[#allocation14 + $0x188] sm:$0xff]
        %v6179 = vld [vmem:[#allocation14 + $0x190] sm:$0xff]
        %v6180 = vld [vmem:[#allocation14 + $0x198] sm:$0xff]
        %v6181 = vld [vmem:[#allocation14 + $0x1a0] sm:$0xff]
        %v6182 = vld [vmem:[#allocation14 + $0x1a8] sm:$0xff]
        %v6183 = vld [vmem:[#allocation14 + $0x1b0] sm:$0xff]
        %v6184 = vld [vmem:[#allocation14 + $0x1b8] sm:$0xff]
        %v6185 = vld [vmem:[#allocation14 + $0x1c0] sm:$0xff]
        %v6186 = vld [vmem:[#allocation14 + $0x1c8] sm:$0xff]
        %v6187 = vld [vmem:[#allocation14 + $0x1d0] sm:$0xff]
        %v6188 = vld [vmem:[#allocation14 + $0x1d8] sm:$0xff]
        %v6189 = vld [vmem:[#allocation14 + $0x1e0] sm:$0xff]
        %v6190 = vld [vmem:[#allocation14 + $0x1e8] sm:$0xff]
        %v6191 = vld [vmem:[#allocation14 + $0x1f0] sm:$0xff]
        %v6192 = vld [vmem:[#allocation14 + $0x1f8] sm:$0xff]
        %v6193 = vld [vmem:[#allocation14 + $0x200] sm:$0xff]
        %v6194 = vld [vmem:[#allocation14 + $0x208] sm:$0xff]
        %v6195 = vld [vmem:[#allocation14 + $0x210] sm:$0xff]
        %v6196 = vld [vmem:[#allocation14 + $0x218] sm:$0xff]
        %v6197 = vld [vmem:[#allocation14 + $0x220] sm:$0xff]
        %v6198 = vld [vmem:[#allocation14 + $0x228] sm:$0xff]
        %v6199 = vld [vmem:[#allocation14 + $0x230] sm:$0xff]
        %v6200 = vld [vmem:[#allocation14 + $0x238] sm:$0xff]
        %v6201 = vld [vmem:[#allocation14 + $0x240] sm:$0xff]
        %v6202 = vld [vmem:[#allocation14 + $0x248] sm:$0xff]
        %v6203 = vld [vmem:[#allocation14 + $0x250] sm:$0xff]
        %v6204 = vld [vmem:[#allocation14 + $0x258] sm:$0xff]
        %v6205 = vld [vmem:[#allocation14 + $0x260] sm:$0xff]
        %v6206 = vld [vmem:[#allocation14 + $0x268] sm:$0xff]
        %v6207 = vld [vmem:[#allocation14 + $0x270] sm:$0xff]
        %v6208 = vld [vmem:[#allocation14 + $0x278] sm:$0xff]
        %v6209 = vld [vmem:[#allocation14 + $0x280] sm:$0xff]
        %v6210 = vld [vmem:[#allocation14 + $0x288] sm:$0xff]
        %v6211 = vld [vmem:[#allocation14 + $0x290] sm:$0xff]
        %v6212 = vld [vmem:[#allocation14 + $0x298] sm:$0xff]
        %v6213 = vld [vmem:[#allocation14 + $0x2a0] sm:$0xff]
        %v6214 = vld [vmem:[#allocation14 + $0x2a8] sm:$0xff]
        %v6215 = vld [vmem:[#allocation14 + $0x2b0] sm:$0xff]
        %v6216 = vld [vmem:[#allocation14 + $0x2b8] sm:$0xff]
        %v6217 = vld [vmem:[#allocation14 + $0x2c0] sm:$0xff]
        %v6218 = vld [vmem:[#allocation14 + $0x2c8] sm:$0xff]
        %v6219 = vld [vmem:[#allocation14 + $0x2d0] sm:$0xff]
        %v6220 = vld [vmem:[#allocation14 + $0x2d8] sm:$0xff]
        %v6221 = vld [vmem:[#allocation14 + $0x2e0] sm:$0xff]
        %v6222 = vld [vmem:[#allocation14 + $0x2e8] sm:$0xff]
        %v6223 = vld [vmem:[#allocation14 + $0x2f0] sm:$0xff]
        %v6224 = vld [vmem:[#allocation14 + $0x2f8] sm:$0xff]
        %v6225 = vld [vmem:[#allocation14 + $0x300] sm:$0xff]
        %v6226 = vld [vmem:[#allocation14 + $0x308] sm:$0xff]
        %v6227 = vld [vmem:[#allocation14 + $0x310] sm:$0xff]
        %v6228 = vld [vmem:[#allocation14 + $0x318] sm:$0xff]
        %v6229 = vld [vmem:[#allocation14 + $0x320] sm:$0xff]
        %v6230 = vld [vmem:[#allocation14 + $0x328] sm:$0xff]
        %v6231 = vld [vmem:[#allocation14 + $0x330] sm:$0xff]
        %v6232 = vld [vmem:[#allocation14 + $0x338] sm:$0xff]
        %v6233 = vld [vmem:[#allocation14 + $0x340] sm:$0xff]
        %v6234 = vld [vmem:[#allocation14 + $0x348] sm:$0xff]
        %v6235 = vld [vmem:[#allocation14 + $0x350] sm:$0xff]
        %v6236 = vld [vmem:[#allocation14 + $0x358] sm:$0xff]
        %v6237 = vld [vmem:[#allocation14 + $0x360] sm:$0xff]
        %v6238 = vld [vmem:[#allocation14 + $0x368] sm:$0xff]
        %v6239 = vld [vmem:[#allocation14 + $0x370] sm:$0xff]
        %v6240 = vld [vmem:[#allocation14 + $0x378] sm:$0xff]
        %v6241 = vld [vmem:[#allocation14 + $0x380] sm:$0xff]
        %v6242 = vld [vmem:[#allocation14 + $0x388] sm:$0xff]
        %v6243 = vld [vmem:[#allocation14 + $0x390] sm:$0xff]
        %v6244 = vld [vmem:[#allocation14 + $0x398] sm:$0xff]
        %v6245 = vld [vmem:[#allocation14 + $0x3a0] sm:$0xff]
        %v6246 = vld [vmem:[#allocation14 + $0x3a8] sm:$0xff]
        %v6247 = vld [vmem:[#allocation14 + $0x3b0] sm:$0xff]
        %v6248 = vld [vmem:[#allocation14 + $0x3b8] sm:$0xff]
        %v6249 = vld [vmem:[#allocation14 + $0x3c0] sm:$0xff]
        %v6250 = vld [vmem:[#allocation14 + $0x3c8] sm:$0xff]
        %v6251 = vld [vmem:[#allocation14 + $0x3d0] sm:$0xff]
        %v6252 = vld [vmem:[#allocation14 + $0x3d8] sm:$0xff]
        %v6253 = vld [vmem:[#allocation14 + $0x3e0] sm:$0xff]
        %v6254 = vld [vmem:[#allocation14 + $0x3e8] sm:$0xff]
        %v6255 = vld [vmem:[#allocation14 + $0x3f0] sm:$0xff]
        %v6256 = vld [vmem:[#allocation14 + $0x3f8] sm:$0xff]
        %v6257 = vld [vmem:[#allocation14 + $0x400] sm:$0xff]
        %v6258 = vld [vmem:[#allocation14 + $0x408] sm:$0xff]
        %v6259 = vld [vmem:[#allocation14 + $0x410] sm:$0xff]
        %v6260 = vld [vmem:[#allocation14 + $0x418] sm:$0xff]
        %v6261 = vld [vmem:[#allocation14 + $0x420] sm:$0xff]
        %v6262 = vld [vmem:[#allocation14 + $0x428] sm:$0xff]
        %v6263 = vld [vmem:[#allocation14 + $0x430] sm:$0xff]
        %v6264 = vld [vmem:[#allocation14 + $0x438] sm:$0xff]
        %v6265 = vld [vmem:[#allocation14 + $0x440] sm:$0xff]
        %v6266 = vld [vmem:[#allocation14 + $0x448] sm:$0xff]
        %v6267 = vld [vmem:[#allocation14 + $0x450] sm:$0xff]
        %v6268 = vld [vmem:[#allocation14 + $0x458] sm:$0xff]
        %v6269 = vld [vmem:[#allocation14 + $0x460] sm:$0xff]
        %v6270 = vld [vmem:[#allocation14 + $0x468] sm:$0xff]
        %v6271 = vld [vmem:[#allocation14 + $0x470] sm:$0xff]
        %v6272 = vld [vmem:[#allocation14 + $0x478] sm:$0xff]
        %v6273 = vld [vmem:[#allocation14 + $0x480] sm:$0xff]
        %v6274 = vld [vmem:[#allocation14 + $0x488] sm:$0xff]
        %v6275 = vld [vmem:[#allocation14 + $0x490] sm:$0xff]
        %v6276 = vld [vmem:[#allocation14 + $0x498] sm:$0xff]
        %v6277 = vld [vmem:[#allocation14 + $0x4a0] sm:$0xff]
        %v6278 = vld [vmem:[#allocation14 + $0x4a8] sm:$0xff]
        %v6279 = vld [vmem:[#allocation14 + $0x4b0] sm:$0xff]
        %v6280 = vld [vmem:[#allocation14 + $0x4b8] sm:$0xff]
        %v6281 = vld [vmem:[#allocation14 + $0x4c0] sm:$0xff]
        %v6282 = vld [vmem:[#allocation14 + $0x4c8] sm:$0xff]
        %v6283 = vld [vmem:[#allocation14 + $0x4d0] sm:$0xff]
        %v6284 = vld [vmem:[#allocation14 + $0x4d8] sm:$0xff]
        %v6285 = vld [vmem:[#allocation14 + $0x4e0] sm:$0xff]
        %v6286 = vld [vmem:[#allocation14 + $0x4e8] sm:$0xff]
        %v6287 = vld [vmem:[#allocation14 + $0x4f0] sm:$0xff]
        %v6288 = vld [vmem:[#allocation14 + $0x4f8] sm:$0xff]
        %v6289 = vld [vmem:[#allocation14 + $0x500] sm:$0xff]
        %v6290 = vld [vmem:[#allocation14 + $0x508] sm:$0xff]
        %v6291 = vld [vmem:[#allocation14 + $0x510] sm:$0xff]
        %v6292 = vld [vmem:[#allocation14 + $0x518] sm:$0xff]
        %v6293 = vld [vmem:[#allocation14 + $0x520] sm:$0xff]
        %v6294 = vld [vmem:[#allocation14 + $0x528] sm:$0xff]
        %v6295 = vld [vmem:[#allocation14 + $0x530] sm:$0xff]
        %v6296 = vld [vmem:[#allocation14 + $0x538] sm:$0xff]
        %v6297 = vld [vmem:[#allocation14 + $0x540] sm:$0xff]
        %v6298 = vld [vmem:[#allocation14 + $0x548] sm:$0xff]
        %v6299 = vld [vmem:[#allocation14 + $0x550] sm:$0xff]
        %v6300 = vld [vmem:[#allocation14 + $0x558] sm:$0xff]
        %v6301 = vld [vmem:[#allocation14 + $0x560] sm:$0xff]
        %v6302 = vld [vmem:[#allocation14 + $0x568] sm:$0xff]
        %v6303 = vld [vmem:[#allocation14 + $0x570] sm:$0xff]
        %v6304 = vld [vmem:[#allocation14 + $0x578] sm:$0xff]
        %v6305 = vld [vmem:[#allocation14 + $0x580] sm:$0xff]
        %v6306 = vld [vmem:[#allocation14 + $0x588] sm:$0xff]
        %v6307 = vld [vmem:[#allocation14 + $0x590] sm:$0xff]
        %v6308 = vld [vmem:[#allocation14 + $0x598] sm:$0xff]
        %v6309 = vld [vmem:[#allocation14 + $0x5a0] sm:$0xff]
        %v6310 = vld [vmem:[#allocation14 + $0x5a8] sm:$0xff]
        %v6311 = vld [vmem:[#allocation14 + $0x5b0] sm:$0xff]
        %v6312 = vld [vmem:[#allocation14 + $0x5b8] sm:$0xff]
        %v6313 = vld [vmem:[#allocation14 + $0x5c0] sm:$0xff]
        %v6314 = vld [vmem:[#allocation14 + $0x5c8] sm:$0xff]
        %v6315 = vld [vmem:[#allocation14 + $0x5d0] sm:$0xff]
        %v6316 = vld [vmem:[#allocation14 + $0x5d8] sm:$0xff]
        %v6317 = vld [vmem:[#allocation14 + $0x5e0] sm:$0xff]
        %v6318 = vld [vmem:[#allocation14 + $0x5e8] sm:$0xff]
        %v6319 = vld [vmem:[#allocation14 + $0x5f0] sm:$0xff]
        %v6320 = vld [vmem:[#allocation14 + $0x5f8] sm:$0xff]
        %v6321 = vld [vmem:[#allocation14 + $0x600] sm:$0xff]
        %v6322 = vld [vmem:[#allocation14 + $0x608] sm:$0xff]
        %v6323 = vld [vmem:[#allocation14 + $0x610] sm:$0xff]
        %v6324 = vld [vmem:[#allocation14 + $0x618] sm:$0xff]
        %v6325 = vld [vmem:[#allocation14 + $0x620] sm:$0xff]
        %v6326 = vld [vmem:[#allocation14 + $0x628] sm:$0xff]
        %v6327 = vld [vmem:[#allocation14 + $0x630] sm:$0xff]
        %v6328 = vld [vmem:[#allocation14 + $0x638] sm:$0xff]
        %v6329 = vld [vmem:[#allocation14 + $0x640] sm:$0xff]
        %v6330 = vld [vmem:[#allocation14 + $0x648] sm:$0xff]
        %v6331 = vld [vmem:[#allocation14 + $0x650] sm:$0xff]
        %v6332 = vld [vmem:[#allocation14 + $0x658] sm:$0xff]
        %v6333 = vld [vmem:[#allocation14 + $0x660] sm:$0xff]
        %v6334 = vld [vmem:[#allocation14 + $0x668] sm:$0xff]
        %v6335 = vld [vmem:[#allocation14 + $0x670] sm:$0xff]
        %v6336 = vld [vmem:[#allocation14 + $0x678] sm:$0xff]
        %v6337 = vld [vmem:[#allocation14 + $0x680] sm:$0xff]
        %v6338 = vld [vmem:[#allocation14 + $0x688] sm:$0xff]
        %v6339 = vld [vmem:[#allocation14 + $0x690] sm:$0xff]
        %v6340 = vld [vmem:[#allocation14 + $0x698] sm:$0xff]
        %v6341 = vld [vmem:[#allocation14 + $0x6a0] sm:$0xff]
        %v6342 = vld [vmem:[#allocation14 + $0x6a8] sm:$0xff]
        %v6343 = vld [vmem:[#allocation14 + $0x6b0] sm:$0xff]
        %v6344 = vld [vmem:[#allocation14 + $0x6b8] sm:$0xff]
        %v6345 = vld [vmem:[#allocation14 + $0x6c0] sm:$0xff]
        %v6346 = vld [vmem:[#allocation14 + $0x6c8] sm:$0xff]
        %v6347 = vld [vmem:[#allocation14 + $0x6d0] sm:$0xff]
        %v6348 = vld [vmem:[#allocation14 + $0x6d8] sm:$0xff]
        %v6349 = vld [vmem:[#allocation14 + $0x6e0] sm:$0xff]
        %v6350 = vld [vmem:[#allocation14 + $0x6e8] sm:$0xff]
        %v6351 = vld [vmem:[#allocation14 + $0x6f0] sm:$0xff]
        %v6352 = vld [vmem:[#allocation14 + $0x6f8] sm:$0xff]
        %v6353 = vld [vmem:[#allocation14 + $0x700] sm:$0xff]
        %v6354 = vld [vmem:[#allocation14 + $0x708] sm:$0xff]
        %v6355 = vld [vmem:[#allocation14 + $0x710] sm:$0xff]
        %v6356 = vld [vmem:[#allocation14 + $0x718] sm:$0xff]
        %v6357 = vld [vmem:[#allocation14 + $0x720] sm:$0xff]
        %v6358 = vld [vmem:[#allocation14 + $0x728] sm:$0xff]
        %v6359 = vld [vmem:[#allocation14 + $0x730] sm:$0xff]
        %v6360 = vld [vmem:[#allocation14 + $0x738] sm:$0xff]
        %v6361 = vld [vmem:[#allocation14 + $0x740] sm:$0xff]
        %v6362 = vld [vmem:[#allocation14 + $0x748] sm:$0xff]
        %v6363 = vld [vmem:[#allocation14 + $0x750] sm:$0xff]
        %v6364 = vld [vmem:[#allocation14 + $0x758] sm:$0xff]
        %v6365 = vld [vmem:[#allocation14 + $0x760] sm:$0xff]
        %v6366 = vld [vmem:[#allocation14 + $0x768] sm:$0xff]
        %v6367 = vld [vmem:[#allocation14 + $0x770] sm:$0xff]
        %v6368 = vld [vmem:[#allocation14 + $0x778] sm:$0xff]
        %v6369 = vld [vmem:[#allocation14 + $0x780] sm:$0xff]
        %v6370 = vld [vmem:[#allocation14 + $0x788] sm:$0xff]
        %v6371 = vld [vmem:[#allocation14 + $0x790] sm:$0xff]
        %v6372 = vld [vmem:[#allocation14 + $0x798] sm:$0xff]
        %v6373 = vld [vmem:[#allocation14 + $0x7a0] sm:$0xff]
        %v6374 = vld [vmem:[#allocation14 + $0x7a8] sm:$0xff]
        %v6375 = vld [vmem:[#allocation14 + $0x7b0] sm:$0xff]
        %v6376 = vld [vmem:[#allocation14 + $0x7b8] sm:$0xff]
        %v6377 = vld [vmem:[#allocation14 + $0x7c0] sm:$0xff]
        %v6378 = vld [vmem:[#allocation14 + $0x7c8] sm:$0xff]
        %v6379 = vld [vmem:[#allocation14 + $0x7d0] sm:$0xff]
        %v6380 = vld [vmem:[#allocation14 + $0x7d8] sm:$0xff]
        %v6381 = vld [vmem:[#allocation14 + $0x7e0] sm:$0xff]
        %v6382 = vld [vmem:[#allocation14 + $0x7e8] sm:$0xff]
        %v6383 = vld [vmem:[#allocation14 + $0x7f0] sm:$0xff]
        %v6384 = vld [vmem:[#allocation14 + $0x7f8] sm:$0xff]
        %v6385 = vld [vmem:[%s15] sm:$0xff]
        %v6387 = vlaneseq
        %v6388 = vshrl.u32 %v6387, 7
        %v6389 = vsub.s32 0, %v6388
        %v6390 = vrot.slane %v6385, %v6389
        %v6391 = vlaneseq
        %v6392 = vshrl.u32 %v6391, 7
        %v6393 = vsub.s32 1, %v6392
        %v6394 = vrot.slane %v6385, %v6393
        %v6395 = vlaneseq
        %v6396 = vshrl.u32 %v6395, 7
        %v6397 = vsub.s32 2, %v6396
        %v6398 = vrot.slane %v6385, %v6397
        %v6399 = vlaneseq
        %v6400 = vshrl.u32 %v6399, 7
        %v6401 = vsub.s32 3, %v6400
        %v6402 = vrot.slane %v6385, %v6401
        %v6403 = vlaneseq
        %v6404 = vshrl.u32 %v6403, 7
        %v6405 = vsub.s32 4, %v6404
        %v6406 = vrot.slane %v6385, %v6405
        %v6407 = vlaneseq
        %v6408 = vshrl.u32 %v6407, 7
        %v6409 = vsub.s32 5, %v6408
        %v6410 = vrot.slane %v6385, %v6409
        %v6411 = vlaneseq
        %v6412 = vshrl.u32 %v6411, 7
        %v6413 = vsub.s32 6, %v6412
        %v6414 = vrot.slane %v6385, %v6413
        %v6415 = vlaneseq
        %v6416 = vshrl.u32 %v6415, 7
        %v6417 = vsub.s32 7, %v6416
        %v6418 = vrot.slane %v6385, %v6417
        %6427 = vmatprep.subr.mxu0 %v6130
        %6428 = vmatpush1.msra.mxu0 %v6129
        %6429 = vmatprep.subr.mxu0 %v6138
        %6430 = vmatpush1.msra.mxu0 %v6137
        %6431 = vmatprep.subr.mxu0 %v6146
        %6432 = vmatpush1.msra.mxu0 %v6145
        %6433 = vmatprep.subr.mxu0 %v6154
        %6434 = vmatpush1.msra.mxu0 %v6153
        %6435 = vmatprep.subr.mxu0 %v6162
        %6436 = vmatpush1.msra.mxu0 %v6161
        %6437 = vmatprep.subr.mxu0 %v6170
        %6438 = vmatpush1.msra.mxu0 %v6169
        %6439 = vmatprep.subr.mxu0 %v6178
        %6440 = vmatpush1.msra.mxu0 %v6177
        %6441 = vmatprep.subr.mxu0 %v6186
        %6442 = vmatpush1.msra.mxu0 %v6185
        %6443 = vmatprep.subr.mxu0 %v6194
        %6444 = vmatpush1.msra.mxu0 %v6193
        %6445 = vmatprep.subr.mxu0 %v6202
        %6446 = vmatpush1.msra.mxu0 %v6201
        %6447 = vmatprep.subr.mxu0 %v6210
        %6448 = vmatpush1.msra.mxu0 %v6209
        %6449 = vmatprep.subr.mxu0 %v6218
        %6450 = vmatpush1.msra.mxu0 %v6217
        %6451 = vmatprep.subr.mxu0 %v6226
        %6452 = vmatpush1.msra.mxu0 %v6225
        %6453 = vmatprep.subr.mxu0 %v6234
        %6454 = vmatpush1.msra.mxu0 %v6233
        %6455 = vmatprep.subr.mxu0 %v6242
        %6456 = vmatpush1.msra.mxu0 %v6241
        %6457 = vmatprep.subr.mxu0 %v6250
        %6458 = vmatpush1.msra.mxu0 %v6249
        %6459 = vmatprep.subr.mxu0 %v6258
        %6460 = vmatpush1.msra.mxu0 %v6257
        %6461 = vmatprep.subr.mxu0 %v6266
        %6462 = vmatpush1.msra.mxu0 %v6265
        %6463 = vmatprep.subr.mxu0 %v6274
        %6464 = vmatpush1.msra.mxu0 %v6273
        %6465 = vmatprep.subr.mxu0 %v6282
        %6466 = vmatpush1.msra.mxu0 %v6281
        %6467 = vmatprep.subr.mxu0 %v6290
        %6468 = vmatpush1.msra.mxu0 %v6289
        %6469 = vmatprep.subr.mxu0 %v6298
        %6470 = vmatpush1.msra.mxu0 %v6297
        %6471 = vmatprep.subr.mxu0 %v6306
        %6472 = vmatpush1.msra.mxu0 %v6305
        %6473 = vmatprep.subr.mxu0 %v6314
        %6474 = vmatpush1.msra.mxu0 %v6313
        %6475 = vmatprep.subr.mxu0 %v6322
        %6476 = vmatpush1.msra.mxu0 %v6321
        %6477 = vmatprep.subr.mxu0 %v6330
        %6478 = vmatpush1.msra.mxu0 %v6329
        %6479 = vmatprep.subr.mxu0 %v6338
        %6480 = vmatpush1.msra.mxu0 %v6337
        %6481 = vmatprep.subr.mxu0 %v6346
        %6482 = vmatpush1.msra.mxu0 %v6345
        %6483 = vmatprep.subr.mxu0 %v6354
        %6484 = vmatpush1.msra.mxu0 %v6353
        %6485 = vmatprep.subr.mxu0 %v6362
        %6486 = vmatpush1.msra.mxu0 %v6361
        %6487 = vmatprep.subr.mxu0 %v6370
        %6488 = vmatpush1.msra.mxu0 %v6369
        %6489 = vmatprep.subr.mxu0 %v6378
        %6490 = vmatpush1.msra.mxu0 %v6377
        %6491 = vmatprep.mubr.f32.mxu0 %v6122
        %6492 = vmatmul.mubr.f32.gmra.mrb[0].mxu0 %v6121
        %v6493 = vpop.f32.mrb[0].mxu0
        %v6494 = vadd.f32 %v6390, %v6493
        %v6495 = vpop.f32.mrb[0].mxu0
        %v6496 = vadd.f32 %v6394, %v6495
        %6497 = vmatprep.mubr.f32.mxu0 %v6124
        %6498 = vmatmul.mubr.f32.gmra.mrb[0].mxu0 %v6123
        %v6499 = vpop.f32.mrb[0].mxu0
        %v6500 = vadd.f32 %v6390, %v6499
        %v6501 = vpop.f32.mrb[0].mxu0
        %v6502 = vadd.f32 %v6394, %v6501
        %6503 = vmatprep.mubr.f32.mxu0 %v6126
        %6504 = vmatmul.mubr.f32.gmra.mrb[0].mxu0 %v6125
        %v6505 = vpop.f32.mrb[0].mxu0
        %v6506 = vadd.f32 %v6390, %v6505
        %v6507 = vpop.f32.mrb[0].mxu0
        %v6508 = vadd.f32 %v6394, %v6507
        %6509 = vmatprep.mubr.f32.mxu0 %v6128
        %6510 = vmatmul.mubr.f32.gmra.mrb[0].mxu0 %v6127
        %v6511 = vpop.f32.mrb[0].mxu0
        %v6512 = vadd.f32 %v6390, %v6511
        %v6513 = vpop.f32.mrb[0].mxu0
        %v6514 = vadd.f32 %v6394, %v6513
        %6515 = vdwg.mxu0
        %6516 = vmatprep.subr.mxu0 %v6132
        %6517 = vmatpush1.msra.mxu0 %v6131
        %6518 = vmatprep.subr.mxu0 %v6140
        %6519 = vmatpush1.msra.mxu0 %v6139
        %6520 = vmatprep.subr.mxu0 %v6148
        %6521 = vmatpush1.msra.mxu0 %v6147
        %6522 = vmatprep.subr.mxu0 %v6156
        %6523 = vmatpush1.msra.mxu0 %v6155
        %6524 = vmatprep.subr.mxu0 %v6164
        %6525 = vmatpush1.msra.mxu0 %v6163
        %6526 = vmatprep.subr.mxu0 %v6172
        %6527 = vmatpush1.msra.mxu0 %v6171
        %6528 = vmatprep.subr.mxu0 %v6180
        %6529 = vmatpush1.msra.mxu0 %v6179
        %6530 = vmatprep.subr.mxu0 %v6188
        %6531 = vmatpush1.msra.mxu0 %v6187
        %6532 = vmatprep.subr.mxu0 %v6196
        %6533 = vmatpush1.msra.mxu0 %v6195
        %6534 = vmatprep.subr.mxu0 %v6204
        %6535 = vmatpush1.msra.mxu0 %v6203
        %6536 = vmatprep.subr.mxu0 %v6212
        %6537 = vmatpush1.msra.mxu0 %v6211
        %6538 = vmatprep.subr.mxu0 %v6220
        %6539 = vmatpush1.msra.mxu0 %v6219
        %6540 = vmatprep.subr.mxu0 %v6228
        %6541 = vmatpush1.msra.mxu0 %v6227
        %6542 = vmatprep.subr.mxu0 %v6236
        %6543 = vmatpush1.msra.mxu0 %v6235
        %6544 = vmatprep.subr.mxu0 %v6244
        %6545 = vmatpush1.msra.mxu0 %v6243
        %6546 = vmatprep.subr.mxu0 %v6252
        %6547 = vmatpush1.msra.mxu0 %v6251
        %6548 = vmatprep.subr.mxu0 %v6260
        %6549 = vmatpush1.msra.mxu0 %v6259
        %6550 = vmatprep.subr.mxu0 %v6268
        %6551 = vmatpush1.msra.mxu0 %v6267
        %6552 = vmatprep.subr.mxu0 %v6276
        %6553 = vmatpush1.msra.mxu0 %v6275
        %6554 = vmatprep.subr.mxu0 %v6284
        %6555 = vmatpush1.msra.mxu0 %v6283
        %6556 = vmatprep.subr.mxu0 %v6292
        %6557 = vmatpush1.msra.mxu0 %v6291
        %6558 = vmatprep.subr.mxu0 %v6300
        %6559 = vmatpush1.msra.mxu0 %v6299
        %6560 = vmatprep.subr.mxu0 %v6308
        %6561 = vmatpush1.msra.mxu0 %v6307
        %6562 = vmatprep.subr.mxu0 %v6316
        %6563 = vmatpush1.msra.mxu0 %v6315
        %6564 = vmatprep.subr.mxu0 %v6324
        %6565 = vmatpush1.msra.mxu0 %v6323
        %6566 = vmatprep.subr.mxu0 %v6332
        %6567 = vmatpush1.msra.mxu0 %v6331
        %6568 = vmatprep.subr.mxu0 %v6340
        %6569 = vmatpush1.msra.mxu0 %v6339
        %6570 = vmatprep.subr.mxu0 %v6348
        %6571 = vmatpush1.msra.mxu0 %v6347
        %6572 = vmatprep.subr.mxu0 %v6356
        %6573 = vmatpush1.msra.mxu0 %v6355
        %6574 = vmatprep.subr.mxu0 %v6364
        %6575 = vmatpush1.msra.mxu0 %v6363
        %6576 = vmatprep.subr.mxu0 %v6372
        %6577 = vmatpush1.msra.mxu0 %v6371
        %6578 = vmatprep.subr.mxu0 %v6380
        %6579 = vmatpush1.msra.mxu0 %v6379
        %6580 = vmatprep.mubr.f32.mxu0 %v6122
        %6581 = vmatmul.mubr.f32.gmra.mrb[0].mxu0 %v6121
        %v6582 = vpop.f32.mrb[0].mxu0
        %v6583 = vadd.f32 %v6398, %v6582
        %v6584 = vpop.f32.mrb[0].mxu0
        %v6585 = vadd.f32 %v6402, %v6584
        %6586 = vmatprep.mubr.f32.mxu0 %v6124
        %6587 = vmatmul.mubr.f32.gmra.mrb[0].mxu0 %v6123
        %v6588 = vpop.f32.mrb[0].mxu0
        %v6589 = vadd.f32 %v6398, %v6588
        %v6590 = vpop.f32.mrb[0].mxu0
        %v6591 = vadd.f32 %v6402, %v6590
        %6592 = vmatprep.mubr.f32.mxu0 %v6126
        %6593 = vmatmul.mubr.f32.gmra.mrb[0].mxu0 %v6125
        %v6594 = vpop.f32.mrb[0].mxu0
        %v6595 = vadd.f32 %v6398, %v6594
        %v6596 = vpop.f32.mrb[0].mxu0
        %v6597 = vadd.f32 %v6402, %v6596
        %6598 = vmatprep.mubr.f32.mxu0 %v6128
        %6599 = vmatmul.mubr.f32.gmra.mrb[0].mxu0 %v6127
        %v6600 = vpop.f32.mrb[0].mxu0
        %v6601 = vadd.f32 %v6398, %v6600
        %v6602 = vpop.f32.mrb[0].mxu0
        %v6603 = vadd.f32 %v6402, %v6602
        %6604 = vdwg.mxu0
        %6605 = vmatprep.subr.mxu0 %v6134
        %6606 = vmatpush1.msra.mxu0 %v6133
        %6607 = vmatprep.subr.mxu0 %v6142
        %6608 = vmatpush1.msra.mxu0 %v6141
        %6609 = vmatprep.subr.mxu0 %v6150
        %6610 = vmatpush1.msra.mxu0 %v6149
        %6611 = vmatprep.subr.mxu0 %v6158
        %6612 = vmatpush1.msra.mxu0 %v6157
        %6613 = vmatprep.subr.mxu0 %v6166
        %6614 = vmatpush1.msra.mxu0 %v6165
        %6615 = vmatprep.subr.mxu0 %v6174
        %6616 = vmatpush1.msra.mxu0 %v6173
        %6617 = vmatprep.subr.mxu0 %v6182
        %6618 = vmatpush1.msra.mxu0 %v6181
        %6619 = vmatprep.subr.mxu0 %v6190
        %6620 = vmatpush1.msra.mxu0 %v6189
        %6621 = vmatprep.subr.mxu0 %v6198
        %6622 = vmatpush1.msra.mxu0 %v6197
        %6623 = vmatprep.subr.mxu0 %v6206
        %6624 = vmatpush1.msra.mxu0 %v6205
        %6625 = vmatprep.subr.mxu0 %v6214
        %6626 = vmatpush1.msra.mxu0 %v6213
        %6627 = vmatprep.subr.mxu0 %v6222
        %6628 = vmatpush1.msra.mxu0 %v6221
        %6629 = vmatprep.subr.mxu0 %v6230
        %6630 = vmatpush1.msra.mxu0 %v6229
        %6631 = vmatprep.subr.mxu0 %v6238
        %6632 = vmatpush1.msra.mxu0 %v6237
        %6633 = vmatprep.subr.mxu0 %v6246
        %6634 = vmatpush1.msra.mxu0 %v6245
        %6635 = vmatprep.subr.mxu0 %v6254
        %6636 = vmatpush1.msra.mxu0 %v6253
        %6637 = vmatprep.subr.mxu0 %v6262
        %6638 = vmatpush1.msra.mxu0 %v6261
        %6639 = vmatprep.subr.mxu0 %v6270
        %6640 = vmatpush1.msra.mxu0 %v6269
        %6641 = vmatprep.subr.mxu0 %v6278
        %6642 = vmatpush1.msra.mxu0 %v6277
        %6643 = vmatprep.subr.mxu0 %v6286
        %6644 = vmatpush1.msra.mxu0 %v6285
        %6645 = vmatprep.subr.mxu0 %v6294
        %6646 = vmatpush1.msra.mxu0 %v6293
        %6647 = vmatprep.subr.mxu0 %v6302
        %6648 = vmatpush1.msra.mxu0 %v6301
        %6649 = vmatprep.subr.mxu0 %v6310
        %6650 = vmatpush1.msra.mxu0 %v6309
        %6651 = vmatprep.subr.mxu0 %v6318
        %6652 = vmatpush1.msra.mxu0 %v6317
        %6653 = vmatprep.subr.mxu0 %v6326
        %6654 = vmatpush1.msra.mxu0 %v6325
        %6655 = vmatprep.subr.mxu0 %v6334
        %6656 = vmatpush1.msra.mxu0 %v6333
        %6657 = vmatprep.subr.mxu0 %v6342
        %6658 = vmatpush1.msra.mxu0 %v6341
        %6659 = vmatprep.subr.mxu0 %v6350
        %6660 = vmatpush1.msra.mxu0 %v6349
        %6661 = vmatprep.subr.mxu0 %v6358
        %6662 = vmatpush1.msra.mxu0 %v6357
        %6663 = vmatprep.subr.mxu0 %v6366
        %6664 = vmatpush1.msra.mxu0 %v6365
        %6665 = vmatprep.subr.mxu0 %v6374
        %6666 = vmatpush1.msra.mxu0 %v6373
        %6667 = vmatprep.subr.mxu0 %v6382
        %6668 = vmatpush1.msra.mxu0 %v6381
        %6669 = vmatprep.mubr.f32.mxu0 %v6122
        %6670 = vmatmul.mubr.f32.gmra.mrb[0].mxu0 %v6121
        %v6671 = vpop.f32.mrb[0].mxu0
        %v6672 = vadd.f32 %v6406, %v6671
        %v6673 = vpop.f32.mrb[0].mxu0
        %v6674 = vadd.f32 %v6410, %v6673
        %6675 = vmatprep.mubr.f32.mxu0 %v6124
        %6676 = vmatmul.mubr.f32.gmra.mrb[0].mxu0 %v6123
        %v6677 = vpop.f32.mrb[0].mxu0
        %v6678 = vadd.f32 %v6406, %v6677
        %v6679 = vpop.f32.mrb[0].mxu0
        %v6680 = vadd.f32 %v6410, %v6679
        %6681 = vmatprep.mubr.f32.mxu0 %v6126
        %6682 = vmatmul.mubr.f32.gmra.mrb[0].mxu0 %v6125
        %v6683 = vpop.f32.mrb[0].mxu0
        %v6684 = vadd.f32 %v6406, %v6683
        %v6685 = vpop.f32.mrb[0].mxu0
        %v6686 = vadd.f32 %v6410, %v6685
        %6687 = vmatprep.mubr.f32.mxu0 %v6128
        %6688 = vmatmul.mubr.f32.gmra.mrb[0].mxu0 %v6127
        %v6689 = vpop.f32.mrb[0].mxu0
        %v6690 = vadd.f32 %v6406, %v6689
        %v6691 = vpop.f32.mrb[0].mxu0
        %v6692 = vadd.f32 %v6410, %v6691
        %6693 = vdwg.mxu0
        %6694 = vmatprep.subr.mxu0 %v6136
        %6695 = vmatpush1.msra.mxu0 %v6135
        %6696 = vmatprep.subr.mxu0 %v6144
        %6697 = vmatpush1.msra.mxu0 %v6143
        %6698 = vmatprep.subr.mxu0 %v6152
        %6699 = vmatpush1.msra.mxu0 %v6151
        %6700 = vmatprep.subr.mxu0 %v6160
        %6701 = vmatpush1.msra.mxu0 %v6159
        %6702 = vmatprep.subr.mxu0 %v6168
        %6703 = vmatpush1.msra.mxu0 %v6167
        %6704 = vmatprep.subr.mxu0 %v6176
        %6705 = vmatpush1.msra.mxu0 %v6175
        %6706 = vmatprep.subr.mxu0 %v6184
        %6707 = vmatpush1.msra.mxu0 %v6183
        %6708 = vmatprep.subr.mxu0 %v6192
        %6709 = vmatpush1.msra.mxu0 %v6191
        %6710 = vmatprep.subr.mxu0 %v6200
        %6711 = vmatpush1.msra.mxu0 %v6199
        %6712 = vmatprep.subr.mxu0 %v6208
        %6713 = vmatpush1.msra.mxu0 %v6207
        %6714 = vmatprep.subr.mxu0 %v6216
        %6715 = vmatpush1.msra.mxu0 %v6215
        %6716 = vmatprep.subr.mxu0 %v6224
        %6717 = vmatpush1.msra.mxu0 %v6223
        %6718 = vmatprep.subr.mxu0 %v6232
        %6719 = vmatpush1.msra.mxu0 %v6231
        %6720 = vmatprep.subr.mxu0 %v6240
        %6721 = vmatpush1.msra.mxu0 %v6239
        %6722 = vmatprep.subr.mxu0 %v6248
        %6723 = vmatpush1.msra.mxu0 %v6247
        %6724 = vmatprep.subr.mxu0 %v6256
        %6725 = vmatpush1.msra.mxu0 %v6255
        %6726 = vmatprep.subr.mxu0 %v6264
        %6727 = vmatpush1.msra.mxu0 %v6263
        %6728 = vmatprep.subr.mxu0 %v6272
        %6729 = vmatpush1.msra.mxu0 %v6271
        %6730 = vmatprep.subr.mxu0 %v6280
        %6731 = vmatpush1.msra.mxu0 %v6279
        %6732 = vmatprep.subr.mxu0 %v6288
        %6733 = vmatpush1.msra.mxu0 %v6287
        %6734 = vmatprep.subr.mxu0 %v6296
        %6735 = vmatpush1.msra.mxu0 %v6295
        %6736 = vmatprep.subr.mxu0 %v6304
        %6737 = vmatpush1.msra.mxu0 %v6303
        %6738 = vmatprep.subr.mxu0 %v6312
        %6739 = vmatpush1.msra.mxu0 %v6311
        %6740 = vmatprep.subr.mxu0 %v6320
        %6741 = vmatpush1.msra.mxu0 %v6319
        %6742 = vmatprep.subr.mxu0 %v6328
        %6743 = vmatpush1.msra.mxu0 %v6327
        %6744 = vmatprep.subr.mxu0 %v6336
        %6745 = vmatpush1.msra.mxu0 %v6335
        %6746 = vmatprep.subr.mxu0 %v6344
        %6747 = vmatpush1.msra.mxu0 %v6343
        %6748 = vmatprep.subr.mxu0 %v6352
        %6749 = vmatpush1.msra.mxu0 %v6351
        %6750 = vmatprep.subr.mxu0 %v6360
        %6751 = vmatpush1.msra.mxu0 %v6359
        %6752 = vmatprep.subr.mxu0 %v6368
        %6753 = vmatpush1.msra.mxu0 %v6367
        %6754 = vmatprep.subr.mxu0 %v6376
        %6755 = vmatpush1.msra.mxu0 %v6375
        %6756 = vmatprep.subr.mxu0 %v6384
        %6757 = vmatpush1.msra.mxu0 %v6383
        %6758 = vmatprep.mubr.f32.mxu0 %v6122
        %6759 = vmatmul.mubr.f32.gmra.mrb[0].mxu0 %v6121
        %v6760 = vpop.f32.mrb[0].mxu0
        %v6761 = vadd.f32 %v6414, %v6760
        %v6762 = vpop.f32.mrb[0].mxu0
        %v6763 = vadd.f32 %v6418, %v6762
        %6764 = vmatprep.mubr.f32.mxu0 %v6124
        %6765 = vmatmul.mubr.f32.gmra.mrb[0].mxu0 %v6123
        %v6766 = vpop.f32.mrb[0].mxu0
        %v6767 = vadd.f32 %v6414, %v6766
        %v6768 = vpop.f32.mrb[0].mxu0
        %v6769 = vadd.f32 %v6418, %v6768
        %6770 = vmatprep.mubr.f32.mxu0 %v6126
        %6771 = vmatmul.mubr.f32.gmra.mrb[0].mxu0 %v6125
        %v6772 = vpop.f32.mrb[0].mxu0
        %v6773 = vadd.f32 %v6414, %v6772
        %v6774 = vpop.f32.mrb[0].mxu0
        %v6775 = vadd.f32 %v6418, %v6774
        %6776 = vmatprep.mubr.f32.mxu0 %v6128
        %6777 = vmatmul.mubr.f32.gmra.mrb[0].mxu0 %v6127
        %v6778 = vpop.f32.mrb[0].mxu0
        %v6779 = vadd.f32 %v6414, %v6778
        %v6780 = vpop.f32.mrb[0].mxu0
        %v6781 = vadd.f32 %v6418, %v6780
        %6782 = vdwg.mxu0
        %v6783 = vmax.f32 %v6494, 0.0
        %v6784 = vmax.f32 %v6496, 0.0
        %v6785 = vmax.f32 %v6583, 0.0
        %v6786 = vmax.f32 %v6585, 0.0
        %v6787 = vmax.f32 %v6672, 0.0
        %v6788 = vmax.f32 %v6674, 0.0
        %v6789 = vmax.f32 %v6761, 0.0
        %v6790 = vmax.f32 %v6763, 0.0
        %v6791 = vmax.f32 %v6500, 0.0
        %v6792 = vmax.f32 %v6502, 0.0
        %v6793 = vmax.f32 %v6589, 0.0
        %v6794 = vmax.f32 %v6591, 0.0
        %v6795 = vmax.f32 %v6678, 0.0
        %v6796 = vmax.f32 %v6680, 0.0
        %v6797 = vmax.f32 %v6767, 0.0
        %v6798 = vmax.f32 %v6769, 0.0
        %v6799 = vmax.f32 %v6506, 0.0
        %v6800 = vmax.f32 %v6508, 0.0
        %v6801 = vmax.f32 %v6595, 0.0
        %v6802 = vmax.f32 %v6597, 0.0
        %v6803 = vmax.f32 %v6684, 0.0
        %v6804 = vmax.f32 %v6686, 0.0
        %v6805 = vmax.f32 %v6773, 0.0
        %v6806 = vmax.f32 %v6775, 0.0
        %v6807 = vmax.f32 %v6512, 0.0
        %v6808 = vmax.f32 %v6514, 0.0
        %v6809 = vmax.f32 %v6601, 0.0
        %v6810 = vmax.f32 %v6603, 0.0
        %v6811 = vmax.f32 %v6690, 0.0
        %v6812 = vmax.f32 %v6692, 0.0
        %v6813 = vmax.f32 %v6779, 0.0
        %v6814 = vmax.f32 %v6781, 0.0
        %v6815 = vld [vmem:[#allocation16] sm:$0xff]
        %v6816 = vld [vmem:[#allocation16 + $0x8] sm:$0xff]
        %v6817 = vld [vmem:[#allocation16 + $0x10] sm:$0xff]
        %v6818 = vld [vmem:[#allocation16 + $0x18] sm:$0xff]
        %v6819 = vld [vmem:[#allocation16 + $0x20] sm:$0xff]
        %v6820 = vld [vmem:[#allocation16 + $0x28] sm:$0xff]
        %v6821 = vld [vmem:[#allocation16 + $0x30] sm:$0xff]
        %v6822 = vld [vmem:[#allocation16 + $0x38] sm:$0xff]
        %v6823 = vld [vmem:[#allocation16 + $0x40] sm:$0xff]
        %v6824 = vld [vmem:[#allocation16 + $0x48] sm:$0xff]
        %v6825 = vld [vmem:[#allocation16 + $0x50] sm:$0xff]
        %v6826 = vld [vmem:[#allocation16 + $0x58] sm:$0xff]
        %v6827 = vld [vmem:[#allocation16 + $0x60] sm:$0xff]
        %v6828 = vld [vmem:[#allocation16 + $0x68] sm:$0xff]
        %v6829 = vld [vmem:[#allocation16 + $0x70] sm:$0xff]
        %v6830 = vld [vmem:[#allocation16 + $0x78] sm:$0xff]
        %v6831 = vld [vmem:[#allocation16 + $0x80] sm:$0xff]
        %v6832 = vld [vmem:[#allocation16 + $0x88] sm:$0xff]
        %v6833 = vld [vmem:[#allocation16 + $0x90] sm:$0xff]
        %v6834 = vld [vmem:[#allocation16 + $0x98] sm:$0xff]
        %v6835 = vld [vmem:[#allocation16 + $0xa0] sm:$0xff]
        %v6836 = vld [vmem:[#allocation16 + $0xa8] sm:$0xff]
        %v6837 = vld [vmem:[#allocation16 + $0xb0] sm:$0xff]
        %v6838 = vld [vmem:[#allocation16 + $0xb8] sm:$0xff]
        %v6839 = vld [vmem:[#allocation16 + $0xc0] sm:$0xff]
        %v6840 = vld [vmem:[#allocation16 + $0xc8] sm:$0xff]
        %v6841 = vld [vmem:[#allocation16 + $0xd0] sm:$0xff]
        %v6842 = vld [vmem:[#allocation16 + $0xd8] sm:$0xff]
        %v6843 = vld [vmem:[#allocation16 + $0xe0] sm:$0xff]
        %v6844 = vld [vmem:[#allocation16 + $0xe8] sm:$0xff]
        %v6845 = vld [vmem:[#allocation16 + $0xf0] sm:$0xff]
        %v6846 = vld [vmem:[#allocation16 + $0xf8] sm:$0xff]
        %v6847 = vld [vmem:[#allocation16 + $0x100] sm:$0xff]
        %v6848 = vld [vmem:[#allocation16 + $0x108] sm:$0xff]
        %v6849 = vld [vmem:[#allocation16 + $0x110] sm:$0xff]
        %v6850 = vld [vmem:[#allocation16 + $0x118] sm:$0xff]
        %v6851 = vld [vmem:[#allocation16 + $0x120] sm:$0xff]
        %v6852 = vld [vmem:[#allocation16 + $0x128] sm:$0xff]
        %v6853 = vld [vmem:[#allocation16 + $0x130] sm:$0xff]
        %v6854 = vld [vmem:[#allocation16 + $0x138] sm:$0xff]
        %v6855 = vld [vmem:[#allocation16 + $0x140] sm:$0xff]
        %v6856 = vld [vmem:[#allocation16 + $0x148] sm:$0xff]
        %v6857 = vld [vmem:[#allocation16 + $0x150] sm:$0xff]
        %v6858 = vld [vmem:[#allocation16 + $0x158] sm:$0xff]
        %v6859 = vld [vmem:[#allocation16 + $0x160] sm:$0xff]
        %v6860 = vld [vmem:[#allocation16 + $0x168] sm:$0xff]
        %v6861 = vld [vmem:[#allocation16 + $0x170] sm:$0xff]
        %v6862 = vld [vmem:[#allocation16 + $0x178] sm:$0xff]
        %v6863 = vld [vmem:[#allocation16 + $0x180] sm:$0xff]
        %v6864 = vld [vmem:[#allocation16 + $0x188] sm:$0xff]
        %v6865 = vld [vmem:[#allocation16 + $0x190] sm:$0xff]
        %v6866 = vld [vmem:[#allocation16 + $0x198] sm:$0xff]
        %v6867 = vld [vmem:[#allocation16 + $0x1a0] sm:$0xff]
        %v6868 = vld [vmem:[#allocation16 + $0x1a8] sm:$0xff]
        %v6869 = vld [vmem:[#allocation16 + $0x1b0] sm:$0xff]
        %v6870 = vld [vmem:[#allocation16 + $0x1b8] sm:$0xff]
        %v6871 = vld [vmem:[#allocation16 + $0x1c0] sm:$0xff]
        %v6872 = vld [vmem:[#allocation16 + $0x1c8] sm:$0xff]
        %v6873 = vld [vmem:[#allocation16 + $0x1d0] sm:$0xff]
        %v6874 = vld [vmem:[#allocation16 + $0x1d8] sm:$0xff]
        %v6875 = vld [vmem:[#allocation16 + $0x1e0] sm:$0xff]
        %v6876 = vld [vmem:[#allocation16 + $0x1e8] sm:$0xff]
        %v6877 = vld [vmem:[#allocation16 + $0x1f0] sm:$0xff]
        %v6878 = vld [vmem:[#allocation16 + $0x1f8] sm:$0xff]
        %v6879 = vld [vmem:[#allocation16 + $0x200] sm:$0xff]
        %v6880 = vld [vmem:[#allocation16 + $0x208] sm:$0xff]
        %v6881 = vld [vmem:[#allocation16 + $0x210] sm:$0xff]
        %v6882 = vld [vmem:[#allocation16 + $0x218] sm:$0xff]
        %v6883 = vld [vmem:[#allocation16 + $0x220] sm:$0xff]
        %v6884 = vld [vmem:[#allocation16 + $0x228] sm:$0xff]
        %v6885 = vld [vmem:[#allocation16 + $0x230] sm:$0xff]
        %v6886 = vld [vmem:[#allocation16 + $0x238] sm:$0xff]
        %v6887 = vld [vmem:[#allocation16 + $0x240] sm:$0xff]
        %v6888 = vld [vmem:[#allocation16 + $0x248] sm:$0xff]
        %v6889 = vld [vmem:[#allocation16 + $0x250] sm:$0xff]
        %v6890 = vld [vmem:[#allocation16 + $0x258] sm:$0xff]
        %v6891 = vld [vmem:[#allocation16 + $0x260] sm:$0xff]
        %v6892 = vld [vmem:[#allocation16 + $0x268] sm:$0xff]
        %v6893 = vld [vmem:[#allocation16 + $0x270] sm:$0xff]
        %v6894 = vld [vmem:[#allocation16 + $0x278] sm:$0xff]
        %v6895 = vld [vmem:[#allocation16 + $0x280] sm:$0xff]
        %v6896 = vld [vmem:[#allocation16 + $0x288] sm:$0xff]
        %v6897 = vld [vmem:[#allocation16 + $0x290] sm:$0xff]
        %v6898 = vld [vmem:[#allocation16 + $0x298] sm:$0xff]
        %v6899 = vld [vmem:[#allocation16 + $0x2a0] sm:$0xff]
        %v6900 = vld [vmem:[#allocation16 + $0x2a8] sm:$0xff]
        %v6901 = vld [vmem:[#allocation16 + $0x2b0] sm:$0xff]
        %v6902 = vld [vmem:[#allocation16 + $0x2b8] sm:$0xff]
        %v6903 = vld [vmem:[#allocation16 + $0x2c0] sm:$0xff]
        %v6904 = vld [vmem:[#allocation16 + $0x2c8] sm:$0xff]
        %v6905 = vld [vmem:[#allocation16 + $0x2d0] sm:$0xff]
        %v6906 = vld [vmem:[#allocation16 + $0x2d8] sm:$0xff]
        %v6907 = vld [vmem:[#allocation16 + $0x2e0] sm:$0xff]
        %v6908 = vld [vmem:[#allocation16 + $0x2e8] sm:$0xff]
        %v6909 = vld [vmem:[#allocation16 + $0x2f0] sm:$0xff]
        %v6910 = vld [vmem:[#allocation16 + $0x2f8] sm:$0xff]
        %v6911 = vld [vmem:[#allocation16 + $0x300] sm:$0xff]
        %v6912 = vld [vmem:[#allocation16 + $0x308] sm:$0xff]
        %v6913 = vld [vmem:[#allocation16 + $0x310] sm:$0xff]
        %v6914 = vld [vmem:[#allocation16 + $0x318] sm:$0xff]
        %v6915 = vld [vmem:[#allocation16 + $0x320] sm:$0xff]
        %v6916 = vld [vmem:[#allocation16 + $0x328] sm:$0xff]
        %v6917 = vld [vmem:[#allocation16 + $0x330] sm:$0xff]
        %v6918 = vld [vmem:[#allocation16 + $0x338] sm:$0xff]
        %v6919 = vld [vmem:[#allocation16 + $0x340] sm:$0xff]
        %v6920 = vld [vmem:[#allocation16 + $0x348] sm:$0xff]
        %v6921 = vld [vmem:[#allocation16 + $0x350] sm:$0xff]
        %v6922 = vld [vmem:[#allocation16 + $0x358] sm:$0xff]
        %v6923 = vld [vmem:[#allocation16 + $0x360] sm:$0xff]
        %v6924 = vld [vmem:[#allocation16 + $0x368] sm:$0xff]
        %v6925 = vld [vmem:[#allocation16 + $0x370] sm:$0xff]
        %v6926 = vld [vmem:[#allocation16 + $0x378] sm:$0xff]
        %v6927 = vld [vmem:[#allocation16 + $0x380] sm:$0xff]
        %v6928 = vld [vmem:[#allocation16 + $0x388] sm:$0xff]
        %v6929 = vld [vmem:[#allocation16 + $0x390] sm:$0xff]
        %v6930 = vld [vmem:[#allocation16 + $0x398] sm:$0xff]
        %v6931 = vld [vmem:[#allocation16 + $0x3a0] sm:$0xff]
        %v6932 = vld [vmem:[#allocation16 + $0x3a8] sm:$0xff]
        %v6933 = vld [vmem:[#allocation16 + $0x3b0] sm:$0xff]
        %v6934 = vld [vmem:[#allocation16 + $0x3b8] sm:$0xff]
        %v6935 = vld [vmem:[#allocation16 + $0x3c0] sm:$0xff]
        %v6936 = vld [vmem:[#allocation16 + $0x3c8] sm:$0xff]
        %v6937 = vld [vmem:[#allocation16 + $0x3d0] sm:$0xff]
        %v6938 = vld [vmem:[#allocation16 + $0x3d8] sm:$0xff]
        %v6939 = vld [vmem:[#allocation16 + $0x3e0] sm:$0xff]
        %v6940 = vld [vmem:[#allocation16 + $0x3e8] sm:$0xff]
        %v6941 = vld [vmem:[#allocation16 + $0x3f0] sm:$0xff]
        %v6942 = vld [vmem:[#allocation16 + $0x3f8] sm:$0xff]
        %v6943 = vld [vmem:[#allocation16 + $0x400] sm:$0xff]
        %v6944 = vld [vmem:[#allocation16 + $0x408] sm:$0xff]
        %v6945 = vld [vmem:[#allocation16 + $0x410] sm:$0xff]
        %v6946 = vld [vmem:[#allocation16 + $0x418] sm:$0xff]
        %v6947 = vld [vmem:[#allocation16 + $0x420] sm:$0xff]
        %v6948 = vld [vmem:[#allocation16 + $0x428] sm:$0xff]
        %v6949 = vld [vmem:[#allocation16 + $0x430] sm:$0xff]
        %v6950 = vld [vmem:[#allocation16 + $0x438] sm:$0xff]
        %v6951 = vld [vmem:[#allocation16 + $0x440] sm:$0xff]
        %v6952 = vld [vmem:[#allocation16 + $0x448] sm:$0xff]
        %v6953 = vld [vmem:[#allocation16 + $0x450] sm:$0xff]
        %v6954 = vld [vmem:[#allocation16 + $0x458] sm:$0xff]
        %v6955 = vld [vmem:[#allocation16 + $0x460] sm:$0xff]
        %v6956 = vld [vmem:[#allocation16 + $0x468] sm:$0xff]
        %v6957 = vld [vmem:[#allocation16 + $0x470] sm:$0xff]
        %v6958 = vld [vmem:[#allocation16 + $0x478] sm:$0xff]
        %v6959 = vld [vmem:[#allocation16 + $0x480] sm:$0xff]
        %v6960 = vld [vmem:[#allocation16 + $0x488] sm:$0xff]
        %v6961 = vld [vmem:[#allocation16 + $0x490] sm:$0xff]
        %v6962 = vld [vmem:[#allocation16 + $0x498] sm:$0xff]
        %v6963 = vld [vmem:[#allocation16 + $0x4a0] sm:$0xff]
        %v6964 = vld [vmem:[#allocation16 + $0x4a8] sm:$0xff]
        %v6965 = vld [vmem:[#allocation16 + $0x4b0] sm:$0xff]
        %v6966 = vld [vmem:[#allocation16 + $0x4b8] sm:$0xff]
        %v6967 = vld [vmem:[#allocation16 + $0x4c0] sm:$0xff]
        %v6968 = vld [vmem:[#allocation16 + $0x4c8] sm:$0xff]
        %v6969 = vld [vmem:[#allocation16 + $0x4d0] sm:$0xff]
        %v6970 = vld [vmem:[#allocation16 + $0x4d8] sm:$0xff]
        %v6971 = vld [vmem:[#allocation16 + $0x4e0] sm:$0xff]
        %v6972 = vld [vmem:[#allocation16 + $0x4e8] sm:$0xff]
        %v6973 = vld [vmem:[#allocation16 + $0x4f0] sm:$0xff]
        %v6974 = vld [vmem:[#allocation16 + $0x4f8] sm:$0xff]
        %v6975 = vld [vmem:[#allocation16 + $0x500] sm:$0xff]
        %v6976 = vld [vmem:[#allocation16 + $0x508] sm:$0xff]
        %v6977 = vld [vmem:[#allocation16 + $0x510] sm:$0xff]
        %v6978 = vld [vmem:[#allocation16 + $0x518] sm:$0xff]
        %v6979 = vld [vmem:[#allocation16 + $0x520] sm:$0xff]
        %v6980 = vld [vmem:[#allocation16 + $0x528] sm:$0xff]
        %v6981 = vld [vmem:[#allocation16 + $0x530] sm:$0xff]
        %v6982 = vld [vmem:[#allocation16 + $0x538] sm:$0xff]
        %v6983 = vld [vmem:[#allocation16 + $0x540] sm:$0xff]
        %v6984 = vld [vmem:[#allocation16 + $0x548] sm:$0xff]
        %v6985 = vld [vmem:[#allocation16 + $0x550] sm:$0xff]
        %v6986 = vld [vmem:[#allocation16 + $0x558] sm:$0xff]
        %v6987 = vld [vmem:[#allocation16 + $0x560] sm:$0xff]
        %v6988 = vld [vmem:[#allocation16 + $0x568] sm:$0xff]
        %v6989 = vld [vmem:[#allocation16 + $0x570] sm:$0xff]
        %v6990 = vld [vmem:[#allocation16 + $0x578] sm:$0xff]
        %v6991 = vld [vmem:[#allocation16 + $0x580] sm:$0xff]
        %v6992 = vld [vmem:[#allocation16 + $0x588] sm:$0xff]
        %v6993 = vld [vmem:[#allocation16 + $0x590] sm:$0xff]
        %v6994 = vld [vmem:[#allocation16 + $0x598] sm:$0xff]
        %v6995 = vld [vmem:[#allocation16 + $0x5a0] sm:$0xff]
        %v6996 = vld [vmem:[#allocation16 + $0x5a8] sm:$0xff]
        %v6997 = vld [vmem:[#allocation16 + $0x5b0] sm:$0xff]
        %v6998 = vld [vmem:[#allocation16 + $0x5b8] sm:$0xff]
        %v6999 = vld [vmem:[#allocation16 + $0x5c0] sm:$0xff]
        %v7000 = vld [vmem:[#allocation16 + $0x5c8] sm:$0xff]
        %v7001 = vld [vmem:[#allocation16 + $0x5d0] sm:$0xff]
        %v7002 = vld [vmem:[#allocation16 + $0x5d8] sm:$0xff]
        %v7003 = vld [vmem:[#allocation16 + $0x5e0] sm:$0xff]
        %v7004 = vld [vmem:[#allocation16 + $0x5e8] sm:$0xff]
        %v7005 = vld [vmem:[#allocation16 + $0x5f0] sm:$0xff]
        %v7006 = vld [vmem:[#allocation16 + $0x5f8] sm:$0xff]
        %v7007 = vld [vmem:[#allocation16 + $0x600] sm:$0xff]
        %v7008 = vld [vmem:[#allocation16 + $0x608] sm:$0xff]
        %v7009 = vld [vmem:[#allocation16 + $0x610] sm:$0xff]
        %v7010 = vld [vmem:[#allocation16 + $0x618] sm:$0xff]
        %v7011 = vld [vmem:[#allocation16 + $0x620] sm:$0xff]
        %v7012 = vld [vmem:[#allocation16 + $0x628] sm:$0xff]
        %v7013 = vld [vmem:[#allocation16 + $0x630] sm:$0xff]
        %v7014 = vld [vmem:[#allocation16 + $0x638] sm:$0xff]
        %v7015 = vld [vmem:[#allocation16 + $0x640] sm:$0xff]
        %v7016 = vld [vmem:[#allocation16 + $0x648] sm:$0xff]
        %v7017 = vld [vmem:[#allocation16 + $0x650] sm:$0xff]
        %v7018 = vld [vmem:[#allocation16 + $0x658] sm:$0xff]
        %v7019 = vld [vmem:[#allocation16 + $0x660] sm:$0xff]
        %v7020 = vld [vmem:[#allocation16 + $0x668] sm:$0xff]
        %v7021 = vld [vmem:[#allocation16 + $0x670] sm:$0xff]
        %v7022 = vld [vmem:[#allocation16 + $0x678] sm:$0xff]
        %v7023 = vld [vmem:[#allocation16 + $0x680] sm:$0xff]
        %v7024 = vld [vmem:[#allocation16 + $0x688] sm:$0xff]
        %v7025 = vld [vmem:[#allocation16 + $0x690] sm:$0xff]
        %v7026 = vld [vmem:[#allocation16 + $0x698] sm:$0xff]
        %v7027 = vld [vmem:[#allocation16 + $0x6a0] sm:$0xff]
        %v7028 = vld [vmem:[#allocation16 + $0x6a8] sm:$0xff]
        %v7029 = vld [vmem:[#allocation16 + $0x6b0] sm:$0xff]
        %v7030 = vld [vmem:[#allocation16 + $0x6b8] sm:$0xff]
        %v7031 = vld [vmem:[#allocation16 + $0x6c0] sm:$0xff]
        %v7032 = vld [vmem:[#allocation16 + $0x6c8] sm:$0xff]
        %v7033 = vld [vmem:[#allocation16 + $0x6d0] sm:$0xff]
        %v7034 = vld [vmem:[#allocation16 + $0x6d8] sm:$0xff]
        %v7035 = vld [vmem:[#allocation16 + $0x6e0] sm:$0xff]
        %v7036 = vld [vmem:[#allocation16 + $0x6e8] sm:$0xff]
        %v7037 = vld [vmem:[#allocation16 + $0x6f0] sm:$0xff]
        %v7038 = vld [vmem:[#allocation16 + $0x6f8] sm:$0xff]
        %v7039 = vld [vmem:[#allocation16 + $0x700] sm:$0xff]
        %v7040 = vld [vmem:[#allocation16 + $0x708] sm:$0xff]
        %v7041 = vld [vmem:[#allocation16 + $0x710] sm:$0xff]
        %v7042 = vld [vmem:[#allocation16 + $0x718] sm:$0xff]
        %v7043 = vld [vmem:[#allocation16 + $0x720] sm:$0xff]
        %v7044 = vld [vmem:[#allocation16 + $0x728] sm:$0xff]
        %v7045 = vld [vmem:[#allocation16 + $0x730] sm:$0xff]
        %v7046 = vld [vmem:[#allocation16 + $0x738] sm:$0xff]
        %v7047 = vld [vmem:[#allocation16 + $0x740] sm:$0xff]
        %v7048 = vld [vmem:[#allocation16 + $0x748] sm:$0xff]
        %v7049 = vld [vmem:[#allocation16 + $0x750] sm:$0xff]
        %v7050 = vld [vmem:[#allocation16 + $0x758] sm:$0xff]
        %v7051 = vld [vmem:[#allocation16 + $0x760] sm:$0xff]
        %v7052 = vld [vmem:[#allocation16 + $0x768] sm:$0xff]
        %v7053 = vld [vmem:[#allocation16 + $0x770] sm:$0xff]
        %v7054 = vld [vmem:[#allocation16 + $0x778] sm:$0xff]
        %v7055 = vld [vmem:[#allocation16 + $0x780] sm:$0xff]
        %v7056 = vld [vmem:[#allocation16 + $0x788] sm:$0xff]
        %v7057 = vld [vmem:[#allocation16 + $0x790] sm:$0xff]
        %v7058 = vld [vmem:[#allocation16 + $0x798] sm:$0xff]
        %v7059 = vld [vmem:[#allocation16 + $0x7a0] sm:$0xff]
        %v7060 = vld [vmem:[#allocation16 + $0x7a8] sm:$0xff]
        %v7061 = vld [vmem:[#allocation16 + $0x7b0] sm:$0xff]
        %v7062 = vld [vmem:[#allocation16 + $0x7b8] sm:$0xff]
        %v7063 = vld [vmem:[#allocation16 + $0x7c0] sm:$0xff]
        %v7064 = vld [vmem:[#allocation16 + $0x7c8] sm:$0xff]
        %v7065 = vld [vmem:[#allocation16 + $0x7d0] sm:$0xff]
        %v7066 = vld [vmem:[#allocation16 + $0x7d8] sm:$0xff]
        %v7067 = vld [vmem:[#allocation16 + $0x7e0] sm:$0xff]
        %v7068 = vld [vmem:[#allocation16 + $0x7e8] sm:$0xff]
        %v7069 = vld [vmem:[#allocation16 + $0x7f0] sm:$0xff]
        %v7070 = vld [vmem:[#allocation16 + $0x7f8] sm:$0xff]
        %v7071 = vld [vmem:[%s17] sm:$0x3]
        %v7073 = vlaneseq
        %v7074 = vshrl.u32 %v7073, 7
        %v7075 = vsub.s32 0, %v7074
        %v7076 = vrot.slane %v7071, %v7075
        %v7077 = vlaneseq
        %v7078 = vshrl.u32 %v7077, 7
        %v7079 = vsub.s32 1, %v7078
        %v7080 = vrot.slane %v7071, %v7079
        %7083 = vmatprep.subr.mxu0 %v6816
        %7084 = vmatpush1.msra.mxu0 %v6815
        %7085 = vmatprep.subr.mxu0 %v6818
        %7086 = vmatpush1.msra.mxu0 %v6817
        %7087 = vmatprep.subr.mxu0 %v6820
        %7088 = vmatpush1.msra.mxu0 %v6819
        %7089 = vmatprep.subr.mxu0 %v6822
        %7090 = vmatpush1.msra.mxu0 %v6821
        %7091 = vmatprep.subr.mxu0 %v6824
        %7092 = vmatpush1.msra.mxu0 %v6823
        %7093 = vmatprep.subr.mxu0 %v6826
        %7094 = vmatpush1.msra.mxu0 %v6825
        %7095 = vmatprep.subr.mxu0 %v6828
        %7096 = vmatpush1.msra.mxu0 %v6827
        %7097 = vmatprep.subr.mxu0 %v6830
        %7098 = vmatpush1.msra.mxu0 %v6829
        %7099 = vmatprep.subr.mxu0 %v6832
        %7100 = vmatpush1.msra.mxu0 %v6831
        %7101 = vmatprep.subr.mxu0 %v6834
        %7102 = vmatpush1.msra.mxu0 %v6833
        %7103 = vmatprep.subr.mxu0 %v6836
        %7104 = vmatpush1.msra.mxu0 %v6835
        %7105 = vmatprep.subr.mxu0 %v6838
        %7106 = vmatpush1.msra.mxu0 %v6837
        %7107 = vmatprep.subr.mxu0 %v6840
        %7108 = vmatpush1.msra.mxu0 %v6839
        %7109 = vmatprep.subr.mxu0 %v6842
        %7110 = vmatpush1.msra.mxu0 %v6841
        %7111 = vmatprep.subr.mxu0 %v6844
        %7112 = vmatpush1.msra.mxu0 %v6843
        %7113 = vmatprep.subr.mxu0 %v6846
        %7114 = vmatpush1.msra.mxu0 %v6845
        %7115 = vmatprep.subr.mxu0 %v6848
        %7116 = vmatpush1.msra.mxu0 %v6847
        %7117 = vmatprep.subr.mxu0 %v6850
        %7118 = vmatpush1.msra.mxu0 %v6849
        %7119 = vmatprep.subr.mxu0 %v6852
        %7120 = vmatpush1.msra.mxu0 %v6851
        %7121 = vmatprep.subr.mxu0 %v6854
        %7122 = vmatpush1.msra.mxu0 %v6853
        %7123 = vmatprep.subr.mxu0 %v6856
        %7124 = vmatpush1.msra.mxu0 %v6855
        %7125 = vmatprep.subr.mxu0 %v6858
        %7126 = vmatpush1.msra.mxu0 %v6857
        %7127 = vmatprep.subr.mxu0 %v6860
        %7128 = vmatpush1.msra.mxu0 %v6859
        %7129 = vmatprep.subr.mxu0 %v6862
        %7130 = vmatpush1.msra.mxu0 %v6861
        %7131 = vmatprep.subr.mxu0 %v6864
        %7132 = vmatpush1.msra.mxu0 %v6863
        %7133 = vmatprep.subr.mxu0 %v6866
        %7134 = vmatpush1.msra.mxu0 %v6865
        %7135 = vmatprep.subr.mxu0 %v6868
        %7136 = vmatpush1.msra.mxu0 %v6867
        %7137 = vmatprep.subr.mxu0 %v6870
        %7138 = vmatpush1.msra.mxu0 %v6869
        %7139 = vmatprep.subr.mxu0 %v6872
        %7140 = vmatpush1.msra.mxu0 %v6871
        %7141 = vmatprep.subr.mxu0 %v6874
        %7142 = vmatpush1.msra.mxu0 %v6873
        %7143 = vmatprep.subr.mxu0 %v6876
        %7144 = vmatpush1.msra.mxu0 %v6875
        %7145 = vmatprep.subr.mxu0 %v6878
        %7146 = vmatpush1.msra.mxu0 %v6877
        %7147 = vmatprep.mubr.f32.mxu0 %v6784
        %7148 = vmatmul.mubr.f32.gmra.mrb[0].mxu0 %v6783
        %v7149 = vpop.f32.mrb[0].mxu0
        %v7150 = vadd.f32 %v7076, %v7149
        %v7151 = vpop.f32.mrb[0].mxu0
        %v7152 = vadd.f32 %v7080, %v7151
        %7153 = vmatprep.mubr.f32.mxu0 %v6792
        %7154 = vmatmul.mubr.f32.gmra.mrb[0].mxu0 %v6791
        %v7155 = vpop.f32.mrb[0].mxu0
        %v7156 = vadd.f32 %v7076, %v7155
        %v7157 = vpop.f32.mrb[0].mxu0
        %v7158 = vadd.f32 %v7080, %v7157
        %7159 = vmatprep.mubr.f32.mxu0 %v6800
        %7160 = vmatmul.mubr.f32.gmra.mrb[0].mxu0 %v6799
        %v7161 = vpop.f32.mrb[0].mxu0
        %v7162 = vadd.f32 %v7076, %v7161
        %v7163 = vpop.f32.mrb[0].mxu0
        %v7164 = vadd.f32 %v7080, %v7163
        %7165 = vmatprep.mubr.f32.mxu0 %v6808
        %7166 = vmatmul.mubr.f32.gmra.mrb[0].mxu0 %v6807
        %v7167 = vpop.f32.mrb[0].mxu0
        %v7168 = vadd.f32 %v7076, %v7167
        %v7169 = vpop.f32.mrb[0].mxu0
        %v7170 = vadd.f32 %v7080, %v7169
        %7171 = vdwg.mxu0
        %7172 = vmatprep.subr.mxu0 %v6880
        %7173 = vmatpush1.msra.mxu0 %v6879
        %7174 = vmatprep.subr.mxu0 %v6882
        %7175 = vmatpush1.msra.mxu0 %v6881
        %7176 = vmatprep.subr.mxu0 %v6884
        %7177 = vmatpush1.msra.mxu0 %v6883
        %7178 = vmatprep.subr.mxu0 %v6886
        %7179 = vmatpush1.msra.mxu0 %v6885
        %7180 = vmatprep.subr.mxu0 %v6888
        %7181 = vmatpush1.msra.mxu0 %v6887
        %7182 = vmatprep.subr.mxu0 %v6890
        %7183 = vmatpush1.msra.mxu0 %v6889
        %7184 = vmatprep.subr.mxu0 %v6892
        %7185 = vmatpush1.msra.mxu0 %v6891
        %7186 = vmatprep.subr.mxu0 %v6894
        %7187 = vmatpush1.msra.mxu0 %v6893
        %7188 = vmatprep.subr.mxu0 %v6896
        %7189 = vmatpush1.msra.mxu0 %v6895
        %7190 = vmatprep.subr.mxu0 %v6898
        %7191 = vmatpush1.msra.mxu0 %v6897
        %7192 = vmatprep.subr.mxu0 %v6900
        %7193 = vmatpush1.msra.mxu0 %v6899
        %7194 = vmatprep.subr.mxu0 %v6902
        %7195 = vmatpush1.msra.mxu0 %v6901
        %7196 = vmatprep.subr.mxu0 %v6904
        %7197 = vmatpush1.msra.mxu0 %v6903
        %7198 = vmatprep.subr.mxu0 %v6906
        %7199 = vmatpush1.msra.mxu0 %v6905
        %7200 = vmatprep.subr.mxu0 %v6908
        %7201 = vmatpush1.msra.mxu0 %v6907
        %7202 = vmatprep.subr.mxu0 %v6910
        %7203 = vmatpush1.msra.mxu0 %v6909
        %7204 = vmatprep.subr.mxu0 %v6912
        %7205 = vmatpush1.msra.mxu0 %v6911
        %7206 = vmatprep.subr.mxu0 %v6914
        %7207 = vmatpush1.msra.mxu0 %v6913
        %7208 = vmatprep.subr.mxu0 %v6916
        %7209 = vmatpush1.msra.mxu0 %v6915
        %7210 = vmatprep.subr.mxu0 %v6918
        %7211 = vmatpush1.msra.mxu0 %v6917
        %7212 = vmatprep.subr.mxu0 %v6920
        %7213 = vmatpush1.msra.mxu0 %v6919
        %7214 = vmatprep.subr.mxu0 %v6922
        %7215 = vmatpush1.msra.mxu0 %v6921
        %7216 = vmatprep.subr.mxu0 %v6924
        %7217 = vmatpush1.msra.mxu0 %v6923
        %7218 = vmatprep.subr.mxu0 %v6926
        %7219 = vmatpush1.msra.mxu0 %v6925
        %7220 = vmatprep.subr.mxu0 %v6928
        %7221 = vmatpush1.msra.mxu0 %v6927
        %7222 = vmatprep.subr.mxu0 %v6930
        %7223 = vmatpush1.msra.mxu0 %v6929
        %7224 = vmatprep.subr.mxu0 %v6932
        %7225 = vmatpush1.msra.mxu0 %v6931
        %7226 = vmatprep.subr.mxu0 %v6934
        %7227 = vmatpush1.msra.mxu0 %v6933
        %7228 = vmatprep.subr.mxu0 %v6936
        %7229 = vmatpush1.msra.mxu0 %v6935
        %7230 = vmatprep.subr.mxu0 %v6938
        %7231 = vmatpush1.msra.mxu0 %v6937
        %7232 = vmatprep.subr.mxu0 %v6940
        %7233 = vmatpush1.msra.mxu0 %v6939
        %7234 = vmatprep.subr.mxu0 %v6942
        %7235 = vmatpush1.msra.mxu0 %v6941
        %7236 = vmatprep.mubr.f32.mxu0 %v6786
        %7237 = vmatmul.mubr.f32.gmra.mrb[0].mxu0 %v6785
        %v7238 = vpop.f32.mrb[0].mxu0
        %v7239 = vadd.f32 %v7150, %v7238
        %v7240 = vpop.f32.mrb[0].mxu0
        %v7241 = vadd.f32 %v7152, %v7240
        %7242 = vmatprep.mubr.f32.mxu0 %v6794
        %7243 = vmatmul.mubr.f32.gmra.mrb[0].mxu0 %v6793
        %v7244 = vpop.f32.mrb[0].mxu0
        %v7245 = vadd.f32 %v7156, %v7244
        %v7246 = vpop.f32.mrb[0].mxu0
        %v7247 = vadd.f32 %v7158, %v7246
        %7248 = vmatprep.mubr.f32.mxu0 %v6802
        %7249 = vmatmul.mubr.f32.gmra.mrb[0].mxu0 %v6801
        %v7250 = vpop.f32.mrb[0].mxu0
        %v7251 = vadd.f32 %v7162, %v7250
        %v7252 = vpop.f32.mrb[0].mxu0
        %v7253 = vadd.f32 %v7164, %v7252
        %7254 = vmatprep.mubr.f32.mxu0 %v6810
        %7255 = vmatmul.mubr.f32.gmra.mrb[0].mxu0 %v6809
        %v7256 = vpop.f32.mrb[0].mxu0
        %v7257 = vadd.f32 %v7168, %v7256
        %v7258 = vpop.f32.mrb[0].mxu0
        %v7259 = vadd.f32 %v7170, %v7258
        %7260 = vdwg.mxu0
        %7261 = vmatprep.subr.mxu0 %v6944
        %7262 = vmatpush1.msra.mxu0 %v6943
        %7263 = vmatprep.subr.mxu0 %v6946
        %7264 = vmatpush1.msra.mxu0 %v6945
        %7265 = vmatprep.subr.mxu0 %v6948
        %7266 = vmatpush1.msra.mxu0 %v6947
        %7267 = vmatprep.subr.mxu0 %v6950
        %7268 = vmatpush1.msra.mxu0 %v6949
        %7269 = vmatprep.subr.mxu0 %v6952
        %7270 = vmatpush1.msra.mxu0 %v6951
        %7271 = vmatprep.subr.mxu0 %v6954
        %7272 = vmatpush1.msra.mxu0 %v6953
        %7273 = vmatprep.subr.mxu0 %v6956
        %7274 = vmatpush1.msra.mxu0 %v6955
        %7275 = vmatprep.subr.mxu0 %v6958
        %7276 = vmatpush1.msra.mxu0 %v6957
        %7277 = vmatprep.subr.mxu0 %v6960
        %7278 = vmatpush1.msra.mxu0 %v6959
        %7279 = vmatprep.subr.mxu0 %v6962
        %7280 = vmatpush1.msra.mxu0 %v6961
        %7281 = vmatprep.subr.mxu0 %v6964
        %7282 = vmatpush1.msra.mxu0 %v6963
        %7283 = vmatprep.subr.mxu0 %v6966
        %7284 = vmatpush1.msra.mxu0 %v6965
        %7285 = vmatprep.subr.mxu0 %v6968
        %7286 = vmatpush1.msra.mxu0 %v6967
        %7287 = vmatprep.subr.mxu0 %v6970
        %7288 = vmatpush1.msra.mxu0 %v6969
        %7289 = vmatprep.subr.mxu0 %v6972
        %7290 = vmatpush1.msra.mxu0 %v6971
        %7291 = vmatprep.subr.mxu0 %v6974
        %7292 = vmatpush1.msra.mxu0 %v6973
        %7293 = vmatprep.subr.mxu0 %v6976
        %7294 = vmatpush1.msra.mxu0 %v6975
        %7295 = vmatprep.subr.mxu0 %v6978
        %7296 = vmatpush1.msra.mxu0 %v6977
        %7297 = vmatprep.subr.mxu0 %v6980
        %7298 = vmatpush1.msra.mxu0 %v6979
        %7299 = vmatprep.subr.mxu0 %v6982
        %7300 = vmatpush1.msra.mxu0 %v6981
        %7301 = vmatprep.subr.mxu0 %v6984
        %7302 = vmatpush1.msra.mxu0 %v6983
        %7303 = vmatprep.subr.mxu0 %v6986
        %7304 = vmatpush1.msra.mxu0 %v6985
        %7305 = vmatprep.subr.mxu0 %v6988
        %7306 = vmatpush1.msra.mxu0 %v6987
        %7307 = vmatprep.subr.mxu0 %v6990
        %7308 = vmatpush1.msra.mxu0 %v6989
        %7309 = vmatprep.subr.mxu0 %v6992
        %7310 = vmatpush1.msra.mxu0 %v6991
        %7311 = vmatprep.subr.mxu0 %v6994
        %7312 = vmatpush1.msra.mxu0 %v6993
        %7313 = vmatprep.subr.mxu0 %v6996
        %7314 = vmatpush1.msra.mxu0 %v6995
        %7315 = vmatprep.subr.mxu0 %v6998
        %7316 = vmatpush1.msra.mxu0 %v6997
        %7317 = vmatprep.subr.mxu0 %v7000
        %7318 = vmatpush1.msra.mxu0 %v6999
        %7319 = vmatprep.subr.mxu0 %v7002
        %7320 = vmatpush1.msra.mxu0 %v7001
        %7321 = vmatprep.subr.mxu0 %v7004
        %7322 = vmatpush1.msra.mxu0 %v7003
        %7323 = vmatprep.subr.mxu0 %v7006
        %7324 = vmatpush1.msra.mxu0 %v7005
        %7325 = vmatprep.mubr.f32.mxu0 %v6788
        %7326 = vmatmul.mubr.f32.gmra.mrb[0].mxu0 %v6787
        %v7327 = vpop.f32.mrb[0].mxu0
        %v7328 = vadd.f32 %v7239, %v7327
        %v7329 = vpop.f32.mrb[0].mxu0
        %v7330 = vadd.f32 %v7241, %v7329
        %7331 = vmatprep.mubr.f32.mxu0 %v6796
        %7332 = vmatmul.mubr.f32.gmra.mrb[0].mxu0 %v6795
        %v7333 = vpop.f32.mrb[0].mxu0
        %v7334 = vadd.f32 %v7245, %v7333
        %v7335 = vpop.f32.mrb[0].mxu0
        %v7336 = vadd.f32 %v7247, %v7335
        %7337 = vmatprep.mubr.f32.mxu0 %v6804
        %7338 = vmatmul.mubr.f32.gmra.mrb[0].mxu0 %v6803
        %v7339 = vpop.f32.mrb[0].mxu0
        %v7340 = vadd.f32 %v7251, %v7339
        %v7341 = vpop.f32.mrb[0].mxu0
        %v7342 = vadd.f32 %v7253, %v7341
        %7343 = vmatprep.mubr.f32.mxu0 %v6812
        %7344 = vmatmul.mubr.f32.gmra.mrb[0].mxu0 %v6811
        %v7345 = vpop.f32.mrb[0].mxu0
        %v7346 = vadd.f32 %v7257, %v7345
        %v7347 = vpop.f32.mrb[0].mxu0
        %v7348 = vadd.f32 %v7259, %v7347
        %7349 = vdwg.mxu0
        %7350 = vmatprep.subr.mxu0 %v7008
        %7351 = vmatpush1.msra.mxu0 %v7007
        %7352 = vmatprep.subr.mxu0 %v7010
        %7353 = vmatpush1.msra.mxu0 %v7009
        %7354 = vmatprep.subr.mxu0 %v7012
        %7355 = vmatpush1.msra.mxu0 %v7011
        %7356 = vmatprep.subr.mxu0 %v7014
        %7357 = vmatpush1.msra.mxu0 %v7013
        %7358 = vmatprep.subr.mxu0 %v7016
        %7359 = vmatpush1.msra.mxu0 %v7015
        %7360 = vmatprep.subr.mxu0 %v7018
        %7361 = vmatpush1.msra.mxu0 %v7017
        %7362 = vmatprep.subr.mxu0 %v7020
        %7363 = vmatpush1.msra.mxu0 %v7019
        %7364 = vmatprep.subr.mxu0 %v7022
        %7365 = vmatpush1.msra.mxu0 %v7021
        %7366 = vmatprep.subr.mxu0 %v7024
        %7367 = vmatpush1.msra.mxu0 %v7023
        %7368 = vmatprep.subr.mxu0 %v7026
        %7369 = vmatpush1.msra.mxu0 %v7025
        %7370 = vmatprep.subr.mxu0 %v7028
        %7371 = vmatpush1.msra.mxu0 %v7027
        %7372 = vmatprep.subr.mxu0 %v7030
        %7373 = vmatpush1.msra.mxu0 %v7029
        %7374 = vmatprep.subr.mxu0 %v7032
        %7375 = vmatpush1.msra.mxu0 %v7031
        %7376 = vmatprep.subr.mxu0 %v7034
        %7377 = vmatpush1.msra.mxu0 %v7033
        %7378 = vmatprep.subr.mxu0 %v7036
        %7379 = vmatpush1.msra.mxu0 %v7035
        %7380 = vmatprep.subr.mxu0 %v7038
        %7381 = vmatpush1.msra.mxu0 %v7037
        %7382 = vmatprep.subr.mxu0 %v7040
        %7383 = vmatpush1.msra.mxu0 %v7039
        %7384 = vmatprep.subr.mxu0 %v7042
        %7385 = vmatpush1.msra.mxu0 %v7041
        %7386 = vmatprep.subr.mxu0 %v7044
        %7387 = vmatpush1.msra.mxu0 %v7043
        %7388 = vmatprep.subr.mxu0 %v7046
        %7389 = vmatpush1.msra.mxu0 %v7045
        %7390 = vmatprep.subr.mxu0 %v7048
        %7391 = vmatpush1.msra.mxu0 %v7047
        %7392 = vmatprep.subr.mxu0 %v7050
        %7393 = vmatpush1.msra.mxu0 %v7049
        %7394 = vmatprep.subr.mxu0 %v7052
        %7395 = vmatpush1.msra.mxu0 %v7051
        %7396 = vmatprep.subr.mxu0 %v7054
        %7397 = vmatpush1.msra.mxu0 %v7053
        %7398 = vmatprep.subr.mxu0 %v7056
        %7399 = vmatpush1.msra.mxu0 %v7055
        %7400 = vmatprep.subr.mxu0 %v7058
        %7401 = vmatpush1.msra.mxu0 %v7057
        %7402 = vmatprep.subr.mxu0 %v7060
        %7403 = vmatpush1.msra.mxu0 %v7059
        %7404 = vmatprep.subr.mxu0 %v7062
        %7405 = vmatpush1.msra.mxu0 %v7061
        %7406 = vmatprep.subr.mxu0 %v7064
        %7407 = vmatpush1.msra.mxu0 %v7063
        %7408 = vmatprep.subr.mxu0 %v7066
        %7409 = vmatpush1.msra.mxu0 %v7065
        %7410 = vmatprep.subr.mxu0 %v7068
        %7411 = vmatpush1.msra.mxu0 %v7067
        %7412 = vmatprep.subr.mxu0 %v7070
        %7413 = vmatpush1.msra.mxu0 %v7069
        %7414 = vmatprep.mubr.f32.mxu0 %v6790
        %7415 = vmatmul.mubr.f32.gmra.mrb[0].mxu0 %v6789
        %v7416 = vpop.f32.mrb[0].mxu0
        %v7417 = vadd.f32 %v7328, %v7416
        %v7418 = vpop.f32.mrb[0].mxu0
        %v7419 = vadd.f32 %v7330, %v7418
        %7420 = vmatprep.mubr.f32.mxu0 %v6798
        %7421 = vmatmul.mubr.f32.gmra.mrb[0].mxu0 %v6797
        %v7422 = vpop.f32.mrb[0].mxu0
        %v7423 = vadd.f32 %v7334, %v7422
        %v7424 = vpop.f32.mrb[0].mxu0
        %v7425 = vadd.f32 %v7336, %v7424
        %7426 = vmatprep.mubr.f32.mxu0 %v6806
        %7427 = vmatmul.mubr.f32.gmra.mrb[0].mxu0 %v6805
        %v7428 = vpop.f32.mrb[0].mxu0
        %v7429 = vadd.f32 %v7340, %v7428
        %v7430 = vpop.f32.mrb[0].mxu0
        %v7431 = vadd.f32 %v7342, %v7430
        %7432 = vmatprep.mubr.f32.mxu0 %v6814
        %7433 = vmatmul.mubr.f32.gmra.mrb[0].mxu0 %v6813
        %v7434 = vpop.f32.mrb[0].mxu0
        %v7435 = vadd.f32 %v7346, %v7434
        %v7436 = vpop.f32.mrb[0].mxu0
        %v7437 = vadd.f32 %v7348, %v7436
        %7438 = vdwg.mxu0
        %v7439 = vadd.f32 %v6121, %v7417
        %v7440 = vadd.f32 %v6122, %v7419
        %v7441 = vadd.f32 %v6123, %v7423
        %v7442 = vadd.f32 %v6124, %v7425
        %v7443 = vadd.f32 %v6125, %v7429
        %v7444 = vadd.f32 %v6126, %v7431
        %v7445 = vadd.f32 %v6127, %v7435
        %v7446 = vadd.f32 %v6128, %v7437
        %v7447 = vadd.f32 %v7439, %v7440
        %7448 = vadd.xlane.f32.xlu0 %v7447
        %v7449 = vpop.xlane.xlu0 %7448
        %v7450 = vadd.f32 %v7441, %v7442
        %7451 = vadd.xlane.f32.xlu0 %v7450
        %v7452 = vpop.xlane.xlu0 %7451
        %v7453 = vadd.f32 %v7443, %v7444
        %7454 = vadd.xlane.f32.xlu0 %v7453
        %v7455 = vpop.xlane.xlu0 %7454
        %v7456 = vadd.f32 %v7445, %v7446
        %7457 = vadd.xlane.f32.xlu0 %v7456
        %v7458 = vpop.xlane.xlu0 %7457
        %v7459 = vmul.f32 %v7449, %v6036
        %v7460 = vmul.f32 %v7452, %v6036
        %v7461 = vmul.f32 %v7455, %v6036
        %v7462 = vmul.f32 %v7458, %v6036
        %v7463 = vsub.f32 %v7439, %v7459
        %v7464 = vsub.f32 %v7440, %v7459
        %v7465 = vsub.f32 %v7441, %v7460
        %v7466 = vsub.f32 %v7442, %v7460
        %v7467 = vsub.f32 %v7443, %v7461
        %v7468 = vsub.f32 %v7444, %v7461
        %v7469 = vsub.f32 %v7445, %v7462
        %v7470 = vsub.f32 %v7446, %v7462
        %v7471 = vmul.f32 %v7463, %v7463
        %v7472 = vmul.f32 %v7464, %v7464
        %v7473 = vmul.f32 %v7465, %v7465
        %v7474 = vmul.f32 %v7466, %v7466
        %v7475 = vmul.f32 %v7467, %v7467
        %v7476 = vmul.f32 %v7468, %v7468
        %v7477 = vmul.f32 %v7469, %v7469
        %v7478 = vmul.f32 %v7470, %v7470
        %v7479 = vadd.f32 %v7471, %v7472
        %7480 = vadd.xlane.f32.xlu0 %v7479
        %v7481 = vpop.xlane.xlu0 %7480
        %v7482 = vadd.f32 %v7473, %v7474
        %7483 = vadd.xlane.f32.xlu0 %v7482
        %v7484 = vpop.xlane.xlu0 %7483
        %v7485 = vadd.f32 %v7475, %v7476
        %7486 = vadd.xlane.f32.xlu0 %v7485
        %v7487 = vpop.xlane.xlu0 %7486
        %v7488 = vadd.f32 %v7477, %v7478
        %7489 = vadd.xlane.f32.xlu0 %v7488
        %v7490 = vpop.xlane.xlu0 %7489
        %v7491 = vmul.f32 %v7481, %v6036
        %v7492 = vmul.f32 %v7484, %v6036
        %v7493 = vmul.f32 %v7487, %v6036
        %v7494 = vmul.f32 %v7490, %v6036
        %v7495 = vadd.f32 %v7491, 1e-05
        %v7496 = vadd.f32 %v7492, 1e-05
        %v7497 = vadd.f32 %v7493, 1e-05
        %v7498 = vadd.f32 %v7494, 1e-05
        %v7499 = vrsqrt.pop %v7495
        %v7500 = vrsqrt.pop %v7496
        %v7501 = vrsqrt.pop %v7497
        %v7502 = vrsqrt.pop %v7498
        %v7503 = vmul.f32 %v7463, %v7499
        %v7504 = vmul.f32 %v7464, %v7499
        %v7505 = vmul.f32 %v7465, %v7500
        %v7506 = vmul.f32 %v7466, %v7500
        %v7507 = vmul.f32 %v7467, %v7501
        %v7508 = vmul.f32 %v7468, %v7501
        %v7509 = vmul.f32 %v7469, %v7502
        %v7510 = vmul.f32 %v7470, %v7502
        %v7511 = vld [vmem:[%s18] sm:$0x3]
        %v7513 = vlaneseq
        %v7514 = vshrl.u32 %v7513, 7
        %v7515 = vsub.s32 0, %v7514
        %v7516 = vrot.slane %v7511, %v7515
        %v7517 = vlaneseq
        %v7518 = vshrl.u32 %v7517, 7
        %v7519 = vsub.s32 1, %v7518
        %v7520 = vrot.slane %v7511, %v7519
        %v7523 = vmul.f32 %v7503, %v7516
        %v7524 = vmul.f32 %v7504, %v7520
        %v7525 = vmul.f32 %v7505, %v7516
        %v7526 = vmul.f32 %v7506, %v7520
        %v7527 = vmul.f32 %v7507, %v7516
        %v7528 = vmul.f32 %v7508, %v7520
        %v7529 = vmul.f32 %v7509, %v7516
        %v7530 = vmul.f32 %v7510, %v7520
        %v7531 = vld [vmem:[%s19] sm:$0x3]
        %v7533 = vlaneseq
        %v7534 = vshrl.u32 %v7533, 7
        %v7535 = vsub.s32 0, %v7534
        %v7536 = vrot.slane %v7531, %v7535
        %v7537 = vlaneseq
        %v7538 = vshrl.u32 %v7537, 7
        %v7539 = vsub.s32 1, %v7538
        %v7540 = vrot.slane %v7531, %v7539
        %v7543 = vadd.f32 %v7523, %v7536
        %v7544 = vadd.f32 %v7524, %v7540
        %v7545 = vadd.f32 %v7525, %v7536
        %v7546 = vadd.f32 %v7526, %v7540
        %v7547 = vadd.f32 %v7527, %v7536
        %v7548 = vadd.f32 %v7528, %v7540
        %v7549 = vadd.f32 %v7529, %v7536
        %v7550 = vadd.f32 %v7530, %v7540
        %7551 = vst [vmem:[%s790] sm:$0xff] %v7543
        %7552 = vst [vmem:[%s790 + $0x8] sm:$0xff] %v7544
        %7553 = vst [vmem:[%s790 + $0x10] sm:$0xff] %v7545
        %7554 = vst [vmem:[%s790 + $0x18] sm:$0xff] %v7546
        %7555 = vst [vmem:[%s790 + $0x20] sm:$0xff] %v7547
        %7556 = vst [vmem:[%s790 + $0x28] sm:$0xff] %v7548
        %7557 = vst [vmem:[%s790 + $0x30] sm:$0xff] %v7549
        %7558 = vst [vmem:[%s790 + $0x38] sm:$0xff] %v7550
        %s7559 = sand.u32 %s481, 1
        %s7560 = scalar_lea.sflag [#allocation4], %s7559
        %s7561 = sand.u32 %s481, 1
        %s7562 = smul.addr %s7561, 64
        %s7563 = scalar_lea.vmem [#allocation17], %s7562
        // Predicated region
        $region137: #{tpu_custom_call.1} parent=99 // pred_check
          %p7564 = pneg %p491
        $region138: #{tpu_custom_call.1} parent=99 // pred_check_branch
          %7566 = sbr.rel (%p7564) target = $region140
        $region139: #{tpu_custom_call.1} parent=99 // pred_region
          %s7567 = smul.u32 2, %s43
          %s7569 = ssub.s32 1024, 1024
          %7570 = vsyncadd %s7560, %s7569
          %s7571 = smul.addr %s7567, 4
          %s7572 = smul.addr %s7571, 128
          %s7573 = scalar_lea.hbm %s20, %s7572
          %s7574 = sshll.u32 %s7563, 4
          %s7575 = int_to_ptr.vmem [resolvable:$true] %s7574
          %7580 = dma.vmem_to_hbm [thread:$0]  %s7575, 1024, %s7573, %s7560, 256, 256, 16
        $region140: #{tpu_custom_call.1} parent=99 // pred_fallthru
          _
      $region100: #{tpu_custom_call.1} parent=5 // pred_fallthru
        _
      %p7581 = scmp.le.s32.totalorder 2, %s38
      // Predicated region
      $region141: #{tpu_custom_call.1} parent=5 // pred_check
        %p7582 = pneg %p7581
      $region142: #{tpu_custom_call.1} parent=5 // pred_check_branch
        %7584 = sbr.rel (%p7582) target = $region144
      $region143: #{tpu_custom_call.1} parent=5 // pred_region
        %s7585 = ssub.s32 %s38, 2
        // Predicated region
        $region145: #{tpu_custom_call.1} parent=143 // pred_check
          %p7586 = pneg %p497
        $region146: #{tpu_custom_call.1} parent=143 // pred_check_branch
          %7588 = sbr.rel (%p7586) target = $region148
        $region147: #{tpu_custom_call.1} parent=143 // pred_region
          %s7589 = sand.u32 %s482, 1
          %s7590 = scalar_lea.sflag [#allocation4], %s7589
          %s7591 = sand.u32 %s482, 1
          %s7592 = smul.addr %s7591, 64
          %s7593 = scalar_lea.vmem [#allocation17], %s7592
          %7594 = dma.done %s7590, 1024
        $region148: #{tpu_custom_call.1} parent=143 // pred_fallthru
          _
      $region144: #{tpu_custom_call.1} parent=5 // pred_fallthru
        _
    $region6: #{tpu_custom_call.1} parent=1 // loop_footer
      %s42 = sadd.s32 1, %s38
    $region7: #{tpu_custom_call.1} parent=1 // loop_footer_branch
      %37 = sbr.rel target = $region3
    $region8: #{tpu_custom_call.1} parent=1 // loop_exit
      _
    %7595 = vsyncpa [#allocation3], 1
    %s7596 = scalar_lea.sflag [#allocation3], 1
    %7597 = vsyncpa %s7596, 1
    %7598 = vsyncpa [#allocation6], 1
    %s7599 = scalar_lea.sflag [#allocation6], 1
    %7600 = vsyncpa %s7599, 1
    %7601 = vsyncpa [#allocation9], 1
    %7602 = vsyncpa [#allocation12], 1
    %7603 = vsyncpa [#allocation15], 1
    %7604 = vsyncpa [#allocation4], 1
    %s7605 = scalar_lea.sflag [#allocation4], 1
    %7606 = vsyncpa %s7605, 1

</llo_original>
